<compile_context>
chip_gen: v6e
topology: v6e:2x2x1
jax: 0.10.0
libtpu: 0.0.40
codegen_flags: <defaults>
</compile_context>

<pallas_src>
import jax
import jax.numpy as jnp
import numpy as np
from jax.experimental import pallas as pl
from jax.experimental.pallas import tpu as pltpu

_BN_EPS = 1e-5


# ---------------------------------------------------------------------------
# Small helpers
# ---------------------------------------------------------------------------
def _fold_bn(p, eps=_BN_EPS):
    scale = p["gamma"] / jnp.sqrt(p["var"] + eps)
    bias = p["beta"] - p["mean"] * scale
    return scale, bias


def _shift_cols(v, off):
    """out[:, p] = v[:, (p + off) % ncols]   (== jnp.roll(v, -off, axis=-1)).

    Columns that wrap around carry garbage for the conv; they are zeroed
    afterwards by the per-tap validity mask, so only in-range columns matter.
    """
    ncols = v.shape[-1]
    o = off % ncols
    if o == 0:
        return v
    return jnp.concatenate([v[:, o:], v[:, :o]], axis=-1)


def _make_tap_masks(h, w, k):
    """(k*k, 1, h*w) f32 validity masks for a 'same' kxk conv, tap t = dy*k+dx."""
    pad = k // 2
    hh, ww = np.meshgrid(np.arange(h), np.arange(w), indexing="ij")
    masks = []
    for dy in range(k):
        for dx in range(k):
            sh, sw = hh + dy - pad, ww + dx - pad
            valid = (sh >= 0) & (sh < h) & (sw >= 0) & (sw < w)
            masks.append(valid.astype(np.float32).reshape(1, h * w))
    return np.stack(masks, axis=0)


# ---------------------------------------------------------------------------
# Fused HGBlock forward (single pallas_call)
# ---------------------------------------------------------------------------
def hgblock_forward(x_nchw, params, add, compute_dtype=jnp.float32):
    nb, c1, H, W = x_nchw.shape
    hw = H * W
    mids = params["m"]
    n_mid = len(mids)
    cm, _, k, _ = mids[0]["w"].shape
    csc = params["sc"]["w"].shape[0]
    c2 = params["ec"]["w"].shape[0]
    pad = k // 2
    kk = k * k
    cp = max(c1, cm)                     # uniform channel width for mid stages

    # -------- parameter prep (tiny one-time folds; BN scale folded into W) ----
    def prep_mid(p):
        cout, cin = p["w"].shape[:2]
        scale, bias = _fold_bn(p)
        wt = p["w"] * scale[:, None, None, None]                 # fold BN scale
        wt = jnp.transpose(wt, (2, 3, 0, 1)).reshape(kk, cout, cin)  # per tap (O,I)
        wt = jnp.pad(wt, ((0, 0), (0, cp - cout), (0, cp - cin)))
        b = jnp.pad(bias, (0, cp - cout)).reshape(cp, 1)
        return wt.astype(compute_dtype), b.astype(jnp.float32)

    wm_l, bm_l = zip(*(prep_mid(p) for p in mids))
    wm = jnp.stack(wm_l)                                # (n, k*k, cp, cp)
    bm = jnp.stack(bm_l)                                # (n, cp, 1)

    sc_scale, sc_bias = _fold_bn(params["sc"])
    wsc_full = params["sc"]["w"][:, :, 0, 0] * sc_scale[:, None]   # (csc, c1+n*cm)
    pieces = [jnp.pad(wsc_full[:, :c1], ((0, 0), (0, cp - c1)))]
    for i in range(n_mid):
        sl = wsc_full[:, c1 + i * cm: c1 + (i + 1) * cm]
        pieces.append(jnp.pad(sl, ((0, 0), (0, cp - cm))))
    wsc = jnp.stack(pieces).astype(compute_dtype)        # (n+1, csc, cp)
    bsc = sc_bias.reshape(csc, 1).astype(jnp.float32)

    ec_scale, ec_bias = _fold_bn(params["ec"])
    wec = (params["ec"]["w"][:, :, 0, 0] * ec_scale[:, None]).astype(compute_dtype)
    bec = ec_bias.reshape(c2, 1).astype(jnp.float32)

    masks = jnp.asarray(_make_tap_masks(H, W, k))        # (k*k, 1, hw) f32

    # NCHW with HW flattened is already channel-major / lane-dense (hw on lanes);
    # only pad channels up to cp so every mid conv sees a uniform (cp, hw) slab.
    x_flat = x_nchw.reshape(nb, c1, hw)
    if cp > c1:
        x_flat = jnp.pad(x_flat, ((0, 0), (0, cp - c1), (0, 0)))

    # ---------------------------- fused kernel --------------------------------
    def kernel(mask_ref, x_ref, wm_ref, bm_ref, wsc_ref, bsc_ref, wec_ref,
               bec_ref, o_ref):
        x32 = x_ref[0].astype(jnp.float32)               # (cp, hw)
        cur32 = x32
        # torch.cat never materializes: accumulate the squeeze conv (sc) piece
        # by piece, starting with the x piece.
        sc_acc = jnp.dot(wsc_ref[0], cur32.astype(compute_dtype),
                         preferred_element_type=jnp.float32)      # (csc, hw)
        for i in range(n_mid):
            acc = jnp.zeros((cp, hw), jnp.float32)
            for t in range(kk):
                dy, dx = t // k, t % k
                if dy == pad and dx == pad:              # center tap, no shift/mask
                    part = jnp.dot(wm_ref[i, t], cur32.astype(compute_dtype),
                                   preferred_element_type=jnp.float32)
                else:
                    off = (dy - pad) * W + (dx - pad)
                    src = _shift_cols(cur32, off)
                    part = jnp.dot(wm_ref[i, t], src.astype(compute_dtype),
                                   preferred_element_type=jnp.float32)
                    part = part * mask_ref[t]            # zero out-of-image taps
                acc = acc + part
            cur32 = jnp.maximum(acc + bm_ref[i], 0.0)    # BN bias + ReLU (f32 VPU)
            sc_acc = sc_acc + jnp.dot(wsc_ref[i + 1],
                                      cur32.astype(compute_dtype),
                                      preferred_element_type=jnp.float32)
        sc = jnp.maximum(sc_acc + bsc_ref[...], 0.0)     # squeeze conv output
        ec = jnp.dot(wec_ref[...], sc.astype(compute_dtype),
                     preferred_element_type=jnp.float32)
        out = jnp.maximum(ec + bec_ref[...], 0.0)        # (c2, hw), lane-dense
        if add:                                          # residual (c1 == c2)
            out = out + x32[:c2]
        o_ref[0] = out.astype(o_ref.dtype)

    out = pl.pallas_call(
        kernel,
        out_shape=jax.ShapeDtypeStruct((nb, c2, hw), x_nchw.dtype),
        grid=(nb,),
        in_specs=[
            pl.BlockSpec((kk, 1, hw), lambda b: (0, 0, 0)),          # tap masks
            pl.BlockSpec((1, cp, hw), lambda b: (b, 0, 0)),          # x (per image)
            pl.BlockSpec((n_mid, kk, cp, cp), lambda b: (0, 0, 0, 0)),  # mid W
            pl.BlockSpec((n_mid, cp, 1), lambda b: (0, 0, 0)),       # mid bias
            pl.BlockSpec((n_mid + 1, csc, cp), lambda b: (0, 0, 0)), # sc W pieces
            pl.BlockSpec((csc, 1), lambda b: (0, 0)),                # sc bias
            pl.BlockSpec((c2, csc), lambda b: (0, 0)),               # ec W
            pl.BlockSpec((c2, 1), lambda b: (0, 0)),                 # ec bias
        ],
        out_specs=pl.BlockSpec((1, c2, hw), lambda b: (b, 0, 0)),
        compiler_params=pltpu.CompilerParams(
            dimension_semantics=("parallel",)),                      # v7x: 2 TCs
    )(masks, x_flat, wm, bm, wsc, bsc, wec, bec)

    return out.reshape(nb, c2, H, W)


# ---------------------------------------------------------------------------
# Pure-JAX reference (lax.conv) for correctness checking
# ---------------------------------------------------------------------------
def _ref_conv_block(x_nchw, p, eps=_BN_EPS):
    wt = p["w"]
    pd = wt.shape[2] // 2
    y = jax.lax.conv_general_dilated(
        x_nchw, wt, window_strides=(1, 1),
        padding=[(pd, pd), (pd, pd)],
        dimension_numbers=("NCHW", "OIHW", "NCHW"),
        precision=jax.lax.Precision.HIGHEST)
    scale = p["gamma"] / jnp.sqrt(p["var"] + eps)
    bias = p["beta"] - p["mean"] * scale
    y = y * scale[None, :, None, None] + bias[None, :, None, None]
    return jnp.maximum(y, 0.0)


def hgblock_reference(x, params, add):
    ys = [x]
    for p in params["m"]:
        ys.append(_ref_conv_block(ys[-1], p))
    y = jnp.concatenate(ys, axis=1)
    y = _ref_conv_block(y, params["sc"])
    y = _ref_conv_block(y, params["ec"])
    return y + x if add else y


# ---------------------------------------------------------------------------
if __name__ == "__main__":
    # HGBlock(c1=4, cm=16, c2=32, k=3, n=6, lightconv=False, shortcut=False, ReLU)
    c1, cm, c2, k, n_blocks = 4, 16, 32, 3, 6
    shortcut = False
    add = shortcut and (c1 == c2)

    key = jax.random.PRNGKey(0)
    key, kx = jax.random.split(key)
    x = jax.random.normal(kx, (2, c1, 16, 16), dtype=jnp.float32)

    def make_conv_params(key_, c_in, c_out, ksize):
        kw_, kg, kb, km, kv = jax.random.split(key_, 5)
        fan_in = c_in * ksize * ksize
        return {
            "w": jax.random.normal(kw_, (c_out, c_in, ksize, ksize), jnp.float32)
                 / jnp.sqrt(fan_in),
            "gamma": jax.random.uniform(kg, (c_out,), jnp.float32, 0.5, 1.5),
            "beta": 0.1 * jax.random.normal(kb, (c_out,), jnp.float32),
            "mean": 0.1 * jax.random.normal(km, (c_out,), jnp.float32),
            "var": jax.random.uniform(kv, (c_out,), jnp.float32, 0.5, 1.5),
        }

    m_params = []
    c_prev = c1
    for _ in range(n_blocks):
        key, sub = jax.random.split(key)
        m_params.append(make_conv_params(sub, c_prev, cm, k))
        c_prev = cm
    key, ks, ke = jax.random.split(key, 3)
    params = {
        "m": tuple(m_params),
        "sc": make_conv_params(ks, c1 + n_blocks * cm, c2 // 2, 1),
        "ec": make_conv_params(ke, c2 // 2, c2, 1),
    }

    fwd = jax.jit(hgblock_forward, static_argnames=("add", "compute_dtype"))

    # f32 MXU-operand path: strict check against the lax.conv reference.
    out = jax.block_until_ready(fwd(x, params, add=add))
    ref = hgblock_reference(x, params, add)
    assert out.shape == (2, c2, 16, 16)
    max_err = jnp.max(jnp.abs(out - ref))
    assert jnp.allclose(out, ref, atol=2e-3, rtol=2e-3), f"f32 mismatch: {max_err}"

    # bf16 MXU-operand path (recommended on v6e/v7x: ~2x MXU throughput, half
    # the weight DMA bytes); accumulation + epilogue stay f32.  Loose smoke
    # check only, relative to the reference's dynamic range.
    out_bf16 = jax.block_until_ready(
        fwd(x, params, add=add, compute_dtype=jnp.bfloat16))
    err_bf16 = jnp.max(jnp.abs(out_bf16 - ref))
    assert err_bf16 < 0.25 * jnp.max(jnp.abs(ref)) + 1e-3, (
        f"bf16 path error too large: {err_bf16}")

    print("KERNEL_OK")
</pallas_src>

<mosaic_0001>
module attributes {stable_mosaic.version = 11 : i64} {
  func.func @kernel(%arg0: i32, %arg1: memref<9x1x256xf32, #tpu.memory_space<vmem>>, %arg2: memref<1x16x256xf32, #tpu.memory_space<vmem>>, %arg3: memref<6x9x16x16xf32, #tpu.memory_space<vmem>>, %arg4: memref<6x16x1xf32, #tpu.memory_space<vmem>>, %arg5: memref<7x16x16xf32, #tpu.memory_space<vmem>>, %arg6: memref<16x1xf32, #tpu.memory_space<vmem>>, %arg7: memref<32x16xf32, #tpu.memory_space<vmem>>, %arg8: memref<32x1xf32, #tpu.memory_space<vmem>>, %arg9: memref<1x32x256xf32, #tpu.memory_space<vmem>>) attributes {dimension_semantics = [#tpu.dimension_semantics<parallel>], iteration_bounds = array<i64: 2>, scalar_prefetch = 0 : i64, scratch_operands = 0 : i64, tpu.core_type = #tpu.core_type<tc>, window_params = [{pipeline_mode = #tpu.pipeline_mode<synchronous>, transform_indices = @transform_0, window_bounds = array<i64: 9, 1, 256>}, {transform_indices = @transform_1, window_bounds = array<i64: 1, 16, 256>}, {pipeline_mode = #tpu.pipeline_mode<synchronous>, transform_indices = @transform_2, window_bounds = array<i64: 6, 9, 16, 16>}, {pipeline_mode = #tpu.pipeline_mode<synchronous>, transform_indices = @transform_3, window_bounds = array<i64: 6, 16, 1>}, {pipeline_mode = #tpu.pipeline_mode<synchronous>, transform_indices = @transform_4, window_bounds = array<i64: 7, 16, 16>}, {pipeline_mode = #tpu.pipeline_mode<synchronous>, transform_indices = @transform_5, window_bounds = array<i64: 16, 1>}, {pipeline_mode = #tpu.pipeline_mode<synchronous>, transform_indices = @transform_6, window_bounds = array<i64: 32, 16>}, {pipeline_mode = #tpu.pipeline_mode<synchronous>, transform_indices = @transform_7, window_bounds = array<i64: 32, 1>}, {transform_indices = @transform_8, window_bounds = array<i64: 1, 32, 256>}]} {
    %c0 = arith.constant 0 : index
    %c0_0 = arith.constant 0 : index
    %c0_1 = arith.constant 0 : index
    %0 = vector.load %arg2[%c0, %c0_0, %c0_1] : memref<1x16x256xf32, #tpu.memory_space<vmem>>, vector<1x16x256xf32>
    %1 = vector.shape_cast %0 : vector<1x16x256xf32> to vector<16x256xf32>
    %c0_2 = arith.constant 0 : index
    %c0_3 = arith.constant 0 : index
    %c0_4 = arith.constant 0 : index
    %2 = vector.load %arg5[%c0_2, %c0_3, %c0_4] : memref<7x16x16xf32, #tpu.memory_space<vmem>>, vector<1x16x16xf32>
    %3 = vector.shape_cast %2 : vector<1x16x16xf32> to vector<16x16xf32>
    %cst = arith.constant dense<0.000000e+00> : vector<16x256xf32>
    %4 = tpu.matmul %3, %1, %cst {dimension_numbers = #tpu.dot_dimension_numbers<[1], [0], [0], [1], [0, 0, 1, 1], [], []>} : vector<16x16xf32>, vector<16x256xf32>, vector<16x256xf32> -> vector<16x256xf32>
    %cst_5 = arith.constant 0.000000e+00 : f32
    %5 = vector.broadcast %cst_5 : f32 to vector<16x256xf32>
    %6 = vector.extract_strided_slice %1 {offsets = [0, 239], sizes = [16, 17], strides = [1, 1]} : vector<16x256xf32> to vector<16x17xf32>
    %7 = vector.extract_strided_slice %1 {offsets = [0, 0], sizes = [16, 239], strides = [1, 1]} : vector<16x256xf32> to vector<16x239xf32>
    %8 = tpu.concatenate %6, %7 in 1 : vector<16x17xf32>, vector<16x239xf32> -> vector<16x256xf32>
    %c0_6 = arith.constant 0 : index
    %c0_7 = arith.constant 0 : index
    %c0_8 = arith.constant 0 : index
    %c0_9 = arith.constant 0 : index
    %9 = vector.load %arg3[%c0_6, %c0_7, %c0_8, %c0_9] : memref<6x9x16x16xf32, #tpu.memory_space<vmem>>, vector<1x1x16x16xf32>
    %10 = vector.shape_cast %9 : vector<1x1x16x16xf32> to vector<16x16xf32>
    %cst_10 = arith.constant dense<0.000000e+00> : vector<16x256xf32>
    %11 = tpu.matmul %10, %8, %cst_10 {dimension_numbers = #tpu.dot_dimension_numbers<[1], [0], [0], [1], [0, 0, 1, 1], [], []>} : vector<16x16xf32>, vector<16x256xf32>, vector<16x256xf32> -> vector<16x256xf32>
    %c0_11 = arith.constant 0 : index
    %c0_12 = arith.constant 0 : index
    %c0_13 = arith.constant 0 : index
    %12 = vector.load %arg1[%c0_11, %c0_12, %c0_13] : memref<9x1x256xf32, #tpu.memory_space<vmem>>, vector<1x1x256xf32>
    %13 = vector.shape_cast %12 : vector<1x1x256xf32> to vector<1x256xf32>
    %14 = vector.broadcast %13 : vector<1x256xf32> to vector<16x256xf32>
    %15 = arith.mulf %11, %14 : vector<16x256xf32>
    %16 = arith.addf %5, %15 : vector<16x256xf32>
    %17 = vector.extract_strided_slice %1 {offsets = [0, 240], sizes = [16, 16], strides = [1, 1]} : vector<16x256xf32> to vector<16x16xf32>
    %18 = vector.extract_strided_slice %1 {offsets = [0, 0], sizes = [16, 240], strides = [1, 1]} : vector<16x256xf32> to vector<16x240xf32>
    %19 = tpu.concatenate %17, %18 in 1 : vector<16x16xf32>, vector<16x240xf32> -> vector<16x256xf32>
    %c0_14 = arith.constant 0 : index
    %c1 = arith.constant 1 : index
    %c0_15 = arith.constant 0 : index
    %c0_16 = arith.constant 0 : index
    %20 = vector.load %arg3[%c0_14, %c1, %c0_15, %c0_16] : memref<6x9x16x16xf32, #tpu.memory_space<vmem>>, vector<1x1x16x16xf32>
    %21 = vector.shape_cast %20 : vector<1x1x16x16xf32> to vector<16x16xf32>
    %cst_17 = arith.constant dense<0.000000e+00> : vector<16x256xf32>
    %22 = tpu.matmul %21, %19, %cst_17 {dimension_numbers = #tpu.dot_dimension_numbers<[1], [0], [0], [1], [0, 0, 1, 1], [], []>} : vector<16x16xf32>, vector<16x256xf32>, vector<16x256xf32> -> vector<16x256xf32>
    %c1_18 = arith.constant 1 : index
    %c0_19 = arith.constant 0 : index
    %c0_20 = arith.constant 0 : index
    %23 = vector.load %arg1[%c1_18, %c0_19, %c0_20] : memref<9x1x256xf32, #tpu.memory_space<vmem>>, vector<1x1x256xf32>
    %24 = vector.shape_cast %23 : vector<1x1x256xf32> to vector<1x256xf32>
    %25 = vector.broadcast %24 : vector<1x256xf32> to vector<16x256xf32>
    %26 = arith.mulf %22, %25 : vector<16x256xf32>
    %27 = arith.addf %16, %26 : vector<16x256xf32>
    %28 = vector.extract_strided_slice %1 {offsets = [0, 241], sizes = [16, 15], strides = [1, 1]} : vector<16x256xf32> to vector<16x15xf32>
    %29 = vector.extract_strided_slice %1 {offsets = [0, 0], sizes = [16, 241], strides = [1, 1]} : vector<16x256xf32> to vector<16x241xf32>
    %30 = tpu.concatenate %28, %29 in 1 : vector<16x15xf32>, vector<16x241xf32> -> vector<16x256xf32>
    %c0_21 = arith.constant 0 : index
    %c2 = arith.constant 2 : index
    %c0_22 = arith.constant 0 : index
    %c0_23 = arith.constant 0 : index
    %31 = vector.load %arg3[%c0_21, %c2, %c0_22, %c0_23] : memref<6x9x16x16xf32, #tpu.memory_space<vmem>>, vector<1x1x16x16xf32>
    %32 = vector.shape_cast %31 : vector<1x1x16x16xf32> to vector<16x16xf32>
    %cst_24 = arith.constant dense<0.000000e+00> : vector<16x256xf32>
    %33 = tpu.matmul %32, %30, %cst_24 {dimension_numbers = #tpu.dot_dimension_numbers<[1], [0], [0], [1], [0, 0, 1, 1], [], []>} : vector<16x16xf32>, vector<16x256xf32>, vector<16x256xf32> -> vector<16x256xf32>
    %c2_25 = arith.constant 2 : index
    %c0_26 = arith.constant 0 : index
    %c0_27 = arith.constant 0 : index
    %34 = vector.load %arg1[%c2_25, %c0_26, %c0_27] : memref<9x1x256xf32, #tpu.memory_space<vmem>>, vector<1x1x256xf32>
    %35 = vector.shape_cast %34 : vector<1x1x256xf32> to vector<1x256xf32>
    %36 = vector.broadcast %35 : vector<1x256xf32> to vector<16x256xf32>
    %37 = arith.mulf %33, %36 : vector<16x256xf32>
    %38 = arith.addf %27, %37 : vector<16x256xf32>
    %39 = vector.extract_strided_slice %1 {offsets = [0, 255], sizes = [16, 1], strides = [1, 1]} : vector<16x256xf32> to vector<16x1xf32>
    %40 = vector.extract_strided_slice %1 {offsets = [0, 0], sizes = [16, 255], strides = [1, 1]} : vector<16x256xf32> to vector<16x255xf32>
    %41 = tpu.concatenate %39, %40 in 1 : vector<16x1xf32>, vector<16x255xf32> -> vector<16x256xf32>
    %c0_28 = arith.constant 0 : index
    %c3 = arith.constant 3 : index
    %c0_29 = arith.constant 0 : index
    %c0_30 = arith.constant 0 : index
    %42 = vector.load %arg3[%c0_28, %c3, %c0_29, %c0_30] : memref<6x9x16x16xf32, #tpu.memory_space<vmem>>, vector<1x1x16x16xf32>
    %43 = vector.shape_cast %42 : vector<1x1x16x16xf32> to vector<16x16xf32>
    %cst_31 = arith.constant dense<0.000000e+00> : vector<16x256xf32>
    %44 = tpu.matmul %43, %41, %cst_31 {dimension_numbers = #tpu.dot_dimension_numbers<[1], [0], [0], [1], [0, 0, 1, 1], [], []>} : vector<16x16xf32>, vector<16x256xf32>, vector<16x256xf32> -> vector<16x256xf32>
    %c3_32 = arith.constant 3 : index
    %c0_33 = arith.constant 0 : index
    %c0_34 = arith.constant 0 : index
    %45 = vector.load %arg1[%c3_32, %c0_33, %c0_34] : memref<9x1x256xf32, #tpu.memory_space<vmem>>, vector<1x1x256xf32>
    %46 = vector.shape_cast %45 : vector<1x1x256xf32> to vector<1x256xf32>
    %47 = vector.broadcast %46 : vector<1x256xf32> to vector<16x256xf32>
    %48 = arith.mulf %44, %47 : vector<16x256xf32>
    %49 = arith.addf %38, %48 : vector<16x256xf32>
    %c0_35 = arith.constant 0 : index
    %c4 = arith.constant 4 : index
    %c0_36 = arith.constant 0 : index
    %c0_37 = arith.constant 0 : index
    %50 = vector.load %arg3[%c0_35, %c4, %c0_36, %c0_37] : memref<6x9x16x16xf32, #tpu.memory_space<vmem>>, vector<1x1x16x16xf32>
    %51 = vector.shape_cast %50 : vector<1x1x16x16xf32> to vector<16x16xf32>
    %cst_38 = arith.constant dense<0.000000e+00> : vector<16x256xf32>
    %52 = tpu.matmul %51, %1, %cst_38 {dimension_numbers = #tpu.dot_dimension_numbers<[1], [0], [0], [1], [0, 0, 1, 1], [], []>} : vector<16x16xf32>, vector<16x256xf32>, vector<16x256xf32> -> vector<16x256xf32>
    %53 = arith.addf %49, %52 : vector<16x256xf32>
    %54 = vector.extract_strided_slice %1 {offsets = [0, 1], sizes = [16, 255], strides = [1, 1]} : vector<16x256xf32> to vector<16x255xf32>
    %55 = vector.extract_strided_slice %1 {offsets = [0, 0], sizes = [16, 1], strides = [1, 1]} : vector<16x256xf32> to vector<16x1xf32>
    %56 = tpu.concatenate %54, %55 in 1 : vector<16x255xf32>, vector<16x1xf32> -> vector<16x256xf32>
    %c0_39 = arith.constant 0 : index
    %c5 = arith.constant 5 : index
    %c0_40 = arith.constant 0 : index
    %c0_41 = arith.constant 0 : index
    %57 = vector.load %arg3[%c0_39, %c5, %c0_40, %c0_41] : memref<6x9x16x16xf32, #tpu.memory_space<vmem>>, vector<1x1x16x16xf32>
    %58 = vector.shape_cast %57 : vector<1x1x16x16xf32> to vector<16x16xf32>
    %cst_42 = arith.constant dense<0.000000e+00> : vector<16x256xf32>
    %59 = tpu.matmul %58, %56, %cst_42 {dimension_numbers = #tpu.dot_dimension_numbers<[1], [0], [0], [1], [0, 0, 1, 1], [], []>} : vector<16x16xf32>, vector<16x256xf32>, vector<16x256xf32> -> vector<16x256xf32>
    %c5_43 = arith.constant 5 : index
    %c0_44 = arith.constant 0 : index
    %c0_45 = arith.constant 0 : index
    %60 = vector.load %arg1[%c5_43, %c0_44, %c0_45] : memref<9x1x256xf32, #tpu.memory_space<vmem>>, vector<1x1x256xf32>
    %61 = vector.shape_cast %60 : vector<1x1x256xf32> to vector<1x256xf32>
    %62 = vector.broadcast %61 : vector<1x256xf32> to vector<16x256xf32>
    %63 = arith.mulf %59, %62 : vector<16x256xf32>
    %64 = arith.addf %53, %63 : vector<16x256xf32>
    %65 = vector.extract_strided_slice %1 {offsets = [0, 15], sizes = [16, 241], strides = [1, 1]} : vector<16x256xf32> to vector<16x241xf32>
    %66 = vector.extract_strided_slice %1 {offsets = [0, 0], sizes = [16, 15], strides = [1, 1]} : vector<16x256xf32> to vector<16x15xf32>
    %67 = tpu.concatenate %65, %66 in 1 : vector<16x241xf32>, vector<16x15xf32> -> vector<16x256xf32>
    %c0_46 = arith.constant 0 : index
    %c6 = arith.constant 6 : index
    %c0_47 = arith.constant 0 : index
    %c0_48 = arith.constant 0 : index
    %68 = vector.load %arg3[%c0_46, %c6, %c0_47, %c0_48] : memref<6x9x16x16xf32, #tpu.memory_space<vmem>>, vector<1x1x16x16xf32>
    %69 = vector.shape_cast %68 : vector<1x1x16x16xf32> to vector<16x16xf32>
    %cst_49 = arith.constant dense<0.000000e+00> : vector<16x256xf32>
    %70 = tpu.matmul %69, %67, %cst_49 {dimension_numbers = #tpu.dot_dimension_numbers<[1], [0], [0], [1], [0, 0, 1, 1], [], []>} : vector<16x16xf32>, vector<16x256xf32>, vector<16x256xf32> -> vector<16x256xf32>
    %c6_50 = arith.constant 6 : index
    %c0_51 = arith.constant 0 : index
    %c0_52 = arith.constant 0 : index
    %71 = vector.load %arg1[%c6_50, %c0_51, %c0_52] : memref<9x1x256xf32, #tpu.memory_space<vmem>>, vector<1x1x256xf32>
    %72 = vector.shape_cast %71 : vector<1x1x256xf32> to vector<1x256xf32>
    %73 = vector.broadcast %72 : vector<1x256xf32> to vector<16x256xf32>
    %74 = arith.mulf %70, %73 : vector<16x256xf32>
    %75 = arith.addf %64, %74 : vector<16x256xf32>
    %76 = vector.extract_strided_slice %1 {offsets = [0, 16], sizes = [16, 240], strides = [1, 1]} : vector<16x256xf32> to vector<16x240xf32>
    %77 = vector.extract_strided_slice %1 {offsets = [0, 0], sizes = [16, 16], strides = [1, 1]} : vector<16x256xf32> to vector<16x16xf32>
    %78 = tpu.concatenate %76, %77 in 1 : vector<16x240xf32>, vector<16x16xf32> -> vector<16x256xf32>
    %c0_53 = arith.constant 0 : index
    %c7 = arith.constant 7 : index
    %c0_54 = arith.constant 0 : index
    %c0_55 = arith.constant 0 : index
    %79 = vector.load %arg3[%c0_53, %c7, %c0_54, %c0_55] : memref<6x9x16x16xf32, #tpu.memory_space<vmem>>, vector<1x1x16x16xf32>
    %80 = vector.shape_cast %79 : vector<1x1x16x16xf32> to vector<16x16xf32>
    %cst_56 = arith.constant dense<0.000000e+00> : vector<16x256xf32>
    %81 = tpu.matmul %80, %78, %cst_56 {dimension_numbers = #tpu.dot_dimension_numbers<[1], [0], [0], [1], [0, 0, 1, 1], [], []>} : vector<16x16xf32>, vector<16x256xf32>, vector<16x256xf32> -> vector<16x256xf32>
    %c7_57 = arith.constant 7 : index
    %c0_58 = arith.constant 0 : index
    %c0_59 = arith.constant 0 : index
    %82 = vector.load %arg1[%c7_57, %c0_58, %c0_59] : memref<9x1x256xf32, #tpu.memory_space<vmem>>, vector<1x1x256xf32>
    %83 = vector.shape_cast %82 : vector<1x1x256xf32> to vector<1x256xf32>
    %84 = vector.broadcast %83 : vector<1x256xf32> to vector<16x256xf32>
    %85 = arith.mulf %81, %84 : vector<16x256xf32>
    %86 = arith.addf %75, %85 : vector<16x256xf32>
    %87 = vector.extract_strided_slice %1 {offsets = [0, 17], sizes = [16, 239], strides = [1, 1]} : vector<16x256xf32> to vector<16x239xf32>
    %88 = vector.extract_strided_slice %1 {offsets = [0, 0], sizes = [16, 17], strides = [1, 1]} : vector<16x256xf32> to vector<16x17xf32>
    %89 = tpu.concatenate %87, %88 in 1 : vector<16x239xf32>, vector<16x17xf32> -> vector<16x256xf32>
    %c0_60 = arith.constant 0 : index
    %c8 = arith.constant 8 : index
    %c0_61 = arith.constant 0 : index
    %c0_62 = arith.constant 0 : index
    %90 = vector.load %arg3[%c0_60, %c8, %c0_61, %c0_62] : memref<6x9x16x16xf32, #tpu.memory_space<vmem>>, vector<1x1x16x16xf32>
    %91 = vector.shape_cast %90 : vector<1x1x16x16xf32> to vector<16x16xf32>
    %cst_63 = arith.constant dense<0.000000e+00> : vector<16x256xf32>
    %92 = tpu.matmul %91, %89, %cst_63 {dimension_numbers = #tpu.dot_dimension_numbers<[1], [0], [0], [1], [0, 0, 1, 1], [], []>} : vector<16x16xf32>, vector<16x256xf32>, vector<16x256xf32> -> vector<16x256xf32>
    %c8_64 = arith.constant 8 : index
    %c0_65 = arith.constant 0 : index
    %c0_66 = arith.constant 0 : index
    %93 = vector.load %arg1[%c8_64, %c0_65, %c0_66] : memref<9x1x256xf32, #tpu.memory_space<vmem>>, vector<1x1x256xf32>
    %94 = vector.shape_cast %93 : vector<1x1x256xf32> to vector<1x256xf32>
    %95 = vector.broadcast %94 : vector<1x256xf32> to vector<16x256xf32>
    %96 = arith.mulf %92, %95 : vector<16x256xf32>
    %97 = arith.addf %86, %96 : vector<16x256xf32>
    %c0_67 = arith.constant 0 : index
    %c0_68 = arith.constant 0 : index
    %c0_69 = arith.constant 0 : index
    %98 = vector.load %arg4[%c0_67, %c0_68, %c0_69] : memref<6x16x1xf32, #tpu.memory_space<vmem>>, vector<1x16x1xf32>
    %99 = vector.shape_cast %98 : vector<1x16x1xf32> to vector<16x1xf32>
    %100 = vector.broadcast %99 : vector<16x1xf32> to vector<16x256xf32>
    %101 = arith.addf %97, %100 : vector<16x256xf32>
    %cst_70 = arith.constant 0.000000e+00 : f32
    %102 = vector.broadcast %cst_70 : f32 to vector<16x256xf32>
    %103 = arith.maximumf %101, %102 : vector<16x256xf32>
    %c1_71 = arith.constant 1 : index
    %c0_72 = arith.constant 0 : index
    %c0_73 = arith.constant 0 : index
    %104 = vector.load %arg5[%c1_71, %c0_72, %c0_73] : memref<7x16x16xf32, #tpu.memory_space<vmem>>, vector<1x16x16xf32>
    %105 = vector.shape_cast %104 : vector<1x16x16xf32> to vector<16x16xf32>
    %cst_74 = arith.constant dense<0.000000e+00> : vector<16x256xf32>
    %106 = tpu.matmul %105, %103, %cst_74 {dimension_numbers = #tpu.dot_dimension_numbers<[1], [0], [0], [1], [0, 0, 1, 1], [], []>} : vector<16x16xf32>, vector<16x256xf32>, vector<16x256xf32> -> vector<16x256xf32>
    %107 = arith.addf %4, %106 : vector<16x256xf32>
    %cst_75 = arith.constant 0.000000e+00 : f32
    %108 = vector.broadcast %cst_75 : f32 to vector<16x256xf32>
    %109 = vector.extract_strided_slice %103 {offsets = [0, 239], sizes = [16, 17], strides = [1, 1]} : vector<16x256xf32> to vector<16x17xf32>
    %110 = vector.extract_strided_slice %103 {offsets = [0, 0], sizes = [16, 239], strides = [1, 1]} : vector<16x256xf32> to vector<16x239xf32>
    %111 = tpu.concatenate %109, %110 in 1 : vector<16x17xf32>, vector<16x239xf32> -> vector<16x256xf32>
    %c1_76 = arith.constant 1 : index
    %c0_77 = arith.constant 0 : index
    %c0_78 = arith.constant 0 : index
    %c0_79 = arith.constant 0 : index
    %112 = vector.load %arg3[%c1_76, %c0_77, %c0_78, %c0_79] : memref<6x9x16x16xf32, #tpu.memory_space<vmem>>, vector<1x1x16x16xf32>
    %113 = vector.shape_cast %112 : vector<1x1x16x16xf32> to vector<16x16xf32>
    %cst_80 = arith.constant dense<0.000000e+00> : vector<16x256xf32>
    %114 = tpu.matmul %113, %111, %cst_80 {dimension_numbers = #tpu.dot_dimension_numbers<[1], [0], [0], [1], [0, 0, 1, 1], [], []>} : vector<16x16xf32>, vector<16x256xf32>, vector<16x256xf32> -> vector<16x256xf32>
    %c0_81 = arith.constant 0 : index
    %c0_82 = arith.constant 0 : index
    %c0_83 = arith.constant 0 : index
    %115 = vector.load %arg1[%c0_81, %c0_82, %c0_83] : memref<9x1x256xf32, #tpu.memory_space<vmem>>, vector<1x1x256xf32>
    %116 = vector.shape_cast %115 : vector<1x1x256xf32> to vector<1x256xf32>
    %117 = vector.broadcast %116 : vector<1x256xf32> to vector<16x256xf32>
    %118 = arith.mulf %114, %117 : vector<16x256xf32>
    %119 = arith.addf %108, %118 : vector<16x256xf32>
    %120 = vector.extract_strided_slice %103 {offsets = [0, 240], sizes = [16, 16], strides = [1, 1]} : vector<16x256xf32> to vector<16x16xf32>
    %121 = vector.extract_strided_slice %103 {offsets = [0, 0], sizes = [16, 240], strides = [1, 1]} : vector<16x256xf32> to vector<16x240xf32>
    %122 = tpu.concatenate %120, %121 in 1 : vector<16x16xf32>, vector<16x240xf32> -> vector<16x256xf32>
    %c1_84 = arith.constant 1 : index
    %c1_85 = arith.constant 1 : index
    %c0_86 = arith.constant 0 : index
    %c0_87 = arith.constant 0 : index
    %123 = vector.load %arg3[%c1_84, %c1_85, %c0_86, %c0_87] : memref<6x9x16x16xf32, #tpu.memory_space<vmem>>, vector<1x1x16x16xf32>
    %124 = vector.shape_cast %123 : vector<1x1x16x16xf32> to vector<16x16xf32>
    %cst_88 = arith.constant dense<0.000000e+00> : vector<16x256xf32>
    %125 = tpu.matmul %124, %122, %cst_88 {dimension_numbers = #tpu.dot_dimension_numbers<[1], [0], [0], [1], [0, 0, 1, 1], [], []>} : vector<16x16xf32>, vector<16x256xf32>, vector<16x256xf32> -> vector<16x256xf32>
    %c1_89 = arith.constant 1 : index
    %c0_90 = arith.constant 0 : index
    %c0_91 = arith.constant 0 : index
    %126 = vector.load %arg1[%c1_89, %c0_90, %c0_91] : memref<9x1x256xf32, #tpu.memory_space<vmem>>, vector<1x1x256xf32>
    %127 = vector.shape_cast %126 : vector<1x1x256xf32> to vector<1x256xf32>
    %128 = vector.broadcast %127 : vector<1x256xf32> to vector<16x256xf32>
    %129 = arith.mulf %125, %128 : vector<16x256xf32>
    %130 = arith.addf %119, %129 : vector<16x256xf32>
    %131 = vector.extract_strided_slice %103 {offsets = [0, 241], sizes = [16, 15], strides = [1, 1]} : vector<16x256xf32> to vector<16x15xf32>
    %132 = vector.extract_strided_slice %103 {offsets = [0, 0], sizes = [16, 241], strides = [1, 1]} : vector<16x256xf32> to vector<16x241xf32>
    %133 = tpu.concatenate %131, %132 in 1 : vector<16x15xf32>, vector<16x241xf32> -> vector<16x256xf32>
    %c1_92 = arith.constant 1 : index
    %c2_93 = arith.constant 2 : index
    %c0_94 = arith.constant 0 : index
    %c0_95 = arith.constant 0 : index
    %134 = vector.load %arg3[%c1_92, %c2_93, %c0_94, %c0_95] : memref<6x9x16x16xf32, #tpu.memory_space<vmem>>, vector<1x1x16x16xf32>
    %135 = vector.shape_cast %134 : vector<1x1x16x16xf32> to vector<16x16xf32>
    %cst_96 = arith.constant dense<0.000000e+00> : vector<16x256xf32>
    %136 = tpu.matmul %135, %133, %cst_96 {dimension_numbers = #tpu.dot_dimension_numbers<[1], [0], [0], [1], [0, 0, 1, 1], [], []>} : vector<16x16xf32>, vector<16x256xf32>, vector<16x256xf32> -> vector<16x256xf32>
    %c2_97 = arith.constant 2 : index
    %c0_98 = arith.constant 0 : index
    %c0_99 = arith.constant 0 : index
    %137 = vector.load %arg1[%c2_97, %c0_98, %c0_99] : memref<9x1x256xf32, #tpu.memory_space<vmem>>, vector<1x1x256xf32>
    %138 = vector.shape_cast %137 : vector<1x1x256xf32> to vector<1x256xf32>
    %139 = vector.broadcast %138 : vector<1x256xf32> to vector<16x256xf32>
    %140 = arith.mulf %136, %139 : vector<16x256xf32>
    %141 = arith.addf %130, %140 : vector<16x256xf32>
    %142 = vector.extract_strided_slice %103 {offsets = [0, 255], sizes = [16, 1], strides = [1, 1]} : vector<16x256xf32> to vector<16x1xf32>
    %143 = vector.extract_strided_slice %103 {offsets = [0, 0], sizes = [16, 255], strides = [1, 1]} : vector<16x256xf32> to vector<16x255xf32>
    %144 = tpu.concatenate %142, %143 in 1 : vector<16x1xf32>, vector<16x255xf32> -> vector<16x256xf32>
    %c1_100 = arith.constant 1 : index
    %c3_101 = arith.constant 3 : index
    %c0_102 = arith.constant 0 : index
    %c0_103 = arith.constant 0 : index
    %145 = vector.load %arg3[%c1_100, %c3_101, %c0_102, %c0_103] : memref<6x9x16x16xf32, #tpu.memory_space<vmem>>, vector<1x1x16x16xf32>
    %146 = vector.shape_cast %145 : vector<1x1x16x16xf32> to vector<16x16xf32>
    %cst_104 = arith.constant dense<0.000000e+00> : vector<16x256xf32>
    %147 = tpu.matmul %146, %144, %cst_104 {dimension_numbers = #tpu.dot_dimension_numbers<[1], [0], [0], [1], [0, 0, 1, 1], [], []>} : vector<16x16xf32>, vector<16x256xf32>, vector<16x256xf32> -> vector<16x256xf32>
    %c3_105 = arith.constant 3 : index
    %c0_106 = arith.constant 0 : index
    %c0_107 = arith.constant 0 : index
    %148 = vector.load %arg1[%c3_105, %c0_106, %c0_107] : memref<9x1x256xf32, #tpu.memory_space<vmem>>, vector<1x1x256xf32>
    %149 = vector.shape_cast %148 : vector<1x1x256xf32> to vector<1x256xf32>
    %150 = vector.broadcast %149 : vector<1x256xf32> to vector<16x256xf32>
    %151 = arith.mulf %147, %150 : vector<16x256xf32>
    %152 = arith.addf %141, %151 : vector<16x256xf32>
    %c1_108 = arith.constant 1 : index
    %c4_109 = arith.constant 4 : index
    %c0_110 = arith.constant 0 : index
    %c0_111 = arith.constant 0 : index
    %153 = vector.load %arg3[%c1_108, %c4_109, %c0_110, %c0_111] : memref<6x9x16x16xf32, #tpu.memory_space<vmem>>, vector<1x1x16x16xf32>
    %154 = vector.shape_cast %153 : vector<1x1x16x16xf32> to vector<16x16xf32>
    %cst_112 = arith.constant dense<0.000000e+00> : vector<16x256xf32>
    %155 = tpu.matmul %154, %103, %cst_112 {dimension_numbers = #tpu.dot_dimension_numbers<[1], [0], [0], [1], [0, 0, 1, 1], [], []>} : vector<16x16xf32>, vector<16x256xf32>, vector<16x256xf32> -> vector<16x256xf32>
    %156 = arith.addf %152, %155 : vector<16x256xf32>
    %157 = vector.extract_strided_slice %103 {offsets = [0, 1], sizes = [16, 255], strides = [1, 1]} : vector<16x256xf32> to vector<16x255xf32>
    %158 = vector.extract_strided_slice %103 {offsets = [0, 0], sizes = [16, 1], strides = [1, 1]} : vector<16x256xf32> to vector<16x1xf32>
    %159 = tpu.concatenate %157, %158 in 1 : vector<16x255xf32>, vector<16x1xf32> -> vector<16x256xf32>
    %c1_113 = arith.constant 1 : index
    %c5_114 = arith.constant 5 : index
    %c0_115 = arith.constant 0 : index
    %c0_116 = arith.constant 0 : index
    %160 = vector.load %arg3[%c1_113, %c5_114, %c0_115, %c0_116] : memref<6x9x16x16xf32, #tpu.memory_space<vmem>>, vector<1x1x16x16xf32>
    %161 = vector.shape_cast %160 : vector<1x1x16x16xf32> to vector<16x16xf32>
    %cst_117 = arith.constant dense<0.000000e+00> : vector<16x256xf32>
    %162 = tpu.matmul %161, %159, %cst_117 {dimension_numbers = #tpu.dot_dimension_numbers<[1], [0], [0], [1], [0, 0, 1, 1], [], []>} : vector<16x16xf32>, vector<16x256xf32>, vector<16x256xf32> -> vector<16x256xf32>
    %c5_118 = arith.constant 5 : index
    %c0_119 = arith.constant 0 : index
    %c0_120 = arith.constant 0 : index
    %163 = vector.load %arg1[%c5_118, %c0_119, %c0_120] : memref<9x1x256xf32, #tpu.memory_space<vmem>>, vector<1x1x256xf32>
    %164 = vector.shape_cast %163 : vector<1x1x256xf32> to vector<1x256xf32>
    %165 = vector.broadcast %164 : vector<1x256xf32> to vector<16x256xf32>
    %166 = arith.mulf %162, %165 : vector<16x256xf32>
    %167 = arith.addf %156, %166 : vector<16x256xf32>
    %168 = vector.extract_strided_slice %103 {offsets = [0, 15], sizes = [16, 241], strides = [1, 1]} : vector<16x256xf32> to vector<16x241xf32>
    %169 = vector.extract_strided_slice %103 {offsets = [0, 0], sizes = [16, 15], strides = [1, 1]} : vector<16x256xf32> to vector<16x15xf32>
    %170 = tpu.concatenate %168, %169 in 1 : vector<16x241xf32>, vector<16x15xf32> -> vector<16x256xf32>
    %c1_121 = arith.constant 1 : index
    %c6_122 = arith.constant 6 : index
    %c0_123 = arith.constant 0 : index
    %c0_124 = arith.constant 0 : index
    %171 = vector.load %arg3[%c1_121, %c6_122, %c0_123, %c0_124] : memref<6x9x16x16xf32, #tpu.memory_space<vmem>>, vector<1x1x16x16xf32>
    %172 = vector.shape_cast %171 : vector<1x1x16x16xf32> to vector<16x16xf32>
    %cst_125 = arith.constant dense<0.000000e+00> : vector<16x256xf32>
    %173 = tpu.matmul %172, %170, %cst_125 {dimension_numbers = #tpu.dot_dimension_numbers<[1], [0], [0], [1], [0, 0, 1, 1], [], []>} : vector<16x16xf32>, vector<16x256xf32>, vector<16x256xf32> -> vector<16x256xf32>
    %c6_126 = arith.constant 6 : index
    %c0_127 = arith.constant 0 : index
    %c0_128 = arith.constant 0 : index
    %174 = vector.load %arg1[%c6_126, %c0_127, %c0_128] : memref<9x1x256xf32, #tpu.memory_space<vmem>>, vector<1x1x256xf32>
    %175 = vector.shape_cast %174 : vector<1x1x256xf32> to vector<1x256xf32>
    %176 = vector.broadcast %175 : vector<1x256xf32> to vector<16x256xf32>
    %177 = arith.mulf %173, %176 : vector<16x256xf32>
    %178 = arith.addf %167, %177 : vector<16x256xf32>
    %179 = vector.extract_strided_slice %103 {offsets = [0, 16], sizes = [16, 240], strides = [1, 1]} : vector<16x256xf32> to vector<16x240xf32>
    %180 = vector.extract_strided_slice %103 {offsets = [0, 0], sizes = [16, 16], strides = [1, 1]} : vector<16x256xf32> to vector<16x16xf32>
    %181 = tpu.concatenate %179, %180 in 1 : vector<16x240xf32>, vector<16x16xf32> -> vector<16x256xf32>
    %c1_129 = arith.constant 1 : index
    %c7_130 = arith.constant 7 : index
    %c0_131 = arith.constant 0 : index
    %c0_132 = arith.constant 0 : index
    %182 = vector.load %arg3[%c1_129, %c7_130, %c0_131, %c0_132] : memref<6x9x16x16xf32, #tpu.memory_space<vmem>>, vector<1x1x16x16xf32>
    %183 = vector.shape_cast %182 : vector<1x1x16x16xf32> to vector<16x16xf32>
    %cst_133 = arith.constant dense<0.000000e+00> : vector<16x256xf32>
    %184 = tpu.matmul %183, %181, %cst_133 {dimension_numbers = #tpu.dot_dimension_numbers<[1], [0], [0], [1], [0, 0, 1, 1], [], []>} : vector<16x16xf32>, vector<16x256xf32>, vector<16x256xf32> -> vector<16x256xf32>
    %c7_134 = arith.constant 7 : index
    %c0_135 = arith.constant 0 : index
    %c0_136 = arith.constant 0 : index
    %185 = vector.load %arg1[%c7_134, %c0_135, %c0_136] : memref<9x1x256xf32, #tpu.memory_space<vmem>>, vector<1x1x256xf32>
    %186 = vector.shape_cast %185 : vector<1x1x256xf32> to vector<1x256xf32>
    %187 = vector.broadcast %186 : vector<1x256xf32> to vector<16x256xf32>
    %188 = arith.mulf %184, %187 : vector<16x256xf32>
    %189 = arith.addf %178, %188 : vector<16x256xf32>
    %190 = vector.extract_strided_slice %103 {offsets = [0, 17], sizes = [16, 239], strides = [1, 1]} : vector<16x256xf32> to vector<16x239xf32>
    %191 = vector.extract_strided_slice %103 {offsets = [0, 0], sizes = [16, 17], strides = [1, 1]} : vector<16x256xf32> to vector<16x17xf32>
    %192 = tpu.concatenate %190, %191 in 1 : vector<16x239xf32>, vector<16x17xf32> -> vector<16x256xf32>
    %c1_137 = arith.constant 1 : index
    %c8_138 = arith.constant 8 : index
    %c0_139 = arith.constant 0 : index
    %c0_140 = arith.constant 0 : index
    %193 = vector.load %arg3[%c1_137, %c8_138, %c0_139, %c0_140] : memref<6x9x16x16xf32, #tpu.memory_space<vmem>>, vector<1x1x16x16xf32>
    %194 = vector.shape_cast %193 : vector<1x1x16x16xf32> to vector<16x16xf32>
    %cst_141 = arith.constant dense<0.000000e+00> : vector<16x256xf32>
    %195 = tpu.matmul %194, %192, %cst_141 {dimension_numbers = #tpu.dot_dimension_numbers<[1], [0], [0], [1], [0, 0, 1, 1], [], []>} : vector<16x16xf32>, vector<16x256xf32>, vector<16x256xf32> -> vector<16x256xf32>
    %c8_142 = arith.constant 8 : index
    %c0_143 = arith.constant 0 : index
    %c0_144 = arith.constant 0 : index
    %196 = vector.load %arg1[%c8_142, %c0_143, %c0_144] : memref<9x1x256xf32, #tpu.memory_space<vmem>>, vector<1x1x256xf32>
    %197 = vector.shape_cast %196 : vector<1x1x256xf32> to vector<1x256xf32>
    %198 = vector.broadcast %197 : vector<1x256xf32> to vector<16x256xf32>
    %199 = arith.mulf %195, %198 : vector<16x256xf32>
    %200 = arith.addf %189, %199 : vector<16x256xf32>
    %c1_145 = arith.constant 1 : index
    %c0_146 = arith.constant 0 : index
    %c0_147 = arith.constant 0 : index
    %201 = vector.load %arg4[%c1_145, %c0_146, %c0_147] : memref<6x16x1xf32, #tpu.memory_space<vmem>>, vector<1x16x1xf32>
    %202 = vector.shape_cast %201 : vector<1x16x1xf32> to vector<16x1xf32>
    %203 = vector.broadcast %202 : vector<16x1xf32> to vector<16x256xf32>
    %204 = arith.addf %200, %203 : vector<16x256xf32>
    %cst_148 = arith.constant 0.000000e+00 : f32
    %205 = vector.broadcast %cst_148 : f32 to vector<16x256xf32>
    %206 = arith.maximumf %204, %205 : vector<16x256xf32>
    %c2_149 = arith.constant 2 : index
    %c0_150 = arith.constant 0 : index
    %c0_151 = arith.constant 0 : index
    %207 = vector.load %arg5[%c2_149, %c0_150, %c0_151] : memref<7x16x16xf32, #tpu.memory_space<vmem>>, vector<1x16x16xf32>
    %208 = vector.shape_cast %207 : vector<1x16x16xf32> to vector<16x16xf32>
    %cst_152 = arith.constant dense<0.000000e+00> : vector<16x256xf32>
    %209 = tpu.matmul %208, %206, %cst_152 {dimension_numbers = #tpu.dot_dimension_numbers<[1], [0], [0], [1], [0, 0, 1, 1], [], []>} : vector<16x16xf32>, vector<16x256xf32>, vector<16x256xf32> -> vector<16x256xf32>
    %210 = arith.addf %107, %209 : vector<16x256xf32>
    %cst_153 = arith.constant 0.000000e+00 : f32
    %211 = vector.broadcast %cst_153 : f32 to vector<16x256xf32>
    %212 = vector.extract_strided_slice %206 {offsets = [0, 239], sizes = [16, 17], strides = [1, 1]} : vector<16x256xf32> to vector<16x17xf32>
    %213 = vector.extract_strided_slice %206 {offsets = [0, 0], sizes = [16, 239], strides = [1, 1]} : vector<16x256xf32> to vector<16x239xf32>
    %214 = tpu.concatenate %212, %213 in 1 : vector<16x17xf32>, vector<16x239xf32> -> vector<16x256xf32>
    %c2_154 = arith.constant 2 : index
    %c0_155 = arith.constant 0 : index
    %c0_156 = arith.constant 0 : index
    %c0_157 = arith.constant 0 : index
    %215 = vector.load %arg3[%c2_154, %c0_155, %c0_156, %c0_157] : memref<6x9x16x16xf32, #tpu.memory_space<vmem>>, vector<1x1x16x16xf32>
    %216 = vector.shape_cast %215 : vector<1x1x16x16xf32> to vector<16x16xf32>
    %cst_158 = arith.constant dense<0.000000e+00> : vector<16x256xf32>
    %217 = tpu.matmul %216, %214, %cst_158 {dimension_numbers = #tpu.dot_dimension_numbers<[1], [0], [0], [1], [0, 0, 1, 1], [], []>} : vector<16x16xf32>, vector<16x256xf32>, vector<16x256xf32> -> vector<16x256xf32>
    %c0_159 = arith.constant 0 : index
    %c0_160 = arith.constant 0 : index
    %c0_161 = arith.constant 0 : index
    %218 = vector.load %arg1[%c0_159, %c0_160, %c0_161] : memref<9x1x256xf32, #tpu.memory_space<vmem>>, vector<1x1x256xf32>
    %219 = vector.shape_cast %218 : vector<1x1x256xf32> to vector<1x256xf32>
    %220 = vector.broadcast %219 : vector<1x256xf32> to vector<16x256xf32>
    %221 = arith.mulf %217, %220 : vector<16x256xf32>
    %222 = arith.addf %211, %221 : vector<16x256xf32>
    %223 = vector.extract_strided_slice %206 {offsets = [0, 240], sizes = [16, 16], strides = [1, 1]} : vector<16x256xf32> to vector<16x16xf32>
    %224 = vector.extract_strided_slice %206 {offsets = [0, 0], sizes = [16, 240], strides = [1, 1]} : vector<16x256xf32> to vector<16x240xf32>
    %225 = tpu.concatenate %223, %224 in 1 : vector<16x16xf32>, vector<16x240xf32> -> vector<16x256xf32>
    %c2_162 = arith.constant 2 : index
    %c1_163 = arith.constant 1 : index
    %c0_164 = arith.constant 0 : index
    %c0_165 = arith.constant 0 : index
    %226 = vector.load %arg3[%c2_162, %c1_163, %c0_164, %c0_165] : memref<6x9x16x16xf32, #tpu.memory_space<vmem>>, vector<1x1x16x16xf32>
    %227 = vector.shape_cast %226 : vector<1x1x16x16xf32> to vector<16x16xf32>
    %cst_166 = arith.constant dense<0.000000e+00> : vector<16x256xf32>
    %228 = tpu.matmul %227, %225, %cst_166 {dimension_numbers = #tpu.dot_dimension_numbers<[1], [0], [0], [1], [0, 0, 1, 1], [], []>} : vector<16x16xf32>, vector<16x256xf32>, vector<16x256xf32> -> vector<16x256xf32>
    %c1_167 = arith.constant 1 : index
    %c0_168 = arith.constant 0 : index
    %c0_169 = arith.constant 0 : index
    %229 = vector.load %arg1[%c1_167, %c0_168, %c0_169] : memref<9x1x256xf32, #tpu.memory_space<vmem>>, vector<1x1x256xf32>
    %230 = vector.shape_cast %229 : vector<1x1x256xf32> to vector<1x256xf32>
    %231 = vector.broadcast %230 : vector<1x256xf32> to vector<16x256xf32>
    %232 = arith.mulf %228, %231 : vector<16x256xf32>
    %233 = arith.addf %222, %232 : vector<16x256xf32>
    %234 = vector.extract_strided_slice %206 {offsets = [0, 241], sizes = [16, 15], strides = [1, 1]} : vector<16x256xf32> to vector<16x15xf32>
    %235 = vector.extract_strided_slice %206 {offsets = [0, 0], sizes = [16, 241], strides = [1, 1]} : vector<16x256xf32> to vector<16x241xf32>
    %236 = tpu.concatenate %234, %235 in 1 : vector<16x15xf32>, vector<16x241xf32> -> vector<16x256xf32>
    %c2_170 = arith.constant 2 : index
    %c2_171 = arith.constant 2 : index
    %c0_172 = arith.constant 0 : index
    %c0_173 = arith.constant 0 : index
    %237 = vector.load %arg3[%c2_170, %c2_171, %c0_172, %c0_173] : memref<6x9x16x16xf32, #tpu.memory_space<vmem>>, vector<1x1x16x16xf32>
    %238 = vector.shape_cast %237 : vector<1x1x16x16xf32> to vector<16x16xf32>
    %cst_174 = arith.constant dense<0.000000e+00> : vector<16x256xf32>
    %239 = tpu.matmul %238, %236, %cst_174 {dimension_numbers = #tpu.dot_dimension_numbers<[1], [0], [0], [1], [0, 0, 1, 1], [], []>} : vector<16x16xf32>, vector<16x256xf32>, vector<16x256xf32> -> vector<16x256xf32>
    %c2_175 = arith.constant 2 : index
    %c0_176 = arith.constant 0 : index
    %c0_177 = arith.constant 0 : index
    %240 = vector.load %arg1[%c2_175, %c0_176, %c0_177] : memref<9x1x256xf32, #tpu.memory_space<vmem>>, vector<1x1x256xf32>
    %241 = vector.shape_cast %240 : vector<1x1x256xf32> to vector<1x256xf32>
    %242 = vector.broadcast %241 : vector<1x256xf32> to vector<16x256xf32>
    %243 = arith.mulf %239, %242 : vector<16x256xf32>
    %244 = arith.addf %233, %243 : vector<16x256xf32>
    %245 = vector.extract_strided_slice %206 {offsets = [0, 255], sizes = [16, 1], strides = [1, 1]} : vector<16x256xf32> to vector<16x1xf32>
    %246 = vector.extract_strided_slice %206 {offsets = [0, 0], sizes = [16, 255], strides = [1, 1]} : vector<16x256xf32> to vector<16x255xf32>
    %247 = tpu.concatenate %245, %246 in 1 : vector<16x1xf32>, vector<16x255xf32> -> vector<16x256xf32>
    %c2_178 = arith.constant 2 : index
    %c3_179 = arith.constant 3 : index
    %c0_180 = arith.constant 0 : index
    %c0_181 = arith.constant 0 : index
    %248 = vector.load %arg3[%c2_178, %c3_179, %c0_180, %c0_181] : memref<6x9x16x16xf32, #tpu.memory_space<vmem>>, vector<1x1x16x16xf32>
    %249 = vector.shape_cast %248 : vector<1x1x16x16xf32> to vector<16x16xf32>
    %cst_182 = arith.constant dense<0.000000e+00> : vector<16x256xf32>
    %250 = tpu.matmul %249, %247, %cst_182 {dimension_numbers = #tpu.dot_dimension_numbers<[1], [0], [0], [1], [0, 0, 1, 1], [], []>} : vector<16x16xf32>, vector<16x256xf32>, vector<16x256xf32> -> vector<16x256xf32>
    %c3_183 = arith.constant 3 : index
    %c0_184 = arith.constant 0 : index
    %c0_185 = arith.constant 0 : index
    %251 = vector.load %arg1[%c3_183, %c0_184, %c0_185] : memref<9x1x256xf32, #tpu.memory_space<vmem>>, vector<1x1x256xf32>
    %252 = vector.shape_cast %251 : vector<1x1x256xf32> to vector<1x256xf32>
    %253 = vector.broadcast %252 : vector<1x256xf32> to vector<16x256xf32>
    %254 = arith.mulf %250, %253 : vector<16x256xf32>
    %255 = arith.addf %244, %254 : vector<16x256xf32>
    %c2_186 = arith.constant 2 : index
    %c4_187 = arith.constant 4 : index
    %c0_188 = arith.constant 0 : index
    %c0_189 = arith.constant 0 : index
    %256 = vector.load %arg3[%c2_186, %c4_187, %c0_188, %c0_189] : memref<6x9x16x16xf32, #tpu.memory_space<vmem>>, vector<1x1x16x16xf32>
    %257 = vector.shape_cast %256 : vector<1x1x16x16xf32> to vector<16x16xf32>
    %cst_190 = arith.constant dense<0.000000e+00> : vector<16x256xf32>
    %258 = tpu.matmul %257, %206, %cst_190 {dimension_numbers = #tpu.dot_dimension_numbers<[1], [0], [0], [1], [0, 0, 1, 1], [], []>} : vector<16x16xf32>, vector<16x256xf32>, vector<16x256xf32> -> vector<16x256xf32>
    %259 = arith.addf %255, %258 : vector<16x256xf32>
    %260 = vector.extract_strided_slice %206 {offsets = [0, 1], sizes = [16, 255], strides = [1, 1]} : vector<16x256xf32> to vector<16x255xf32>
    %261 = vector.extract_strided_slice %206 {offsets = [0, 0], sizes = [16, 1], strides = [1, 1]} : vector<16x256xf32> to vector<16x1xf32>
    %262 = tpu.concatenate %260, %261 in 1 : vector<16x255xf32>, vector<16x1xf32> -> vector<16x256xf32>
    %c2_191 = arith.constant 2 : index
    %c5_192 = arith.constant 5 : index
    %c0_193 = arith.constant 0 : index
    %c0_194 = arith.constant 0 : index
    %263 = vector.load %arg3[%c2_191, %c5_192, %c0_193, %c0_194] : memref<6x9x16x16xf32, #tpu.memory_space<vmem>>, vector<1x1x16x16xf32>
    %264 = vector.shape_cast %263 : vector<1x1x16x16xf32> to vector<16x16xf32>
    %cst_195 = arith.constant dense<0.000000e+00> : vector<16x256xf32>
    %265 = tpu.matmul %264, %262, %cst_195 {dimension_numbers = #tpu.dot_dimension_numbers<[1], [0], [0], [1], [0, 0, 1, 1], [], []>} : vector<16x16xf32>, vector<16x256xf32>, vector<16x256xf32> -> vector<16x256xf32>
    %c5_196 = arith.constant 5 : index
    %c0_197 = arith.constant 0 : index
    %c0_198 = arith.constant 0 : index
    %266 = vector.load %arg1[%c5_196, %c0_197, %c0_198] : memref<9x1x256xf32, #tpu.memory_space<vmem>>, vector<1x1x256xf32>
    %267 = vector.shape_cast %266 : vector<1x1x256xf32> to vector<1x256xf32>
    %268 = vector.broadcast %267 : vector<1x256xf32> to vector<16x256xf32>
    %269 = arith.mulf %265, %268 : vector<16x256xf32>
    %270 = arith.addf %259, %269 : vector<16x256xf32>
    %271 = vector.extract_strided_slice %206 {offsets = [0, 15], sizes = [16, 241], strides = [1, 1]} : vector<16x256xf32> to vector<16x241xf32>
    %272 = vector.extract_strided_slice %206 {offsets = [0, 0], sizes = [16, 15], strides = [1, 1]} : vector<16x256xf32> to vector<16x15xf32>
    %273 = tpu.concatenate %271, %272 in 1 : vector<16x241xf32>, vector<16x15xf32> -> vector<16x256xf32>
    %c2_199 = arith.constant 2 : index
    %c6_200 = arith.constant 6 : index
    %c0_201 = arith.constant 0 : index
    %c0_202 = arith.constant 0 : index
    %274 = vector.load %arg3[%c2_199, %c6_200, %c0_201, %c0_202] : memref<6x9x16x16xf32, #tpu.memory_space<vmem>>, vector<1x1x16x16xf32>
    %275 = vector.shape_cast %274 : vector<1x1x16x16xf32> to vector<16x16xf32>
    %cst_203 = arith.constant dense<0.000000e+00> : vector<16x256xf32>
    %276 = tpu.matmul %275, %273, %cst_203 {dimension_numbers = #tpu.dot_dimension_numbers<[1], [0], [0], [1], [0, 0, 1, 1], [], []>} : vector<16x16xf32>, vector<16x256xf32>, vector<16x256xf32> -> vector<16x256xf32>
    %c6_204 = arith.constant 6 : index
    %c0_205 = arith.constant 0 : index
    %c0_206 = arith.constant 0 : index
    %277 = vector.load %arg1[%c6_204, %c0_205, %c0_206] : memref<9x1x256xf32, #tpu.memory_space<vmem>>, vector<1x1x256xf32>
    %278 = vector.shape_cast %277 : vector<1x1x256xf32> to vector<1x256xf32>
    %279 = vector.broadcast %278 : vector<1x256xf32> to vector<16x256xf32>
    %280 = arith.mulf %276, %279 : vector<16x256xf32>
    %281 = arith.addf %270, %280 : vector<16x256xf32>
    %282 = vector.extract_strided_slice %206 {offsets = [0, 16], sizes = [16, 240], strides = [1, 1]} : vector<16x256xf32> to vector<16x240xf32>
    %283 = vector.extract_strided_slice %206 {offsets = [0, 0], sizes = [16, 16], strides = [1, 1]} : vector<16x256xf32> to vector<16x16xf32>
    %284 = tpu.concatenate %282, %283 in 1 : vector<16x240xf32>, vector<16x16xf32> -> vector<16x256xf32>
    %c2_207 = arith.constant 2 : index
    %c7_208 = arith.constant 7 : index
    %c0_209 = arith.constant 0 : index
    %c0_210 = arith.constant 0 : index
    %285 = vector.load %arg3[%c2_207, %c7_208, %c0_209, %c0_210] : memref<6x9x16x16xf32, #tpu.memory_space<vmem>>, vector<1x1x16x16xf32>
    %286 = vector.shape_cast %285 : vector<1x1x16x16xf32> to vector<16x16xf32>
    %cst_211 = arith.constant dense<0.000000e+00> : vector<16x256xf32>
    %287 = tpu.matmul %286, %284, %cst_211 {dimension_numbers = #tpu.dot_dimension_numbers<[1], [0], [0], [1], [0, 0, 1, 1], [], []>} : vector<16x16xf32>, vector<16x256xf32>, vector<16x256xf32> -> vector<16x256xf32>
    %c7_212 = arith.constant 7 : index
    %c0_213 = arith.constant 0 : index
    %c0_214 = arith.constant 0 : index
    %288 = vector.load %arg1[%c7_212, %c0_213, %c0_214] : memref<9x1x256xf32, #tpu.memory_space<vmem>>, vector<1x1x256xf32>
    %289 = vector.shape_cast %288 : vector<1x1x256xf32> to vector<1x256xf32>
    %290 = vector.broadcast %289 : vector<1x256xf32> to vector<16x256xf32>
    %291 = arith.mulf %287, %290 : vector<16x256xf32>
    %292 = arith.addf %281, %291 : vector<16x256xf32>
    %293 = vector.extract_strided_slice %206 {offsets = [0, 17], sizes = [16, 239], strides = [1, 1]} : vector<16x256xf32> to vector<16x239xf32>
    %294 = vector.extract_strided_slice %206 {offsets = [0, 0], sizes = [16, 17], strides = [1, 1]} : vector<16x256xf32> to vector<16x17xf32>
    %295 = tpu.concatenate %293, %294 in 1 : vector<16x239xf32>, vector<16x17xf32> -> vector<16x256xf32>
    %c2_215 = arith.constant 2 : index
    %c8_216 = arith.constant 8 : index
    %c0_217 = arith.constant 0 : index
    %c0_218 = arith.constant 0 : index
    %296 = vector.load %arg3[%c2_215, %c8_216, %c0_217, %c0_218] : memref<6x9x16x16xf32, #tpu.memory_space<vmem>>, vector<1x1x16x16xf32>
    %297 = vector.shape_cast %296 : vector<1x1x16x16xf32> to vector<16x16xf32>
    %cst_219 = arith.constant dense<0.000000e+00> : vector<16x256xf32>
    %298 = tpu.matmul %297, %295, %cst_219 {dimension_numbers = #tpu.dot_dimension_numbers<[1], [0], [0], [1], [0, 0, 1, 1], [], []>} : vector<16x16xf32>, vector<16x256xf32>, vector<16x256xf32> -> vector<16x256xf32>
    %c8_220 = arith.constant 8 : index
    %c0_221 = arith.constant 0 : index
    %c0_222 = arith.constant 0 : index
    %299 = vector.load %arg1[%c8_220, %c0_221, %c0_222] : memref<9x1x256xf32, #tpu.memory_space<vmem>>, vector<1x1x256xf32>
    %300 = vector.shape_cast %299 : vector<1x1x256xf32> to vector<1x256xf32>
    %301 = vector.broadcast %300 : vector<1x256xf32> to vector<16x256xf32>
    %302 = arith.mulf %298, %301 : vector<16x256xf32>
    %303 = arith.addf %292, %302 : vector<16x256xf32>
    %c2_223 = arith.constant 2 : index
    %c0_224 = arith.constant 0 : index
    %c0_225 = arith.constant 0 : index
    %304 = vector.load %arg4[%c2_223, %c0_224, %c0_225] : memref<6x16x1xf32, #tpu.memory_space<vmem>>, vector<1x16x1xf32>
    %305 = vector.shape_cast %304 : vector<1x16x1xf32> to vector<16x1xf32>
    %306 = vector.broadcast %305 : vector<16x1xf32> to vector<16x256xf32>
    %307 = arith.addf %303, %306 : vector<16x256xf32>
    %cst_226 = arith.constant 0.000000e+00 : f32
    %308 = vector.broadcast %cst_226 : f32 to vector<16x256xf32>
    %309 = arith.maximumf %307, %308 : vector<16x256xf32>
    %c3_227 = arith.constant 3 : index
    %c0_228 = arith.constant 0 : index
    %c0_229 = arith.constant 0 : index
    %310 = vector.load %arg5[%c3_227, %c0_228, %c0_229] : memref<7x16x16xf32, #tpu.memory_space<vmem>>, vector<1x16x16xf32>
    %311 = vector.shape_cast %310 : vector<1x16x16xf32> to vector<16x16xf32>
    %cst_230 = arith.constant dense<0.000000e+00> : vector<16x256xf32>
    %312 = tpu.matmul %311, %309, %cst_230 {dimension_numbers = #tpu.dot_dimension_numbers<[1], [0], [0], [1], [0, 0, 1, 1], [], []>} : vector<16x16xf32>, vector<16x256xf32>, vector<16x256xf32> -> vector<16x256xf32>
    %313 = arith.addf %210, %312 : vector<16x256xf32>
    %cst_231 = arith.constant 0.000000e+00 : f32
    %314 = vector.broadcast %cst_231 : f32 to vector<16x256xf32>
    %315 = vector.extract_strided_slice %309 {offsets = [0, 239], sizes = [16, 17], strides = [1, 1]} : vector<16x256xf32> to vector<16x17xf32>
    %316 = vector.extract_strided_slice %309 {offsets = [0, 0], sizes = [16, 239], strides = [1, 1]} : vector<16x256xf32> to vector<16x239xf32>
    %317 = tpu.concatenate %315, %316 in 1 : vector<16x17xf32>, vector<16x239xf32> -> vector<16x256xf32>
    %c3_232 = arith.constant 3 : index
    %c0_233 = arith.constant 0 : index
    %c0_234 = arith.constant 0 : index
    %c0_235 = arith.constant 0 : index
    %318 = vector.load %arg3[%c3_232, %c0_233, %c0_234, %c0_235] : memref<6x9x16x16xf32, #tpu.memory_space<vmem>>, vector<1x1x16x16xf32>
    %319 = vector.shape_cast %318 : vector<1x1x16x16xf32> to vector<16x16xf32>
    %cst_236 = arith.constant dense<0.000000e+00> : vector<16x256xf32>
    %320 = tpu.matmul %319, %317, %cst_236 {dimension_numbers = #tpu.dot_dimension_numbers<[1], [0], [0], [1], [0, 0, 1, 1], [], []>} : vector<16x16xf32>, vector<16x256xf32>, vector<16x256xf32> -> vector<16x256xf32>
    %c0_237 = arith.constant 0 : index
    %c0_238 = arith.constant 0 : index
    %c0_239 = arith.constant 0 : index
    %321 = vector.load %arg1[%c0_237, %c0_238, %c0_239] : memref<9x1x256xf32, #tpu.memory_space<vmem>>, vector<1x1x256xf32>
    %322 = vector.shape_cast %321 : vector<1x1x256xf32> to vector<1x256xf32>
    %323 = vector.broadcast %322 : vector<1x256xf32> to vector<16x256xf32>
    %324 = arith.mulf %320, %323 : vector<16x256xf32>
    %325 = arith.addf %314, %324 : vector<16x256xf32>
    %326 = vector.extract_strided_slice %309 {offsets = [0, 240], sizes = [16, 16], strides = [1, 1]} : vector<16x256xf32> to vector<16x16xf32>
    %327 = vector.extract_strided_slice %309 {offsets = [0, 0], sizes = [16, 240], strides = [1, 1]} : vector<16x256xf32> to vector<16x240xf32>
    %328 = tpu.concatenate %326, %327 in 1 : vector<16x16xf32>, vector<16x240xf32> -> vector<16x256xf32>
    %c3_240 = arith.constant 3 : index
    %c1_241 = arith.constant 1 : index
    %c0_242 = arith.constant 0 : index
    %c0_243 = arith.constant 0 : index
    %329 = vector.load %arg3[%c3_240, %c1_241, %c0_242, %c0_243] : memref<6x9x16x16xf32, #tpu.memory_space<vmem>>, vector<1x1x16x16xf32>
    %330 = vector.shape_cast %329 : vector<1x1x16x16xf32> to vector<16x16xf32>
    %cst_244 = arith.constant dense<0.000000e+00> : vector<16x256xf32>
    %331 = tpu.matmul %330, %328, %cst_244 {dimension_numbers = #tpu.dot_dimension_numbers<[1], [0], [0], [1], [0, 0, 1, 1], [], []>} : vector<16x16xf32>, vector<16x256xf32>, vector<16x256xf32> -> vector<16x256xf32>
    %c1_245 = arith.constant 1 : index
    %c0_246 = arith.constant 0 : index
    %c0_247 = arith.constant 0 : index
    %332 = vector.load %arg1[%c1_245, %c0_246, %c0_247] : memref<9x1x256xf32, #tpu.memory_space<vmem>>, vector<1x1x256xf32>
    %333 = vector.shape_cast %332 : vector<1x1x256xf32> to vector<1x256xf32>
    %334 = vector.broadcast %333 : vector<1x256xf32> to vector<16x256xf32>
    %335 = arith.mulf %331, %334 : vector<16x256xf32>
    %336 = arith.addf %325, %335 : vector<16x256xf32>
    %337 = vector.extract_strided_slice %309 {offsets = [0, 241], sizes = [16, 15], strides = [1, 1]} : vector<16x256xf32> to vector<16x15xf32>
    %338 = vector.extract_strided_slice %309 {offsets = [0, 0], sizes = [16, 241], strides = [1, 1]} : vector<16x256xf32> to vector<16x241xf32>
    %339 = tpu.concatenate %337, %338 in 1 : vector<16x15xf32>, vector<16x241xf32> -> vector<16x256xf32>
    %c3_248 = arith.constant 3 : index
    %c2_249 = arith.constant 2 : index
    %c0_250 = arith.constant 0 : index
    %c0_251 = arith.constant 0 : index
    %340 = vector.load %arg3[%c3_248, %c2_249, %c0_250, %c0_251] : memref<6x9x16x16xf32, #tpu.memory_space<vmem>>, vector<1x1x16x16xf32>
    %341 = vector.shape_cast %340 : vector<1x1x16x16xf32> to vector<16x16xf32>
    %cst_252 = arith.constant dense<0.000000e+00> : vector<16x256xf32>
    %342 = tpu.matmul %341, %339, %cst_252 {dimension_numbers = #tpu.dot_dimension_numbers<[1], [0], [0], [1], [0, 0, 1, 1], [], []>} : vector<16x16xf32>, vector<16x256xf32>, vector<16x256xf32> -> vector<16x256xf32>
    %c2_253 = arith.constant 2 : index
    %c0_254 = arith.constant 0 : index
    %c0_255 = arith.constant 0 : index
    %343 = vector.load %arg1[%c2_253, %c0_254, %c0_255] : memref<9x1x256xf32, #tpu.memory_space<vmem>>, vector<1x1x256xf32>
    %344 = vector.shape_cast %343 : vector<1x1x256xf32> to vector<1x256xf32>
    %345 = vector.broadcast %344 : vector<1x256xf32> to vector<16x256xf32>
    %346 = arith.mulf %342, %345 : vector<16x256xf32>
    %347 = arith.addf %336, %346 : vector<16x256xf32>
    %348 = vector.extract_strided_slice %309 {offsets = [0, 255], sizes = [16, 1], strides = [1, 1]} : vector<16x256xf32> to vector<16x1xf32>
    %349 = vector.extract_strided_slice %309 {offsets = [0, 0], sizes = [16, 255], strides = [1, 1]} : vector<16x256xf32> to vector<16x255xf32>
    %350 = tpu.concatenate %348, %349 in 1 : vector<16x1xf32>, vector<16x255xf32> -> vector<16x256xf32>
    %c3_256 = arith.constant 3 : index
    %c3_257 = arith.constant 3 : index
    %c0_258 = arith.constant 0 : index
    %c0_259 = arith.constant 0 : index
    %351 = vector.load %arg3[%c3_256, %c3_257, %c0_258, %c0_259] : memref<6x9x16x16xf32, #tpu.memory_space<vmem>>, vector<1x1x16x16xf32>
    %352 = vector.shape_cast %351 : vector<1x1x16x16xf32> to vector<16x16xf32>
    %cst_260 = arith.constant dense<0.000000e+00> : vector<16x256xf32>
    %353 = tpu.matmul %352, %350, %cst_260 {dimension_numbers = #tpu.dot_dimension_numbers<[1], [0], [0], [1], [0, 0, 1, 1], [], []>} : vector<16x16xf32>, vector<16x256xf32>, vector<16x256xf32> -> vector<16x256xf32>
    %c3_261 = arith.constant 3 : index
    %c0_262 = arith.constant 0 : index
    %c0_263 = arith.constant 0 : index
    %354 = vector.load %arg1[%c3_261, %c0_262, %c0_263] : memref<9x1x256xf32, #tpu.memory_space<vmem>>, vector<1x1x256xf32>
    %355 = vector.shape_cast %354 : vector<1x1x256xf32> to vector<1x256xf32>
    %356 = vector.broadcast %355 : vector<1x256xf32> to vector<16x256xf32>
    %357 = arith.mulf %353, %356 : vector<16x256xf32>
    %358 = arith.addf %347, %357 : vector<16x256xf32>
    %c3_264 = arith.constant 3 : index
    %c4_265 = arith.constant 4 : index
    %c0_266 = arith.constant 0 : index
    %c0_267 = arith.constant 0 : index
    %359 = vector.load %arg3[%c3_264, %c4_265, %c0_266, %c0_267] : memref<6x9x16x16xf32, #tpu.memory_space<vmem>>, vector<1x1x16x16xf32>
    %360 = vector.shape_cast %359 : vector<1x1x16x16xf32> to vector<16x16xf32>
    %cst_268 = arith.constant dense<0.000000e+00> : vector<16x256xf32>
    %361 = tpu.matmul %360, %309, %cst_268 {dimension_numbers = #tpu.dot_dimension_numbers<[1], [0], [0], [1], [0, 0, 1, 1], [], []>} : vector<16x16xf32>, vector<16x256xf32>, vector<16x256xf32> -> vector<16x256xf32>
    %362 = arith.addf %358, %361 : vector<16x256xf32>
    %363 = vector.extract_strided_slice %309 {offsets = [0, 1], sizes = [16, 255], strides = [1, 1]} : vector<16x256xf32> to vector<16x255xf32>
    %364 = vector.extract_strided_slice %309 {offsets = [0, 0], sizes = [16, 1], strides = [1, 1]} : vector<16x256xf32> to vector<16x1xf32>
    %365 = tpu.concatenate %363, %364 in 1 : vector<16x255xf32>, vector<16x1xf32> -> vector<16x256xf32>
    %c3_269 = arith.constant 3 : index
    %c5_270 = arith.constant 5 : index
    %c0_271 = arith.constant 0 : index
    %c0_272 = arith.constant 0 : index
    %366 = vector.load %arg3[%c3_269, %c5_270, %c0_271, %c0_272] : memref<6x9x16x16xf32, #tpu.memory_space<vmem>>, vector<1x1x16x16xf32>
    %367 = vector.shape_cast %366 : vector<1x1x16x16xf32> to vector<16x16xf32>
    %cst_273 = arith.constant dense<0.000000e+00> : vector<16x256xf32>
    %368 = tpu.matmul %367, %365, %cst_273 {dimension_numbers = #tpu.dot_dimension_numbers<[1], [0], [0], [1], [0, 0, 1, 1], [], []>} : vector<16x16xf32>, vector<16x256xf32>, vector<16x256xf32> -> vector<16x256xf32>
    %c5_274 = arith.constant 5 : index
    %c0_275 = arith.constant 0 : index
    %c0_276 = arith.constant 0 : index
    %369 = vector.load %arg1[%c5_274, %c0_275, %c0_276] : memref<9x1x256xf32, #tpu.memory_space<vmem>>, vector<1x1x256xf32>
    %370 = vector.shape_cast %369 : vector<1x1x256xf32> to vector<1x256xf32>
    %371 = vector.broadcast %370 : vector<1x256xf32> to vector<16x256xf32>
    %372 = arith.mulf %368, %371 : vector<16x256xf32>
    %373 = arith.addf %362, %372 : vector<16x256xf32>
    %374 = vector.extract_strided_slice %309 {offsets = [0, 15], sizes = [16, 241], strides = [1, 1]} : vector<16x256xf32> to vector<16x241xf32>
    %375 = vector.extract_strided_slice %309 {offsets = [0, 0], sizes = [16, 15], strides = [1, 1]} : vector<16x256xf32> to vector<16x15xf32>
    %376 = tpu.concatenate %374, %375 in 1 : vector<16x241xf32>, vector<16x15xf32> -> vector<16x256xf32>
    %c3_277 = arith.constant 3 : index
    %c6_278 = arith.constant 6 : index
    %c0_279 = arith.constant 0 : index
    %c0_280 = arith.constant 0 : index
    %377 = vector.load %arg3[%c3_277, %c6_278, %c0_279, %c0_280] : memref<6x9x16x16xf32, #tpu.memory_space<vmem>>, vector<1x1x16x16xf32>
    %378 = vector.shape_cast %377 : vector<1x1x16x16xf32> to vector<16x16xf32>
    %cst_281 = arith.constant dense<0.000000e+00> : vector<16x256xf32>
    %379 = tpu.matmul %378, %376, %cst_281 {dimension_numbers = #tpu.dot_dimension_numbers<[1], [0], [0], [1], [0, 0, 1, 1], [], []>} : vector<16x16xf32>, vector<16x256xf32>, vector<16x256xf32> -> vector<16x256xf32>
    %c6_282 = arith.constant 6 : index
    %c0_283 = arith.constant 0 : index
    %c0_284 = arith.constant 0 : index
    %380 = vector.load %arg1[%c6_282, %c0_283, %c0_284] : memref<9x1x256xf32, #tpu.memory_space<vmem>>, vector<1x1x256xf32>
    %381 = vector.shape_cast %380 : vector<1x1x256xf32> to vector<1x256xf32>
    %382 = vector.broadcast %381 : vector<1x256xf32> to vector<16x256xf32>
    %383 = arith.mulf %379, %382 : vector<16x256xf32>
    %384 = arith.addf %373, %383 : vector<16x256xf32>
    %385 = vector.extract_strided_slice %309 {offsets = [0, 16], sizes = [16, 240], strides = [1, 1]} : vector<16x256xf32> to vector<16x240xf32>
    %386 = vector.extract_strided_slice %309 {offsets = [0, 0], sizes = [16, 16], strides = [1, 1]} : vector<16x256xf32> to vector<16x16xf32>
    %387 = tpu.concatenate %385, %386 in 1 : vector<16x240xf32>, vector<16x16xf32> -> vector<16x256xf32>
    %c3_285 = arith.constant 3 : index
    %c7_286 = arith.constant 7 : index
    %c0_287 = arith.constant 0 : index
    %c0_288 = arith.constant 0 : index
    %388 = vector.load %arg3[%c3_285, %c7_286, %c0_287, %c0_288] : memref<6x9x16x16xf32, #tpu.memory_space<vmem>>, vector<1x1x16x16xf32>
    %389 = vector.shape_cast %388 : vector<1x1x16x16xf32> to vector<16x16xf32>
    %cst_289 = arith.constant dense<0.000000e+00> : vector<16x256xf32>
    %390 = tpu.matmul %389, %387, %cst_289 {dimension_numbers = #tpu.dot_dimension_numbers<[1], [0], [0], [1], [0, 0, 1, 1], [], []>} : vector<16x16xf32>, vector<16x256xf32>, vector<16x256xf32> -> vector<16x256xf32>
    %c7_290 = arith.constant 7 : index
    %c0_291 = arith.constant 0 : index
    %c0_292 = arith.constant 0 : index
    %391 = vector.load %arg1[%c7_290, %c0_291, %c0_292] : memref<9x1x256xf32, #tpu.memory_space<vmem>>, vector<1x1x256xf32>
    %392 = vector.shape_cast %391 : vector<1x1x256xf32> to vector<1x256xf32>
    %393 = vector.broadcast %392 : vector<1x256xf32> to vector<16x256xf32>
    %394 = arith.mulf %390, %393 : vector<16x256xf32>
    %395 = arith.addf %384, %394 : vector<16x256xf32>
    %396 = vector.extract_strided_slice %309 {offsets = [0, 17], sizes = [16, 239], strides = [1, 1]} : vector<16x256xf32> to vector<16x239xf32>
    %397 = vector.extract_strided_slice %309 {offsets = [0, 0], sizes = [16, 17], strides = [1, 1]} : vector<16x256xf32> to vector<16x17xf32>
    %398 = tpu.concatenate %396, %397 in 1 : vector<16x239xf32>, vector<16x17xf32> -> vector<16x256xf32>
    %c3_293 = arith.constant 3 : index
    %c8_294 = arith.constant 8 : index
    %c0_295 = arith.constant 0 : index
    %c0_296 = arith.constant 0 : index
    %399 = vector.load %arg3[%c3_293, %c8_294, %c0_295, %c0_296] : memref<6x9x16x16xf32, #tpu.memory_space<vmem>>, vector<1x1x16x16xf32>
    %400 = vector.shape_cast %399 : vector<1x1x16x16xf32> to vector<16x16xf32>
    %cst_297 = arith.constant dense<0.000000e+00> : vector<16x256xf32>
    %401 = tpu.matmul %400, %398, %cst_297 {dimension_numbers = #tpu.dot_dimension_numbers<[1], [0], [0], [1], [0, 0, 1, 1], [], []>} : vector<16x16xf32>, vector<16x256xf32>, vector<16x256xf32> -> vector<16x256xf32>
    %c8_298 = arith.constant 8 : index
    %c0_299 = arith.constant 0 : index
    %c0_300 = arith.constant 0 : index
    %402 = vector.load %arg1[%c8_298, %c0_299, %c0_300] : memref<9x1x256xf32, #tpu.memory_space<vmem>>, vector<1x1x256xf32>
    %403 = vector.shape_cast %402 : vector<1x1x256xf32> to vector<1x256xf32>
    %404 = vector.broadcast %403 : vector<1x256xf32> to vector<16x256xf32>
    %405 = arith.mulf %401, %404 : vector<16x256xf32>
    %406 = arith.addf %395, %405 : vector<16x256xf32>
    %c3_301 = arith.constant 3 : index
    %c0_302 = arith.constant 0 : index
    %c0_303 = arith.constant 0 : index
    %407 = vector.load %arg4[%c3_301, %c0_302, %c0_303] : memref<6x16x1xf32, #tpu.memory_space<vmem>>, vector<1x16x1xf32>
    %408 = vector.shape_cast %407 : vector<1x16x1xf32> to vector<16x1xf32>
    %409 = vector.broadcast %408 : vector<16x1xf32> to vector<16x256xf32>
    %410 = arith.addf %406, %409 : vector<16x256xf32>
    %cst_304 = arith.constant 0.000000e+00 : f32
    %411 = vector.broadcast %cst_304 : f32 to vector<16x256xf32>
    %412 = arith.maximumf %410, %411 : vector<16x256xf32>
    %c4_305 = arith.constant 4 : index
    %c0_306 = arith.constant 0 : index
    %c0_307 = arith.constant 0 : index
    %413 = vector.load %arg5[%c4_305, %c0_306, %c0_307] : memref<7x16x16xf32, #tpu.memory_space<vmem>>, vector<1x16x16xf32>
    %414 = vector.shape_cast %413 : vector<1x16x16xf32> to vector<16x16xf32>
    %cst_308 = arith.constant dense<0.000000e+00> : vector<16x256xf32>
    %415 = tpu.matmul %414, %412, %cst_308 {dimension_numbers = #tpu.dot_dimension_numbers<[1], [0], [0], [1], [0, 0, 1, 1], [], []>} : vector<16x16xf32>, vector<16x256xf32>, vector<16x256xf32> -> vector<16x256xf32>
    %416 = arith.addf %313, %415 : vector<16x256xf32>
    %cst_309 = arith.constant 0.000000e+00 : f32
    %417 = vector.broadcast %cst_309 : f32 to vector<16x256xf32>
    %418 = vector.extract_strided_slice %412 {offsets = [0, 239], sizes = [16, 17], strides = [1, 1]} : vector<16x256xf32> to vector<16x17xf32>
    %419 = vector.extract_strided_slice %412 {offsets = [0, 0], sizes = [16, 239], strides = [1, 1]} : vector<16x256xf32> to vector<16x239xf32>
    %420 = tpu.concatenate %418, %419 in 1 : vector<16x17xf32>, vector<16x239xf32> -> vector<16x256xf32>
    %c4_310 = arith.constant 4 : index
    %c0_311 = arith.constant 0 : index
    %c0_312 = arith.constant 0 : index
    %c0_313 = arith.constant 0 : index
    %421 = vector.load %arg3[%c4_310, %c0_311, %c0_312, %c0_313] : memref<6x9x16x16xf32, #tpu.memory_space<vmem>>, vector<1x1x16x16xf32>
    %422 = vector.shape_cast %421 : vector<1x1x16x16xf32> to vector<16x16xf32>
    %cst_314 = arith.constant dense<0.000000e+00> : vector<16x256xf32>
    %423 = tpu.matmul %422, %420, %cst_314 {dimension_numbers = #tpu.dot_dimension_numbers<[1], [0], [0], [1], [0, 0, 1, 1], [], []>} : vector<16x16xf32>, vector<16x256xf32>, vector<16x256xf32> -> vector<16x256xf32>
    %c0_315 = arith.constant 0 : index
    %c0_316 = arith.constant 0 : index
    %c0_317 = arith.constant 0 : index
    %424 = vector.load %arg1[%c0_315, %c0_316, %c0_317] : memref<9x1x256xf32, #tpu.memory_space<vmem>>, vector<1x1x256xf32>
    %425 = vector.shape_cast %424 : vector<1x1x256xf32> to vector<1x256xf32>
    %426 = vector.broadcast %425 : vector<1x256xf32> to vector<16x256xf32>
    %427 = arith.mulf %423, %426 : vector<16x256xf32>
    %428 = arith.addf %417, %427 : vector<16x256xf32>
    %429 = vector.extract_strided_slice %412 {offsets = [0, 240], sizes = [16, 16], strides = [1, 1]} : vector<16x256xf32> to vector<16x16xf32>
    %430 = vector.extract_strided_slice %412 {offsets = [0, 0], sizes = [16, 240], strides = [1, 1]} : vector<16x256xf32> to vector<16x240xf32>
    %431 = tpu.concatenate %429, %430 in 1 : vector<16x16xf32>, vector<16x240xf32> -> vector<16x256xf32>
    %c4_318 = arith.constant 4 : index
    %c1_319 = arith.constant 1 : index
    %c0_320 = arith.constant 0 : index
    %c0_321 = arith.constant 0 : index
    %432 = vector.load %arg3[%c4_318, %c1_319, %c0_320, %c0_321] : memref<6x9x16x16xf32, #tpu.memory_space<vmem>>, vector<1x1x16x16xf32>
    %433 = vector.shape_cast %432 : vector<1x1x16x16xf32> to vector<16x16xf32>
    %cst_322 = arith.constant dense<0.000000e+00> : vector<16x256xf32>
    %434 = tpu.matmul %433, %431, %cst_322 {dimension_numbers = #tpu.dot_dimension_numbers<[1], [0], [0], [1], [0, 0, 1, 1], [], []>} : vector<16x16xf32>, vector<16x256xf32>, vector<16x256xf32> -> vector<16x256xf32>
    %c1_323 = arith.constant 1 : index
    %c0_324 = arith.constant 0 : index
    %c0_325 = arith.constant 0 : index
    %435 = vector.load %arg1[%c1_323, %c0_324, %c0_325] : memref<9x1x256xf32, #tpu.memory_space<vmem>>, vector<1x1x256xf32>
    %436 = vector.shape_cast %435 : vector<1x1x256xf32> to vector<1x256xf32>
    %437 = vector.broadcast %436 : vector<1x256xf32> to vector<16x256xf32>
    %438 = arith.mulf %434, %437 : vector<16x256xf32>
    %439 = arith.addf %428, %438 : vector<16x256xf32>
    %440 = vector.extract_strided_slice %412 {offsets = [0, 241], sizes = [16, 15], strides = [1, 1]} : vector<16x256xf32> to vector<16x15xf32>
    %441 = vector.extract_strided_slice %412 {offsets = [0, 0], sizes = [16, 241], strides = [1, 1]} : vector<16x256xf32> to vector<16x241xf32>
    %442 = tpu.concatenate %440, %441 in 1 : vector<16x15xf32>, vector<16x241xf32> -> vector<16x256xf32>
    %c4_326 = arith.constant 4 : index
    %c2_327 = arith.constant 2 : index
    %c0_328 = arith.constant 0 : index
    %c0_329 = arith.constant 0 : index
    %443 = vector.load %arg3[%c4_326, %c2_327, %c0_328, %c0_329] : memref<6x9x16x16xf32, #tpu.memory_space<vmem>>, vector<1x1x16x16xf32>
    %444 = vector.shape_cast %443 : vector<1x1x16x16xf32> to vector<16x16xf32>
    %cst_330 = arith.constant dense<0.000000e+00> : vector<16x256xf32>
    %445 = tpu.matmul %444, %442, %cst_330 {dimension_numbers = #tpu.dot_dimension_numbers<[1], [0], [0], [1], [0, 0, 1, 1], [], []>} : vector<16x16xf32>, vector<16x256xf32>, vector<16x256xf32> -> vector<16x256xf32>
    %c2_331 = arith.constant 2 : index
    %c0_332 = arith.constant 0 : index
    %c0_333 = arith.constant 0 : index
    %446 = vector.load %arg1[%c2_331, %c0_332, %c0_333] : memref<9x1x256xf32, #tpu.memory_space<vmem>>, vector<1x1x256xf32>
    %447 = vector.shape_cast %446 : vector<1x1x256xf32> to vector<1x256xf32>
    %448 = vector.broadcast %447 : vector<1x256xf32> to vector<16x256xf32>
    %449 = arith.mulf %445, %448 : vector<16x256xf32>
    %450 = arith.addf %439, %449 : vector<16x256xf32>
    %451 = vector.extract_strided_slice %412 {offsets = [0, 255], sizes = [16, 1], strides = [1, 1]} : vector<16x256xf32> to vector<16x1xf32>
    %452 = vector.extract_strided_slice %412 {offsets = [0, 0], sizes = [16, 255], strides = [1, 1]} : vector<16x256xf32> to vector<16x255xf32>
    %453 = tpu.concatenate %451, %452 in 1 : vector<16x1xf32>, vector<16x255xf32> -> vector<16x256xf32>
    %c4_334 = arith.constant 4 : index
    %c3_335 = arith.constant 3 : index
    %c0_336 = arith.constant 0 : index
    %c0_337 = arith.constant 0 : index
    %454 = vector.load %arg3[%c4_334, %c3_335, %c0_336, %c0_337] : memref<6x9x16x16xf32, #tpu.memory_space<vmem>>, vector<1x1x16x16xf32>
    %455 = vector.shape_cast %454 : vector<1x1x16x16xf32> to vector<16x16xf32>
    %cst_338 = arith.constant dense<0.000000e+00> : vector<16x256xf32>
    %456 = tpu.matmul %455, %453, %cst_338 {dimension_numbers = #tpu.dot_dimension_numbers<[1], [0], [0], [1], [0, 0, 1, 1], [], []>} : vector<16x16xf32>, vector<16x256xf32>, vector<16x256xf32> -> vector<16x256xf32>
    %c3_339 = arith.constant 3 : index
    %c0_340 = arith.constant 0 : index
    %c0_341 = arith.constant 0 : index
    %457 = vector.load %arg1[%c3_339, %c0_340, %c0_341] : memref<9x1x256xf32, #tpu.memory_space<vmem>>, vector<1x1x256xf32>
    %458 = vector.shape_cast %457 : vector<1x1x256xf32> to vector<1x256xf32>
    %459 = vector.broadcast %458 : vector<1x256xf32> to vector<16x256xf32>
    %460 = arith.mulf %456, %459 : vector<16x256xf32>
    %461 = arith.addf %450, %460 : vector<16x256xf32>
    %c4_342 = arith.constant 4 : index
    %c4_343 = arith.constant 4 : index
    %c0_344 = arith.constant 0 : index
    %c0_345 = arith.constant 0 : index
    %462 = vector.load %arg3[%c4_342, %c4_343, %c0_344, %c0_345] : memref<6x9x16x16xf32, #tpu.memory_space<vmem>>, vector<1x1x16x16xf32>
    %463 = vector.shape_cast %462 : vector<1x1x16x16xf32> to vector<16x16xf32>
    %cst_346 = arith.constant dense<0.000000e+00> : vector<16x256xf32>
    %464 = tpu.matmul %463, %412, %cst_346 {dimension_numbers = #tpu.dot_dimension_numbers<[1], [0], [0], [1], [0, 0, 1, 1], [], []>} : vector<16x16xf32>, vector<16x256xf32>, vector<16x256xf32> -> vector<16x256xf32>
    %465 = arith.addf %461, %464 : vector<16x256xf32>
    %466 = vector.extract_strided_slice %412 {offsets = [0, 1], sizes = [16, 255], strides = [1, 1]} : vector<16x256xf32> to vector<16x255xf32>
    %467 = vector.extract_strided_slice %412 {offsets = [0, 0], sizes = [16, 1], strides = [1, 1]} : vector<16x256xf32> to vector<16x1xf32>
    %468 = tpu.concatenate %466, %467 in 1 : vector<16x255xf32>, vector<16x1xf32> -> vector<16x256xf32>
    %c4_347 = arith.constant 4 : index
    %c5_348 = arith.constant 5 : index
    %c0_349 = arith.constant 0 : index
    %c0_350 = arith.constant 0 : index
    %469 = vector.load %arg3[%c4_347, %c5_348, %c0_349, %c0_350] : memref<6x9x16x16xf32, #tpu.memory_space<vmem>>, vector<1x1x16x16xf32>
    %470 = vector.shape_cast %469 : vector<1x1x16x16xf32> to vector<16x16xf32>
    %cst_351 = arith.constant dense<0.000000e+00> : vector<16x256xf32>
    %471 = tpu.matmul %470, %468, %cst_351 {dimension_numbers = #tpu.dot_dimension_numbers<[1], [0], [0], [1], [0, 0, 1, 1], [], []>} : vector<16x16xf32>, vector<16x256xf32>, vector<16x256xf32> -> vector<16x256xf32>
    %c5_352 = arith.constant 5 : index
    %c0_353 = arith.constant 0 : index
    %c0_354 = arith.constant 0 : index
    %472 = vector.load %arg1[%c5_352, %c0_353, %c0_354] : memref<9x1x256xf32, #tpu.memory_space<vmem>>, vector<1x1x256xf32>
    %473 = vector.shape_cast %472 : vector<1x1x256xf32> to vector<1x256xf32>
    %474 = vector.broadcast %473 : vector<1x256xf32> to vector<16x256xf32>
    %475 = arith.mulf %471, %474 : vector<16x256xf32>
    %476 = arith.addf %465, %475 : vector<16x256xf32>
    %477 = vector.extract_strided_slice %412 {offsets = [0, 15], sizes = [16, 241], strides = [1, 1]} : vector<16x256xf32> to vector<16x241xf32>
    %478 = vector.extract_strided_slice %412 {offsets = [0, 0], sizes = [16, 15], strides = [1, 1]} : vector<16x256xf32> to vector<16x15xf32>
    %479 = tpu.concatenate %477, %478 in 1 : vector<16x241xf32>, vector<16x15xf32> -> vector<16x256xf32>
    %c4_355 = arith.constant 4 : index
    %c6_356 = arith.constant 6 : index
    %c0_357 = arith.constant 0 : index
    %c0_358 = arith.constant 0 : index
    %480 = vector.load %arg3[%c4_355, %c6_356, %c0_357, %c0_358] : memref<6x9x16x16xf32, #tpu.memory_space<vmem>>, vector<1x1x16x16xf32>
    %481 = vector.shape_cast %480 : vector<1x1x16x16xf32> to vector<16x16xf32>
    %cst_359 = arith.constant dense<0.000000e+00> : vector<16x256xf32>
    %482 = tpu.matmul %481, %479, %cst_359 {dimension_numbers = #tpu.dot_dimension_numbers<[1], [0], [0], [1], [0, 0, 1, 1], [], []>} : vector<16x16xf32>, vector<16x256xf32>, vector<16x256xf32> -> vector<16x256xf32>
    %c6_360 = arith.constant 6 : index
    %c0_361 = arith.constant 0 : index
    %c0_362 = arith.constant 0 : index
    %483 = vector.load %arg1[%c6_360, %c0_361, %c0_362] : memref<9x1x256xf32, #tpu.memory_space<vmem>>, vector<1x1x256xf32>
    %484 = vector.shape_cast %483 : vector<1x1x256xf32> to vector<1x256xf32>
    %485 = vector.broadcast %484 : vector<1x256xf32> to vector<16x256xf32>
    %486 = arith.mulf %482, %485 : vector<16x256xf32>
    %487 = arith.addf %476, %486 : vector<16x256xf32>
    %488 = vector.extract_strided_slice %412 {offsets = [0, 16], sizes = [16, 240], strides = [1, 1]} : vector<16x256xf32> to vector<16x240xf32>
    %489 = vector.extract_strided_slice %412 {offsets = [0, 0], sizes = [16, 16], strides = [1, 1]} : vector<16x256xf32> to vector<16x16xf32>
    %490 = tpu.concatenate %488, %489 in 1 : vector<16x240xf32>, vector<16x16xf32> -> vector<16x256xf32>
    %c4_363 = arith.constant 4 : index
    %c7_364 = arith.constant 7 : index
    %c0_365 = arith.constant 0 : index
    %c0_366 = arith.constant 0 : index
    %491 = vector.load %arg3[%c4_363, %c7_364, %c0_365, %c0_366] : memref<6x9x16x16xf32, #tpu.memory_space<vmem>>, vector<1x1x16x16xf32>
    %492 = vector.shape_cast %491 : vector<1x1x16x16xf32> to vector<16x16xf32>
    %cst_367 = arith.constant dense<0.000000e+00> : vector<16x256xf32>
    %493 = tpu.matmul %492, %490, %cst_367 {dimension_numbers = #tpu.dot_dimension_numbers<[1], [0], [0], [1], [0, 0, 1, 1], [], []>} : vector<16x16xf32>, vector<16x256xf32>, vector<16x256xf32> -> vector<16x256xf32>
    %c7_368 = arith.constant 7 : index
    %c0_369 = arith.constant 0 : index
    %c0_370 = arith.constant 0 : index
    %494 = vector.load %arg1[%c7_368, %c0_369, %c0_370] : memref<9x1x256xf32, #tpu.memory_space<vmem>>, vector<1x1x256xf32>
    %495 = vector.shape_cast %494 : vector<1x1x256xf32> to vector<1x256xf32>
    %496 = vector.broadcast %495 : vector<1x256xf32> to vector<16x256xf32>
    %497 = arith.mulf %493, %496 : vector<16x256xf32>
    %498 = arith.addf %487, %497 : vector<16x256xf32>
    %499 = vector.extract_strided_slice %412 {offsets = [0, 17], sizes = [16, 239], strides = [1, 1]} : vector<16x256xf32> to vector<16x239xf32>
    %500 = vector.extract_strided_slice %412 {offsets = [0, 0], sizes = [16, 17], strides = [1, 1]} : vector<16x256xf32> to vector<16x17xf32>
    %501 = tpu.concatenate %499, %500 in 1 : vector<16x239xf32>, vector<16x17xf32> -> vector<16x256xf32>
    %c4_371 = arith.constant 4 : index
    %c8_372 = arith.constant 8 : index
    %c0_373 = arith.constant 0 : index
    %c0_374 = arith.constant 0 : index
    %502 = vector.load %arg3[%c4_371, %c8_372, %c0_373, %c0_374] : memref<6x9x16x16xf32, #tpu.memory_space<vmem>>, vector<1x1x16x16xf32>
    %503 = vector.shape_cast %502 : vector<1x1x16x16xf32> to vector<16x16xf32>
    %cst_375 = arith.constant dense<0.000000e+00> : vector<16x256xf32>
    %504 = tpu.matmul %503, %501, %cst_375 {dimension_numbers = #tpu.dot_dimension_numbers<[1], [0], [0], [1], [0, 0, 1, 1], [], []>} : vector<16x16xf32>, vector<16x256xf32>, vector<16x256xf32> -> vector<16x256xf32>
    %c8_376 = arith.constant 8 : index
    %c0_377 = arith.constant 0 : index
    %c0_378 = arith.constant 0 : index
    %505 = vector.load %arg1[%c8_376, %c0_377, %c0_378] : memref<9x1x256xf32, #tpu.memory_space<vmem>>, vector<1x1x256xf32>
    %506 = vector.shape_cast %505 : vector<1x1x256xf32> to vector<1x256xf32>
    %507 = vector.broadcast %506 : vector<1x256xf32> to vector<16x256xf32>
    %508 = arith.mulf %504, %507 : vector<16x256xf32>
    %509 = arith.addf %498, %508 : vector<16x256xf32>
    %c4_379 = arith.constant 4 : index
    %c0_380 = arith.constant 0 : index
    %c0_381 = arith.constant 0 : index
    %510 = vector.load %arg4[%c4_379, %c0_380, %c0_381] : memref<6x16x1xf32, #tpu.memory_space<vmem>>, vector<1x16x1xf32>
    %511 = vector.shape_cast %510 : vector<1x16x1xf32> to vector<16x1xf32>
    %512 = vector.broadcast %511 : vector<16x1xf32> to vector<16x256xf32>
    %513 = arith.addf %509, %512 : vector<16x256xf32>
    %cst_382 = arith.constant 0.000000e+00 : f32
    %514 = vector.broadcast %cst_382 : f32 to vector<16x256xf32>
    %515 = arith.maximumf %513, %514 : vector<16x256xf32>
    %c5_383 = arith.constant 5 : index
    %c0_384 = arith.constant 0 : index
    %c0_385 = arith.constant 0 : index
    %516 = vector.load %arg5[%c5_383, %c0_384, %c0_385] : memref<7x16x16xf32, #tpu.memory_space<vmem>>, vector<1x16x16xf32>
    %517 = vector.shape_cast %516 : vector<1x16x16xf32> to vector<16x16xf32>
    %cst_386 = arith.constant dense<0.000000e+00> : vector<16x256xf32>
    %518 = tpu.matmul %517, %515, %cst_386 {dimension_numbers = #tpu.dot_dimension_numbers<[1], [0], [0], [1], [0, 0, 1, 1], [], []>} : vector<16x16xf32>, vector<16x256xf32>, vector<16x256xf32> -> vector<16x256xf32>
    %519 = arith.addf %416, %518 : vector<16x256xf32>
    %cst_387 = arith.constant 0.000000e+00 : f32
    %520 = vector.broadcast %cst_387 : f32 to vector<16x256xf32>
    %521 = vector.extract_strided_slice %515 {offsets = [0, 239], sizes = [16, 17], strides = [1, 1]} : vector<16x256xf32> to vector<16x17xf32>
    %522 = vector.extract_strided_slice %515 {offsets = [0, 0], sizes = [16, 239], strides = [1, 1]} : vector<16x256xf32> to vector<16x239xf32>
    %523 = tpu.concatenate %521, %522 in 1 : vector<16x17xf32>, vector<16x239xf32> -> vector<16x256xf32>
    %c5_388 = arith.constant 5 : index
    %c0_389 = arith.constant 0 : index
    %c0_390 = arith.constant 0 : index
    %c0_391 = arith.constant 0 : index
    %524 = vector.load %arg3[%c5_388, %c0_389, %c0_390, %c0_391] : memref<6x9x16x16xf32, #tpu.memory_space<vmem>>, vector<1x1x16x16xf32>
    %525 = vector.shape_cast %524 : vector<1x1x16x16xf32> to vector<16x16xf32>
    %cst_392 = arith.constant dense<0.000000e+00> : vector<16x256xf32>
    %526 = tpu.matmul %525, %523, %cst_392 {dimension_numbers = #tpu.dot_dimension_numbers<[1], [0], [0], [1], [0, 0, 1, 1], [], []>} : vector<16x16xf32>, vector<16x256xf32>, vector<16x256xf32> -> vector<16x256xf32>
    %c0_393 = arith.constant 0 : index
    %c0_394 = arith.constant 0 : index
    %c0_395 = arith.constant 0 : index
    %527 = vector.load %arg1[%c0_393, %c0_394, %c0_395] : memref<9x1x256xf32, #tpu.memory_space<vmem>>, vector<1x1x256xf32>
    %528 = vector.shape_cast %527 : vector<1x1x256xf32> to vector<1x256xf32>
    %529 = vector.broadcast %528 : vector<1x256xf32> to vector<16x256xf32>
    %530 = arith.mulf %526, %529 : vector<16x256xf32>
    %531 = arith.addf %520, %530 : vector<16x256xf32>
    %532 = vector.extract_strided_slice %515 {offsets = [0, 240], sizes = [16, 16], strides = [1, 1]} : vector<16x256xf32> to vector<16x16xf32>
    %533 = vector.extract_strided_slice %515 {offsets = [0, 0], sizes = [16, 240], strides = [1, 1]} : vector<16x256xf32> to vector<16x240xf32>
    %534 = tpu.concatenate %532, %533 in 1 : vector<16x16xf32>, vector<16x240xf32> -> vector<16x256xf32>
    %c5_396 = arith.constant 5 : index
    %c1_397 = arith.constant 1 : index
    %c0_398 = arith.constant 0 : index
    %c0_399 = arith.constant 0 : index
    %535 = vector.load %arg3[%c5_396, %c1_397, %c0_398, %c0_399] : memref<6x9x16x16xf32, #tpu.memory_space<vmem>>, vector<1x1x16x16xf32>
    %536 = vector.shape_cast %535 : vector<1x1x16x16xf32> to vector<16x16xf32>
    %cst_400 = arith.constant dense<0.000000e+00> : vector<16x256xf32>
    %537 = tpu.matmul %536, %534, %cst_400 {dimension_numbers = #tpu.dot_dimension_numbers<[1], [0], [0], [1], [0, 0, 1, 1], [], []>} : vector<16x16xf32>, vector<16x256xf32>, vector<16x256xf32> -> vector<16x256xf32>
    %c1_401 = arith.constant 1 : index
    %c0_402 = arith.constant 0 : index
    %c0_403 = arith.constant 0 : index
    %538 = vector.load %arg1[%c1_401, %c0_402, %c0_403] : memref<9x1x256xf32, #tpu.memory_space<vmem>>, vector<1x1x256xf32>
    %539 = vector.shape_cast %538 : vector<1x1x256xf32> to vector<1x256xf32>
    %540 = vector.broadcast %539 : vector<1x256xf32> to vector<16x256xf32>
    %541 = arith.mulf %537, %540 : vector<16x256xf32>
    %542 = arith.addf %531, %541 : vector<16x256xf32>
    %543 = vector.extract_strided_slice %515 {offsets = [0, 241], sizes = [16, 15], strides = [1, 1]} : vector<16x256xf32> to vector<16x15xf32>
    %544 = vector.extract_strided_slice %515 {offsets = [0, 0], sizes = [16, 241], strides = [1, 1]} : vector<16x256xf32> to vector<16x241xf32>
    %545 = tpu.concatenate %543, %544 in 1 : vector<16x15xf32>, vector<16x241xf32> -> vector<16x256xf32>
    %c5_404 = arith.constant 5 : index
    %c2_405 = arith.constant 2 : index
    %c0_406 = arith.constant 0 : index
    %c0_407 = arith.constant 0 : index
    %546 = vector.load %arg3[%c5_404, %c2_405, %c0_406, %c0_407] : memref<6x9x16x16xf32, #tpu.memory_space<vmem>>, vector<1x1x16x16xf32>
    %547 = vector.shape_cast %546 : vector<1x1x16x16xf32> to vector<16x16xf32>
    %cst_408 = arith.constant dense<0.000000e+00> : vector<16x256xf32>
    %548 = tpu.matmul %547, %545, %cst_408 {dimension_numbers = #tpu.dot_dimension_numbers<[1], [0], [0], [1], [0, 0, 1, 1], [], []>} : vector<16x16xf32>, vector<16x256xf32>, vector<16x256xf32> -> vector<16x256xf32>
    %c2_409 = arith.constant 2 : index
    %c0_410 = arith.constant 0 : index
    %c0_411 = arith.constant 0 : index
    %549 = vector.load %arg1[%c2_409, %c0_410, %c0_411] : memref<9x1x256xf32, #tpu.memory_space<vmem>>, vector<1x1x256xf32>
    %550 = vector.shape_cast %549 : vector<1x1x256xf32> to vector<1x256xf32>
    %551 = vector.broadcast %550 : vector<1x256xf32> to vector<16x256xf32>
    %552 = arith.mulf %548, %551 : vector<16x256xf32>
    %553 = arith.addf %542, %552 : vector<16x256xf32>
    %554 = vector.extract_strided_slice %515 {offsets = [0, 255], sizes = [16, 1], strides = [1, 1]} : vector<16x256xf32> to vector<16x1xf32>
    %555 = vector.extract_strided_slice %515 {offsets = [0, 0], sizes = [16, 255], strides = [1, 1]} : vector<16x256xf32> to vector<16x255xf32>
    %556 = tpu.concatenate %554, %555 in 1 : vector<16x1xf32>, vector<16x255xf32> -> vector<16x256xf32>
    %c5_412 = arith.constant 5 : index
    %c3_413 = arith.constant 3 : index
    %c0_414 = arith.constant 0 : index
    %c0_415 = arith.constant 0 : index
    %557 = vector.load %arg3[%c5_412, %c3_413, %c0_414, %c0_415] : memref<6x9x16x16xf32, #tpu.memory_space<vmem>>, vector<1x1x16x16xf32>
    %558 = vector.shape_cast %557 : vector<1x1x16x16xf32> to vector<16x16xf32>
    %cst_416 = arith.constant dense<0.000000e+00> : vector<16x256xf32>
    %559 = tpu.matmul %558, %556, %cst_416 {dimension_numbers = #tpu.dot_dimension_numbers<[1], [0], [0], [1], [0, 0, 1, 1], [], []>} : vector<16x16xf32>, vector<16x256xf32>, vector<16x256xf32> -> vector<16x256xf32>
    %c3_417 = arith.constant 3 : index
    %c0_418 = arith.constant 0 : index
    %c0_419 = arith.constant 0 : index
    %560 = vector.load %arg1[%c3_417, %c0_418, %c0_419] : memref<9x1x256xf32, #tpu.memory_space<vmem>>, vector<1x1x256xf32>
    %561 = vector.shape_cast %560 : vector<1x1x256xf32> to vector<1x256xf32>
    %562 = vector.broadcast %561 : vector<1x256xf32> to vector<16x256xf32>
    %563 = arith.mulf %559, %562 : vector<16x256xf32>
    %564 = arith.addf %553, %563 : vector<16x256xf32>
    %c5_420 = arith.constant 5 : index
    %c4_421 = arith.constant 4 : index
    %c0_422 = arith.constant 0 : index
    %c0_423 = arith.constant 0 : index
    %565 = vector.load %arg3[%c5_420, %c4_421, %c0_422, %c0_423] : memref<6x9x16x16xf32, #tpu.memory_space<vmem>>, vector<1x1x16x16xf32>
    %566 = vector.shape_cast %565 : vector<1x1x16x16xf32> to vector<16x16xf32>
    %cst_424 = arith.constant dense<0.000000e+00> : vector<16x256xf32>
    %567 = tpu.matmul %566, %515, %cst_424 {dimension_numbers = #tpu.dot_dimension_numbers<[1], [0], [0], [1], [0, 0, 1, 1], [], []>} : vector<16x16xf32>, vector<16x256xf32>, vector<16x256xf32> -> vector<16x256xf32>
    %568 = arith.addf %564, %567 : vector<16x256xf32>
    %569 = vector.extract_strided_slice %515 {offsets = [0, 1], sizes = [16, 255], strides = [1, 1]} : vector<16x256xf32> to vector<16x255xf32>
    %570 = vector.extract_strided_slice %515 {offsets = [0, 0], sizes = [16, 1], strides = [1, 1]} : vector<16x256xf32> to vector<16x1xf32>
    %571 = tpu.concatenate %569, %570 in 1 : vector<16x255xf32>, vector<16x1xf32> -> vector<16x256xf32>
    %c5_425 = arith.constant 5 : index
    %c5_426 = arith.constant 5 : index
    %c0_427 = arith.constant 0 : index
    %c0_428 = arith.constant 0 : index
    %572 = vector.load %arg3[%c5_425, %c5_426, %c0_427, %c0_428] : memref<6x9x16x16xf32, #tpu.memory_space<vmem>>, vector<1x1x16x16xf32>
    %573 = vector.shape_cast %572 : vector<1x1x16x16xf32> to vector<16x16xf32>
    %cst_429 = arith.constant dense<0.000000e+00> : vector<16x256xf32>
    %574 = tpu.matmul %573, %571, %cst_429 {dimension_numbers = #tpu.dot_dimension_numbers<[1], [0], [0], [1], [0, 0, 1, 1], [], []>} : vector<16x16xf32>, vector<16x256xf32>, vector<16x256xf32> -> vector<16x256xf32>
    %c5_430 = arith.constant 5 : index
    %c0_431 = arith.constant 0 : index
    %c0_432 = arith.constant 0 : index
    %575 = vector.load %arg1[%c5_430, %c0_431, %c0_432] : memref<9x1x256xf32, #tpu.memory_space<vmem>>, vector<1x1x256xf32>
    %576 = vector.shape_cast %575 : vector<1x1x256xf32> to vector<1x256xf32>
    %577 = vector.broadcast %576 : vector<1x256xf32> to vector<16x256xf32>
    %578 = arith.mulf %574, %577 : vector<16x256xf32>
    %579 = arith.addf %568, %578 : vector<16x256xf32>
    %580 = vector.extract_strided_slice %515 {offsets = [0, 15], sizes = [16, 241], strides = [1, 1]} : vector<16x256xf32> to vector<16x241xf32>
    %581 = vector.extract_strided_slice %515 {offsets = [0, 0], sizes = [16, 15], strides = [1, 1]} : vector<16x256xf32> to vector<16x15xf32>
    %582 = tpu.concatenate %580, %581 in 1 : vector<16x241xf32>, vector<16x15xf32> -> vector<16x256xf32>
    %c5_433 = arith.constant 5 : index
    %c6_434 = arith.constant 6 : index
    %c0_435 = arith.constant 0 : index
    %c0_436 = arith.constant 0 : index
    %583 = vector.load %arg3[%c5_433, %c6_434, %c0_435, %c0_436] : memref<6x9x16x16xf32, #tpu.memory_space<vmem>>, vector<1x1x16x16xf32>
    %584 = vector.shape_cast %583 : vector<1x1x16x16xf32> to vector<16x16xf32>
    %cst_437 = arith.constant dense<0.000000e+00> : vector<16x256xf32>
    %585 = tpu.matmul %584, %582, %cst_437 {dimension_numbers = #tpu.dot_dimension_numbers<[1], [0], [0], [1], [0, 0, 1, 1], [], []>} : vector<16x16xf32>, vector<16x256xf32>, vector<16x256xf32> -> vector<16x256xf32>
    %c6_438 = arith.constant 6 : index
    %c0_439 = arith.constant 0 : index
    %c0_440 = arith.constant 0 : index
    %586 = vector.load %arg1[%c6_438, %c0_439, %c0_440] : memref<9x1x256xf32, #tpu.memory_space<vmem>>, vector<1x1x256xf32>
    %587 = vector.shape_cast %586 : vector<1x1x256xf32> to vector<1x256xf32>
    %588 = vector.broadcast %587 : vector<1x256xf32> to vector<16x256xf32>
    %589 = arith.mulf %585, %588 : vector<16x256xf32>
    %590 = arith.addf %579, %589 : vector<16x256xf32>
    %591 = vector.extract_strided_slice %515 {offsets = [0, 16], sizes = [16, 240], strides = [1, 1]} : vector<16x256xf32> to vector<16x240xf32>
    %592 = vector.extract_strided_slice %515 {offsets = [0, 0], sizes = [16, 16], strides = [1, 1]} : vector<16x256xf32> to vector<16x16xf32>
    %593 = tpu.concatenate %591, %592 in 1 : vector<16x240xf32>, vector<16x16xf32> -> vector<16x256xf32>
    %c5_441 = arith.constant 5 : index
    %c7_442 = arith.constant 7 : index
    %c0_443 = arith.constant 0 : index
    %c0_444 = arith.constant 0 : index
    %594 = vector.load %arg3[%c5_441, %c7_442, %c0_443, %c0_444] : memref<6x9x16x16xf32, #tpu.memory_space<vmem>>, vector<1x1x16x16xf32>
    %595 = vector.shape_cast %594 : vector<1x1x16x16xf32> to vector<16x16xf32>
    %cst_445 = arith.constant dense<0.000000e+00> : vector<16x256xf32>
    %596 = tpu.matmul %595, %593, %cst_445 {dimension_numbers = #tpu.dot_dimension_numbers<[1], [0], [0], [1], [0, 0, 1, 1], [], []>} : vector<16x16xf32>, vector<16x256xf32>, vector<16x256xf32> -> vector<16x256xf32>
    %c7_446 = arith.constant 7 : index
    %c0_447 = arith.constant 0 : index
    %c0_448 = arith.constant 0 : index
    %597 = vector.load %arg1[%c7_446, %c0_447, %c0_448] : memref<9x1x256xf32, #tpu.memory_space<vmem>>, vector<1x1x256xf32>
    %598 = vector.shape_cast %597 : vector<1x1x256xf32> to vector<1x256xf32>
    %599 = vector.broadcast %598 : vector<1x256xf32> to vector<16x256xf32>
    %600 = arith.mulf %596, %599 : vector<16x256xf32>
    %601 = arith.addf %590, %600 : vector<16x256xf32>
    %602 = vector.extract_strided_slice %515 {offsets = [0, 17], sizes = [16, 239], strides = [1, 1]} : vector<16x256xf32> to vector<16x239xf32>
    %603 = vector.extract_strided_slice %515 {offsets = [0, 0], sizes = [16, 17], strides = [1, 1]} : vector<16x256xf32> to vector<16x17xf32>
    %604 = tpu.concatenate %602, %603 in 1 : vector<16x239xf32>, vector<16x17xf32> -> vector<16x256xf32>
    %c5_449 = arith.constant 5 : index
    %c8_450 = arith.constant 8 : index
    %c0_451 = arith.constant 0 : index
    %c0_452 = arith.constant 0 : index
    %605 = vector.load %arg3[%c5_449, %c8_450, %c0_451, %c0_452] : memref<6x9x16x16xf32, #tpu.memory_space<vmem>>, vector<1x1x16x16xf32>
    %606 = vector.shape_cast %605 : vector<1x1x16x16xf32> to vector<16x16xf32>
    %cst_453 = arith.constant dense<0.000000e+00> : vector<16x256xf32>
    %607 = tpu.matmul %606, %604, %cst_453 {dimension_numbers = #tpu.dot_dimension_numbers<[1], [0], [0], [1], [0, 0, 1, 1], [], []>} : vector<16x16xf32>, vector<16x256xf32>, vector<16x256xf32> -> vector<16x256xf32>
    %c8_454 = arith.constant 8 : index
    %c0_455 = arith.constant 0 : index
    %c0_456 = arith.constant 0 : index
    %608 = vector.load %arg1[%c8_454, %c0_455, %c0_456] : memref<9x1x256xf32, #tpu.memory_space<vmem>>, vector<1x1x256xf32>
    %609 = vector.shape_cast %608 : vector<1x1x256xf32> to vector<1x256xf32>
    %610 = vector.broadcast %609 : vector<1x256xf32> to vector<16x256xf32>
    %611 = arith.mulf %607, %610 : vector<16x256xf32>
    %612 = arith.addf %601, %611 : vector<16x256xf32>
    %c5_457 = arith.constant 5 : index
    %c0_458 = arith.constant 0 : index
    %c0_459 = arith.constant 0 : index
    %613 = vector.load %arg4[%c5_457, %c0_458, %c0_459] : memref<6x16x1xf32, #tpu.memory_space<vmem>>, vector<1x16x1xf32>
    %614 = vector.shape_cast %613 : vector<1x16x1xf32> to vector<16x1xf32>
    %615 = vector.broadcast %614 : vector<16x1xf32> to vector<16x256xf32>
    %616 = arith.addf %612, %615 : vector<16x256xf32>
    %cst_460 = arith.constant 0.000000e+00 : f32
    %617 = vector.broadcast %cst_460 : f32 to vector<16x256xf32>
    %618 = arith.maximumf %616, %617 : vector<16x256xf32>
    %c6_461 = arith.constant 6 : index
    %c0_462 = arith.constant 0 : index
    %c0_463 = arith.constant 0 : index
    %619 = vector.load %arg5[%c6_461, %c0_462, %c0_463] : memref<7x16x16xf32, #tpu.memory_space<vmem>>, vector<1x16x16xf32>
    %620 = vector.shape_cast %619 : vector<1x16x16xf32> to vector<16x16xf32>
    %cst_464 = arith.constant dense<0.000000e+00> : vector<16x256xf32>
    %621 = tpu.matmul %620, %618, %cst_464 {dimension_numbers = #tpu.dot_dimension_numbers<[1], [0], [0], [1], [0, 0, 1, 1], [], []>} : vector<16x16xf32>, vector<16x256xf32>, vector<16x256xf32> -> vector<16x256xf32>
    %622 = arith.addf %519, %621 : vector<16x256xf32>
    %c0_465 = arith.constant 0 : index
    %c0_466 = arith.constant 0 : index
    %623 = vector.load %arg6[%c0_465, %c0_466] : memref<16x1xf32, #tpu.memory_space<vmem>>, vector<16x1xf32>
    %624 = vector.broadcast %623 : vector<16x1xf32> to vector<16x256xf32>
    %625 = arith.addf %622, %624 : vector<16x256xf32>
    %cst_467 = arith.constant 0.000000e+00 : f32
    %626 = vector.broadcast %cst_467 : f32 to vector<16x256xf32>
    %627 = arith.maximumf %625, %626 : vector<16x256xf32>
    %c0_468 = arith.constant 0 : index
    %c0_469 = arith.constant 0 : index
    %628 = vector.load %arg7[%c0_468, %c0_469] : memref<32x16xf32, #tpu.memory_space<vmem>>, vector<32x16xf32>
    %cst_470 = arith.constant dense<0.000000e+00> : vector<32x256xf32>
    %629 = tpu.matmul %628, %627, %cst_470 {dimension_numbers = #tpu.dot_dimension_numbers<[1], [0], [0], [1], [0, 0, 1, 1], [], []>} : vector<32x16xf32>, vector<16x256xf32>, vector<32x256xf32> -> vector<32x256xf32>
    %c0_471 = arith.constant 0 : index
    %c0_472 = arith.constant 0 : index
    %630 = vector.load %arg8[%c0_471, %c0_472] : memref<32x1xf32, #tpu.memory_space<vmem>>, vector<32x1xf32>
    %631 = vector.broadcast %630 : vector<32x1xf32> to vector<32x256xf32>
    %632 = arith.addf %629, %631 : vector<32x256xf32>
    %cst_473 = arith.constant 0.000000e+00 : f32
    %633 = vector.broadcast %cst_473 : f32 to vector<32x256xf32>
    %634 = arith.maximumf %632, %633 : vector<32x256xf32>
    %c0_474 = arith.constant 0 : index
    %c0_475 = arith.constant 0 : index
    %c0_476 = arith.constant 0 : index
    %635 = vector.load %arg9[%c0_474, %c0_475, %c0_476] : memref<1x32x256xf32, #tpu.memory_space<vmem>>, vector<1x32x256xf32>
    %636 = vector.shape_cast %635 : vector<1x32x256xf32> to vector<32x256xf32>
    %637 = vector.shape_cast %634 : vector<32x256xf32> to vector<1x32x256xf32>
    tpu.vector_store %arg9[%c0_474, %c0_475, %c0_476], %637 {strides = array<i32>} : memref<1x32x256xf32, #tpu.memory_space<vmem>>, vector<1x32x256xf32>,
    return
  }
  func.func @transform_0(%arg0: i32) -> (i32, i32, i32) {
    %c0_i32 = arith.constant 0 : i32
    %c0_i32_0 = arith.constant 0 : i32
    %c0_i32_1 = arith.constant 0 : i32
    %c0_i32_2 = arith.constant 0 : i32
    return %c0_i32, %c0_i32_0, %c0_i32_1 : i32, i32, i32
  }
  func.func @transform_1(%arg0: i32) -> (i32, i32, i32) {
    %c0_i32 = arith.constant 0 : i32
    %c0_i32_0 = arith.constant 0 : i32
    %c0_i32_1 = arith.constant 0 : i32
    return %arg0, %c0_i32, %c0_i32_0 : i32, i32, i32
  }
  func.func @transform_2(%arg0: i32) -> (i32, i32, i32, i32) {
    %c0_i32 = arith.constant 0 : i32
    %c0_i32_0 = arith.constant 0 : i32
    %c0_i32_1 = arith.constant 0 : i32
    %c0_i32_2 = arith.constant 0 : i32
    %c0_i32_3 = arith.constant 0 : i32
    return %c0_i32, %c0_i32_0, %c0_i32_1, %c0_i32_2 : i32, i32, i32, i32
  }
  func.func @transform_3(%arg0: i32) -> (i32, i32, i32) {
    %c0_i32 = arith.constant 0 : i32
    %c0_i32_0 = arith.constant 0 : i32
    %c0_i32_1 = arith.constant 0 : i32
    %c0_i32_2 = arith.constant 0 : i32
    return %c0_i32, %c0_i32_0, %c0_i32_1 : i32, i32, i32
  }
  func.func @transform_4(%arg0: i32) -> (i32, i32, i32) {
    %c0_i32 = arith.constant 0 : i32
    %c0_i32_0 = arith.constant 0 : i32
    %c0_i32_1 = arith.constant 0 : i32
    %c0_i32_2 = arith.constant 0 : i32
    return %c0_i32, %c0_i32_0, %c0_i32_1 : i32, i32, i32
  }
  func.func @transform_5(%arg0: i32) -> (i32, i32) {
    %c0_i32 = arith.constant 0 : i32
    %c0_i32_0 = arith.constant 0 : i32
    %c0_i32_1 = arith.constant 0 : i32
    return %c0_i32, %c0_i32_0 : i32, i32
  }
  func.func @transform_6(%arg0: i32) -> (i32, i32) {
    %c0_i32 = arith.constant 0 : i32
    %c0_i32_0 = arith.constant 0 : i32
    %c0_i32_1 = arith.constant 0 : i32
    return %c0_i32, %c0_i32_0 : i32, i32
  }
  func.func @transform_7(%arg0: i32) -> (i32, i32) {
    %c0_i32 = arith.constant 0 : i32
    %c0_i32_0 = arith.constant 0 : i32
    %c0_i32_1 = arith.constant 0 : i32
    return %c0_i32, %c0_i32_0 : i32, i32
  }
  func.func @transform_8(%arg0: i32) -> (i32, i32, i32) {
    %c0_i32 = arith.constant 0 : i32
    %c0_i32_0 = arith.constant 0 : i32
    %c0_i32_1 = arith.constant 0 : i32
    return %arg0, %c0_i32, %c0_i32_0 : i32, i32, i32
  }
}

</mosaic_0001>

<llo_original>
// kernel: hgblock_forward.1
$region0: #{hgblock_forward.1}
  #allocation0 [shape = 'u32[]', space=smem, size = 0x4, offset = 0x4, fixed_abs, tag = 'smem constant byte address 0x4 - core index']
  #allocation1 [shape = 'u32[144,128]{1,0:T(1,128)}', space=vmem, size = 0x12000, scoped, tag = 'internal scratch']
  %s0 = inlined_call_operand.vmem [shape: f32[9,1,256], index: 0, kind: input, shape index: {}]
  %s1 = inlined_call_operand.vmem [shape: f32[2,16,256], index: 1, kind: input, shape index: {}]
  %s2 = inlined_call_operand.vmem [shape: f32[6,9,16,16], index: 2, kind: input, shape index: {}]
  %s3 = inlined_call_operand.vmem [shape: f32[6,16,1], index: 3, kind: input, shape index: {}]
  %s4 = inlined_call_operand.vmem [shape: f32[7,16,16], index: 4, kind: input, shape index: {}]
  %s5 = inlined_call_operand.vmem [shape: f32[16,1], index: 5, kind: input, shape index: {}]
  %s6 = inlined_call_operand.vmem [shape: f32[32,16], index: 6, kind: input, shape index: {}]
  %s7 = inlined_call_operand.vmem [shape: f32[32,1], index: 7, kind: input, shape index: {}]
  %s8 = inlined_call_operand.vmem [shape: f32[2,32,256], index: 8, kind: output, shape index: {}]
  %s9 = sld [smem:[#allocation0]]
  $region65: #{hgblock_forward.1} parent=0
    _
  %s11 = ssub.s32 1, %s9
  %s12 = scalar_select 0, %s11, %s9
  loop: start=0, step=1, limit=4
  $region2: #{hgblock_forward.1} parent=0 // loop_pre_header
    _
  $region3: #{hgblock_forward.1} parent=0 // loop_header
    %s14 = sphi 0, %s18
    %p15 = scmp.ge.s32.totalorder %s14, 4
    %s22 = sphi 0, %s22
    %s24 = sphi 0, %s22
    %s25 = sphi 0, %s24
    %s39 = sphi 0, %s25
    %s45 = sphi 0, %s47
    %s48 = sphi 0, %s45
    %s49 = sphi 0, %s48
    %s65 = sphi 0, %s49
    %s69 = sphi 0, %s69
    %s71 = sphi 0, %s69
    %s72 = sphi 0, %s71
    %s86 = sphi 0, %s72
    %s90 = sphi 0, %s90
    %s92 = sphi 0, %s90
    %s93 = sphi 0, %s92
    %s107 = sphi 0, %s93
    %s111 = sphi 0, %s111
    %s113 = sphi 0, %s111
    %s114 = sphi 0, %s113
    %s128 = sphi 0, %s114
    %s132 = sphi 0, %s132
    %s134 = sphi 0, %s132
    %s135 = sphi 0, %s134
    %s149 = sphi 0, %s135
    %s153 = sphi 0, %s153
    %s155 = sphi 0, %s153
    %s156 = sphi 0, %s155
    %s170 = sphi 0, %s156
    %s174 = sphi 0, %s174
    %s176 = sphi 0, %s174
    %s177 = sphi 0, %s176
    %s191 = sphi 0, %s177
    %s197 = sphi 0, %s199
    %s200 = sphi 0, %s197
    %s201 = sphi 0, %s200
    %s217 = sphi 0, %s201
  $region4: #{hgblock_forward.1} parent=0 // loop_header_branch
    %17 = sbr.rel (%p15) target = $region8
  $region5: #{hgblock_forward.1} parent=0 // loop_body
    %s19 = ssub.s32 %s14, 1
    %s20 = ssub.s32 %s14, 2
    %s21 = sadd.s32 %s14, 1
    %s23 = sadd.s32 %s22, 1
    %p26 = scmp.eq.s32.totalorder %s14, 1
    %p27 = scmp.ne.s32.totalorder %s22, %s24
    %p28 = scmp.eq.s32.totalorder %s14, 0
    %p29 = por %p27, %p28
    %p30 = scmp.ne.s32.totalorder %s22, %s24
    %p31 = scmp.eq.s32.totalorder %s19, 1
    %p32 = por %p30, %p31
    %p33 = scmp.ne.s32.totalorder %s24, %s25
    %p34 = scmp.eq.s32.totalorder %s19, 0
    %p35 = por %p33, %p34
    %p36 = scmp.ne.s32.totalorder %s24, %s25
    %p37 = scmp.eq.s32.totalorder %s20, 1
    %p38 = por %p36, %p37
    %p40 = scmp.ne.s32.totalorder %s25, %s39
    %p41 = scmp.eq.s32.totalorder %s20, 0
    %p42 = por %p40, %p41
    %s43 = ssub.s32 %s14, %s21
    %p44 = scmp.eq.s32.totalorder %s43, 0
    %s46 = sadd.s32 %s45, 1
    %s47 = scalar_select %p44, %s45, %s46
    %p50 = pneg %p44
    %p51 = scmp.eq.s32.totalorder %s14, 1
    %p52 = por %p50, %p51
    %p53 = scmp.ne.s32.totalorder %s45, %s48
    %p54 = scmp.eq.s32.totalorder %s14, 0
    %p55 = por %p53, %p54
    %p56 = scmp.ne.s32.totalorder %s45, %s48
    %p57 = scmp.eq.s32.totalorder %s19, 1
    %p58 = por %p56, %p57
    %p59 = scmp.ne.s32.totalorder %s48, %s49
    %p60 = scmp.eq.s32.totalorder %s19, 0
    %p61 = por %p59, %p60
    %p62 = scmp.ne.s32.totalorder %s48, %s49
    %p63 = scmp.eq.s32.totalorder %s20, 1
    %p64 = por %p62, %p63
    %p66 = scmp.ne.s32.totalorder %s49, %s65
    %p67 = scmp.eq.s32.totalorder %s20, 0
    %p68 = por %p66, %p67
    %s70 = sadd.s32 %s69, 1
    %p73 = scmp.eq.s32.totalorder %s14, 1
    %p74 = scmp.ne.s32.totalorder %s69, %s71
    %p75 = scmp.eq.s32.totalorder %s14, 0
    %p76 = por %p74, %p75
    %p77 = scmp.ne.s32.totalorder %s69, %s71
    %p78 = scmp.eq.s32.totalorder %s19, 1
    %p79 = por %p77, %p78
    %p80 = scmp.ne.s32.totalorder %s71, %s72
    %p81 = scmp.eq.s32.totalorder %s19, 0
    %p82 = por %p80, %p81
    %p83 = scmp.ne.s32.totalorder %s71, %s72
    %p84 = scmp.eq.s32.totalorder %s20, 1
    %p85 = por %p83, %p84
    %p87 = scmp.ne.s32.totalorder %s72, %s86
    %p88 = scmp.eq.s32.totalorder %s20, 0
    %p89 = por %p87, %p88
    %s91 = sadd.s32 %s90, 1
    %p94 = scmp.eq.s32.totalorder %s14, 1
    %p95 = scmp.ne.s32.totalorder %s90, %s92
    %p96 = scmp.eq.s32.totalorder %s14, 0
    %p97 = por %p95, %p96
    %p98 = scmp.ne.s32.totalorder %s90, %s92
    %p99 = scmp.eq.s32.totalorder %s19, 1
    %p100 = por %p98, %p99
    %p101 = scmp.ne.s32.totalorder %s92, %s93
    %p102 = scmp.eq.s32.totalorder %s19, 0
    %p103 = por %p101, %p102
    %p104 = scmp.ne.s32.totalorder %s92, %s93
    %p105 = scmp.eq.s32.totalorder %s20, 1
    %p106 = por %p104, %p105
    %p108 = scmp.ne.s32.totalorder %s93, %s107
    %p109 = scmp.eq.s32.totalorder %s20, 0
    %p110 = por %p108, %p109
    %s112 = sadd.s32 %s111, 1
    %p115 = scmp.eq.s32.totalorder %s14, 1
    %p116 = scmp.ne.s32.totalorder %s111, %s113
    %p117 = scmp.eq.s32.totalorder %s14, 0
    %p118 = por %p116, %p117
    %p119 = scmp.ne.s32.totalorder %s111, %s113
    %p120 = scmp.eq.s32.totalorder %s19, 1
    %p121 = por %p119, %p120
    %p122 = scmp.ne.s32.totalorder %s113, %s114
    %p123 = scmp.eq.s32.totalorder %s19, 0
    %p124 = por %p122, %p123
    %p125 = scmp.ne.s32.totalorder %s113, %s114
    %p126 = scmp.eq.s32.totalorder %s20, 1
    %p127 = por %p125, %p126
    %p129 = scmp.ne.s32.totalorder %s114, %s128
    %p130 = scmp.eq.s32.totalorder %s20, 0
    %p131 = por %p129, %p130
    %s133 = sadd.s32 %s132, 1
    %p136 = scmp.eq.s32.totalorder %s14, 1
    %p137 = scmp.ne.s32.totalorder %s132, %s134
    %p138 = scmp.eq.s32.totalorder %s14, 0
    %p139 = por %p137, %p138
    %p140 = scmp.ne.s32.totalorder %s132, %s134
    %p141 = scmp.eq.s32.totalorder %s19, 1
    %p142 = por %p140, %p141
    %p143 = scmp.ne.s32.totalorder %s134, %s135
    %p144 = scmp.eq.s32.totalorder %s19, 0
    %p145 = por %p143, %p144
    %p146 = scmp.ne.s32.totalorder %s134, %s135
    %p147 = scmp.eq.s32.totalorder %s20, 1
    %p148 = por %p146, %p147
    %p150 = scmp.ne.s32.totalorder %s135, %s149
    %p151 = scmp.eq.s32.totalorder %s20, 0
    %p152 = por %p150, %p151
    %s154 = sadd.s32 %s153, 1
    %p157 = scmp.eq.s32.totalorder %s14, 1
    %p158 = scmp.ne.s32.totalorder %s153, %s155
    %p159 = scmp.eq.s32.totalorder %s14, 0
    %p160 = por %p158, %p159
    %p161 = scmp.ne.s32.totalorder %s153, %s155
    %p162 = scmp.eq.s32.totalorder %s19, 1
    %p163 = por %p161, %p162
    %p164 = scmp.ne.s32.totalorder %s155, %s156
    %p165 = scmp.eq.s32.totalorder %s19, 0
    %p166 = por %p164, %p165
    %p167 = scmp.ne.s32.totalorder %s155, %s156
    %p168 = scmp.eq.s32.totalorder %s20, 1
    %p169 = por %p167, %p168
    %p171 = scmp.ne.s32.totalorder %s156, %s170
    %p172 = scmp.eq.s32.totalorder %s20, 0
    %p173 = por %p171, %p172
    %s175 = sadd.s32 %s174, 1
    %p178 = scmp.eq.s32.totalorder %s14, 1
    %p179 = scmp.ne.s32.totalorder %s174, %s176
    %p180 = scmp.eq.s32.totalorder %s14, 0
    %p181 = por %p179, %p180
    %p182 = scmp.ne.s32.totalorder %s174, %s176
    %p183 = scmp.eq.s32.totalorder %s19, 1
    %p184 = por %p182, %p183
    %p185 = scmp.ne.s32.totalorder %s176, %s177
    %p186 = scmp.eq.s32.totalorder %s19, 0
    %p187 = por %p185, %p186
    %p188 = scmp.ne.s32.totalorder %s176, %s177
    %p189 = scmp.eq.s32.totalorder %s20, 1
    %p190 = por %p188, %p189
    %p192 = scmp.ne.s32.totalorder %s177, %s191
    %p193 = scmp.eq.s32.totalorder %s20, 0
    %p194 = por %p192, %p193
    %s195 = ssub.s32 %s14, %s21
    %p196 = scmp.eq.s32.totalorder %s195, 0
    %s198 = sadd.s32 %s197, 1
    %s199 = scalar_select %p196, %s197, %s198
    %p202 = pneg %p196
    %p203 = scmp.eq.s32.totalorder %s14, 1
    %p204 = por %p202, %p203
    %p205 = scmp.ne.s32.totalorder %s197, %s200
    %p206 = scmp.eq.s32.totalorder %s14, 0
    %p207 = por %p205, %p206
    %p208 = scmp.ne.s32.totalorder %s197, %s200
    %p209 = scmp.eq.s32.totalorder %s19, 1
    %p210 = por %p208, %p209
    %p211 = scmp.ne.s32.totalorder %s200, %s201
    %p212 = scmp.eq.s32.totalorder %s19, 0
    %p213 = por %p211, %p212
    %p214 = scmp.ne.s32.totalorder %s200, %s201
    %p215 = scmp.eq.s32.totalorder %s20, 1
    %p216 = por %p214, %p215
    %p218 = scmp.ne.s32.totalorder %s201, %s217
    %p219 = scmp.eq.s32.totalorder %s20, 0
    %p220 = por %p218, %p219
    %p221 = scmp.le.s32.totalorder 1, %s14
    %p222 = scmp.lt.s32.totalorder %s14, 3
    %p223 = pnand %p221, %p222
    %p224 = pneg %p223
    // Predicated region
    $region9: #{hgblock_forward.1} parent=5 // pred_check
      _
    $region10: #{hgblock_forward.1} parent=5 // pred_check_branch
      %226 = sbr.rel (%p223) target = $region12
    $region11: #{hgblock_forward.1} parent=5 // pred_region
      %s227 = ssub.s32 %s14, 1
      // Predicated region
      $region13: #{hgblock_forward.1} parent=11 // pred_check
        %p228 = pneg %p35
      $region14: #{hgblock_forward.1} parent=11 // pred_check_branch
        %230 = sbr.rel (%p228) target = $region16
      $region15: #{hgblock_forward.1} parent=11 // pred_region
        _
      $region16: #{hgblock_forward.1} parent=11 // pred_fallthru
        _
      // Predicated region
      $region17: #{hgblock_forward.1} parent=11 // pred_check
        %p231 = pneg %p82
      $region18: #{hgblock_forward.1} parent=11 // pred_check_branch
        %233 = sbr.rel (%p231) target = $region20
      $region19: #{hgblock_forward.1} parent=11 // pred_region
        _
      $region20: #{hgblock_forward.1} parent=11 // pred_fallthru
        _
      // Predicated region
      $region21: #{hgblock_forward.1} parent=11 // pred_check
        %p234 = pneg %p103
      $region22: #{hgblock_forward.1} parent=11 // pred_check_branch
        %236 = sbr.rel (%p234) target = $region24
      $region23: #{hgblock_forward.1} parent=11 // pred_region
        _
      $region24: #{hgblock_forward.1} parent=11 // pred_fallthru
        _
      // Predicated region
      $region25: #{hgblock_forward.1} parent=11 // pred_check
        %p237 = pneg %p124
      $region26: #{hgblock_forward.1} parent=11 // pred_check_branch
        %239 = sbr.rel (%p237) target = $region28
      $region27: #{hgblock_forward.1} parent=11 // pred_region
        _
      $region28: #{hgblock_forward.1} parent=11 // pred_fallthru
        _
      // Predicated region
      $region29: #{hgblock_forward.1} parent=11 // pred_check
        %p240 = pneg %p145
      $region30: #{hgblock_forward.1} parent=11 // pred_check_branch
        %242 = sbr.rel (%p240) target = $region32
      $region31: #{hgblock_forward.1} parent=11 // pred_region
        _
      $region32: #{hgblock_forward.1} parent=11 // pred_fallthru
        _
      // Predicated region
      $region33: #{hgblock_forward.1} parent=11 // pred_check
        %p243 = pneg %p166
      $region34: #{hgblock_forward.1} parent=11 // pred_check_branch
        %245 = sbr.rel (%p243) target = $region36
      $region35: #{hgblock_forward.1} parent=11 // pred_region
        _
      $region36: #{hgblock_forward.1} parent=11 // pred_fallthru
        _
      // Predicated region
      $region37: #{hgblock_forward.1} parent=11 // pred_check
        %p246 = pneg %p187
      $region38: #{hgblock_forward.1} parent=11 // pred_check_branch
        %248 = sbr.rel (%p246) target = $region40
      $region39: #{hgblock_forward.1} parent=11 // pred_region
        _
      $region40: #{hgblock_forward.1} parent=11 // pred_fallthru
        _
    $region12: #{hgblock_forward.1} parent=5 // pred_fallthru
      _
    %p249 = scmp.lt.s32.totalorder %s14, 2
    // Predicated region
    $region41: #{hgblock_forward.1} parent=5 // pred_check
      %p250 = pneg %p249
    $region42: #{hgblock_forward.1} parent=5 // pred_check_branch
      %252 = sbr.rel (%p250) target = $region44
    $region43: #{hgblock_forward.1} parent=5 // pred_region
      // Predicated region
      $region45: #{hgblock_forward.1} parent=43 // pred_check
        %p253 = pneg %p55
      $region46: #{hgblock_forward.1} parent=43 // pred_check_branch
        %255 = sbr.rel (%p253) target = $region48
      $region47: #{hgblock_forward.1} parent=43 // pred_region
        %p256 = scmp.lt.s32.totalorder %s14, 1
        %s257 = scalar_select %p256, %s14, 1
        %s258 = smul.addr %s257, 4
        %s259 = smul.addr %s258, 8
        %s260 = scalar_lea.vmem %s1, %s259
      $region48: #{hgblock_forward.1} parent=43 // pred_fallthru
        _
    $region44: #{hgblock_forward.1} parent=5 // pred_fallthru
      _
    %p261 = scmp.le.s32.totalorder 1, %s14
    %p262 = scmp.lt.s32.totalorder %s14, 3
    %p263 = pnand %p261, %p262
    %p264 = pneg %p263
    // Predicated region
    $region49: #{hgblock_forward.1} parent=5 // pred_check
      _
    $region50: #{hgblock_forward.1} parent=5 // pred_check_branch
      %266 = sbr.rel (%p263) target = $region52
    $region51: #{hgblock_forward.1} parent=5 // pred_region
      %s267 = ssub.s32 %s14, 1
      %p268 = pneg %p35
      %p269 = pneg %p32
      %p270 = scmp.lt.s32.totalorder %s19, 1
      %s271 = scalar_select %p270, %s19, 1
      %s272 = smul.addr %s271, 4
      %s273 = smul.addr %s272, 8
      %s274 = scalar_lea.vmem %s1, %s273
      %p275 = pneg %p61
      %p276 = pneg %p58
      %p277 = pneg %p82
      %p278 = pneg %p79
      %p279 = pneg %p103
      %p280 = pneg %p100
      %p281 = pneg %p124
      %p282 = pneg %p121
      %p283 = pneg %p145
      %p284 = pneg %p142
      %p285 = pneg %p166
      %p286 = pneg %p163
      %p287 = pneg %p187
      %p288 = pneg %p184
      %p289 = pneg %p213
      %p290 = pneg %p210
      %p291 = scmp.lt.s32.totalorder %s19, 1
      %s292 = scalar_select %p291, %s19, 1
      %s293 = smul.addr %s292, 8
      %s294 = smul.addr %s293, 8
      %s295 = scalar_lea.vmem %s8, %s294
      %p296 = scmp.lt.s32.totalorder %s19, 1
      %s297 = scalar_select %p296, %s19, 1
      %s298 = smul.addr %s297, 4
      %s299 = smul.addr %s298, 8
      %s300 = scalar_lea.vmem %s1, %s299
      %p301 = scmp.lt.s32.totalorder %s19, 1
      %s302 = scalar_select %p301, %s19, 1
      %s303 = smul.addr %s302, 8
      %s304 = smul.addr %s303, 8
      %s305 = scalar_lea.vmem %s8, %s304
      %v306 = vld [vmem:[%s300] sm:$0xff]
      %v307 = vld [vmem:[%s300 + $0x8] sm:$0xff]
      %v308 = vld [vmem:[%s300 + $0x10] sm:$0xff]
      %v309 = vld [vmem:[%s300 + $0x18] sm:$0xff]
      %v310 = vld [vmem:[%s4] sm:$0xff]
      %v311 = vld [vmem:[%s4 + $0x8] sm:$0xff]
      %314 = vrot.lane.b32.xlu0 %v307, 17
      %v315 = vpop.permute.xlu0 %314
      %316 = vrot.lane.b32.xlu0 %v309, 17
      %v317 = vpop.permute.xlu0 %316
      %322 = vrot.lane.b32.xlu0 %v306, 17
      %v323 = vpop.permute.xlu0 %322
      %324 = vrot.lane.b32.xlu0 %v308, 17
      %v325 = vpop.permute.xlu0 %324
      %vm326 = vcmask 138240
      %v327 = vsel %vm326, %v323, %v315
      %v328 = vsel %vm326, %v325, %v317
      %v333 = vsel %vm326, %v315, %v323
      %v334 = vsel %vm326, %v317, %v325
      %v335 = vld [vmem:[%s2] sm:$0xff]
      %v336 = vld [vmem:[%s2 + $0x8] sm:$0xff]
      %vm337 = vcmask 130048
      %v339 = vsel %vm337, %v335, 0
      %v342 = vsel %vm337, %v336, 0
      %344 = vmatprep.subr.mxu0 0.0
      %345 = vmatpush1.msra.mxu0 0.0
      %346 = vmatprep.subr.mxu0 0.0
      %347 = vmatpush1.msra.mxu0 0.0
      %348 = vmatprep.subr.mxu0 0.0
      %349 = vmatpush1.msra.mxu0 0.0
      %350 = vmatprep.subr.mxu0 0.0
      %351 = vmatpush1.msra.mxu0 0.0
      %352 = vmatprep.subr.mxu0 0.0
      %353 = vmatpush1.msra.mxu0 0.0
      %354 = vmatprep.subr.mxu0 0.0
      %355 = vmatpush1.msra.mxu0 0.0
      %356 = vmatprep.subr.mxu0 0.0
      %357 = vmatpush1.msra.mxu0 0.0
      %358 = vmatprep.subr.mxu0 0.0
      %359 = vmatpush1.msra.mxu0 0.0
      %360 = vmatprep.subr.mxu0 0.0
      %361 = vmatpush1.msra.mxu0 0.0
      %362 = vmatprep.subr.mxu0 0.0
      %363 = vmatpush1.msra.mxu0 0.0
      %364 = vmatprep.subr.mxu0 0.0
      %365 = vmatpush1.msra.mxu0 0.0
      %366 = vmatprep.subr.mxu0 0.0
      %367 = vmatpush1.msra.mxu0 0.0
      %368 = vmatprep.subr.mxu0 0.0
      %369 = vmatpush1.msra.mxu0 0.0
      %370 = vmatprep.subr.mxu0 0.0
      %371 = vmatpush1.msra.mxu0 0.0
      %372 = vmatprep.subr.mxu0 %v328
      %373 = vmatpush1.msra.mxu0 %v334
      %374 = vmatprep.subr.mxu0 %v327
      %375 = vmatpush1.msra.mxu0 %v333
      %376 = vmatprep.subr.mxu0 0.0
      %377 = vmatpush2.msra.mxu0 0.0
      %378 = vmatprep.subr.mxu0 0.0
      %379 = vmatpush2.msra.mxu0 0.0
      %380 = vmatprep.subr.mxu0 0.0
      %381 = vmatpush2.msra.mxu0 0.0
      %382 = vmatprep.subr.mxu0 0.0
      %383 = vmatpush2.msra.mxu0 0.0
      %384 = vmatprep.subr.mxu0 0.0
      %385 = vmatpush2.msra.mxu0 0.0
      %386 = vmatprep.subr.mxu0 0.0
      %387 = vmatpush2.msra.mxu0 0.0
      %388 = vmatprep.subr.mxu0 0.0
      %389 = vmatpush2.msra.mxu0 0.0
      %390 = vmatprep.subr.mxu0 0.0
      %391 = vmatpush2.msra.mxu0 0.0
      %392 = vmatprep.subr.mxu0 0.0
      %393 = vmatpush2.msra.mxu0 0.0
      %394 = vmatprep.subr.mxu0 0.0
      %395 = vmatpush2.msra.mxu0 0.0
      %396 = vmatprep.subr.mxu0 0.0
      %397 = vmatpush2.msra.mxu0 0.0
      %398 = vmatprep.subr.mxu0 0.0
      %399 = vmatpush2.msra.mxu0 0.0
      %400 = vmatprep.subr.mxu0 0.0
      %401 = vmatpush2.msra.mxu0 0.0
      %402 = vmatprep.subr.mxu0 0.0
      %403 = vmatpush2.msra.mxu0 0.0
      %404 = vmatprep.subr.mxu0 0.0
      %405 = vmatpush2.msra.mxu0 0.0
      %406 = vmatprep.subr.mxu0 0.0
      %407 = vmatpush2.msra.mxu0 0.0
      %408 = vmatprep.mubr.f32.mxu0 0.0
      %409 = vmatmul.mubr.f32.gmra.mxu0 %v339
      %v410 = vpop.f32.mrf.mxu0
      %v411 = vadd.f32 0.0, %v410
      %v412 = vpop.f32.mrf.mxu0
      %v413 = vadd.f32 0.0, %v412
      %414 = vmatprep.mubr.f32.mxu0 0.0
      %415 = vmatmul.mubr.f32.gmra.mxu0 %v342
      %v416 = vpop.f32.mrf.mxu0
      %v417 = vadd.f32 0.0, %v416
      %v418 = vpop.f32.mrf.mxu0
      %v419 = vadd.f32 0.0, %v418
      %420 = vdwg.mxu0
      %v421 = vld [vmem:[%s0] sm:$0x3]
      %v423 = vlaneseq
      %v424 = vshrl.u32 %v423, 7
      %v425 = vsub.s32 0, %v424
      %v426 = vrot.slane %v421, %v425
      %v427 = vlaneseq
      %v428 = vshrl.u32 %v427, 7
      %v429 = vsub.s32 1, %v428
      %v430 = vrot.slane %v421, %v429
      %v433 = vmul.f32 %v411, %v426
      %v434 = vmul.f32 %v413, %v430
      %v435 = vmul.f32 %v417, %v426
      %v436 = vmul.f32 %v419, %v430
      %v437 = vadd.f32 %v433, 0.0
      %v438 = vadd.f32 %v434, 0.0
      %v439 = vadd.f32 %v435, 0.0
      %v440 = vadd.f32 %v436, 0.0
      %441 = vrot.lane.b32.xlu0 %v307, 16
      %v442 = vpop.permute.xlu0 %441
      %443 = vrot.lane.b32.xlu0 %v309, 16
      %v444 = vpop.permute.xlu0 %443
      %447 = vrot.lane.b32.xlu0 %v306, 16
      %v448 = vpop.permute.xlu0 %447
      %449 = vrot.lane.b32.xlu0 %v308, 16
      %v450 = vpop.permute.xlu0 %449
      %v451 = vsel %vm337, %v448, %v442
      %v452 = vsel %vm337, %v450, %v444
      %v457 = vsel %vm337, %v442, %v448
      %v458 = vsel %vm337, %v444, %v450
      %s459 = scalar_lea.vmem %s2, 16
      %v460 = vld [vmem:[%s459] sm:$0xff]
      %v461 = vld [vmem:[%s459 + $0x8] sm:$0xff]
      %v463 = vsel %vm337, %v460, 0
      %v466 = vsel %vm337, %v461, 0
      %468 = vmatprep.subr.mxu0 0.0
      %469 = vmatpush1.msra.mxu0 0.0
      %470 = vmatprep.subr.mxu0 0.0
      %471 = vmatpush1.msra.mxu0 0.0
      %472 = vmatprep.subr.mxu0 0.0
      %473 = vmatpush1.msra.mxu0 0.0
      %474 = vmatprep.subr.mxu0 0.0
      %475 = vmatpush1.msra.mxu0 0.0
      %476 = vmatprep.subr.mxu0 0.0
      %477 = vmatpush1.msra.mxu0 0.0
      %478 = vmatprep.subr.mxu0 0.0
      %479 = vmatpush1.msra.mxu0 0.0
      %480 = vmatprep.subr.mxu0 0.0
      %481 = vmatpush1.msra.mxu0 0.0
      %482 = vmatprep.subr.mxu0 0.0
      %483 = vmatpush1.msra.mxu0 0.0
      %484 = vmatprep.subr.mxu0 0.0
      %485 = vmatpush1.msra.mxu0 0.0
      %486 = vmatprep.subr.mxu0 0.0
      %487 = vmatpush1.msra.mxu0 0.0
      %488 = vmatprep.subr.mxu0 0.0
      %489 = vmatpush1.msra.mxu0 0.0
      %490 = vmatprep.subr.mxu0 0.0
      %491 = vmatpush1.msra.mxu0 0.0
      %492 = vmatprep.subr.mxu0 0.0
      %493 = vmatpush1.msra.mxu0 0.0
      %494 = vmatprep.subr.mxu0 0.0
      %495 = vmatpush1.msra.mxu0 0.0
      %496 = vmatprep.subr.mxu0 %v452
      %497 = vmatpush1.msra.mxu0 %v458
      %498 = vmatprep.subr.mxu0 %v451
      %499 = vmatpush1.msra.mxu0 %v457
      %500 = vmatprep.subr.mxu0 0.0
      %501 = vmatpush2.msra.mxu0 0.0
      %502 = vmatprep.subr.mxu0 0.0
      %503 = vmatpush2.msra.mxu0 0.0
      %504 = vmatprep.subr.mxu0 0.0
      %505 = vmatpush2.msra.mxu0 0.0
      %506 = vmatprep.subr.mxu0 0.0
      %507 = vmatpush2.msra.mxu0 0.0
      %508 = vmatprep.subr.mxu0 0.0
      %509 = vmatpush2.msra.mxu0 0.0
      %510 = vmatprep.subr.mxu0 0.0
      %511 = vmatpush2.msra.mxu0 0.0
      %512 = vmatprep.subr.mxu0 0.0
      %513 = vmatpush2.msra.mxu0 0.0
      %514 = vmatprep.subr.mxu0 0.0
      %515 = vmatpush2.msra.mxu0 0.0
      %516 = vmatprep.subr.mxu0 0.0
      %517 = vmatpush2.msra.mxu0 0.0
      %518 = vmatprep.subr.mxu0 0.0
      %519 = vmatpush2.msra.mxu0 0.0
      %520 = vmatprep.subr.mxu0 0.0
      %521 = vmatpush2.msra.mxu0 0.0
      %522 = vmatprep.subr.mxu0 0.0
      %523 = vmatpush2.msra.mxu0 0.0
      %524 = vmatprep.subr.mxu0 0.0
      %525 = vmatpush2.msra.mxu0 0.0
      %526 = vmatprep.subr.mxu0 0.0
      %527 = vmatpush2.msra.mxu0 0.0
      %528 = vmatprep.subr.mxu0 0.0
      %529 = vmatpush2.msra.mxu0 0.0
      %530 = vmatprep.subr.mxu0 0.0
      %531 = vmatpush2.msra.mxu0 0.0
      %532 = vmatprep.mubr.f32.mxu0 0.0
      %533 = vmatmul.mubr.f32.gmra.mxu0 %v463
      %v534 = vpop.f32.mrf.mxu0
      %v535 = vadd.f32 0.0, %v534
      %v536 = vpop.f32.mrf.mxu0
      %v537 = vadd.f32 0.0, %v536
      %538 = vmatprep.mubr.f32.mxu0 0.0
      %539 = vmatmul.mubr.f32.gmra.mxu0 %v466
      %v540 = vpop.f32.mrf.mxu0
      %v541 = vadd.f32 0.0, %v540
      %v542 = vpop.f32.mrf.mxu0
      %v543 = vadd.f32 0.0, %v542
      %544 = vdwg.mxu0
      %s545 = scalar_lea.vmem %s0, 2
      %v546 = vld [vmem:[%s545] sm:$0x3]
      %v548 = vlaneseq
      %v549 = vshrl.u32 %v548, 7
      %v550 = vsub.s32 0, %v549
      %v551 = vrot.slane %v546, %v550
      %v552 = vlaneseq
      %v553 = vshrl.u32 %v552, 7
      %v554 = vsub.s32 1, %v553
      %v555 = vrot.slane %v546, %v554
      %v558 = vmul.f32 %v535, %v551
      %v559 = vmul.f32 %v537, %v555
      %v560 = vmul.f32 %v541, %v551
      %v561 = vmul.f32 %v543, %v555
      %v562 = vadd.f32 %v437, %v558
      %v563 = vadd.f32 %v438, %v559
      %v564 = vadd.f32 %v439, %v560
      %v565 = vadd.f32 %v440, %v561
      %566 = vrot.lane.b32.xlu0 %v307, 15
      %v567 = vpop.permute.xlu0 %566
      %568 = vrot.lane.b32.xlu0 %v309, 15
      %v569 = vpop.permute.xlu0 %568
      %572 = vrot.lane.b32.xlu0 %v306, 15
      %v573 = vpop.permute.xlu0 %572
      %574 = vrot.lane.b32.xlu0 %v308, 15
      %v575 = vpop.permute.xlu0 %574
      %vm576 = vcmask 121856
      %v577 = vsel %vm576, %v573, %v567
      %v578 = vsel %vm576, %v575, %v569
      %v583 = vsel %vm576, %v567, %v573
      %v584 = vsel %vm576, %v569, %v575
      %s585 = scalar_lea.vmem %s2, 32
      %v586 = vld [vmem:[%s585] sm:$0xff]
      %v587 = vld [vmem:[%s585 + $0x8] sm:$0xff]
      %v589 = vsel %vm337, %v586, 0
      %v592 = vsel %vm337, %v587, 0
      %594 = vmatprep.subr.mxu0 0.0
      %595 = vmatpush1.msra.mxu0 0.0
      %596 = vmatprep.subr.mxu0 0.0
      %597 = vmatpush1.msra.mxu0 0.0
      %598 = vmatprep.subr.mxu0 0.0
      %599 = vmatpush1.msra.mxu0 0.0
      %600 = vmatprep.subr.mxu0 0.0
      %601 = vmatpush1.msra.mxu0 0.0
      %602 = vmatprep.subr.mxu0 0.0
      %603 = vmatpush1.msra.mxu0 0.0
      %604 = vmatprep.subr.mxu0 0.0
      %605 = vmatpush1.msra.mxu0 0.0
      %606 = vmatprep.subr.mxu0 0.0
      %607 = vmatpush1.msra.mxu0 0.0
      %608 = vmatprep.subr.mxu0 0.0
      %609 = vmatpush1.msra.mxu0 0.0
      %610 = vmatprep.subr.mxu0 0.0
      %611 = vmatpush1.msra.mxu0 0.0
      %612 = vmatprep.subr.mxu0 0.0
      %613 = vmatpush1.msra.mxu0 0.0
      %614 = vmatprep.subr.mxu0 0.0
      %615 = vmatpush1.msra.mxu0 0.0
      %616 = vmatprep.subr.mxu0 0.0
      %617 = vmatpush1.msra.mxu0 0.0
      %618 = vmatprep.subr.mxu0 0.0
      %619 = vmatpush1.msra.mxu0 0.0
      %620 = vmatprep.subr.mxu0 0.0
      %621 = vmatpush1.msra.mxu0 0.0
      %622 = vmatprep.subr.mxu0 %v578
      %623 = vmatpush1.msra.mxu0 %v584
      %624 = vmatprep.subr.mxu0 %v577
      %625 = vmatpush1.msra.mxu0 %v583
      %626 = vmatprep.subr.mxu0 0.0
      %627 = vmatpush2.msra.mxu0 0.0
      %628 = vmatprep.subr.mxu0 0.0
      %629 = vmatpush2.msra.mxu0 0.0
      %630 = vmatprep.subr.mxu0 0.0
      %631 = vmatpush2.msra.mxu0 0.0
      %632 = vmatprep.subr.mxu0 0.0
      %633 = vmatpush2.msra.mxu0 0.0
      %634 = vmatprep.subr.mxu0 0.0
      %635 = vmatpush2.msra.mxu0 0.0
      %636 = vmatprep.subr.mxu0 0.0
      %637 = vmatpush2.msra.mxu0 0.0
      %638 = vmatprep.subr.mxu0 0.0
      %639 = vmatpush2.msra.mxu0 0.0
      %640 = vmatprep.subr.mxu0 0.0
      %641 = vmatpush2.msra.mxu0 0.0
      %642 = vmatprep.subr.mxu0 0.0
      %643 = vmatpush2.msra.mxu0 0.0
      %644 = vmatprep.subr.mxu0 0.0
      %645 = vmatpush2.msra.mxu0 0.0
      %646 = vmatprep.subr.mxu0 0.0
      %647 = vmatpush2.msra.mxu0 0.0
      %648 = vmatprep.subr.mxu0 0.0
      %649 = vmatpush2.msra.mxu0 0.0
      %650 = vmatprep.subr.mxu0 0.0
      %651 = vmatpush2.msra.mxu0 0.0
      %652 = vmatprep.subr.mxu0 0.0
      %653 = vmatpush2.msra.mxu0 0.0
      %654 = vmatprep.subr.mxu0 0.0
      %655 = vmatpush2.msra.mxu0 0.0
      %656 = vmatprep.subr.mxu0 0.0
      %657 = vmatpush2.msra.mxu0 0.0
      %658 = vmatprep.mubr.f32.mxu0 0.0
      %659 = vmatmul.mubr.f32.gmra.mxu0 %v589
      %v660 = vpop.f32.mrf.mxu0
      %v661 = vadd.f32 0.0, %v660
      %v662 = vpop.f32.mrf.mxu0
      %v663 = vadd.f32 0.0, %v662
      %664 = vmatprep.mubr.f32.mxu0 0.0
      %665 = vmatmul.mubr.f32.gmra.mxu0 %v592
      %v666 = vpop.f32.mrf.mxu0
      %v667 = vadd.f32 0.0, %v666
      %v668 = vpop.f32.mrf.mxu0
      %v669 = vadd.f32 0.0, %v668
      %670 = vdwg.mxu0
      %s671 = scalar_lea.vmem %s0, 4
      %v672 = vld [vmem:[%s671] sm:$0x3]
      %v674 = vlaneseq
      %v675 = vshrl.u32 %v674, 7
      %v676 = vsub.s32 0, %v675
      %v677 = vrot.slane %v672, %v676
      %v678 = vlaneseq
      %v679 = vshrl.u32 %v678, 7
      %v680 = vsub.s32 1, %v679
      %v681 = vrot.slane %v672, %v680
      %v684 = vmul.f32 %v661, %v677
      %v685 = vmul.f32 %v663, %v681
      %v686 = vmul.f32 %v667, %v677
      %v687 = vmul.f32 %v669, %v681
      %v688 = vadd.f32 %v562, %v684
      %v689 = vadd.f32 %v563, %v685
      %v690 = vadd.f32 %v564, %v686
      %v691 = vadd.f32 %v565, %v687
      %692 = vrot.lane.b32.xlu0 %v307, 1
      %v693 = vpop.permute.xlu0 %692
      %694 = vrot.lane.b32.xlu0 %v309, 1
      %v695 = vpop.permute.xlu0 %694
      %698 = vrot.lane.b32.xlu0 %v306, 1
      %v699 = vpop.permute.xlu0 %698
      %700 = vrot.lane.b32.xlu0 %v308, 1
      %v701 = vpop.permute.xlu0 %700
      %vm702 = vcmask 7168
      %v703 = vsel %vm702, %v699, %v693
      %v704 = vsel %vm702, %v701, %v695
      %v709 = vsel %vm702, %v693, %v699
      %v710 = vsel %vm702, %v695, %v701
      %s711 = scalar_lea.vmem %s2, 48
      %v712 = vld [vmem:[%s711] sm:$0xff]
      %v713 = vld [vmem:[%s711 + $0x8] sm:$0xff]
      %v715 = vsel %vm337, %v712, 0
      %v718 = vsel %vm337, %v713, 0
      %720 = vmatprep.subr.mxu0 0.0
      %721 = vmatpush1.msra.mxu0 0.0
      %722 = vmatprep.subr.mxu0 0.0
      %723 = vmatpush1.msra.mxu0 0.0
      %724 = vmatprep.subr.mxu0 0.0
      %725 = vmatpush1.msra.mxu0 0.0
      %726 = vmatprep.subr.mxu0 0.0
      %727 = vmatpush1.msra.mxu0 0.0
      %728 = vmatprep.subr.mxu0 0.0
      %729 = vmatpush1.msra.mxu0 0.0
      %730 = vmatprep.subr.mxu0 0.0
      %731 = vmatpush1.msra.mxu0 0.0
      %732 = vmatprep.subr.mxu0 0.0
      %733 = vmatpush1.msra.mxu0 0.0
      %734 = vmatprep.subr.mxu0 0.0
      %735 = vmatpush1.msra.mxu0 0.0
      %736 = vmatprep.subr.mxu0 0.0
      %737 = vmatpush1.msra.mxu0 0.0
      %738 = vmatprep.subr.mxu0 0.0
      %739 = vmatpush1.msra.mxu0 0.0
      %740 = vmatprep.subr.mxu0 0.0
      %741 = vmatpush1.msra.mxu0 0.0
      %742 = vmatprep.subr.mxu0 0.0
      %743 = vmatpush1.msra.mxu0 0.0
      %744 = vmatprep.subr.mxu0 0.0
      %745 = vmatpush1.msra.mxu0 0.0
      %746 = vmatprep.subr.mxu0 0.0
      %747 = vmatpush1.msra.mxu0 0.0
      %748 = vmatprep.subr.mxu0 %v704
      %749 = vmatpush1.msra.mxu0 %v710
      %750 = vmatprep.subr.mxu0 %v703
      %751 = vmatpush1.msra.mxu0 %v709
      %752 = vmatprep.subr.mxu0 0.0
      %753 = vmatpush2.msra.mxu0 0.0
      %754 = vmatprep.subr.mxu0 0.0
      %755 = vmatpush2.msra.mxu0 0.0
      %756 = vmatprep.subr.mxu0 0.0
      %757 = vmatpush2.msra.mxu0 0.0
      %758 = vmatprep.subr.mxu0 0.0
      %759 = vmatpush2.msra.mxu0 0.0
      %760 = vmatprep.subr.mxu0 0.0
      %761 = vmatpush2.msra.mxu0 0.0
      %762 = vmatprep.subr.mxu0 0.0
      %763 = vmatpush2.msra.mxu0 0.0
      %764 = vmatprep.subr.mxu0 0.0
      %765 = vmatpush2.msra.mxu0 0.0
      %766 = vmatprep.subr.mxu0 0.0
      %767 = vmatpush2.msra.mxu0 0.0
      %768 = vmatprep.subr.mxu0 0.0
      %769 = vmatpush2.msra.mxu0 0.0
      %770 = vmatprep.subr.mxu0 0.0
      %771 = vmatpush2.msra.mxu0 0.0
      %772 = vmatprep.subr.mxu0 0.0
      %773 = vmatpush2.msra.mxu0 0.0
      %774 = vmatprep.subr.mxu0 0.0
      %775 = vmatpush2.msra.mxu0 0.0
      %776 = vmatprep.subr.mxu0 0.0
      %777 = vmatpush2.msra.mxu0 0.0
      %778 = vmatprep.subr.mxu0 0.0
      %779 = vmatpush2.msra.mxu0 0.0
      %780 = vmatprep.subr.mxu0 0.0
      %781 = vmatpush2.msra.mxu0 0.0
      %782 = vmatprep.subr.mxu0 0.0
      %783 = vmatpush2.msra.mxu0 0.0
      %784 = vmatprep.mubr.f32.mxu0 0.0
      %785 = vmatmul.mubr.f32.gmra.mxu0 %v715
      %v786 = vpop.f32.mrf.mxu0
      %v787 = vadd.f32 0.0, %v786
      %v788 = vpop.f32.mrf.mxu0
      %v789 = vadd.f32 0.0, %v788
      %790 = vmatprep.mubr.f32.mxu0 0.0
      %791 = vmatmul.mubr.f32.gmra.mxu0 %v718
      %v792 = vpop.f32.mrf.mxu0
      %v793 = vadd.f32 0.0, %v792
      %v794 = vpop.f32.mrf.mxu0
      %v795 = vadd.f32 0.0, %v794
      %796 = vdwg.mxu0
      %s797 = scalar_lea.vmem %s0, 6
      %v798 = vld [vmem:[%s797] sm:$0x3]
      %v800 = vlaneseq
      %v801 = vshrl.u32 %v800, 7
      %v802 = vsub.s32 0, %v801
      %v803 = vrot.slane %v798, %v802
      %v804 = vlaneseq
      %v805 = vshrl.u32 %v804, 7
      %v806 = vsub.s32 1, %v805
      %v807 = vrot.slane %v798, %v806
      %v810 = vmul.f32 %v787, %v803
      %v811 = vmul.f32 %v789, %v807
      %v812 = vmul.f32 %v793, %v803
      %v813 = vmul.f32 %v795, %v807
      %v814 = vadd.f32 %v688, %v810
      %v815 = vadd.f32 %v689, %v811
      %v816 = vadd.f32 %v690, %v812
      %v817 = vadd.f32 %v691, %v813
      %s818 = scalar_lea.vmem %s2, 64
      %v819 = vld [vmem:[%s818] sm:$0xff]
      %v820 = vld [vmem:[%s818 + $0x8] sm:$0xff]
      %v822 = vsel %vm337, %v819, 0
      %v825 = vsel %vm337, %v820, 0
      %827 = vmatprep.subr.mxu0 0.0
      %828 = vmatpush1.msra.mxu0 0.0
      %829 = vmatprep.subr.mxu0 0.0
      %830 = vmatpush1.msra.mxu0 0.0
      %831 = vmatprep.subr.mxu0 0.0
      %832 = vmatpush1.msra.mxu0 0.0
      %833 = vmatprep.subr.mxu0 0.0
      %834 = vmatpush1.msra.mxu0 0.0
      %835 = vmatprep.subr.mxu0 0.0
      %836 = vmatpush1.msra.mxu0 0.0
      %837 = vmatprep.subr.mxu0 0.0
      %838 = vmatpush1.msra.mxu0 0.0
      %839 = vmatprep.subr.mxu0 0.0
      %840 = vmatpush1.msra.mxu0 0.0
      %841 = vmatprep.subr.mxu0 0.0
      %842 = vmatpush1.msra.mxu0 0.0
      %843 = vmatprep.subr.mxu0 0.0
      %844 = vmatpush1.msra.mxu0 0.0
      %845 = vmatprep.subr.mxu0 0.0
      %846 = vmatpush1.msra.mxu0 0.0
      %847 = vmatprep.subr.mxu0 0.0
      %848 = vmatpush1.msra.mxu0 0.0
      %849 = vmatprep.subr.mxu0 0.0
      %850 = vmatpush1.msra.mxu0 0.0
      %851 = vmatprep.subr.mxu0 0.0
      %852 = vmatpush1.msra.mxu0 0.0
      %853 = vmatprep.subr.mxu0 0.0
      %854 = vmatpush1.msra.mxu0 0.0
      %855 = vmatprep.subr.mxu0 %v309
      %856 = vmatpush1.msra.mxu0 %v308
      %857 = vmatprep.subr.mxu0 %v307
      %858 = vmatpush1.msra.mxu0 %v306
      %859 = vmatprep.subr.mxu0 0.0
      %860 = vmatpush2.msra.mxu0 0.0
      %861 = vmatprep.subr.mxu0 0.0
      %862 = vmatpush2.msra.mxu0 0.0
      %863 = vmatprep.subr.mxu0 0.0
      %864 = vmatpush2.msra.mxu0 0.0
      %865 = vmatprep.subr.mxu0 0.0
      %866 = vmatpush2.msra.mxu0 0.0
      %867 = vmatprep.subr.mxu0 0.0
      %868 = vmatpush2.msra.mxu0 0.0
      %869 = vmatprep.subr.mxu0 0.0
      %870 = vmatpush2.msra.mxu0 0.0
      %871 = vmatprep.subr.mxu0 0.0
      %872 = vmatpush2.msra.mxu0 0.0
      %873 = vmatprep.subr.mxu0 0.0
      %874 = vmatpush2.msra.mxu0 0.0
      %875 = vmatprep.subr.mxu0 0.0
      %876 = vmatpush2.msra.mxu0 0.0
      %877 = vmatprep.subr.mxu0 0.0
      %878 = vmatpush2.msra.mxu0 0.0
      %879 = vmatprep.subr.mxu0 0.0
      %880 = vmatpush2.msra.mxu0 0.0
      %881 = vmatprep.subr.mxu0 0.0
      %882 = vmatpush2.msra.mxu0 0.0
      %883 = vmatprep.subr.mxu0 0.0
      %884 = vmatpush2.msra.mxu0 0.0
      %885 = vmatprep.subr.mxu0 0.0
      %886 = vmatpush2.msra.mxu0 0.0
      %887 = vmatprep.subr.mxu0 0.0
      %888 = vmatpush2.msra.mxu0 0.0
      %889 = vmatprep.subr.mxu0 0.0
      %890 = vmatpush2.msra.mxu0 0.0
      %891 = vmatprep.mubr.f32.mxu0 0.0
      %892 = vmatmul.mubr.f32.gmra.mxu0 %v822
      %v893 = vpop.f32.mrf.mxu0
      %v894 = vadd.f32 0.0, %v893
      %v895 = vpop.f32.mrf.mxu0
      %v896 = vadd.f32 0.0, %v895
      %897 = vmatprep.mubr.f32.mxu0 0.0
      %898 = vmatmul.mubr.f32.gmra.mxu0 %v825
      %v899 = vpop.f32.mrf.mxu0
      %v900 = vadd.f32 0.0, %v899
      %v901 = vpop.f32.mrf.mxu0
      %v902 = vadd.f32 0.0, %v901
      %903 = vdwg.mxu0
      %v904 = vadd.f32 %v814, %v894
      %v905 = vadd.f32 %v815, %v896
      %v906 = vadd.f32 %v816, %v900
      %v907 = vadd.f32 %v817, %v902
      %908 = vrot.lane.b32.xlu0 %v306, 127
      %v909 = vpop.permute.xlu0 %908
      %910 = vrot.lane.b32.xlu0 %v307, 127
      %v911 = vpop.permute.xlu0 %910
      %912 = vrot.lane.b32.xlu0 %v308, 127
      %v913 = vpop.permute.xlu0 %912
      %914 = vrot.lane.b32.xlu0 %v309, 127
      %v915 = vpop.permute.xlu0 %914
      %vm916 = vcmask 1039360
      %v917 = vsel %vm916, %v909, %v911
      %v918 = vsel %vm916, %v913, %v915
      %v925 = vsel %vm916, %v911, %v909
      %v926 = vsel %vm916, %v915, %v913
      %s927 = scalar_lea.vmem %s2, 80
      %v928 = vld [vmem:[%s927] sm:$0xff]
      %v929 = vld [vmem:[%s927 + $0x8] sm:$0xff]
      %v931 = vsel %vm337, %v928, 0
      %v934 = vsel %vm337, %v929, 0
      %936 = vmatprep.subr.mxu0 0.0
      %937 = vmatpush1.msra.mxu0 0.0
      %938 = vmatprep.subr.mxu0 0.0
      %939 = vmatpush1.msra.mxu0 0.0
      %940 = vmatprep.subr.mxu0 0.0
      %941 = vmatpush1.msra.mxu0 0.0
      %942 = vmatprep.subr.mxu0 0.0
      %943 = vmatpush1.msra.mxu0 0.0
      %944 = vmatprep.subr.mxu0 0.0
      %945 = vmatpush1.msra.mxu0 0.0
      %946 = vmatprep.subr.mxu0 0.0
      %947 = vmatpush1.msra.mxu0 0.0
      %948 = vmatprep.subr.mxu0 0.0
      %949 = vmatpush1.msra.mxu0 0.0
      %950 = vmatprep.subr.mxu0 0.0
      %951 = vmatpush1.msra.mxu0 0.0
      %952 = vmatprep.subr.mxu0 0.0
      %953 = vmatpush1.msra.mxu0 0.0
      %954 = vmatprep.subr.mxu0 0.0
      %955 = vmatpush1.msra.mxu0 0.0
      %956 = vmatprep.subr.mxu0 0.0
      %957 = vmatpush1.msra.mxu0 0.0
      %958 = vmatprep.subr.mxu0 0.0
      %959 = vmatpush1.msra.mxu0 0.0
      %960 = vmatprep.subr.mxu0 0.0
      %961 = vmatpush1.msra.mxu0 0.0
      %962 = vmatprep.subr.mxu0 0.0
      %963 = vmatpush1.msra.mxu0 0.0
      %964 = vmatprep.subr.mxu0 %v926
      %965 = vmatpush1.msra.mxu0 %v918
      %966 = vmatprep.subr.mxu0 %v925
      %967 = vmatpush1.msra.mxu0 %v917
      %968 = vmatprep.subr.mxu0 0.0
      %969 = vmatpush2.msra.mxu0 0.0
      %970 = vmatprep.subr.mxu0 0.0
      %971 = vmatpush2.msra.mxu0 0.0
      %972 = vmatprep.subr.mxu0 0.0
      %973 = vmatpush2.msra.mxu0 0.0
      %974 = vmatprep.subr.mxu0 0.0
      %975 = vmatpush2.msra.mxu0 0.0
      %976 = vmatprep.subr.mxu0 0.0
      %977 = vmatpush2.msra.mxu0 0.0
      %978 = vmatprep.subr.mxu0 0.0
      %979 = vmatpush2.msra.mxu0 0.0
      %980 = vmatprep.subr.mxu0 0.0
      %981 = vmatpush2.msra.mxu0 0.0
      %982 = vmatprep.subr.mxu0 0.0
      %983 = vmatpush2.msra.mxu0 0.0
      %984 = vmatprep.subr.mxu0 0.0
      %985 = vmatpush2.msra.mxu0 0.0
      %986 = vmatprep.subr.mxu0 0.0
      %987 = vmatpush2.msra.mxu0 0.0
      %988 = vmatprep.subr.mxu0 0.0
      %989 = vmatpush2.msra.mxu0 0.0
      %990 = vmatprep.subr.mxu0 0.0
      %991 = vmatpush2.msra.mxu0 0.0
      %992 = vmatprep.subr.mxu0 0.0
      %993 = vmatpush2.msra.mxu0 0.0
      %994 = vmatprep.subr.mxu0 0.0
      %995 = vmatpush2.msra.mxu0 0.0
      %996 = vmatprep.subr.mxu0 0.0
      %997 = vmatpush2.msra.mxu0 0.0
      %998 = vmatprep.subr.mxu0 0.0
      %999 = vmatpush2.msra.mxu0 0.0
      %1000 = vmatprep.mubr.f32.mxu0 0.0
      %1001 = vmatmul.mubr.f32.gmra.mxu0 %v931
      %v1002 = vpop.f32.mrf.mxu0
      %v1003 = vadd.f32 0.0, %v1002
      %v1004 = vpop.f32.mrf.mxu0
      %v1005 = vadd.f32 0.0, %v1004
      %1006 = vmatprep.mubr.f32.mxu0 0.0
      %1007 = vmatmul.mubr.f32.gmra.mxu0 %v934
      %v1008 = vpop.f32.mrf.mxu0
      %v1009 = vadd.f32 0.0, %v1008
      %v1010 = vpop.f32.mrf.mxu0
      %v1011 = vadd.f32 0.0, %v1010
      %1012 = vdwg.mxu0
      %s1013 = scalar_lea.vmem %s0, 10
      %v1014 = vld [vmem:[%s1013] sm:$0x3]
      %v1016 = vlaneseq
      %v1017 = vshrl.u32 %v1016, 7
      %v1018 = vsub.s32 0, %v1017
      %v1019 = vrot.slane %v1014, %v1018
      %v1020 = vlaneseq
      %v1021 = vshrl.u32 %v1020, 7
      %v1022 = vsub.s32 1, %v1021
      %v1023 = vrot.slane %v1014, %v1022
      %v1026 = vmul.f32 %v1003, %v1019
      %v1027 = vmul.f32 %v1005, %v1023
      %v1028 = vmul.f32 %v1009, %v1019
      %v1029 = vmul.f32 %v1011, %v1023
      %v1030 = vadd.f32 %v904, %v1026
      %v1031 = vadd.f32 %v905, %v1027
      %v1032 = vadd.f32 %v906, %v1028
      %v1033 = vadd.f32 %v907, %v1029
      %1034 = vrot.lane.b32.xlu0 %v306, 113
      %v1035 = vpop.permute.xlu0 %1034
      %1036 = vrot.lane.b32.xlu0 %v307, 113
      %v1037 = vpop.permute.xlu0 %1036
      %1038 = vrot.lane.b32.xlu0 %v308, 113
      %v1039 = vpop.permute.xlu0 %1038
      %1040 = vrot.lane.b32.xlu0 %v309, 113
      %v1041 = vpop.permute.xlu0 %1040
      %vm1042 = vcmask 924672
      %v1043 = vsel %vm1042, %v1035, %v1037
      %v1044 = vsel %vm1042, %v1039, %v1041
      %v1051 = vsel %vm1042, %v1037, %v1035
      %v1052 = vsel %vm1042, %v1041, %v1039
      %s1053 = scalar_lea.vmem %s2, 96
      %v1054 = vld [vmem:[%s1053] sm:$0xff]
      %v1055 = vld [vmem:[%s1053 + $0x8] sm:$0xff]
      %v1057 = vsel %vm337, %v1054, 0
      %v1060 = vsel %vm337, %v1055, 0
      %1062 = vmatprep.subr.mxu0 0.0
      %1063 = vmatpush1.msra.mxu0 0.0
      %1064 = vmatprep.subr.mxu0 0.0
      %1065 = vmatpush1.msra.mxu0 0.0
      %1066 = vmatprep.subr.mxu0 0.0
      %1067 = vmatpush1.msra.mxu0 0.0
      %1068 = vmatprep.subr.mxu0 0.0
      %1069 = vmatpush1.msra.mxu0 0.0
      %1070 = vmatprep.subr.mxu0 0.0
      %1071 = vmatpush1.msra.mxu0 0.0
      %1072 = vmatprep.subr.mxu0 0.0
      %1073 = vmatpush1.msra.mxu0 0.0
      %1074 = vmatprep.subr.mxu0 0.0
      %1075 = vmatpush1.msra.mxu0 0.0
      %1076 = vmatprep.subr.mxu0 0.0
      %1077 = vmatpush1.msra.mxu0 0.0
      %1078 = vmatprep.subr.mxu0 0.0
      %1079 = vmatpush1.msra.mxu0 0.0
      %1080 = vmatprep.subr.mxu0 0.0
      %1081 = vmatpush1.msra.mxu0 0.0
      %1082 = vmatprep.subr.mxu0 0.0
      %1083 = vmatpush1.msra.mxu0 0.0
      %1084 = vmatprep.subr.mxu0 0.0
      %1085 = vmatpush1.msra.mxu0 0.0
      %1086 = vmatprep.subr.mxu0 0.0
      %1087 = vmatpush1.msra.mxu0 0.0
      %1088 = vmatprep.subr.mxu0 0.0
      %1089 = vmatpush1.msra.mxu0 0.0
      %1090 = vmatprep.subr.mxu0 %v1052
      %1091 = vmatpush1.msra.mxu0 %v1044
      %1092 = vmatprep.subr.mxu0 %v1051
      %1093 = vmatpush1.msra.mxu0 %v1043
      %1094 = vmatprep.subr.mxu0 0.0
      %1095 = vmatpush2.msra.mxu0 0.0
      %1096 = vmatprep.subr.mxu0 0.0
      %1097 = vmatpush2.msra.mxu0 0.0
      %1098 = vmatprep.subr.mxu0 0.0
      %1099 = vmatpush2.msra.mxu0 0.0
      %1100 = vmatprep.subr.mxu0 0.0
      %1101 = vmatpush2.msra.mxu0 0.0
      %1102 = vmatprep.subr.mxu0 0.0
      %1103 = vmatpush2.msra.mxu0 0.0
      %1104 = vmatprep.subr.mxu0 0.0
      %1105 = vmatpush2.msra.mxu0 0.0
      %1106 = vmatprep.subr.mxu0 0.0
      %1107 = vmatpush2.msra.mxu0 0.0
      %1108 = vmatprep.subr.mxu0 0.0
      %1109 = vmatpush2.msra.mxu0 0.0
      %1110 = vmatprep.subr.mxu0 0.0
      %1111 = vmatpush2.msra.mxu0 0.0
      %1112 = vmatprep.subr.mxu0 0.0
      %1113 = vmatpush2.msra.mxu0 0.0
      %1114 = vmatprep.subr.mxu0 0.0
      %1115 = vmatpush2.msra.mxu0 0.0
      %1116 = vmatprep.subr.mxu0 0.0
      %1117 = vmatpush2.msra.mxu0 0.0
      %1118 = vmatprep.subr.mxu0 0.0
      %1119 = vmatpush2.msra.mxu0 0.0
      %1120 = vmatprep.subr.mxu0 0.0
      %1121 = vmatpush2.msra.mxu0 0.0
      %1122 = vmatprep.subr.mxu0 0.0
      %1123 = vmatpush2.msra.mxu0 0.0
      %1124 = vmatprep.subr.mxu0 0.0
      %1125 = vmatpush2.msra.mxu0 0.0
      %1126 = vmatprep.mubr.f32.mxu0 0.0
      %1127 = vmatmul.mubr.f32.gmra.mxu0 %v1057
      %v1128 = vpop.f32.mrf.mxu0
      %v1129 = vadd.f32 0.0, %v1128
      %v1130 = vpop.f32.mrf.mxu0
      %v1131 = vadd.f32 0.0, %v1130
      %1132 = vmatprep.mubr.f32.mxu0 0.0
      %1133 = vmatmul.mubr.f32.gmra.mxu0 %v1060
      %v1134 = vpop.f32.mrf.mxu0
      %v1135 = vadd.f32 0.0, %v1134
      %v1136 = vpop.f32.mrf.mxu0
      %v1137 = vadd.f32 0.0, %v1136
      %1138 = vdwg.mxu0
      %s1139 = scalar_lea.vmem %s0, 12
      %v1140 = vld [vmem:[%s1139] sm:$0x3]
      %v1142 = vlaneseq
      %v1143 = vshrl.u32 %v1142, 7
      %v1144 = vsub.s32 0, %v1143
      %v1145 = vrot.slane %v1140, %v1144
      %v1146 = vlaneseq
      %v1147 = vshrl.u32 %v1146, 7
      %v1148 = vsub.s32 1, %v1147
      %v1149 = vrot.slane %v1140, %v1148
      %v1152 = vmul.f32 %v1129, %v1145
      %v1153 = vmul.f32 %v1131, %v1149
      %v1154 = vmul.f32 %v1135, %v1145
      %v1155 = vmul.f32 %v1137, %v1149
      %v1156 = vadd.f32 %v1030, %v1152
      %v1157 = vadd.f32 %v1031, %v1153
      %v1158 = vadd.f32 %v1032, %v1154
      %v1159 = vadd.f32 %v1033, %v1155
      %1160 = vrot.lane.b32.xlu0 %v306, 112
      %v1161 = vpop.permute.xlu0 %1160
      %1162 = vrot.lane.b32.xlu0 %v307, 112
      %v1163 = vpop.permute.xlu0 %1162
      %1164 = vrot.lane.b32.xlu0 %v308, 112
      %v1165 = vpop.permute.xlu0 %1164
      %1166 = vrot.lane.b32.xlu0 %v309, 112
      %v1167 = vpop.permute.xlu0 %1166
      %vm1168 = vcmask 916480
      %v1169 = vsel %vm1168, %v1161, %v1163
      %v1170 = vsel %vm1168, %v1165, %v1167
      %v1177 = vsel %vm1168, %v1163, %v1161
      %v1178 = vsel %vm1168, %v1167, %v1165
      %s1179 = scalar_lea.vmem %s2, 112
      %v1180 = vld [vmem:[%s1179] sm:$0xff]
      %v1181 = vld [vmem:[%s1179 + $0x8] sm:$0xff]
      %v1183 = vsel %vm337, %v1180, 0
      %v1186 = vsel %vm337, %v1181, 0
      %1188 = vmatprep.subr.mxu0 0.0
      %1189 = vmatpush1.msra.mxu0 0.0
      %1190 = vmatprep.subr.mxu0 0.0
      %1191 = vmatpush1.msra.mxu0 0.0
      %1192 = vmatprep.subr.mxu0 0.0
      %1193 = vmatpush1.msra.mxu0 0.0
      %1194 = vmatprep.subr.mxu0 0.0
      %1195 = vmatpush1.msra.mxu0 0.0
      %1196 = vmatprep.subr.mxu0 0.0
      %1197 = vmatpush1.msra.mxu0 0.0
      %1198 = vmatprep.subr.mxu0 0.0
      %1199 = vmatpush1.msra.mxu0 0.0
      %1200 = vmatprep.subr.mxu0 0.0
      %1201 = vmatpush1.msra.mxu0 0.0
      %1202 = vmatprep.subr.mxu0 0.0
      %1203 = vmatpush1.msra.mxu0 0.0
      %1204 = vmatprep.subr.mxu0 0.0
      %1205 = vmatpush1.msra.mxu0 0.0
      %1206 = vmatprep.subr.mxu0 0.0
      %1207 = vmatpush1.msra.mxu0 0.0
      %1208 = vmatprep.subr.mxu0 0.0
      %1209 = vmatpush1.msra.mxu0 0.0
      %1210 = vmatprep.subr.mxu0 0.0
      %1211 = vmatpush1.msra.mxu0 0.0
      %1212 = vmatprep.subr.mxu0 0.0
      %1213 = vmatpush1.msra.mxu0 0.0
      %1214 = vmatprep.subr.mxu0 0.0
      %1215 = vmatpush1.msra.mxu0 0.0
      %1216 = vmatprep.subr.mxu0 %v1178
      %1217 = vmatpush1.msra.mxu0 %v1170
      %1218 = vmatprep.subr.mxu0 %v1177
      %1219 = vmatpush1.msra.mxu0 %v1169
      %1220 = vmatprep.subr.mxu0 0.0
      %1221 = vmatpush2.msra.mxu0 0.0
      %1222 = vmatprep.subr.mxu0 0.0
      %1223 = vmatpush2.msra.mxu0 0.0
      %1224 = vmatprep.subr.mxu0 0.0
      %1225 = vmatpush2.msra.mxu0 0.0
      %1226 = vmatprep.subr.mxu0 0.0
      %1227 = vmatpush2.msra.mxu0 0.0
      %1228 = vmatprep.subr.mxu0 0.0
      %1229 = vmatpush2.msra.mxu0 0.0
      %1230 = vmatprep.subr.mxu0 0.0
      %1231 = vmatpush2.msra.mxu0 0.0
      %1232 = vmatprep.subr.mxu0 0.0
      %1233 = vmatpush2.msra.mxu0 0.0
      %1234 = vmatprep.subr.mxu0 0.0
      %1235 = vmatpush2.msra.mxu0 0.0
      %1236 = vmatprep.subr.mxu0 0.0
      %1237 = vmatpush2.msra.mxu0 0.0
      %1238 = vmatprep.subr.mxu0 0.0
      %1239 = vmatpush2.msra.mxu0 0.0
      %1240 = vmatprep.subr.mxu0 0.0
      %1241 = vmatpush2.msra.mxu0 0.0
      %1242 = vmatprep.subr.mxu0 0.0
      %1243 = vmatpush2.msra.mxu0 0.0
      %1244 = vmatprep.subr.mxu0 0.0
      %1245 = vmatpush2.msra.mxu0 0.0
      %1246 = vmatprep.subr.mxu0 0.0
      %1247 = vmatpush2.msra.mxu0 0.0
      %1248 = vmatprep.subr.mxu0 0.0
      %1249 = vmatpush2.msra.mxu0 0.0
      %1250 = vmatprep.subr.mxu0 0.0
      %1251 = vmatpush2.msra.mxu0 0.0
      %1252 = vmatprep.mubr.f32.mxu0 0.0
      %1253 = vmatmul.mubr.f32.gmra.mxu0 %v1183
      %v1254 = vpop.f32.mrf.mxu0
      %v1255 = vadd.f32 0.0, %v1254
      %v1256 = vpop.f32.mrf.mxu0
      %v1257 = vadd.f32 0.0, %v1256
      %1258 = vmatprep.mubr.f32.mxu0 0.0
      %1259 = vmatmul.mubr.f32.gmra.mxu0 %v1186
      %v1260 = vpop.f32.mrf.mxu0
      %v1261 = vadd.f32 0.0, %v1260
      %v1262 = vpop.f32.mrf.mxu0
      %v1263 = vadd.f32 0.0, %v1262
      %1264 = vdwg.mxu0
      %s1265 = scalar_lea.vmem %s0, 14
      %v1266 = vld [vmem:[%s1265] sm:$0x3]
      %v1268 = vlaneseq
      %v1269 = vshrl.u32 %v1268, 7
      %v1270 = vsub.s32 0, %v1269
      %v1271 = vrot.slane %v1266, %v1270
      %v1272 = vlaneseq
      %v1273 = vshrl.u32 %v1272, 7
      %v1274 = vsub.s32 1, %v1273
      %v1275 = vrot.slane %v1266, %v1274
      %v1278 = vmul.f32 %v1255, %v1271
      %v1279 = vmul.f32 %v1257, %v1275
      %v1280 = vmul.f32 %v1261, %v1271
      %v1281 = vmul.f32 %v1263, %v1275
      %v1282 = vadd.f32 %v1156, %v1278
      %v1283 = vadd.f32 %v1157, %v1279
      %v1284 = vadd.f32 %v1158, %v1280
      %v1285 = vadd.f32 %v1159, %v1281
      %1286 = vrot.lane.b32.xlu0 %v306, 111
      %v1287 = vpop.permute.xlu0 %1286
      %1288 = vrot.lane.b32.xlu0 %v307, 111
      %v1289 = vpop.permute.xlu0 %1288
      %1290 = vrot.lane.b32.xlu0 %v308, 111
      %v1291 = vpop.permute.xlu0 %1290
      %1292 = vrot.lane.b32.xlu0 %v309, 111
      %v1293 = vpop.permute.xlu0 %1292
      %vm1294 = vcmask 908288
      %v1295 = vsel %vm1294, %v1287, %v1289
      %v1296 = vsel %vm1294, %v1291, %v1293
      %v1303 = vsel %vm1294, %v1289, %v1287
      %v1304 = vsel %vm1294, %v1293, %v1291
      %s1305 = scalar_lea.vmem %s2, 128
      %v1306 = vld [vmem:[%s1305] sm:$0xff]
      %v1307 = vld [vmem:[%s1305 + $0x8] sm:$0xff]
      %v1309 = vsel %vm337, %v1306, 0
      %v1312 = vsel %vm337, %v1307, 0
      %1314 = vmatprep.subr.mxu0 0.0
      %1315 = vmatpush1.msra.mxu0 0.0
      %1316 = vmatprep.subr.mxu0 0.0
      %1317 = vmatpush1.msra.mxu0 0.0
      %1318 = vmatprep.subr.mxu0 0.0
      %1319 = vmatpush1.msra.mxu0 0.0
      %1320 = vmatprep.subr.mxu0 0.0
      %1321 = vmatpush1.msra.mxu0 0.0
      %1322 = vmatprep.subr.mxu0 0.0
      %1323 = vmatpush1.msra.mxu0 0.0
      %1324 = vmatprep.subr.mxu0 0.0
      %1325 = vmatpush1.msra.mxu0 0.0
      %1326 = vmatprep.subr.mxu0 0.0
      %1327 = vmatpush1.msra.mxu0 0.0
      %1328 = vmatprep.subr.mxu0 0.0
      %1329 = vmatpush1.msra.mxu0 0.0
      %1330 = vmatprep.subr.mxu0 0.0
      %1331 = vmatpush1.msra.mxu0 0.0
      %1332 = vmatprep.subr.mxu0 0.0
      %1333 = vmatpush1.msra.mxu0 0.0
      %1334 = vmatprep.subr.mxu0 0.0
      %1335 = vmatpush1.msra.mxu0 0.0
      %1336 = vmatprep.subr.mxu0 0.0
      %1337 = vmatpush1.msra.mxu0 0.0
      %1338 = vmatprep.subr.mxu0 0.0
      %1339 = vmatpush1.msra.mxu0 0.0
      %1340 = vmatprep.subr.mxu0 0.0
      %1341 = vmatpush1.msra.mxu0 0.0
      %1342 = vmatprep.subr.mxu0 %v1304
      %1343 = vmatpush1.msra.mxu0 %v1296
      %1344 = vmatprep.subr.mxu0 %v1303
      %1345 = vmatpush1.msra.mxu0 %v1295
      %1346 = vmatprep.subr.mxu0 0.0
      %1347 = vmatpush2.msra.mxu0 0.0
      %1348 = vmatprep.subr.mxu0 0.0
      %1349 = vmatpush2.msra.mxu0 0.0
      %1350 = vmatprep.subr.mxu0 0.0
      %1351 = vmatpush2.msra.mxu0 0.0
      %1352 = vmatprep.subr.mxu0 0.0
      %1353 = vmatpush2.msra.mxu0 0.0
      %1354 = vmatprep.subr.mxu0 0.0
      %1355 = vmatpush2.msra.mxu0 0.0
      %1356 = vmatprep.subr.mxu0 0.0
      %1357 = vmatpush2.msra.mxu0 0.0
      %1358 = vmatprep.subr.mxu0 0.0
      %1359 = vmatpush2.msra.mxu0 0.0
      %1360 = vmatprep.subr.mxu0 0.0
      %1361 = vmatpush2.msra.mxu0 0.0
      %1362 = vmatprep.subr.mxu0 0.0
      %1363 = vmatpush2.msra.mxu0 0.0
      %1364 = vmatprep.subr.mxu0 0.0
      %1365 = vmatpush2.msra.mxu0 0.0
      %1366 = vmatprep.subr.mxu0 0.0
      %1367 = vmatpush2.msra.mxu0 0.0
      %1368 = vmatprep.subr.mxu0 0.0
      %1369 = vmatpush2.msra.mxu0 0.0
      %1370 = vmatprep.subr.mxu0 0.0
      %1371 = vmatpush2.msra.mxu0 0.0
      %1372 = vmatprep.subr.mxu0 0.0
      %1373 = vmatpush2.msra.mxu0 0.0
      %1374 = vmatprep.subr.mxu0 0.0
      %1375 = vmatpush2.msra.mxu0 0.0
      %1376 = vmatprep.subr.mxu0 0.0
      %1377 = vmatpush2.msra.mxu0 0.0
      %1378 = vmatprep.mubr.f32.mxu0 0.0
      %1379 = vmatmul.mubr.f32.gmra.mxu0 %v1309
      %v1380 = vpop.f32.mrf.mxu0
      %v1381 = vadd.f32 0.0, %v1380
      %v1382 = vpop.f32.mrf.mxu0
      %v1383 = vadd.f32 0.0, %v1382
      %1384 = vmatprep.mubr.f32.mxu0 0.0
      %1385 = vmatmul.mubr.f32.gmra.mxu0 %v1312
      %v1386 = vpop.f32.mrf.mxu0
      %v1387 = vadd.f32 0.0, %v1386
      %v1388 = vpop.f32.mrf.mxu0
      %v1389 = vadd.f32 0.0, %v1388
      %1390 = vdwg.mxu0
      %s1391 = scalar_lea.vmem %s0, 16
      %v1392 = vld [vmem:[%s1391] sm:$0x3]
      %v1394 = vlaneseq
      %v1395 = vshrl.u32 %v1394, 7
      %v1396 = vsub.s32 0, %v1395
      %v1397 = vrot.slane %v1392, %v1396
      %v1398 = vlaneseq
      %v1399 = vshrl.u32 %v1398, 7
      %v1400 = vsub.s32 1, %v1399
      %v1401 = vrot.slane %v1392, %v1400
      %v1404 = vmul.f32 %v1381, %v1397
      %v1405 = vmul.f32 %v1383, %v1401
      %v1406 = vmul.f32 %v1387, %v1397
      %v1407 = vmul.f32 %v1389, %v1401
      %v1408 = vadd.f32 %v1282, %v1404
      %v1409 = vadd.f32 %v1283, %v1405
      %v1410 = vadd.f32 %v1284, %v1406
      %v1411 = vadd.f32 %v1285, %v1407
      %v1412 = vld [vmem:[%s3] sm:$0xff]
      %v1413 = vld [vmem:[%s3 + $0x8] sm:$0xff]
      %1415 = vset.pattern.permute.xlu0 0
      %1416 = vperm.xlu0 %1415, %v1412
      %v1417 = vpop.permute.xlu0 %1416
      %1420 = vset.pattern.permute.xlu0 0
      %1421 = vperm.xlu0 %1420, %v1413
      %v1422 = vpop.permute.xlu0 %1421
      %v1424 = vadd.f32 %v1408, %v1417
      %v1425 = vadd.f32 %v1409, %v1417
      %v1426 = vadd.f32 %v1410, %v1422
      %v1427 = vadd.f32 %v1411, %v1422
      %v1428 = vmax.f32 %v1424, 0.0
      %v1429 = vmax.f32 %v1425, 0.0
      %v1430 = vmax.f32 %v1426, 0.0
      %v1431 = vmax.f32 %v1427, 0.0
      %s1432 = scalar_lea.vmem %s4, 16
      %v1433 = vld [vmem:[%s1432] sm:$0xff]
      %v1434 = vld [vmem:[%s1432 + $0x8] sm:$0xff]
      %v1436 = vsel %vm337, %v1433, 0
      %v1439 = vsel %vm337, %v1434, 0
      %1441 = vmatprep.subr.mxu0 0.0
      %1442 = vmatpush1.msra.mxu0 0.0
      %1443 = vmatprep.subr.mxu0 0.0
      %1444 = vmatpush1.msra.mxu0 0.0
      %1445 = vmatprep.subr.mxu0 0.0
      %1446 = vmatpush1.msra.mxu0 0.0
      %1447 = vmatprep.subr.mxu0 0.0
      %1448 = vmatpush1.msra.mxu0 0.0
      %1449 = vmatprep.subr.mxu0 0.0
      %1450 = vmatpush1.msra.mxu0 0.0
      %1451 = vmatprep.subr.mxu0 0.0
      %1452 = vmatpush1.msra.mxu0 0.0
      %1453 = vmatprep.subr.mxu0 0.0
      %1454 = vmatpush1.msra.mxu0 0.0
      %1455 = vmatprep.subr.mxu0 0.0
      %1456 = vmatpush1.msra.mxu0 0.0
      %1457 = vmatprep.subr.mxu0 0.0
      %1458 = vmatpush1.msra.mxu0 0.0
      %1459 = vmatprep.subr.mxu0 0.0
      %1460 = vmatpush1.msra.mxu0 0.0
      %1461 = vmatprep.subr.mxu0 0.0
      %1462 = vmatpush1.msra.mxu0 0.0
      %1463 = vmatprep.subr.mxu0 0.0
      %1464 = vmatpush1.msra.mxu0 0.0
      %1465 = vmatprep.subr.mxu0 0.0
      %1466 = vmatpush1.msra.mxu0 0.0
      %1467 = vmatprep.subr.mxu0 0.0
      %1468 = vmatpush1.msra.mxu0 0.0
      %1469 = vmatprep.subr.mxu0 %v1431
      %1470 = vmatpush1.msra.mxu0 %v1430
      %1471 = vmatprep.subr.mxu0 %v1429
      %1472 = vmatpush1.msra.mxu0 %v1428
      %1473 = vmatprep.subr.mxu0 0.0
      %1474 = vmatpush2.msra.mxu0 0.0
      %1475 = vmatprep.subr.mxu0 0.0
      %1476 = vmatpush2.msra.mxu0 0.0
      %1477 = vmatprep.subr.mxu0 0.0
      %1478 = vmatpush2.msra.mxu0 0.0
      %1479 = vmatprep.subr.mxu0 0.0
      %1480 = vmatpush2.msra.mxu0 0.0
      %1481 = vmatprep.subr.mxu0 0.0
      %1482 = vmatpush2.msra.mxu0 0.0
      %1483 = vmatprep.subr.mxu0 0.0
      %1484 = vmatpush2.msra.mxu0 0.0
      %1485 = vmatprep.subr.mxu0 0.0
      %1486 = vmatpush2.msra.mxu0 0.0
      %1487 = vmatprep.subr.mxu0 0.0
      %1488 = vmatpush2.msra.mxu0 0.0
      %1489 = vmatprep.subr.mxu0 0.0
      %1490 = vmatpush2.msra.mxu0 0.0
      %1491 = vmatprep.subr.mxu0 0.0
      %1492 = vmatpush2.msra.mxu0 0.0
      %1493 = vmatprep.subr.mxu0 0.0
      %1494 = vmatpush2.msra.mxu0 0.0
      %1495 = vmatprep.subr.mxu0 0.0
      %1496 = vmatpush2.msra.mxu0 0.0
      %1497 = vmatprep.subr.mxu0 0.0
      %1498 = vmatpush2.msra.mxu0 0.0
      %1499 = vmatprep.subr.mxu0 0.0
      %1500 = vmatpush2.msra.mxu0 0.0
      %1501 = vmatprep.subr.mxu0 0.0
      %1502 = vmatpush2.msra.mxu0 0.0
      %1503 = vmatprep.subr.mxu0 0.0
      %1504 = vmatpush2.msra.mxu0 0.0
      %1505 = vmatprep.mubr.f32.mxu0 0.0
      %1506 = vmatmul.mubr.f32.gmra.mxu0 %v1436
      %v1507 = vpop.f32.mrf.mxu0
      %v1508 = vadd.f32 0.0, %v1507
      %v1509 = vpop.f32.mrf.mxu0
      %v1510 = vadd.f32 0.0, %v1509
      %1511 = vmatprep.mubr.f32.mxu0 0.0
      %1512 = vmatmul.mubr.f32.gmra.mxu0 %v1439
      %v1513 = vpop.f32.mrf.mxu0
      %v1514 = vadd.f32 0.0, %v1513
      %v1515 = vpop.f32.mrf.mxu0
      %v1516 = vadd.f32 0.0, %v1515
      %1517 = vdwg.mxu0
      %v1519 = vsel %vm337, %v310, 0
      %v1522 = vsel %vm337, %v311, 0
      %1524 = vmatprep.subr.mxu0 0.0
      %1525 = vmatpush1.msra.mxu0 0.0
      %1526 = vmatprep.subr.mxu0 0.0
      %1527 = vmatpush1.msra.mxu0 0.0
      %1528 = vmatprep.subr.mxu0 0.0
      %1529 = vmatpush1.msra.mxu0 0.0
      %1530 = vmatprep.subr.mxu0 0.0
      %1531 = vmatpush1.msra.mxu0 0.0
      %1532 = vmatprep.subr.mxu0 0.0
      %1533 = vmatpush1.msra.mxu0 0.0
      %1534 = vmatprep.subr.mxu0 0.0
      %1535 = vmatpush1.msra.mxu0 0.0
      %1536 = vmatprep.subr.mxu0 0.0
      %1537 = vmatpush1.msra.mxu0 0.0
      %1538 = vmatprep.subr.mxu0 0.0
      %1539 = vmatpush1.msra.mxu0 0.0
      %1540 = vmatprep.subr.mxu0 0.0
      %1541 = vmatpush1.msra.mxu0 0.0
      %1542 = vmatprep.subr.mxu0 0.0
      %1543 = vmatpush1.msra.mxu0 0.0
      %1544 = vmatprep.subr.mxu0 0.0
      %1545 = vmatpush1.msra.mxu0 0.0
      %1546 = vmatprep.subr.mxu0 0.0
      %1547 = vmatpush1.msra.mxu0 0.0
      %1548 = vmatprep.subr.mxu0 0.0
      %1549 = vmatpush1.msra.mxu0 0.0
      %1550 = vmatprep.subr.mxu0 0.0
      %1551 = vmatpush1.msra.mxu0 0.0
      %1552 = vmatprep.subr.mxu0 %v309
      %1553 = vmatpush1.msra.mxu0 %v308
      %1554 = vmatprep.subr.mxu0 %v307
      %1555 = vmatpush1.msra.mxu0 %v306
      %1556 = vmatprep.subr.mxu0 0.0
      %1557 = vmatpush2.msra.mxu0 0.0
      %1558 = vmatprep.subr.mxu0 0.0
      %1559 = vmatpush2.msra.mxu0 0.0
      %1560 = vmatprep.subr.mxu0 0.0
      %1561 = vmatpush2.msra.mxu0 0.0
      %1562 = vmatprep.subr.mxu0 0.0
      %1563 = vmatpush2.msra.mxu0 0.0
      %1564 = vmatprep.subr.mxu0 0.0
      %1565 = vmatpush2.msra.mxu0 0.0
      %1566 = vmatprep.subr.mxu0 0.0
      %1567 = vmatpush2.msra.mxu0 0.0
      %1568 = vmatprep.subr.mxu0 0.0
      %1569 = vmatpush2.msra.mxu0 0.0
      %1570 = vmatprep.subr.mxu0 0.0
      %1571 = vmatpush2.msra.mxu0 0.0
      %1572 = vmatprep.subr.mxu0 0.0
      %1573 = vmatpush2.msra.mxu0 0.0
      %1574 = vmatprep.subr.mxu0 0.0
      %1575 = vmatpush2.msra.mxu0 0.0
      %1576 = vmatprep.subr.mxu0 0.0
      %1577 = vmatpush2.msra.mxu0 0.0
      %1578 = vmatprep.subr.mxu0 0.0
      %1579 = vmatpush2.msra.mxu0 0.0
      %1580 = vmatprep.subr.mxu0 0.0
      %1581 = vmatpush2.msra.mxu0 0.0
      %1582 = vmatprep.subr.mxu0 0.0
      %1583 = vmatpush2.msra.mxu0 0.0
      %1584 = vmatprep.subr.mxu0 0.0
      %1585 = vmatpush2.msra.mxu0 0.0
      %1586 = vmatprep.subr.mxu0 0.0
      %1587 = vmatpush2.msra.mxu0 0.0
      %1588 = vmatprep.mubr.f32.mxu0 0.0
      %1589 = vmatmul.mubr.f32.gmra.mxu0 %v1519
      %v1590 = vpop.f32.mrf.mxu0
      %v1591 = vadd.f32 %v1508, %v1590
      %v1592 = vpop.f32.mrf.mxu0
      %v1593 = vadd.f32 %v1510, %v1592
      %1594 = vmatprep.mubr.f32.mxu0 0.0
      %1595 = vmatmul.mubr.f32.gmra.mxu0 %v1522
      %v1596 = vpop.f32.mrf.mxu0
      %v1597 = vadd.f32 %v1514, %v1596
      %v1598 = vpop.f32.mrf.mxu0
      %v1599 = vadd.f32 %v1516, %v1598
      %1600 = vdwg.mxu0
      %1603 = vrot.lane.b32.xlu0 %v1429, 17
      %v1604 = vpop.permute.xlu0 %1603
      %1605 = vrot.lane.b32.xlu0 %v1431, 17
      %v1606 = vpop.permute.xlu0 %1605
      %1611 = vrot.lane.b32.xlu0 %v1428, 17
      %v1612 = vpop.permute.xlu0 %1611
      %1613 = vrot.lane.b32.xlu0 %v1430, 17
      %v1614 = vpop.permute.xlu0 %1613
      %v1615 = vsel %vm326, %v1612, %v1604
      %v1616 = vsel %vm326, %v1614, %v1606
      %v1621 = vsel %vm326, %v1604, %v1612
      %v1622 = vsel %vm326, %v1606, %v1614
      %s1623 = scalar_lea.vmem %s2, 144
      %v1624 = vld [vmem:[%s1623] sm:$0xff]
      %v1625 = vld [vmem:[%s1623 + $0x8] sm:$0xff]
      %v1627 = vsel %vm337, %v1624, 0
      %v1630 = vsel %vm337, %v1625, 0
      %1632 = vmatprep.subr.mxu0 0.0
      %1633 = vmatpush1.msra.mxu0 0.0
      %1634 = vmatprep.subr.mxu0 0.0
      %1635 = vmatpush1.msra.mxu0 0.0
      %1636 = vmatprep.subr.mxu0 0.0
      %1637 = vmatpush1.msra.mxu0 0.0
      %1638 = vmatprep.subr.mxu0 0.0
      %1639 = vmatpush1.msra.mxu0 0.0
      %1640 = vmatprep.subr.mxu0 0.0
      %1641 = vmatpush1.msra.mxu0 0.0
      %1642 = vmatprep.subr.mxu0 0.0
      %1643 = vmatpush1.msra.mxu0 0.0
      %1644 = vmatprep.subr.mxu0 0.0
      %1645 = vmatpush1.msra.mxu0 0.0
      %1646 = vmatprep.subr.mxu0 0.0
      %1647 = vmatpush1.msra.mxu0 0.0
      %1648 = vmatprep.subr.mxu0 0.0
      %1649 = vmatpush1.msra.mxu0 0.0
      %1650 = vmatprep.subr.mxu0 0.0
      %1651 = vmatpush1.msra.mxu0 0.0
      %1652 = vmatprep.subr.mxu0 0.0
      %1653 = vmatpush1.msra.mxu0 0.0
      %1654 = vmatprep.subr.mxu0 0.0
      %1655 = vmatpush1.msra.mxu0 0.0
      %1656 = vmatprep.subr.mxu0 0.0
      %1657 = vmatpush1.msra.mxu0 0.0
      %1658 = vmatprep.subr.mxu0 0.0
      %1659 = vmatpush1.msra.mxu0 0.0
      %1660 = vmatprep.subr.mxu0 %v1616
      %1661 = vmatpush1.msra.mxu0 %v1622
      %1662 = vmatprep.subr.mxu0 %v1615
      %1663 = vmatpush1.msra.mxu0 %v1621
      %1664 = vmatprep.subr.mxu0 0.0
      %1665 = vmatpush2.msra.mxu0 0.0
      %1666 = vmatprep.subr.mxu0 0.0
      %1667 = vmatpush2.msra.mxu0 0.0
      %1668 = vmatprep.subr.mxu0 0.0
      %1669 = vmatpush2.msra.mxu0 0.0
      %1670 = vmatprep.subr.mxu0 0.0
      %1671 = vmatpush2.msra.mxu0 0.0
      %1672 = vmatprep.subr.mxu0 0.0
      %1673 = vmatpush2.msra.mxu0 0.0
      %1674 = vmatprep.subr.mxu0 0.0
      %1675 = vmatpush2.msra.mxu0 0.0
      %1676 = vmatprep.subr.mxu0 0.0
      %1677 = vmatpush2.msra.mxu0 0.0
      %1678 = vmatprep.subr.mxu0 0.0
      %1679 = vmatpush2.msra.mxu0 0.0
      %1680 = vmatprep.subr.mxu0 0.0
      %1681 = vmatpush2.msra.mxu0 0.0
      %1682 = vmatprep.subr.mxu0 0.0
      %1683 = vmatpush2.msra.mxu0 0.0
      %1684 = vmatprep.subr.mxu0 0.0
      %1685 = vmatpush2.msra.mxu0 0.0
      %1686 = vmatprep.subr.mxu0 0.0
      %1687 = vmatpush2.msra.mxu0 0.0
      %1688 = vmatprep.subr.mxu0 0.0
      %1689 = vmatpush2.msra.mxu0 0.0
      %1690 = vmatprep.subr.mxu0 0.0
      %1691 = vmatpush2.msra.mxu0 0.0
      %1692 = vmatprep.subr.mxu0 0.0
      %1693 = vmatpush2.msra.mxu0 0.0
      %1694 = vmatprep.subr.mxu0 0.0
      %1695 = vmatpush2.msra.mxu0 0.0
      %1696 = vmatprep.mubr.f32.mxu0 0.0
      %1697 = vmatmul.mubr.f32.gmra.mxu0 %v1627
      %v1698 = vpop.f32.mrf.mxu0
      %v1699 = vadd.f32 0.0, %v1698
      %v1700 = vpop.f32.mrf.mxu0
      %v1701 = vadd.f32 0.0, %v1700
      %1702 = vmatprep.mubr.f32.mxu0 0.0
      %1703 = vmatmul.mubr.f32.gmra.mxu0 %v1630
      %v1704 = vpop.f32.mrf.mxu0
      %v1705 = vadd.f32 0.0, %v1704
      %v1706 = vpop.f32.mrf.mxu0
      %v1707 = vadd.f32 0.0, %v1706
      %1708 = vdwg.mxu0
      %v1709 = vmul.f32 %v1699, %v426
      %v1710 = vmul.f32 %v1701, %v430
      %v1711 = vmul.f32 %v1705, %v426
      %v1712 = vmul.f32 %v1707, %v430
      %v1713 = vadd.f32 %v1709, 0.0
      %v1714 = vadd.f32 %v1710, 0.0
      %v1715 = vadd.f32 %v1711, 0.0
      %v1716 = vadd.f32 %v1712, 0.0
      %1717 = vrot.lane.b32.xlu0 %v1429, 16
      %v1718 = vpop.permute.xlu0 %1717
      %1719 = vrot.lane.b32.xlu0 %v1431, 16
      %v1720 = vpop.permute.xlu0 %1719
      %1723 = vrot.lane.b32.xlu0 %v1428, 16
      %v1724 = vpop.permute.xlu0 %1723
      %1725 = vrot.lane.b32.xlu0 %v1430, 16
      %v1726 = vpop.permute.xlu0 %1725
      %v1727 = vsel %vm337, %v1724, %v1718
      %v1728 = vsel %vm337, %v1726, %v1720
      %v1733 = vsel %vm337, %v1718, %v1724
      %v1734 = vsel %vm337, %v1720, %v1726
      %s1735 = scalar_lea.vmem %s2, 160
      %v1736 = vld [vmem:[%s1735] sm:$0xff]
      %v1737 = vld [vmem:[%s1735 + $0x8] sm:$0xff]
      %v1739 = vsel %vm337, %v1736, 0
      %v1742 = vsel %vm337, %v1737, 0
      %1744 = vmatprep.subr.mxu0 0.0
      %1745 = vmatpush1.msra.mxu0 0.0
      %1746 = vmatprep.subr.mxu0 0.0
      %1747 = vmatpush1.msra.mxu0 0.0
      %1748 = vmatprep.subr.mxu0 0.0
      %1749 = vmatpush1.msra.mxu0 0.0
      %1750 = vmatprep.subr.mxu0 0.0
      %1751 = vmatpush1.msra.mxu0 0.0
      %1752 = vmatprep.subr.mxu0 0.0
      %1753 = vmatpush1.msra.mxu0 0.0
      %1754 = vmatprep.subr.mxu0 0.0
      %1755 = vmatpush1.msra.mxu0 0.0
      %1756 = vmatprep.subr.mxu0 0.0
      %1757 = vmatpush1.msra.mxu0 0.0
      %1758 = vmatprep.subr.mxu0 0.0
      %1759 = vmatpush1.msra.mxu0 0.0
      %1760 = vmatprep.subr.mxu0 0.0
      %1761 = vmatpush1.msra.mxu0 0.0
      %1762 = vmatprep.subr.mxu0 0.0
      %1763 = vmatpush1.msra.mxu0 0.0
      %1764 = vmatprep.subr.mxu0 0.0
      %1765 = vmatpush1.msra.mxu0 0.0
      %1766 = vmatprep.subr.mxu0 0.0
      %1767 = vmatpush1.msra.mxu0 0.0
      %1768 = vmatprep.subr.mxu0 0.0
      %1769 = vmatpush1.msra.mxu0 0.0
      %1770 = vmatprep.subr.mxu0 0.0
      %1771 = vmatpush1.msra.mxu0 0.0
      %1772 = vmatprep.subr.mxu0 %v1728
      %1773 = vmatpush1.msra.mxu0 %v1734
      %1774 = vmatprep.subr.mxu0 %v1727
      %1775 = vmatpush1.msra.mxu0 %v1733
      %1776 = vmatprep.subr.mxu0 0.0
      %1777 = vmatpush2.msra.mxu0 0.0
      %1778 = vmatprep.subr.mxu0 0.0
      %1779 = vmatpush2.msra.mxu0 0.0
      %1780 = vmatprep.subr.mxu0 0.0
      %1781 = vmatpush2.msra.mxu0 0.0
      %1782 = vmatprep.subr.mxu0 0.0
      %1783 = vmatpush2.msra.mxu0 0.0
      %1784 = vmatprep.subr.mxu0 0.0
      %1785 = vmatpush2.msra.mxu0 0.0
      %1786 = vmatprep.subr.mxu0 0.0
      %1787 = vmatpush2.msra.mxu0 0.0
      %1788 = vmatprep.subr.mxu0 0.0
      %1789 = vmatpush2.msra.mxu0 0.0
      %1790 = vmatprep.subr.mxu0 0.0
      %1791 = vmatpush2.msra.mxu0 0.0
      %1792 = vmatprep.subr.mxu0 0.0
      %1793 = vmatpush2.msra.mxu0 0.0
      %1794 = vmatprep.subr.mxu0 0.0
      %1795 = vmatpush2.msra.mxu0 0.0
      %1796 = vmatprep.subr.mxu0 0.0
      %1797 = vmatpush2.msra.mxu0 0.0
      %1798 = vmatprep.subr.mxu0 0.0
      %1799 = vmatpush2.msra.mxu0 0.0
      %1800 = vmatprep.subr.mxu0 0.0
      %1801 = vmatpush2.msra.mxu0 0.0
      %1802 = vmatprep.subr.mxu0 0.0
      %1803 = vmatpush2.msra.mxu0 0.0
      %1804 = vmatprep.subr.mxu0 0.0
      %1805 = vmatpush2.msra.mxu0 0.0
      %1806 = vmatprep.subr.mxu0 0.0
      %1807 = vmatpush2.msra.mxu0 0.0
      %1808 = vmatprep.mubr.f32.mxu0 0.0
      %1809 = vmatmul.mubr.f32.gmra.mxu0 %v1739
      %v1810 = vpop.f32.mrf.mxu0
      %v1811 = vadd.f32 0.0, %v1810
      %v1812 = vpop.f32.mrf.mxu0
      %v1813 = vadd.f32 0.0, %v1812
      %1814 = vmatprep.mubr.f32.mxu0 0.0
      %1815 = vmatmul.mubr.f32.gmra.mxu0 %v1742
      %v1816 = vpop.f32.mrf.mxu0
      %v1817 = vadd.f32 0.0, %v1816
      %v1818 = vpop.f32.mrf.mxu0
      %v1819 = vadd.f32 0.0, %v1818
      %1820 = vdwg.mxu0
      %v1821 = vmul.f32 %v1811, %v551
      %v1822 = vmul.f32 %v1813, %v555
      %v1823 = vmul.f32 %v1817, %v551
      %v1824 = vmul.f32 %v1819, %v555
      %v1825 = vadd.f32 %v1713, %v1821
      %v1826 = vadd.f32 %v1714, %v1822
      %v1827 = vadd.f32 %v1715, %v1823
      %v1828 = vadd.f32 %v1716, %v1824
      %1829 = vrot.lane.b32.xlu0 %v1429, 15
      %v1830 = vpop.permute.xlu0 %1829
      %1831 = vrot.lane.b32.xlu0 %v1431, 15
      %v1832 = vpop.permute.xlu0 %1831
      %1835 = vrot.lane.b32.xlu0 %v1428, 15
      %v1836 = vpop.permute.xlu0 %1835
      %1837 = vrot.lane.b32.xlu0 %v1430, 15
      %v1838 = vpop.permute.xlu0 %1837
      %v1839 = vsel %vm576, %v1836, %v1830
      %v1840 = vsel %vm576, %v1838, %v1832
      %v1845 = vsel %vm576, %v1830, %v1836
      %v1846 = vsel %vm576, %v1832, %v1838
      %s1847 = scalar_lea.vmem %s2, 176
      %v1848 = vld [vmem:[%s1847] sm:$0xff]
      %v1849 = vld [vmem:[%s1847 + $0x8] sm:$0xff]
      %v1851 = vsel %vm337, %v1848, 0
      %v1854 = vsel %vm337, %v1849, 0
      %1856 = vmatprep.subr.mxu0 0.0
      %1857 = vmatpush1.msra.mxu0 0.0
      %1858 = vmatprep.subr.mxu0 0.0
      %1859 = vmatpush1.msra.mxu0 0.0
      %1860 = vmatprep.subr.mxu0 0.0
      %1861 = vmatpush1.msra.mxu0 0.0
      %1862 = vmatprep.subr.mxu0 0.0
      %1863 = vmatpush1.msra.mxu0 0.0
      %1864 = vmatprep.subr.mxu0 0.0
      %1865 = vmatpush1.msra.mxu0 0.0
      %1866 = vmatprep.subr.mxu0 0.0
      %1867 = vmatpush1.msra.mxu0 0.0
      %1868 = vmatprep.subr.mxu0 0.0
      %1869 = vmatpush1.msra.mxu0 0.0
      %1870 = vmatprep.subr.mxu0 0.0
      %1871 = vmatpush1.msra.mxu0 0.0
      %1872 = vmatprep.subr.mxu0 0.0
      %1873 = vmatpush1.msra.mxu0 0.0
      %1874 = vmatprep.subr.mxu0 0.0
      %1875 = vmatpush1.msra.mxu0 0.0
      %1876 = vmatprep.subr.mxu0 0.0
      %1877 = vmatpush1.msra.mxu0 0.0
      %1878 = vmatprep.subr.mxu0 0.0
      %1879 = vmatpush1.msra.mxu0 0.0
      %1880 = vmatprep.subr.mxu0 0.0
      %1881 = vmatpush1.msra.mxu0 0.0
      %1882 = vmatprep.subr.mxu0 0.0
      %1883 = vmatpush1.msra.mxu0 0.0
      %1884 = vmatprep.subr.mxu0 %v1840
      %1885 = vmatpush1.msra.mxu0 %v1846
      %1886 = vmatprep.subr.mxu0 %v1839
      %1887 = vmatpush1.msra.mxu0 %v1845
      %1888 = vmatprep.subr.mxu0 0.0
      %1889 = vmatpush2.msra.mxu0 0.0
      %1890 = vmatprep.subr.mxu0 0.0
      %1891 = vmatpush2.msra.mxu0 0.0
      %1892 = vmatprep.subr.mxu0 0.0
      %1893 = vmatpush2.msra.mxu0 0.0
      %1894 = vmatprep.subr.mxu0 0.0
      %1895 = vmatpush2.msra.mxu0 0.0
      %1896 = vmatprep.subr.mxu0 0.0
      %1897 = vmatpush2.msra.mxu0 0.0
      %1898 = vmatprep.subr.mxu0 0.0
      %1899 = vmatpush2.msra.mxu0 0.0
      %1900 = vmatprep.subr.mxu0 0.0
      %1901 = vmatpush2.msra.mxu0 0.0
      %1902 = vmatprep.subr.mxu0 0.0
      %1903 = vmatpush2.msra.mxu0 0.0
      %1904 = vmatprep.subr.mxu0 0.0
      %1905 = vmatpush2.msra.mxu0 0.0
      %1906 = vmatprep.subr.mxu0 0.0
      %1907 = vmatpush2.msra.mxu0 0.0
      %1908 = vmatprep.subr.mxu0 0.0
      %1909 = vmatpush2.msra.mxu0 0.0
      %1910 = vmatprep.subr.mxu0 0.0
      %1911 = vmatpush2.msra.mxu0 0.0
      %1912 = vmatprep.subr.mxu0 0.0
      %1913 = vmatpush2.msra.mxu0 0.0
      %1914 = vmatprep.subr.mxu0 0.0
      %1915 = vmatpush2.msra.mxu0 0.0
      %1916 = vmatprep.subr.mxu0 0.0
      %1917 = vmatpush2.msra.mxu0 0.0
      %1918 = vmatprep.subr.mxu0 0.0
      %1919 = vmatpush2.msra.mxu0 0.0
      %1920 = vmatprep.mubr.f32.mxu0 0.0
      %1921 = vmatmul.mubr.f32.gmra.mxu0 %v1851
      %v1922 = vpop.f32.mrf.mxu0
      %v1923 = vadd.f32 0.0, %v1922
      %v1924 = vpop.f32.mrf.mxu0
      %v1925 = vadd.f32 0.0, %v1924
      %1926 = vmatprep.mubr.f32.mxu0 0.0
      %1927 = vmatmul.mubr.f32.gmra.mxu0 %v1854
      %v1928 = vpop.f32.mrf.mxu0
      %v1929 = vadd.f32 0.0, %v1928
      %v1930 = vpop.f32.mrf.mxu0
      %v1931 = vadd.f32 0.0, %v1930
      %1932 = vdwg.mxu0
      %v1933 = vmul.f32 %v1923, %v677
      %v1934 = vmul.f32 %v1925, %v681
      %v1935 = vmul.f32 %v1929, %v677
      %v1936 = vmul.f32 %v1931, %v681
      %v1937 = vadd.f32 %v1825, %v1933
      %v1938 = vadd.f32 %v1826, %v1934
      %v1939 = vadd.f32 %v1827, %v1935
      %v1940 = vadd.f32 %v1828, %v1936
      %1941 = vrot.lane.b32.xlu0 %v1429, 1
      %v1942 = vpop.permute.xlu0 %1941
      %1943 = vrot.lane.b32.xlu0 %v1431, 1
      %v1944 = vpop.permute.xlu0 %1943
      %1947 = vrot.lane.b32.xlu0 %v1428, 1
      %v1948 = vpop.permute.xlu0 %1947
      %1949 = vrot.lane.b32.xlu0 %v1430, 1
      %v1950 = vpop.permute.xlu0 %1949
      %v1951 = vsel %vm702, %v1948, %v1942
      %v1952 = vsel %vm702, %v1950, %v1944
      %v1957 = vsel %vm702, %v1942, %v1948
      %v1958 = vsel %vm702, %v1944, %v1950
      %s1959 = scalar_lea.vmem %s2, 192
      %v1960 = vld [vmem:[%s1959] sm:$0xff]
      %v1961 = vld [vmem:[%s1959 + $0x8] sm:$0xff]
      %v1963 = vsel %vm337, %v1960, 0
      %v1966 = vsel %vm337, %v1961, 0
      %1968 = vmatprep.subr.mxu0 0.0
      %1969 = vmatpush1.msra.mxu0 0.0
      %1970 = vmatprep.subr.mxu0 0.0
      %1971 = vmatpush1.msra.mxu0 0.0
      %1972 = vmatprep.subr.mxu0 0.0
      %1973 = vmatpush1.msra.mxu0 0.0
      %1974 = vmatprep.subr.mxu0 0.0
      %1975 = vmatpush1.msra.mxu0 0.0
      %1976 = vmatprep.subr.mxu0 0.0
      %1977 = vmatpush1.msra.mxu0 0.0
      %1978 = vmatprep.subr.mxu0 0.0
      %1979 = vmatpush1.msra.mxu0 0.0
      %1980 = vmatprep.subr.mxu0 0.0
      %1981 = vmatpush1.msra.mxu0 0.0
      %1982 = vmatprep.subr.mxu0 0.0
      %1983 = vmatpush1.msra.mxu0 0.0
      %1984 = vmatprep.subr.mxu0 0.0
      %1985 = vmatpush1.msra.mxu0 0.0
      %1986 = vmatprep.subr.mxu0 0.0
      %1987 = vmatpush1.msra.mxu0 0.0
      %1988 = vmatprep.subr.mxu0 0.0
      %1989 = vmatpush1.msra.mxu0 0.0
      %1990 = vmatprep.subr.mxu0 0.0
      %1991 = vmatpush1.msra.mxu0 0.0
      %1992 = vmatprep.subr.mxu0 0.0
      %1993 = vmatpush1.msra.mxu0 0.0
      %1994 = vmatprep.subr.mxu0 0.0
      %1995 = vmatpush1.msra.mxu0 0.0
      %1996 = vmatprep.subr.mxu0 %v1952
      %1997 = vmatpush1.msra.mxu0 %v1958
      %1998 = vmatprep.subr.mxu0 %v1951
      %1999 = vmatpush1.msra.mxu0 %v1957
      %2000 = vmatprep.subr.mxu0 0.0
      %2001 = vmatpush2.msra.mxu0 0.0
      %2002 = vmatprep.subr.mxu0 0.0
      %2003 = vmatpush2.msra.mxu0 0.0
      %2004 = vmatprep.subr.mxu0 0.0
      %2005 = vmatpush2.msra.mxu0 0.0
      %2006 = vmatprep.subr.mxu0 0.0
      %2007 = vmatpush2.msra.mxu0 0.0
      %2008 = vmatprep.subr.mxu0 0.0
      %2009 = vmatpush2.msra.mxu0 0.0
      %2010 = vmatprep.subr.mxu0 0.0
      %2011 = vmatpush2.msra.mxu0 0.0
      %2012 = vmatprep.subr.mxu0 0.0
      %2013 = vmatpush2.msra.mxu0 0.0
      %2014 = vmatprep.subr.mxu0 0.0
      %2015 = vmatpush2.msra.mxu0 0.0
      %2016 = vmatprep.subr.mxu0 0.0
      %2017 = vmatpush2.msra.mxu0 0.0
      %2018 = vmatprep.subr.mxu0 0.0
      %2019 = vmatpush2.msra.mxu0 0.0
      %2020 = vmatprep.subr.mxu0 0.0
      %2021 = vmatpush2.msra.mxu0 0.0
      %2022 = vmatprep.subr.mxu0 0.0
      %2023 = vmatpush2.msra.mxu0 0.0
      %2024 = vmatprep.subr.mxu0 0.0
      %2025 = vmatpush2.msra.mxu0 0.0
      %2026 = vmatprep.subr.mxu0 0.0
      %2027 = vmatpush2.msra.mxu0 0.0
      %2028 = vmatprep.subr.mxu0 0.0
      %2029 = vmatpush2.msra.mxu0 0.0
      %2030 = vmatprep.subr.mxu0 0.0
      %2031 = vmatpush2.msra.mxu0 0.0
      %2032 = vmatprep.mubr.f32.mxu0 0.0
      %2033 = vmatmul.mubr.f32.gmra.mxu0 %v1963
      %v2034 = vpop.f32.mrf.mxu0
      %v2035 = vadd.f32 0.0, %v2034
      %v2036 = vpop.f32.mrf.mxu0
      %v2037 = vadd.f32 0.0, %v2036
      %2038 = vmatprep.mubr.f32.mxu0 0.0
      %2039 = vmatmul.mubr.f32.gmra.mxu0 %v1966
      %v2040 = vpop.f32.mrf.mxu0
      %v2041 = vadd.f32 0.0, %v2040
      %v2042 = vpop.f32.mrf.mxu0
      %v2043 = vadd.f32 0.0, %v2042
      %2044 = vdwg.mxu0
      %v2045 = vmul.f32 %v2035, %v803
      %v2046 = vmul.f32 %v2037, %v807
      %v2047 = vmul.f32 %v2041, %v803
      %v2048 = vmul.f32 %v2043, %v807
      %v2049 = vadd.f32 %v1937, %v2045
      %v2050 = vadd.f32 %v1938, %v2046
      %v2051 = vadd.f32 %v1939, %v2047
      %v2052 = vadd.f32 %v1940, %v2048
      %s2053 = scalar_lea.vmem %s2, 208
      %v2054 = vld [vmem:[%s2053] sm:$0xff]
      %v2055 = vld [vmem:[%s2053 + $0x8] sm:$0xff]
      %v2057 = vsel %vm337, %v2054, 0
      %v2060 = vsel %vm337, %v2055, 0
      %2062 = vmatprep.subr.mxu0 0.0
      %2063 = vmatpush1.msra.mxu0 0.0
      %2064 = vmatprep.subr.mxu0 0.0
      %2065 = vmatpush1.msra.mxu0 0.0
      %2066 = vmatprep.subr.mxu0 0.0
      %2067 = vmatpush1.msra.mxu0 0.0
      %2068 = vmatprep.subr.mxu0 0.0
      %2069 = vmatpush1.msra.mxu0 0.0
      %2070 = vmatprep.subr.mxu0 0.0
      %2071 = vmatpush1.msra.mxu0 0.0
      %2072 = vmatprep.subr.mxu0 0.0
      %2073 = vmatpush1.msra.mxu0 0.0
      %2074 = vmatprep.subr.mxu0 0.0
      %2075 = vmatpush1.msra.mxu0 0.0
      %2076 = vmatprep.subr.mxu0 0.0
      %2077 = vmatpush1.msra.mxu0 0.0
      %2078 = vmatprep.subr.mxu0 0.0
      %2079 = vmatpush1.msra.mxu0 0.0
      %2080 = vmatprep.subr.mxu0 0.0
      %2081 = vmatpush1.msra.mxu0 0.0
      %2082 = vmatprep.subr.mxu0 0.0
      %2083 = vmatpush1.msra.mxu0 0.0
      %2084 = vmatprep.subr.mxu0 0.0
      %2085 = vmatpush1.msra.mxu0 0.0
      %2086 = vmatprep.subr.mxu0 0.0
      %2087 = vmatpush1.msra.mxu0 0.0
      %2088 = vmatprep.subr.mxu0 0.0
      %2089 = vmatpush1.msra.mxu0 0.0
      %2090 = vmatprep.subr.mxu0 %v1431
      %2091 = vmatpush1.msra.mxu0 %v1430
      %2092 = vmatprep.subr.mxu0 %v1429
      %2093 = vmatpush1.msra.mxu0 %v1428
      %2094 = vmatprep.subr.mxu0 0.0
      %2095 = vmatpush2.msra.mxu0 0.0
      %2096 = vmatprep.subr.mxu0 0.0
      %2097 = vmatpush2.msra.mxu0 0.0
      %2098 = vmatprep.subr.mxu0 0.0
      %2099 = vmatpush2.msra.mxu0 0.0
      %2100 = vmatprep.subr.mxu0 0.0
      %2101 = vmatpush2.msra.mxu0 0.0
      %2102 = vmatprep.subr.mxu0 0.0
      %2103 = vmatpush2.msra.mxu0 0.0
      %2104 = vmatprep.subr.mxu0 0.0
      %2105 = vmatpush2.msra.mxu0 0.0
      %2106 = vmatprep.subr.mxu0 0.0
      %2107 = vmatpush2.msra.mxu0 0.0
      %2108 = vmatprep.subr.mxu0 0.0
      %2109 = vmatpush2.msra.mxu0 0.0
      %2110 = vmatprep.subr.mxu0 0.0
      %2111 = vmatpush2.msra.mxu0 0.0
      %2112 = vmatprep.subr.mxu0 0.0
      %2113 = vmatpush2.msra.mxu0 0.0
      %2114 = vmatprep.subr.mxu0 0.0
      %2115 = vmatpush2.msra.mxu0 0.0
      %2116 = vmatprep.subr.mxu0 0.0
      %2117 = vmatpush2.msra.mxu0 0.0
      %2118 = vmatprep.subr.mxu0 0.0
      %2119 = vmatpush2.msra.mxu0 0.0
      %2120 = vmatprep.subr.mxu0 0.0
      %2121 = vmatpush2.msra.mxu0 0.0
      %2122 = vmatprep.subr.mxu0 0.0
      %2123 = vmatpush2.msra.mxu0 0.0
      %2124 = vmatprep.subr.mxu0 0.0
      %2125 = vmatpush2.msra.mxu0 0.0
      %2126 = vmatprep.mubr.f32.mxu0 0.0
      %2127 = vmatmul.mubr.f32.gmra.mxu0 %v2057
      %v2128 = vpop.f32.mrf.mxu0
      %v2129 = vadd.f32 0.0, %v2128
      %v2130 = vpop.f32.mrf.mxu0
      %v2131 = vadd.f32 0.0, %v2130
      %2132 = vmatprep.mubr.f32.mxu0 0.0
      %2133 = vmatmul.mubr.f32.gmra.mxu0 %v2060
      %v2134 = vpop.f32.mrf.mxu0
      %v2135 = vadd.f32 0.0, %v2134
      %v2136 = vpop.f32.mrf.mxu0
      %v2137 = vadd.f32 0.0, %v2136
      %2138 = vdwg.mxu0
      %v2139 = vadd.f32 %v2049, %v2129
      %v2140 = vadd.f32 %v2050, %v2131
      %v2141 = vadd.f32 %v2051, %v2135
      %v2142 = vadd.f32 %v2052, %v2137
      %2143 = vrot.lane.b32.xlu0 %v1428, 127
      %v2144 = vpop.permute.xlu0 %2143
      %2145 = vrot.lane.b32.xlu0 %v1429, 127
      %v2146 = vpop.permute.xlu0 %2145
      %2147 = vrot.lane.b32.xlu0 %v1430, 127
      %v2148 = vpop.permute.xlu0 %2147
      %2149 = vrot.lane.b32.xlu0 %v1431, 127
      %v2150 = vpop.permute.xlu0 %2149
      %v2151 = vsel %vm916, %v2144, %v2146
      %v2152 = vsel %vm916, %v2148, %v2150
      %v2159 = vsel %vm916, %v2146, %v2144
      %v2160 = vsel %vm916, %v2150, %v2148
      %s2161 = scalar_lea.vmem %s2, 224
      %v2162 = vld [vmem:[%s2161] sm:$0xff]
      %v2163 = vld [vmem:[%s2161 + $0x8] sm:$0xff]
      %v2165 = vsel %vm337, %v2162, 0
      %v2168 = vsel %vm337, %v2163, 0
      %2170 = vmatprep.subr.mxu0 0.0
      %2171 = vmatpush1.msra.mxu0 0.0
      %2172 = vmatprep.subr.mxu0 0.0
      %2173 = vmatpush1.msra.mxu0 0.0
      %2174 = vmatprep.subr.mxu0 0.0
      %2175 = vmatpush1.msra.mxu0 0.0
      %2176 = vmatprep.subr.mxu0 0.0
      %2177 = vmatpush1.msra.mxu0 0.0
      %2178 = vmatprep.subr.mxu0 0.0
      %2179 = vmatpush1.msra.mxu0 0.0
      %2180 = vmatprep.subr.mxu0 0.0
      %2181 = vmatpush1.msra.mxu0 0.0
      %2182 = vmatprep.subr.mxu0 0.0
      %2183 = vmatpush1.msra.mxu0 0.0
      %2184 = vmatprep.subr.mxu0 0.0
      %2185 = vmatpush1.msra.mxu0 0.0
      %2186 = vmatprep.subr.mxu0 0.0
      %2187 = vmatpush1.msra.mxu0 0.0
      %2188 = vmatprep.subr.mxu0 0.0
      %2189 = vmatpush1.msra.mxu0 0.0
      %2190 = vmatprep.subr.mxu0 0.0
      %2191 = vmatpush1.msra.mxu0 0.0
      %2192 = vmatprep.subr.mxu0 0.0
      %2193 = vmatpush1.msra.mxu0 0.0
      %2194 = vmatprep.subr.mxu0 0.0
      %2195 = vmatpush1.msra.mxu0 0.0
      %2196 = vmatprep.subr.mxu0 0.0
      %2197 = vmatpush1.msra.mxu0 0.0
      %2198 = vmatprep.subr.mxu0 %v2160
      %2199 = vmatpush1.msra.mxu0 %v2152
      %2200 = vmatprep.subr.mxu0 %v2159
      %2201 = vmatpush1.msra.mxu0 %v2151
      %2202 = vmatprep.subr.mxu0 0.0
      %2203 = vmatpush2.msra.mxu0 0.0
      %2204 = vmatprep.subr.mxu0 0.0
      %2205 = vmatpush2.msra.mxu0 0.0
      %2206 = vmatprep.subr.mxu0 0.0
      %2207 = vmatpush2.msra.mxu0 0.0
      %2208 = vmatprep.subr.mxu0 0.0
      %2209 = vmatpush2.msra.mxu0 0.0
      %2210 = vmatprep.subr.mxu0 0.0
      %2211 = vmatpush2.msra.mxu0 0.0
      %2212 = vmatprep.subr.mxu0 0.0
      %2213 = vmatpush2.msra.mxu0 0.0
      %2214 = vmatprep.subr.mxu0 0.0
      %2215 = vmatpush2.msra.mxu0 0.0
      %2216 = vmatprep.subr.mxu0 0.0
      %2217 = vmatpush2.msra.mxu0 0.0
      %2218 = vmatprep.subr.mxu0 0.0
      %2219 = vmatpush2.msra.mxu0 0.0
      %2220 = vmatprep.subr.mxu0 0.0
      %2221 = vmatpush2.msra.mxu0 0.0
      %2222 = vmatprep.subr.mxu0 0.0
      %2223 = vmatpush2.msra.mxu0 0.0
      %2224 = vmatprep.subr.mxu0 0.0
      %2225 = vmatpush2.msra.mxu0 0.0
      %2226 = vmatprep.subr.mxu0 0.0
      %2227 = vmatpush2.msra.mxu0 0.0
      %2228 = vmatprep.subr.mxu0 0.0
      %2229 = vmatpush2.msra.mxu0 0.0
      %2230 = vmatprep.subr.mxu0 0.0
      %2231 = vmatpush2.msra.mxu0 0.0
      %2232 = vmatprep.subr.mxu0 0.0
      %2233 = vmatpush2.msra.mxu0 0.0
      %2234 = vmatprep.mubr.f32.mxu0 0.0
      %2235 = vmatmul.mubr.f32.gmra.mxu0 %v2165
      %v2236 = vpop.f32.mrf.mxu0
      %v2237 = vadd.f32 0.0, %v2236
      %v2238 = vpop.f32.mrf.mxu0
      %v2239 = vadd.f32 0.0, %v2238
      %2240 = vmatprep.mubr.f32.mxu0 0.0
      %2241 = vmatmul.mubr.f32.gmra.mxu0 %v2168
      %v2242 = vpop.f32.mrf.mxu0
      %v2243 = vadd.f32 0.0, %v2242
      %v2244 = vpop.f32.mrf.mxu0
      %v2245 = vadd.f32 0.0, %v2244
      %2246 = vdwg.mxu0
      %v2247 = vmul.f32 %v2237, %v1019
      %v2248 = vmul.f32 %v2239, %v1023
      %v2249 = vmul.f32 %v2243, %v1019
      %v2250 = vmul.f32 %v2245, %v1023
      %v2251 = vadd.f32 %v2139, %v2247
      %v2252 = vadd.f32 %v2140, %v2248
      %v2253 = vadd.f32 %v2141, %v2249
      %v2254 = vadd.f32 %v2142, %v2250
      %2255 = vrot.lane.b32.xlu0 %v1428, 113
      %v2256 = vpop.permute.xlu0 %2255
      %2257 = vrot.lane.b32.xlu0 %v1429, 113
      %v2258 = vpop.permute.xlu0 %2257
      %2259 = vrot.lane.b32.xlu0 %v1430, 113
      %v2260 = vpop.permute.xlu0 %2259
      %2261 = vrot.lane.b32.xlu0 %v1431, 113
      %v2262 = vpop.permute.xlu0 %2261
      %v2263 = vsel %vm1042, %v2256, %v2258
      %v2264 = vsel %vm1042, %v2260, %v2262
      %v2271 = vsel %vm1042, %v2258, %v2256
      %v2272 = vsel %vm1042, %v2262, %v2260
      %s2273 = scalar_lea.vmem %s2, 240
      %v2274 = vld [vmem:[%s2273] sm:$0xff]
      %v2275 = vld [vmem:[%s2273 + $0x8] sm:$0xff]
      %v2277 = vsel %vm337, %v2274, 0
      %v2280 = vsel %vm337, %v2275, 0
      %2282 = vmatprep.subr.mxu0 0.0
      %2283 = vmatpush1.msra.mxu0 0.0
      %2284 = vmatprep.subr.mxu0 0.0
      %2285 = vmatpush1.msra.mxu0 0.0
      %2286 = vmatprep.subr.mxu0 0.0
      %2287 = vmatpush1.msra.mxu0 0.0
      %2288 = vmatprep.subr.mxu0 0.0
      %2289 = vmatpush1.msra.mxu0 0.0
      %2290 = vmatprep.subr.mxu0 0.0
      %2291 = vmatpush1.msra.mxu0 0.0
      %2292 = vmatprep.subr.mxu0 0.0
      %2293 = vmatpush1.msra.mxu0 0.0
      %2294 = vmatprep.subr.mxu0 0.0
      %2295 = vmatpush1.msra.mxu0 0.0
      %2296 = vmatprep.subr.mxu0 0.0
      %2297 = vmatpush1.msra.mxu0 0.0
      %2298 = vmatprep.subr.mxu0 0.0
      %2299 = vmatpush1.msra.mxu0 0.0
      %2300 = vmatprep.subr.mxu0 0.0
      %2301 = vmatpush1.msra.mxu0 0.0
      %2302 = vmatprep.subr.mxu0 0.0
      %2303 = vmatpush1.msra.mxu0 0.0
      %2304 = vmatprep.subr.mxu0 0.0
      %2305 = vmatpush1.msra.mxu0 0.0
      %2306 = vmatprep.subr.mxu0 0.0
      %2307 = vmatpush1.msra.mxu0 0.0
      %2308 = vmatprep.subr.mxu0 0.0
      %2309 = vmatpush1.msra.mxu0 0.0
      %2310 = vmatprep.subr.mxu0 %v2272
      %2311 = vmatpush1.msra.mxu0 %v2264
      %2312 = vmatprep.subr.mxu0 %v2271
      %2313 = vmatpush1.msra.mxu0 %v2263
      %2314 = vmatprep.subr.mxu0 0.0
      %2315 = vmatpush2.msra.mxu0 0.0
      %2316 = vmatprep.subr.mxu0 0.0
      %2317 = vmatpush2.msra.mxu0 0.0
      %2318 = vmatprep.subr.mxu0 0.0
      %2319 = vmatpush2.msra.mxu0 0.0
      %2320 = vmatprep.subr.mxu0 0.0
      %2321 = vmatpush2.msra.mxu0 0.0
      %2322 = vmatprep.subr.mxu0 0.0
      %2323 = vmatpush2.msra.mxu0 0.0
      %2324 = vmatprep.subr.mxu0 0.0
      %2325 = vmatpush2.msra.mxu0 0.0
      %2326 = vmatprep.subr.mxu0 0.0
      %2327 = vmatpush2.msra.mxu0 0.0
      %2328 = vmatprep.subr.mxu0 0.0
      %2329 = vmatpush2.msra.mxu0 0.0
      %2330 = vmatprep.subr.mxu0 0.0
      %2331 = vmatpush2.msra.mxu0 0.0
      %2332 = vmatprep.subr.mxu0 0.0
      %2333 = vmatpush2.msra.mxu0 0.0
      %2334 = vmatprep.subr.mxu0 0.0
      %2335 = vmatpush2.msra.mxu0 0.0
      %2336 = vmatprep.subr.mxu0 0.0
      %2337 = vmatpush2.msra.mxu0 0.0
      %2338 = vmatprep.subr.mxu0 0.0
      %2339 = vmatpush2.msra.mxu0 0.0
      %2340 = vmatprep.subr.mxu0 0.0
      %2341 = vmatpush2.msra.mxu0 0.0
      %2342 = vmatprep.subr.mxu0 0.0
      %2343 = vmatpush2.msra.mxu0 0.0
      %2344 = vmatprep.subr.mxu0 0.0
      %2345 = vmatpush2.msra.mxu0 0.0
      %2346 = vmatprep.mubr.f32.mxu0 0.0
      %2347 = vmatmul.mubr.f32.gmra.mxu0 %v2277
      %v2348 = vpop.f32.mrf.mxu0
      %v2349 = vadd.f32 0.0, %v2348
      %v2350 = vpop.f32.mrf.mxu0
      %v2351 = vadd.f32 0.0, %v2350
      %2352 = vmatprep.mubr.f32.mxu0 0.0
      %2353 = vmatmul.mubr.f32.gmra.mxu0 %v2280
      %v2354 = vpop.f32.mrf.mxu0
      %v2355 = vadd.f32 0.0, %v2354
      %v2356 = vpop.f32.mrf.mxu0
      %v2357 = vadd.f32 0.0, %v2356
      %2358 = vdwg.mxu0
      %v2359 = vmul.f32 %v2349, %v1145
      %v2360 = vmul.f32 %v2351, %v1149
      %v2361 = vmul.f32 %v2355, %v1145
      %v2362 = vmul.f32 %v2357, %v1149
      %v2363 = vadd.f32 %v2251, %v2359
      %v2364 = vadd.f32 %v2252, %v2360
      %v2365 = vadd.f32 %v2253, %v2361
      %v2366 = vadd.f32 %v2254, %v2362
      %2367 = vrot.lane.b32.xlu0 %v1428, 112
      %v2368 = vpop.permute.xlu0 %2367
      %2369 = vrot.lane.b32.xlu0 %v1429, 112
      %v2370 = vpop.permute.xlu0 %2369
      %2371 = vrot.lane.b32.xlu0 %v1430, 112
      %v2372 = vpop.permute.xlu0 %2371
      %2373 = vrot.lane.b32.xlu0 %v1431, 112
      %v2374 = vpop.permute.xlu0 %2373
      %v2375 = vsel %vm1168, %v2368, %v2370
      %v2376 = vsel %vm1168, %v2372, %v2374
      %v2383 = vsel %vm1168, %v2370, %v2368
      %v2384 = vsel %vm1168, %v2374, %v2372
      %s2385 = scalar_lea.vmem %s2, 256
      %v2386 = vld [vmem:[%s2385] sm:$0xff]
      %v2387 = vld [vmem:[%s2385 + $0x8] sm:$0xff]
      %v2389 = vsel %vm337, %v2386, 0
      %v2392 = vsel %vm337, %v2387, 0
      %2394 = vmatprep.subr.mxu0 0.0
      %2395 = vmatpush1.msra.mxu0 0.0
      %2396 = vmatprep.subr.mxu0 0.0
      %2397 = vmatpush1.msra.mxu0 0.0
      %2398 = vmatprep.subr.mxu0 0.0
      %2399 = vmatpush1.msra.mxu0 0.0
      %2400 = vmatprep.subr.mxu0 0.0
      %2401 = vmatpush1.msra.mxu0 0.0
      %2402 = vmatprep.subr.mxu0 0.0
      %2403 = vmatpush1.msra.mxu0 0.0
      %2404 = vmatprep.subr.mxu0 0.0
      %2405 = vmatpush1.msra.mxu0 0.0
      %2406 = vmatprep.subr.mxu0 0.0
      %2407 = vmatpush1.msra.mxu0 0.0
      %2408 = vmatprep.subr.mxu0 0.0
      %2409 = vmatpush1.msra.mxu0 0.0
      %2410 = vmatprep.subr.mxu0 0.0
      %2411 = vmatpush1.msra.mxu0 0.0
      %2412 = vmatprep.subr.mxu0 0.0
      %2413 = vmatpush1.msra.mxu0 0.0
      %2414 = vmatprep.subr.mxu0 0.0
      %2415 = vmatpush1.msra.mxu0 0.0
      %2416 = vmatprep.subr.mxu0 0.0
      %2417 = vmatpush1.msra.mxu0 0.0
      %2418 = vmatprep.subr.mxu0 0.0
      %2419 = vmatpush1.msra.mxu0 0.0
      %2420 = vmatprep.subr.mxu0 0.0
      %2421 = vmatpush1.msra.mxu0 0.0
      %2422 = vmatprep.subr.mxu0 %v2384
      %2423 = vmatpush1.msra.mxu0 %v2376
      %2424 = vmatprep.subr.mxu0 %v2383
      %2425 = vmatpush1.msra.mxu0 %v2375
      %2426 = vmatprep.subr.mxu0 0.0
      %2427 = vmatpush2.msra.mxu0 0.0
      %2428 = vmatprep.subr.mxu0 0.0
      %2429 = vmatpush2.msra.mxu0 0.0
      %2430 = vmatprep.subr.mxu0 0.0
      %2431 = vmatpush2.msra.mxu0 0.0
      %2432 = vmatprep.subr.mxu0 0.0
      %2433 = vmatpush2.msra.mxu0 0.0
      %2434 = vmatprep.subr.mxu0 0.0
      %2435 = vmatpush2.msra.mxu0 0.0
      %2436 = vmatprep.subr.mxu0 0.0
      %2437 = vmatpush2.msra.mxu0 0.0
      %2438 = vmatprep.subr.mxu0 0.0
      %2439 = vmatpush2.msra.mxu0 0.0
      %2440 = vmatprep.subr.mxu0 0.0
      %2441 = vmatpush2.msra.mxu0 0.0
      %2442 = vmatprep.subr.mxu0 0.0
      %2443 = vmatpush2.msra.mxu0 0.0
      %2444 = vmatprep.subr.mxu0 0.0
      %2445 = vmatpush2.msra.mxu0 0.0
      %2446 = vmatprep.subr.mxu0 0.0
      %2447 = vmatpush2.msra.mxu0 0.0
      %2448 = vmatprep.subr.mxu0 0.0
      %2449 = vmatpush2.msra.mxu0 0.0
      %2450 = vmatprep.subr.mxu0 0.0
      %2451 = vmatpush2.msra.mxu0 0.0
      %2452 = vmatprep.subr.mxu0 0.0
      %2453 = vmatpush2.msra.mxu0 0.0
      %2454 = vmatprep.subr.mxu0 0.0
      %2455 = vmatpush2.msra.mxu0 0.0
      %2456 = vmatprep.subr.mxu0 0.0
      %2457 = vmatpush2.msra.mxu0 0.0
      %2458 = vmatprep.mubr.f32.mxu0 0.0
      %2459 = vmatmul.mubr.f32.gmra.mxu0 %v2389
      %v2460 = vpop.f32.mrf.mxu0
      %v2461 = vadd.f32 0.0, %v2460
      %v2462 = vpop.f32.mrf.mxu0
      %v2463 = vadd.f32 0.0, %v2462
      %2464 = vmatprep.mubr.f32.mxu0 0.0
      %2465 = vmatmul.mubr.f32.gmra.mxu0 %v2392
      %v2466 = vpop.f32.mrf.mxu0
      %v2467 = vadd.f32 0.0, %v2466
      %v2468 = vpop.f32.mrf.mxu0
      %v2469 = vadd.f32 0.0, %v2468
      %2470 = vdwg.mxu0
      %v2471 = vmul.f32 %v2461, %v1271
      %v2472 = vmul.f32 %v2463, %v1275
      %v2473 = vmul.f32 %v2467, %v1271
      %v2474 = vmul.f32 %v2469, %v1275
      %v2475 = vadd.f32 %v2363, %v2471
      %v2476 = vadd.f32 %v2364, %v2472
      %v2477 = vadd.f32 %v2365, %v2473
      %v2478 = vadd.f32 %v2366, %v2474
      %2479 = vrot.lane.b32.xlu0 %v1428, 111
      %v2480 = vpop.permute.xlu0 %2479
      %2481 = vrot.lane.b32.xlu0 %v1429, 111
      %v2482 = vpop.permute.xlu0 %2481
      %2483 = vrot.lane.b32.xlu0 %v1430, 111
      %v2484 = vpop.permute.xlu0 %2483
      %2485 = vrot.lane.b32.xlu0 %v1431, 111
      %v2486 = vpop.permute.xlu0 %2485
      %v2487 = vsel %vm1294, %v2480, %v2482
      %v2488 = vsel %vm1294, %v2484, %v2486
      %v2495 = vsel %vm1294, %v2482, %v2480
      %v2496 = vsel %vm1294, %v2486, %v2484
      %s2497 = scalar_lea.vmem %s2, 272
      %v2498 = vld [vmem:[%s2497] sm:$0xff]
      %v2499 = vld [vmem:[%s2497 + $0x8] sm:$0xff]
      %v2501 = vsel %vm337, %v2498, 0
      %v2504 = vsel %vm337, %v2499, 0
      %2506 = vmatprep.subr.mxu0 0.0
      %2507 = vmatpush1.msra.mxu0 0.0
      %2508 = vmatprep.subr.mxu0 0.0
      %2509 = vmatpush1.msra.mxu0 0.0
      %2510 = vmatprep.subr.mxu0 0.0
      %2511 = vmatpush1.msra.mxu0 0.0
      %2512 = vmatprep.subr.mxu0 0.0
      %2513 = vmatpush1.msra.mxu0 0.0
      %2514 = vmatprep.subr.mxu0 0.0
      %2515 = vmatpush1.msra.mxu0 0.0
      %2516 = vmatprep.subr.mxu0 0.0
      %2517 = vmatpush1.msra.mxu0 0.0
      %2518 = vmatprep.subr.mxu0 0.0
      %2519 = vmatpush1.msra.mxu0 0.0
      %2520 = vmatprep.subr.mxu0 0.0
      %2521 = vmatpush1.msra.mxu0 0.0
      %2522 = vmatprep.subr.mxu0 0.0
      %2523 = vmatpush1.msra.mxu0 0.0
      %2524 = vmatprep.subr.mxu0 0.0
      %2525 = vmatpush1.msra.mxu0 0.0
      %2526 = vmatprep.subr.mxu0 0.0
      %2527 = vmatpush1.msra.mxu0 0.0
      %2528 = vmatprep.subr.mxu0 0.0
      %2529 = vmatpush1.msra.mxu0 0.0
      %2530 = vmatprep.subr.mxu0 0.0
      %2531 = vmatpush1.msra.mxu0 0.0
      %2532 = vmatprep.subr.mxu0 0.0
      %2533 = vmatpush1.msra.mxu0 0.0
      %2534 = vmatprep.subr.mxu0 %v2496
      %2535 = vmatpush1.msra.mxu0 %v2488
      %2536 = vmatprep.subr.mxu0 %v2495
      %2537 = vmatpush1.msra.mxu0 %v2487
      %2538 = vmatprep.subr.mxu0 0.0
      %2539 = vmatpush2.msra.mxu0 0.0
      %2540 = vmatprep.subr.mxu0 0.0
      %2541 = vmatpush2.msra.mxu0 0.0
      %2542 = vmatprep.subr.mxu0 0.0
      %2543 = vmatpush2.msra.mxu0 0.0
      %2544 = vmatprep.subr.mxu0 0.0
      %2545 = vmatpush2.msra.mxu0 0.0
      %2546 = vmatprep.subr.mxu0 0.0
      %2547 = vmatpush2.msra.mxu0 0.0
      %2548 = vmatprep.subr.mxu0 0.0
      %2549 = vmatpush2.msra.mxu0 0.0
      %2550 = vmatprep.subr.mxu0 0.0
      %2551 = vmatpush2.msra.mxu0 0.0
      %2552 = vmatprep.subr.mxu0 0.0
      %2553 = vmatpush2.msra.mxu0 0.0
      %2554 = vmatprep.subr.mxu0 0.0
      %2555 = vmatpush2.msra.mxu0 0.0
      %2556 = vmatprep.subr.mxu0 0.0
      %2557 = vmatpush2.msra.mxu0 0.0
      %2558 = vmatprep.subr.mxu0 0.0
      %2559 = vmatpush2.msra.mxu0 0.0
      %2560 = vmatprep.subr.mxu0 0.0
      %2561 = vmatpush2.msra.mxu0 0.0
      %2562 = vmatprep.subr.mxu0 0.0
      %2563 = vmatpush2.msra.mxu0 0.0
      %2564 = vmatprep.subr.mxu0 0.0
      %2565 = vmatpush2.msra.mxu0 0.0
      %2566 = vmatprep.subr.mxu0 0.0
      %2567 = vmatpush2.msra.mxu0 0.0
      %2568 = vmatprep.subr.mxu0 0.0
      %2569 = vmatpush2.msra.mxu0 0.0
      %2570 = vmatprep.mubr.f32.mxu0 0.0
      %2571 = vmatmul.mubr.f32.gmra.mxu0 %v2501
      %v2572 = vpop.f32.mrf.mxu0
      %v2573 = vadd.f32 0.0, %v2572
      %v2574 = vpop.f32.mrf.mxu0
      %v2575 = vadd.f32 0.0, %v2574
      %2576 = vmatprep.mubr.f32.mxu0 0.0
      %2577 = vmatmul.mubr.f32.gmra.mxu0 %v2504
      %v2578 = vpop.f32.mrf.mxu0
      %v2579 = vadd.f32 0.0, %v2578
      %v2580 = vpop.f32.mrf.mxu0
      %v2581 = vadd.f32 0.0, %v2580
      %2582 = vdwg.mxu0
      %v2583 = vmul.f32 %v2573, %v1397
      %v2584 = vmul.f32 %v2575, %v1401
      %v2585 = vmul.f32 %v2579, %v1397
      %v2586 = vmul.f32 %v2581, %v1401
      %v2587 = vadd.f32 %v2475, %v2583
      %v2588 = vadd.f32 %v2476, %v2584
      %v2589 = vadd.f32 %v2477, %v2585
      %v2590 = vadd.f32 %v2478, %v2586
      %s2591 = scalar_lea.vmem %s3, 16
      %v2592 = vld [vmem:[%s2591] sm:$0xff]
      %v2593 = vld [vmem:[%s2591 + $0x8] sm:$0xff]
      %2595 = vset.pattern.permute.xlu0 0
      %2596 = vperm.xlu0 %2595, %v2592
      %v2597 = vpop.permute.xlu0 %2596
      %2600 = vset.pattern.permute.xlu0 0
      %2601 = vperm.xlu0 %2600, %v2593
      %v2602 = vpop.permute.xlu0 %2601
      %v2604 = vadd.f32 %v2587, %v2597
      %v2605 = vadd.f32 %v2588, %v2597
      %v2606 = vadd.f32 %v2589, %v2602
      %v2607 = vadd.f32 %v2590, %v2602
      %v2608 = vmax.f32 %v2604, 0.0
      %v2609 = vmax.f32 %v2605, 0.0
      %v2610 = vmax.f32 %v2606, 0.0
      %v2611 = vmax.f32 %v2607, 0.0
      %s2612 = scalar_lea.vmem %s4, 32
      %v2613 = vld [vmem:[%s2612] sm:$0xff]
      %v2614 = vld [vmem:[%s2612 + $0x8] sm:$0xff]
      %v2616 = vsel %vm337, %v2613, 0
      %v2619 = vsel %vm337, %v2614, 0
      %2621 = vmatprep.subr.mxu0 0.0
      %2622 = vmatpush1.msra.mxu0 0.0
      %2623 = vmatprep.subr.mxu0 0.0
      %2624 = vmatpush1.msra.mxu0 0.0
      %2625 = vmatprep.subr.mxu0 0.0
      %2626 = vmatpush1.msra.mxu0 0.0
      %2627 = vmatprep.subr.mxu0 0.0
      %2628 = vmatpush1.msra.mxu0 0.0
      %2629 = vmatprep.subr.mxu0 0.0
      %2630 = vmatpush1.msra.mxu0 0.0
      %2631 = vmatprep.subr.mxu0 0.0
      %2632 = vmatpush1.msra.mxu0 0.0
      %2633 = vmatprep.subr.mxu0 0.0
      %2634 = vmatpush1.msra.mxu0 0.0
      %2635 = vmatprep.subr.mxu0 0.0
      %2636 = vmatpush1.msra.mxu0 0.0
      %2637 = vmatprep.subr.mxu0 0.0
      %2638 = vmatpush1.msra.mxu0 0.0
      %2639 = vmatprep.subr.mxu0 0.0
      %2640 = vmatpush1.msra.mxu0 0.0
      %2641 = vmatprep.subr.mxu0 0.0
      %2642 = vmatpush1.msra.mxu0 0.0
      %2643 = vmatprep.subr.mxu0 0.0
      %2644 = vmatpush1.msra.mxu0 0.0
      %2645 = vmatprep.subr.mxu0 0.0
      %2646 = vmatpush1.msra.mxu0 0.0
      %2647 = vmatprep.subr.mxu0 0.0
      %2648 = vmatpush1.msra.mxu0 0.0
      %2649 = vmatprep.subr.mxu0 %v2611
      %2650 = vmatpush1.msra.mxu0 %v2610
      %2651 = vmatprep.subr.mxu0 %v2609
      %2652 = vmatpush1.msra.mxu0 %v2608
      %2653 = vmatprep.subr.mxu0 0.0
      %2654 = vmatpush2.msra.mxu0 0.0
      %2655 = vmatprep.subr.mxu0 0.0
      %2656 = vmatpush2.msra.mxu0 0.0
      %2657 = vmatprep.subr.mxu0 0.0
      %2658 = vmatpush2.msra.mxu0 0.0
      %2659 = vmatprep.subr.mxu0 0.0
      %2660 = vmatpush2.msra.mxu0 0.0
      %2661 = vmatprep.subr.mxu0 0.0
      %2662 = vmatpush2.msra.mxu0 0.0
      %2663 = vmatprep.subr.mxu0 0.0
      %2664 = vmatpush2.msra.mxu0 0.0
      %2665 = vmatprep.subr.mxu0 0.0
      %2666 = vmatpush2.msra.mxu0 0.0
      %2667 = vmatprep.subr.mxu0 0.0
      %2668 = vmatpush2.msra.mxu0 0.0
      %2669 = vmatprep.subr.mxu0 0.0
      %2670 = vmatpush2.msra.mxu0 0.0
      %2671 = vmatprep.subr.mxu0 0.0
      %2672 = vmatpush2.msra.mxu0 0.0
      %2673 = vmatprep.subr.mxu0 0.0
      %2674 = vmatpush2.msra.mxu0 0.0
      %2675 = vmatprep.subr.mxu0 0.0
      %2676 = vmatpush2.msra.mxu0 0.0
      %2677 = vmatprep.subr.mxu0 0.0
      %2678 = vmatpush2.msra.mxu0 0.0
      %2679 = vmatprep.subr.mxu0 0.0
      %2680 = vmatpush2.msra.mxu0 0.0
      %2681 = vmatprep.subr.mxu0 0.0
      %2682 = vmatpush2.msra.mxu0 0.0
      %2683 = vmatprep.subr.mxu0 0.0
      %2684 = vmatpush2.msra.mxu0 0.0
      %2685 = vmatprep.mubr.f32.mxu0 0.0
      %2686 = vmatmul.mubr.f32.gmra.mxu0 %v2616
      %v2687 = vpop.f32.mrf.mxu0
      %v2688 = vadd.f32 0.0, %v2687
      %v2689 = vpop.f32.mrf.mxu0
      %v2690 = vadd.f32 0.0, %v2689
      %2691 = vmatprep.mubr.f32.mxu0 0.0
      %2692 = vmatmul.mubr.f32.gmra.mxu0 %v2619
      %v2693 = vpop.f32.mrf.mxu0
      %v2694 = vadd.f32 0.0, %v2693
      %v2695 = vpop.f32.mrf.mxu0
      %v2696 = vadd.f32 0.0, %v2695
      %2697 = vdwg.mxu0
      %v2698 = vadd.f32 %v1591, %v2688
      %v2699 = vadd.f32 %v1593, %v2690
      %v2700 = vadd.f32 %v1597, %v2694
      %v2701 = vadd.f32 %v1599, %v2696
      %2704 = vrot.lane.b32.xlu0 %v2609, 17
      %v2705 = vpop.permute.xlu0 %2704
      %2706 = vrot.lane.b32.xlu0 %v2611, 17
      %v2707 = vpop.permute.xlu0 %2706
      %2712 = vrot.lane.b32.xlu0 %v2608, 17
      %v2713 = vpop.permute.xlu0 %2712
      %2714 = vrot.lane.b32.xlu0 %v2610, 17
      %v2715 = vpop.permute.xlu0 %2714
      %v2716 = vsel %vm326, %v2713, %v2705
      %v2717 = vsel %vm326, %v2715, %v2707
      %v2722 = vsel %vm326, %v2705, %v2713
      %v2723 = vsel %vm326, %v2707, %v2715
      %s2724 = scalar_lea.vmem %s2, 288
      %v2725 = vld [vmem:[%s2724] sm:$0xff]
      %v2726 = vld [vmem:[%s2724 + $0x8] sm:$0xff]
      %v2728 = vsel %vm337, %v2725, 0
      %v2731 = vsel %vm337, %v2726, 0
      %2733 = vmatprep.subr.mxu0 0.0
      %2734 = vmatpush1.msra.mxu0 0.0
      %2735 = vmatprep.subr.mxu0 0.0
      %2736 = vmatpush1.msra.mxu0 0.0
      %2737 = vmatprep.subr.mxu0 0.0
      %2738 = vmatpush1.msra.mxu0 0.0
      %2739 = vmatprep.subr.mxu0 0.0
      %2740 = vmatpush1.msra.mxu0 0.0
      %2741 = vmatprep.subr.mxu0 0.0
      %2742 = vmatpush1.msra.mxu0 0.0
      %2743 = vmatprep.subr.mxu0 0.0
      %2744 = vmatpush1.msra.mxu0 0.0
      %2745 = vmatprep.subr.mxu0 0.0
      %2746 = vmatpush1.msra.mxu0 0.0
      %2747 = vmatprep.subr.mxu0 0.0
      %2748 = vmatpush1.msra.mxu0 0.0
      %2749 = vmatprep.subr.mxu0 0.0
      %2750 = vmatpush1.msra.mxu0 0.0
      %2751 = vmatprep.subr.mxu0 0.0
      %2752 = vmatpush1.msra.mxu0 0.0
      %2753 = vmatprep.subr.mxu0 0.0
      %2754 = vmatpush1.msra.mxu0 0.0
      %2755 = vmatprep.subr.mxu0 0.0
      %2756 = vmatpush1.msra.mxu0 0.0
      %2757 = vmatprep.subr.mxu0 0.0
      %2758 = vmatpush1.msra.mxu0 0.0
      %2759 = vmatprep.subr.mxu0 0.0
      %2760 = vmatpush1.msra.mxu0 0.0
      %2761 = vmatprep.subr.mxu0 %v2717
      %2762 = vmatpush1.msra.mxu0 %v2723
      %2763 = vmatprep.subr.mxu0 %v2716
      %2764 = vmatpush1.msra.mxu0 %v2722
      %2765 = vmatprep.subr.mxu0 0.0
      %2766 = vmatpush2.msra.mxu0 0.0
      %2767 = vmatprep.subr.mxu0 0.0
      %2768 = vmatpush2.msra.mxu0 0.0
      %2769 = vmatprep.subr.mxu0 0.0
      %2770 = vmatpush2.msra.mxu0 0.0
      %2771 = vmatprep.subr.mxu0 0.0
      %2772 = vmatpush2.msra.mxu0 0.0
      %2773 = vmatprep.subr.mxu0 0.0
      %2774 = vmatpush2.msra.mxu0 0.0
      %2775 = vmatprep.subr.mxu0 0.0
      %2776 = vmatpush2.msra.mxu0 0.0
      %2777 = vmatprep.subr.mxu0 0.0
      %2778 = vmatpush2.msra.mxu0 0.0
      %2779 = vmatprep.subr.mxu0 0.0
      %2780 = vmatpush2.msra.mxu0 0.0
      %2781 = vmatprep.subr.mxu0 0.0
      %2782 = vmatpush2.msra.mxu0 0.0
      %2783 = vmatprep.subr.mxu0 0.0
      %2784 = vmatpush2.msra.mxu0 0.0
      %2785 = vmatprep.subr.mxu0 0.0
      %2786 = vmatpush2.msra.mxu0 0.0
      %2787 = vmatprep.subr.mxu0 0.0
      %2788 = vmatpush2.msra.mxu0 0.0
      %2789 = vmatprep.subr.mxu0 0.0
      %2790 = vmatpush2.msra.mxu0 0.0
      %2791 = vmatprep.subr.mxu0 0.0
      %2792 = vmatpush2.msra.mxu0 0.0
      %2793 = vmatprep.subr.mxu0 0.0
      %2794 = vmatpush2.msra.mxu0 0.0
      %2795 = vmatprep.subr.mxu0 0.0
      %2796 = vmatpush2.msra.mxu0 0.0
      %2797 = vmatprep.mubr.f32.mxu0 0.0
      %2798 = vmatmul.mubr.f32.gmra.mxu0 %v2728
      %v2799 = vpop.f32.mrf.mxu0
      %v2800 = vadd.f32 0.0, %v2799
      %v2801 = vpop.f32.mrf.mxu0
      %v2802 = vadd.f32 0.0, %v2801
      %2803 = vmatprep.mubr.f32.mxu0 0.0
      %2804 = vmatmul.mubr.f32.gmra.mxu0 %v2731
      %v2805 = vpop.f32.mrf.mxu0
      %v2806 = vadd.f32 0.0, %v2805
      %v2807 = vpop.f32.mrf.mxu0
      %v2808 = vadd.f32 0.0, %v2807
      %2809 = vdwg.mxu0
      %v2810 = vmul.f32 %v2800, %v426
      %v2811 = vmul.f32 %v2802, %v430
      %v2812 = vmul.f32 %v2806, %v426
      %v2813 = vmul.f32 %v2808, %v430
      %v2814 = vadd.f32 %v2810, 0.0
      %v2815 = vadd.f32 %v2811, 0.0
      %v2816 = vadd.f32 %v2812, 0.0
      %v2817 = vadd.f32 %v2813, 0.0
      %2818 = vrot.lane.b32.xlu0 %v2609, 16
      %v2819 = vpop.permute.xlu0 %2818
      %2820 = vrot.lane.b32.xlu0 %v2611, 16
      %v2821 = vpop.permute.xlu0 %2820
      %2824 = vrot.lane.b32.xlu0 %v2608, 16
      %v2825 = vpop.permute.xlu0 %2824
      %2826 = vrot.lane.b32.xlu0 %v2610, 16
      %v2827 = vpop.permute.xlu0 %2826
      %v2828 = vsel %vm337, %v2825, %v2819
      %v2829 = vsel %vm337, %v2827, %v2821
      %v2834 = vsel %vm337, %v2819, %v2825
      %v2835 = vsel %vm337, %v2821, %v2827
      %s2836 = scalar_lea.vmem %s2, 304
      %v2837 = vld [vmem:[%s2836] sm:$0xff]
      %v2838 = vld [vmem:[%s2836 + $0x8] sm:$0xff]
      %v2840 = vsel %vm337, %v2837, 0
      %v2843 = vsel %vm337, %v2838, 0
      %2845 = vmatprep.subr.mxu0 0.0
      %2846 = vmatpush1.msra.mxu0 0.0
      %2847 = vmatprep.subr.mxu0 0.0
      %2848 = vmatpush1.msra.mxu0 0.0
      %2849 = vmatprep.subr.mxu0 0.0
      %2850 = vmatpush1.msra.mxu0 0.0
      %2851 = vmatprep.subr.mxu0 0.0
      %2852 = vmatpush1.msra.mxu0 0.0
      %2853 = vmatprep.subr.mxu0 0.0
      %2854 = vmatpush1.msra.mxu0 0.0
      %2855 = vmatprep.subr.mxu0 0.0
      %2856 = vmatpush1.msra.mxu0 0.0
      %2857 = vmatprep.subr.mxu0 0.0
      %2858 = vmatpush1.msra.mxu0 0.0
      %2859 = vmatprep.subr.mxu0 0.0
      %2860 = vmatpush1.msra.mxu0 0.0
      %2861 = vmatprep.subr.mxu0 0.0
      %2862 = vmatpush1.msra.mxu0 0.0
      %2863 = vmatprep.subr.mxu0 0.0
      %2864 = vmatpush1.msra.mxu0 0.0
      %2865 = vmatprep.subr.mxu0 0.0
      %2866 = vmatpush1.msra.mxu0 0.0
      %2867 = vmatprep.subr.mxu0 0.0
      %2868 = vmatpush1.msra.mxu0 0.0
      %2869 = vmatprep.subr.mxu0 0.0
      %2870 = vmatpush1.msra.mxu0 0.0
      %2871 = vmatprep.subr.mxu0 0.0
      %2872 = vmatpush1.msra.mxu0 0.0
      %2873 = vmatprep.subr.mxu0 %v2829
      %2874 = vmatpush1.msra.mxu0 %v2835
      %2875 = vmatprep.subr.mxu0 %v2828
      %2876 = vmatpush1.msra.mxu0 %v2834
      %2877 = vmatprep.subr.mxu0 0.0
      %2878 = vmatpush2.msra.mxu0 0.0
      %2879 = vmatprep.subr.mxu0 0.0
      %2880 = vmatpush2.msra.mxu0 0.0
      %2881 = vmatprep.subr.mxu0 0.0
      %2882 = vmatpush2.msra.mxu0 0.0
      %2883 = vmatprep.subr.mxu0 0.0
      %2884 = vmatpush2.msra.mxu0 0.0
      %2885 = vmatprep.subr.mxu0 0.0
      %2886 = vmatpush2.msra.mxu0 0.0
      %2887 = vmatprep.subr.mxu0 0.0
      %2888 = vmatpush2.msra.mxu0 0.0
      %2889 = vmatprep.subr.mxu0 0.0
      %2890 = vmatpush2.msra.mxu0 0.0
      %2891 = vmatprep.subr.mxu0 0.0
      %2892 = vmatpush2.msra.mxu0 0.0
      %2893 = vmatprep.subr.mxu0 0.0
      %2894 = vmatpush2.msra.mxu0 0.0
      %2895 = vmatprep.subr.mxu0 0.0
      %2896 = vmatpush2.msra.mxu0 0.0
      %2897 = vmatprep.subr.mxu0 0.0
      %2898 = vmatpush2.msra.mxu0 0.0
      %2899 = vmatprep.subr.mxu0 0.0
      %2900 = vmatpush2.msra.mxu0 0.0
      %2901 = vmatprep.subr.mxu0 0.0
      %2902 = vmatpush2.msra.mxu0 0.0
      %2903 = vmatprep.subr.mxu0 0.0
      %2904 = vmatpush2.msra.mxu0 0.0
      %2905 = vmatprep.subr.mxu0 0.0
      %2906 = vmatpush2.msra.mxu0 0.0
      %2907 = vmatprep.subr.mxu0 0.0
      %2908 = vmatpush2.msra.mxu0 0.0
      %2909 = vmatprep.mubr.f32.mxu0 0.0
      %2910 = vmatmul.mubr.f32.gmra.mxu0 %v2840
      %v2911 = vpop.f32.mrf.mxu0
      %v2912 = vadd.f32 0.0, %v2911
      %v2913 = vpop.f32.mrf.mxu0
      %v2914 = vadd.f32 0.0, %v2913
      %2915 = vmatprep.mubr.f32.mxu0 0.0
      %2916 = vmatmul.mubr.f32.gmra.mxu0 %v2843
      %v2917 = vpop.f32.mrf.mxu0
      %v2918 = vadd.f32 0.0, %v2917
      %v2919 = vpop.f32.mrf.mxu0
      %v2920 = vadd.f32 0.0, %v2919
      %2921 = vdwg.mxu0
      %v2922 = vmul.f32 %v2912, %v551
      %v2923 = vmul.f32 %v2914, %v555
      %v2924 = vmul.f32 %v2918, %v551
      %v2925 = vmul.f32 %v2920, %v555
      %v2926 = vadd.f32 %v2814, %v2922
      %v2927 = vadd.f32 %v2815, %v2923
      %v2928 = vadd.f32 %v2816, %v2924
      %v2929 = vadd.f32 %v2817, %v2925
      %2930 = vrot.lane.b32.xlu0 %v2609, 15
      %v2931 = vpop.permute.xlu0 %2930
      %2932 = vrot.lane.b32.xlu0 %v2611, 15
      %v2933 = vpop.permute.xlu0 %2932
      %2936 = vrot.lane.b32.xlu0 %v2608, 15
      %v2937 = vpop.permute.xlu0 %2936
      %2938 = vrot.lane.b32.xlu0 %v2610, 15
      %v2939 = vpop.permute.xlu0 %2938
      %v2940 = vsel %vm576, %v2937, %v2931
      %v2941 = vsel %vm576, %v2939, %v2933
      %v2946 = vsel %vm576, %v2931, %v2937
      %v2947 = vsel %vm576, %v2933, %v2939
      %s2948 = scalar_lea.vmem %s2, 320
      %v2949 = vld [vmem:[%s2948] sm:$0xff]
      %v2950 = vld [vmem:[%s2948 + $0x8] sm:$0xff]
      %v2952 = vsel %vm337, %v2949, 0
      %v2955 = vsel %vm337, %v2950, 0
      %2957 = vmatprep.subr.mxu0 0.0
      %2958 = vmatpush1.msra.mxu0 0.0
      %2959 = vmatprep.subr.mxu0 0.0
      %2960 = vmatpush1.msra.mxu0 0.0
      %2961 = vmatprep.subr.mxu0 0.0
      %2962 = vmatpush1.msra.mxu0 0.0
      %2963 = vmatprep.subr.mxu0 0.0
      %2964 = vmatpush1.msra.mxu0 0.0
      %2965 = vmatprep.subr.mxu0 0.0
      %2966 = vmatpush1.msra.mxu0 0.0
      %2967 = vmatprep.subr.mxu0 0.0
      %2968 = vmatpush1.msra.mxu0 0.0
      %2969 = vmatprep.subr.mxu0 0.0
      %2970 = vmatpush1.msra.mxu0 0.0
      %2971 = vmatprep.subr.mxu0 0.0
      %2972 = vmatpush1.msra.mxu0 0.0
      %2973 = vmatprep.subr.mxu0 0.0
      %2974 = vmatpush1.msra.mxu0 0.0
      %2975 = vmatprep.subr.mxu0 0.0
      %2976 = vmatpush1.msra.mxu0 0.0
      %2977 = vmatprep.subr.mxu0 0.0
      %2978 = vmatpush1.msra.mxu0 0.0
      %2979 = vmatprep.subr.mxu0 0.0
      %2980 = vmatpush1.msra.mxu0 0.0
      %2981 = vmatprep.subr.mxu0 0.0
      %2982 = vmatpush1.msra.mxu0 0.0
      %2983 = vmatprep.subr.mxu0 0.0
      %2984 = vmatpush1.msra.mxu0 0.0
      %2985 = vmatprep.subr.mxu0 %v2941
      %2986 = vmatpush1.msra.mxu0 %v2947
      %2987 = vmatprep.subr.mxu0 %v2940
      %2988 = vmatpush1.msra.mxu0 %v2946
      %2989 = vmatprep.subr.mxu0 0.0
      %2990 = vmatpush2.msra.mxu0 0.0
      %2991 = vmatprep.subr.mxu0 0.0
      %2992 = vmatpush2.msra.mxu0 0.0
      %2993 = vmatprep.subr.mxu0 0.0
      %2994 = vmatpush2.msra.mxu0 0.0
      %2995 = vmatprep.subr.mxu0 0.0
      %2996 = vmatpush2.msra.mxu0 0.0
      %2997 = vmatprep.subr.mxu0 0.0
      %2998 = vmatpush2.msra.mxu0 0.0
      %2999 = vmatprep.subr.mxu0 0.0
      %3000 = vmatpush2.msra.mxu0 0.0
      %3001 = vmatprep.subr.mxu0 0.0
      %3002 = vmatpush2.msra.mxu0 0.0
      %3003 = vmatprep.subr.mxu0 0.0
      %3004 = vmatpush2.msra.mxu0 0.0
      %3005 = vmatprep.subr.mxu0 0.0
      %3006 = vmatpush2.msra.mxu0 0.0
      %3007 = vmatprep.subr.mxu0 0.0
      %3008 = vmatpush2.msra.mxu0 0.0
      %3009 = vmatprep.subr.mxu0 0.0
      %3010 = vmatpush2.msra.mxu0 0.0
      %3011 = vmatprep.subr.mxu0 0.0
      %3012 = vmatpush2.msra.mxu0 0.0
      %3013 = vmatprep.subr.mxu0 0.0
      %3014 = vmatpush2.msra.mxu0 0.0
      %3015 = vmatprep.subr.mxu0 0.0
      %3016 = vmatpush2.msra.mxu0 0.0
      %3017 = vmatprep.subr.mxu0 0.0
      %3018 = vmatpush2.msra.mxu0 0.0
      %3019 = vmatprep.subr.mxu0 0.0
      %3020 = vmatpush2.msra.mxu0 0.0
      %3021 = vmatprep.mubr.f32.mxu0 0.0
      %3022 = vmatmul.mubr.f32.gmra.mxu0 %v2952
      %v3023 = vpop.f32.mrf.mxu0
      %v3024 = vadd.f32 0.0, %v3023
      %v3025 = vpop.f32.mrf.mxu0
      %v3026 = vadd.f32 0.0, %v3025
      %3027 = vmatprep.mubr.f32.mxu0 0.0
      %3028 = vmatmul.mubr.f32.gmra.mxu0 %v2955
      %v3029 = vpop.f32.mrf.mxu0
      %v3030 = vadd.f32 0.0, %v3029
      %v3031 = vpop.f32.mrf.mxu0
      %v3032 = vadd.f32 0.0, %v3031
      %3033 = vdwg.mxu0
      %v3034 = vmul.f32 %v3024, %v677
      %v3035 = vmul.f32 %v3026, %v681
      %v3036 = vmul.f32 %v3030, %v677
      %v3037 = vmul.f32 %v3032, %v681
      %v3038 = vadd.f32 %v2926, %v3034
      %v3039 = vadd.f32 %v2927, %v3035
      %v3040 = vadd.f32 %v2928, %v3036
      %v3041 = vadd.f32 %v2929, %v3037
      %3042 = vrot.lane.b32.xlu0 %v2609, 1
      %v3043 = vpop.permute.xlu0 %3042
      %3044 = vrot.lane.b32.xlu0 %v2611, 1
      %v3045 = vpop.permute.xlu0 %3044
      %3048 = vrot.lane.b32.xlu0 %v2608, 1
      %v3049 = vpop.permute.xlu0 %3048
      %3050 = vrot.lane.b32.xlu0 %v2610, 1
      %v3051 = vpop.permute.xlu0 %3050
      %v3052 = vsel %vm702, %v3049, %v3043
      %v3053 = vsel %vm702, %v3051, %v3045
      %v3058 = vsel %vm702, %v3043, %v3049
      %v3059 = vsel %vm702, %v3045, %v3051
      %s3060 = scalar_lea.vmem %s2, 336
      %v3061 = vld [vmem:[%s3060] sm:$0xff]
      %v3062 = vld [vmem:[%s3060 + $0x8] sm:$0xff]
      %v3064 = vsel %vm337, %v3061, 0
      %v3067 = vsel %vm337, %v3062, 0
      %3069 = vmatprep.subr.mxu0 0.0
      %3070 = vmatpush1.msra.mxu0 0.0
      %3071 = vmatprep.subr.mxu0 0.0
      %3072 = vmatpush1.msra.mxu0 0.0
      %3073 = vmatprep.subr.mxu0 0.0
      %3074 = vmatpush1.msra.mxu0 0.0
      %3075 = vmatprep.subr.mxu0 0.0
      %3076 = vmatpush1.msra.mxu0 0.0
      %3077 = vmatprep.subr.mxu0 0.0
      %3078 = vmatpush1.msra.mxu0 0.0
      %3079 = vmatprep.subr.mxu0 0.0
      %3080 = vmatpush1.msra.mxu0 0.0
      %3081 = vmatprep.subr.mxu0 0.0
      %3082 = vmatpush1.msra.mxu0 0.0
      %3083 = vmatprep.subr.mxu0 0.0
      %3084 = vmatpush1.msra.mxu0 0.0
      %3085 = vmatprep.subr.mxu0 0.0
      %3086 = vmatpush1.msra.mxu0 0.0
      %3087 = vmatprep.subr.mxu0 0.0
      %3088 = vmatpush1.msra.mxu0 0.0
      %3089 = vmatprep.subr.mxu0 0.0
      %3090 = vmatpush1.msra.mxu0 0.0
      %3091 = vmatprep.subr.mxu0 0.0
      %3092 = vmatpush1.msra.mxu0 0.0
      %3093 = vmatprep.subr.mxu0 0.0
      %3094 = vmatpush1.msra.mxu0 0.0
      %3095 = vmatprep.subr.mxu0 0.0
      %3096 = vmatpush1.msra.mxu0 0.0
      %3097 = vmatprep.subr.mxu0 %v3053
      %3098 = vmatpush1.msra.mxu0 %v3059
      %3099 = vmatprep.subr.mxu0 %v3052
      %3100 = vmatpush1.msra.mxu0 %v3058
      %3101 = vmatprep.subr.mxu0 0.0
      %3102 = vmatpush2.msra.mxu0 0.0
      %3103 = vmatprep.subr.mxu0 0.0
      %3104 = vmatpush2.msra.mxu0 0.0
      %3105 = vmatprep.subr.mxu0 0.0
      %3106 = vmatpush2.msra.mxu0 0.0
      %3107 = vmatprep.subr.mxu0 0.0
      %3108 = vmatpush2.msra.mxu0 0.0
      %3109 = vmatprep.subr.mxu0 0.0
      %3110 = vmatpush2.msra.mxu0 0.0
      %3111 = vmatprep.subr.mxu0 0.0
      %3112 = vmatpush2.msra.mxu0 0.0
      %3113 = vmatprep.subr.mxu0 0.0
      %3114 = vmatpush2.msra.mxu0 0.0
      %3115 = vmatprep.subr.mxu0 0.0
      %3116 = vmatpush2.msra.mxu0 0.0
      %3117 = vmatprep.subr.mxu0 0.0
      %3118 = vmatpush2.msra.mxu0 0.0
      %3119 = vmatprep.subr.mxu0 0.0
      %3120 = vmatpush2.msra.mxu0 0.0
      %3121 = vmatprep.subr.mxu0 0.0
      %3122 = vmatpush2.msra.mxu0 0.0
      %3123 = vmatprep.subr.mxu0 0.0
      %3124 = vmatpush2.msra.mxu0 0.0
      %3125 = vmatprep.subr.mxu0 0.0
      %3126 = vmatpush2.msra.mxu0 0.0
      %3127 = vmatprep.subr.mxu0 0.0
      %3128 = vmatpush2.msra.mxu0 0.0
      %3129 = vmatprep.subr.mxu0 0.0
      %3130 = vmatpush2.msra.mxu0 0.0
      %3131 = vmatprep.subr.mxu0 0.0
      %3132 = vmatpush2.msra.mxu0 0.0
      %3133 = vmatprep.mubr.f32.mxu0 0.0
      %3134 = vmatmul.mubr.f32.gmra.mxu0 %v3064
      %v3135 = vpop.f32.mrf.mxu0
      %v3136 = vadd.f32 0.0, %v3135
      %v3137 = vpop.f32.mrf.mxu0
      %v3138 = vadd.f32 0.0, %v3137
      %3139 = vmatprep.mubr.f32.mxu0 0.0
      %3140 = vmatmul.mubr.f32.gmra.mxu0 %v3067
      %v3141 = vpop.f32.mrf.mxu0
      %v3142 = vadd.f32 0.0, %v3141
      %v3143 = vpop.f32.mrf.mxu0
      %v3144 = vadd.f32 0.0, %v3143
      %3145 = vdwg.mxu0
      %v3146 = vmul.f32 %v3136, %v803
      %v3147 = vmul.f32 %v3138, %v807
      %v3148 = vmul.f32 %v3142, %v803
      %v3149 = vmul.f32 %v3144, %v807
      %v3150 = vadd.f32 %v3038, %v3146
      %v3151 = vadd.f32 %v3039, %v3147
      %v3152 = vadd.f32 %v3040, %v3148
      %v3153 = vadd.f32 %v3041, %v3149
      %s3154 = scalar_lea.vmem %s2, 352
      %v3155 = vld [vmem:[%s3154] sm:$0xff]
      %v3156 = vld [vmem:[%s3154 + $0x8] sm:$0xff]
      %v3158 = vsel %vm337, %v3155, 0
      %v3161 = vsel %vm337, %v3156, 0
      %3163 = vmatprep.subr.mxu0 0.0
      %3164 = vmatpush1.msra.mxu0 0.0
      %3165 = vmatprep.subr.mxu0 0.0
      %3166 = vmatpush1.msra.mxu0 0.0
      %3167 = vmatprep.subr.mxu0 0.0
      %3168 = vmatpush1.msra.mxu0 0.0
      %3169 = vmatprep.subr.mxu0 0.0
      %3170 = vmatpush1.msra.mxu0 0.0
      %3171 = vmatprep.subr.mxu0 0.0
      %3172 = vmatpush1.msra.mxu0 0.0
      %3173 = vmatprep.subr.mxu0 0.0
      %3174 = vmatpush1.msra.mxu0 0.0
      %3175 = vmatprep.subr.mxu0 0.0
      %3176 = vmatpush1.msra.mxu0 0.0
      %3177 = vmatprep.subr.mxu0 0.0
      %3178 = vmatpush1.msra.mxu0 0.0
      %3179 = vmatprep.subr.mxu0 0.0
      %3180 = vmatpush1.msra.mxu0 0.0
      %3181 = vmatprep.subr.mxu0 0.0
      %3182 = vmatpush1.msra.mxu0 0.0
      %3183 = vmatprep.subr.mxu0 0.0
      %3184 = vmatpush1.msra.mxu0 0.0
      %3185 = vmatprep.subr.mxu0 0.0
      %3186 = vmatpush1.msra.mxu0 0.0
      %3187 = vmatprep.subr.mxu0 0.0
      %3188 = vmatpush1.msra.mxu0 0.0
      %3189 = vmatprep.subr.mxu0 0.0
      %3190 = vmatpush1.msra.mxu0 0.0
      %3191 = vmatprep.subr.mxu0 %v2611
      %3192 = vmatpush1.msra.mxu0 %v2610
      %3193 = vmatprep.subr.mxu0 %v2609
      %3194 = vmatpush1.msra.mxu0 %v2608
      %3195 = vmatprep.subr.mxu0 0.0
      %3196 = vmatpush2.msra.mxu0 0.0
      %3197 = vmatprep.subr.mxu0 0.0
      %3198 = vmatpush2.msra.mxu0 0.0
      %3199 = vmatprep.subr.mxu0 0.0
      %3200 = vmatpush2.msra.mxu0 0.0
      %3201 = vmatprep.subr.mxu0 0.0
      %3202 = vmatpush2.msra.mxu0 0.0
      %3203 = vmatprep.subr.mxu0 0.0
      %3204 = vmatpush2.msra.mxu0 0.0
      %3205 = vmatprep.subr.mxu0 0.0
      %3206 = vmatpush2.msra.mxu0 0.0
      %3207 = vmatprep.subr.mxu0 0.0
      %3208 = vmatpush2.msra.mxu0 0.0
      %3209 = vmatprep.subr.mxu0 0.0
      %3210 = vmatpush2.msra.mxu0 0.0
      %3211 = vmatprep.subr.mxu0 0.0
      %3212 = vmatpush2.msra.mxu0 0.0
      %3213 = vmatprep.subr.mxu0 0.0
      %3214 = vmatpush2.msra.mxu0 0.0
      %3215 = vmatprep.subr.mxu0 0.0
      %3216 = vmatpush2.msra.mxu0 0.0
      %3217 = vmatprep.subr.mxu0 0.0
      %3218 = vmatpush2.msra.mxu0 0.0
      %3219 = vmatprep.subr.mxu0 0.0
      %3220 = vmatpush2.msra.mxu0 0.0
      %3221 = vmatprep.subr.mxu0 0.0
      %3222 = vmatpush2.msra.mxu0 0.0
      %3223 = vmatprep.subr.mxu0 0.0
      %3224 = vmatpush2.msra.mxu0 0.0
      %3225 = vmatprep.subr.mxu0 0.0
      %3226 = vmatpush2.msra.mxu0 0.0
      %3227 = vmatprep.mubr.f32.mxu0 0.0
      %3228 = vmatmul.mubr.f32.gmra.mxu0 %v3158
      %v3229 = vpop.f32.mrf.mxu0
      %v3230 = vadd.f32 0.0, %v3229
      %v3231 = vpop.f32.mrf.mxu0
      %v3232 = vadd.f32 0.0, %v3231
      %3233 = vmatprep.mubr.f32.mxu0 0.0
      %3234 = vmatmul.mubr.f32.gmra.mxu0 %v3161
      %v3235 = vpop.f32.mrf.mxu0
      %v3236 = vadd.f32 0.0, %v3235
      %v3237 = vpop.f32.mrf.mxu0
      %v3238 = vadd.f32 0.0, %v3237
      %3239 = vdwg.mxu0
      %v3240 = vadd.f32 %v3150, %v3230
      %v3241 = vadd.f32 %v3151, %v3232
      %v3242 = vadd.f32 %v3152, %v3236
      %v3243 = vadd.f32 %v3153, %v3238
      %3244 = vrot.lane.b32.xlu0 %v2608, 127
      %v3245 = vpop.permute.xlu0 %3244
      %3246 = vrot.lane.b32.xlu0 %v2609, 127
      %v3247 = vpop.permute.xlu0 %3246
      %3248 = vrot.lane.b32.xlu0 %v2610, 127
      %v3249 = vpop.permute.xlu0 %3248
      %3250 = vrot.lane.b32.xlu0 %v2611, 127
      %v3251 = vpop.permute.xlu0 %3250
      %v3252 = vsel %vm916, %v3245, %v3247
      %v3253 = vsel %vm916, %v3249, %v3251
      %v3260 = vsel %vm916, %v3247, %v3245
      %v3261 = vsel %vm916, %v3251, %v3249
      %s3262 = scalar_lea.vmem %s2, 368
      %v3263 = vld [vmem:[%s3262] sm:$0xff]
      %v3264 = vld [vmem:[%s3262 + $0x8] sm:$0xff]
      %v3266 = vsel %vm337, %v3263, 0
      %v3269 = vsel %vm337, %v3264, 0
      %3271 = vmatprep.subr.mxu0 0.0
      %3272 = vmatpush1.msra.mxu0 0.0
      %3273 = vmatprep.subr.mxu0 0.0
      %3274 = vmatpush1.msra.mxu0 0.0
      %3275 = vmatprep.subr.mxu0 0.0
      %3276 = vmatpush1.msra.mxu0 0.0
      %3277 = vmatprep.subr.mxu0 0.0
      %3278 = vmatpush1.msra.mxu0 0.0
      %3279 = vmatprep.subr.mxu0 0.0
      %3280 = vmatpush1.msra.mxu0 0.0
      %3281 = vmatprep.subr.mxu0 0.0
      %3282 = vmatpush1.msra.mxu0 0.0
      %3283 = vmatprep.subr.mxu0 0.0
      %3284 = vmatpush1.msra.mxu0 0.0
      %3285 = vmatprep.subr.mxu0 0.0
      %3286 = vmatpush1.msra.mxu0 0.0
      %3287 = vmatprep.subr.mxu0 0.0
      %3288 = vmatpush1.msra.mxu0 0.0
      %3289 = vmatprep.subr.mxu0 0.0
      %3290 = vmatpush1.msra.mxu0 0.0
      %3291 = vmatprep.subr.mxu0 0.0
      %3292 = vmatpush1.msra.mxu0 0.0
      %3293 = vmatprep.subr.mxu0 0.0
      %3294 = vmatpush1.msra.mxu0 0.0
      %3295 = vmatprep.subr.mxu0 0.0
      %3296 = vmatpush1.msra.mxu0 0.0
      %3297 = vmatprep.subr.mxu0 0.0
      %3298 = vmatpush1.msra.mxu0 0.0
      %3299 = vmatprep.subr.mxu0 %v3261
      %3300 = vmatpush1.msra.mxu0 %v3253
      %3301 = vmatprep.subr.mxu0 %v3260
      %3302 = vmatpush1.msra.mxu0 %v3252
      %3303 = vmatprep.subr.mxu0 0.0
      %3304 = vmatpush2.msra.mxu0 0.0
      %3305 = vmatprep.subr.mxu0 0.0
      %3306 = vmatpush2.msra.mxu0 0.0
      %3307 = vmatprep.subr.mxu0 0.0
      %3308 = vmatpush2.msra.mxu0 0.0
      %3309 = vmatprep.subr.mxu0 0.0
      %3310 = vmatpush2.msra.mxu0 0.0
      %3311 = vmatprep.subr.mxu0 0.0
      %3312 = vmatpush2.msra.mxu0 0.0
      %3313 = vmatprep.subr.mxu0 0.0
      %3314 = vmatpush2.msra.mxu0 0.0
      %3315 = vmatprep.subr.mxu0 0.0
      %3316 = vmatpush2.msra.mxu0 0.0
      %3317 = vmatprep.subr.mxu0 0.0
      %3318 = vmatpush2.msra.mxu0 0.0
      %3319 = vmatprep.subr.mxu0 0.0
      %3320 = vmatpush2.msra.mxu0 0.0
      %3321 = vmatprep.subr.mxu0 0.0
      %3322 = vmatpush2.msra.mxu0 0.0
      %3323 = vmatprep.subr.mxu0 0.0
      %3324 = vmatpush2.msra.mxu0 0.0
      %3325 = vmatprep.subr.mxu0 0.0
      %3326 = vmatpush2.msra.mxu0 0.0
      %3327 = vmatprep.subr.mxu0 0.0
      %3328 = vmatpush2.msra.mxu0 0.0
      %3329 = vmatprep.subr.mxu0 0.0
      %3330 = vmatpush2.msra.mxu0 0.0
      %3331 = vmatprep.subr.mxu0 0.0
      %3332 = vmatpush2.msra.mxu0 0.0
      %3333 = vmatprep.subr.mxu0 0.0
      %3334 = vmatpush2.msra.mxu0 0.0
      %3335 = vmatprep.mubr.f32.mxu0 0.0
      %3336 = vmatmul.mubr.f32.gmra.mxu0 %v3266
      %v3337 = vpop.f32.mrf.mxu0
      %v3338 = vadd.f32 0.0, %v3337
      %v3339 = vpop.f32.mrf.mxu0
      %v3340 = vadd.f32 0.0, %v3339
      %3341 = vmatprep.mubr.f32.mxu0 0.0
      %3342 = vmatmul.mubr.f32.gmra.mxu0 %v3269
      %v3343 = vpop.f32.mrf.mxu0
      %v3344 = vadd.f32 0.0, %v3343
      %v3345 = vpop.f32.mrf.mxu0
      %v3346 = vadd.f32 0.0, %v3345
      %3347 = vdwg.mxu0
      %v3348 = vmul.f32 %v3338, %v1019
      %v3349 = vmul.f32 %v3340, %v1023
      %v3350 = vmul.f32 %v3344, %v1019
      %v3351 = vmul.f32 %v3346, %v1023
      %v3352 = vadd.f32 %v3240, %v3348
      %v3353 = vadd.f32 %v3241, %v3349
      %v3354 = vadd.f32 %v3242, %v3350
      %v3355 = vadd.f32 %v3243, %v3351
      %3356 = vrot.lane.b32.xlu0 %v2608, 113
      %v3357 = vpop.permute.xlu0 %3356
      %3358 = vrot.lane.b32.xlu0 %v2609, 113
      %v3359 = vpop.permute.xlu0 %3358
      %3360 = vrot.lane.b32.xlu0 %v2610, 113
      %v3361 = vpop.permute.xlu0 %3360
      %3362 = vrot.lane.b32.xlu0 %v2611, 113
      %v3363 = vpop.permute.xlu0 %3362
      %v3364 = vsel %vm1042, %v3357, %v3359
      %v3365 = vsel %vm1042, %v3361, %v3363
      %v3372 = vsel %vm1042, %v3359, %v3357
      %v3373 = vsel %vm1042, %v3363, %v3361
      %s3374 = scalar_lea.vmem %s2, 384
      %v3375 = vld [vmem:[%s3374] sm:$0xff]
      %v3376 = vld [vmem:[%s3374 + $0x8] sm:$0xff]
      %v3378 = vsel %vm337, %v3375, 0
      %v3381 = vsel %vm337, %v3376, 0
      %3383 = vmatprep.subr.mxu0 0.0
      %3384 = vmatpush1.msra.mxu0 0.0
      %3385 = vmatprep.subr.mxu0 0.0
      %3386 = vmatpush1.msra.mxu0 0.0
      %3387 = vmatprep.subr.mxu0 0.0
      %3388 = vmatpush1.msra.mxu0 0.0
      %3389 = vmatprep.subr.mxu0 0.0
      %3390 = vmatpush1.msra.mxu0 0.0
      %3391 = vmatprep.subr.mxu0 0.0
      %3392 = vmatpush1.msra.mxu0 0.0
      %3393 = vmatprep.subr.mxu0 0.0
      %3394 = vmatpush1.msra.mxu0 0.0
      %3395 = vmatprep.subr.mxu0 0.0
      %3396 = vmatpush1.msra.mxu0 0.0
      %3397 = vmatprep.subr.mxu0 0.0
      %3398 = vmatpush1.msra.mxu0 0.0
      %3399 = vmatprep.subr.mxu0 0.0
      %3400 = vmatpush1.msra.mxu0 0.0
      %3401 = vmatprep.subr.mxu0 0.0
      %3402 = vmatpush1.msra.mxu0 0.0
      %3403 = vmatprep.subr.mxu0 0.0
      %3404 = vmatpush1.msra.mxu0 0.0
      %3405 = vmatprep.subr.mxu0 0.0
      %3406 = vmatpush1.msra.mxu0 0.0
      %3407 = vmatprep.subr.mxu0 0.0
      %3408 = vmatpush1.msra.mxu0 0.0
      %3409 = vmatprep.subr.mxu0 0.0
      %3410 = vmatpush1.msra.mxu0 0.0
      %3411 = vmatprep.subr.mxu0 %v3373
      %3412 = vmatpush1.msra.mxu0 %v3365
      %3413 = vmatprep.subr.mxu0 %v3372
      %3414 = vmatpush1.msra.mxu0 %v3364
      %3415 = vmatprep.subr.mxu0 0.0
      %3416 = vmatpush2.msra.mxu0 0.0
      %3417 = vmatprep.subr.mxu0 0.0
      %3418 = vmatpush2.msra.mxu0 0.0
      %3419 = vmatprep.subr.mxu0 0.0
      %3420 = vmatpush2.msra.mxu0 0.0
      %3421 = vmatprep.subr.mxu0 0.0
      %3422 = vmatpush2.msra.mxu0 0.0
      %3423 = vmatprep.subr.mxu0 0.0
      %3424 = vmatpush2.msra.mxu0 0.0
      %3425 = vmatprep.subr.mxu0 0.0
      %3426 = vmatpush2.msra.mxu0 0.0
      %3427 = vmatprep.subr.mxu0 0.0
      %3428 = vmatpush2.msra.mxu0 0.0
      %3429 = vmatprep.subr.mxu0 0.0
      %3430 = vmatpush2.msra.mxu0 0.0
      %3431 = vmatprep.subr.mxu0 0.0
      %3432 = vmatpush2.msra.mxu0 0.0
      %3433 = vmatprep.subr.mxu0 0.0
      %3434 = vmatpush2.msra.mxu0 0.0
      %3435 = vmatprep.subr.mxu0 0.0
      %3436 = vmatpush2.msra.mxu0 0.0
      %3437 = vmatprep.subr.mxu0 0.0
      %3438 = vmatpush2.msra.mxu0 0.0
      %3439 = vmatprep.subr.mxu0 0.0
      %3440 = vmatpush2.msra.mxu0 0.0
      %3441 = vmatprep.subr.mxu0 0.0
      %3442 = vmatpush2.msra.mxu0 0.0
      %3443 = vmatprep.subr.mxu0 0.0
      %3444 = vmatpush2.msra.mxu0 0.0
      %3445 = vmatprep.subr.mxu0 0.0
      %3446 = vmatpush2.msra.mxu0 0.0
      %3447 = vmatprep.mubr.f32.mxu0 0.0
      %3448 = vmatmul.mubr.f32.gmra.mxu0 %v3378
      %v3449 = vpop.f32.mrf.mxu0
      %v3450 = vadd.f32 0.0, %v3449
      %v3451 = vpop.f32.mrf.mxu0
      %v3452 = vadd.f32 0.0, %v3451
      %3453 = vmatprep.mubr.f32.mxu0 0.0
      %3454 = vmatmul.mubr.f32.gmra.mxu0 %v3381
      %v3455 = vpop.f32.mrf.mxu0
      %v3456 = vadd.f32 0.0, %v3455
      %v3457 = vpop.f32.mrf.mxu0
      %v3458 = vadd.f32 0.0, %v3457
      %3459 = vdwg.mxu0
      %v3460 = vmul.f32 %v3450, %v1145
      %v3461 = vmul.f32 %v3452, %v1149
      %v3462 = vmul.f32 %v3456, %v1145
      %v3463 = vmul.f32 %v3458, %v1149
      %v3464 = vadd.f32 %v3352, %v3460
      %v3465 = vadd.f32 %v3353, %v3461
      %v3466 = vadd.f32 %v3354, %v3462
      %v3467 = vadd.f32 %v3355, %v3463
      %3468 = vrot.lane.b32.xlu0 %v2608, 112
      %v3469 = vpop.permute.xlu0 %3468
      %3470 = vrot.lane.b32.xlu0 %v2609, 112
      %v3471 = vpop.permute.xlu0 %3470
      %3472 = vrot.lane.b32.xlu0 %v2610, 112
      %v3473 = vpop.permute.xlu0 %3472
      %3474 = vrot.lane.b32.xlu0 %v2611, 112
      %v3475 = vpop.permute.xlu0 %3474
      %v3476 = vsel %vm1168, %v3469, %v3471
      %v3477 = vsel %vm1168, %v3473, %v3475
      %v3484 = vsel %vm1168, %v3471, %v3469
      %v3485 = vsel %vm1168, %v3475, %v3473
      %s3486 = scalar_lea.vmem %s2, 400
      %v3487 = vld [vmem:[%s3486] sm:$0xff]
      %v3488 = vld [vmem:[%s3486 + $0x8] sm:$0xff]
      %v3490 = vsel %vm337, %v3487, 0
      %v3493 = vsel %vm337, %v3488, 0
      %3495 = vmatprep.subr.mxu0 0.0
      %3496 = vmatpush1.msra.mxu0 0.0
      %3497 = vmatprep.subr.mxu0 0.0
      %3498 = vmatpush1.msra.mxu0 0.0
      %3499 = vmatprep.subr.mxu0 0.0
      %3500 = vmatpush1.msra.mxu0 0.0
      %3501 = vmatprep.subr.mxu0 0.0
      %3502 = vmatpush1.msra.mxu0 0.0
      %3503 = vmatprep.subr.mxu0 0.0
      %3504 = vmatpush1.msra.mxu0 0.0
      %3505 = vmatprep.subr.mxu0 0.0
      %3506 = vmatpush1.msra.mxu0 0.0
      %3507 = vmatprep.subr.mxu0 0.0
      %3508 = vmatpush1.msra.mxu0 0.0
      %3509 = vmatprep.subr.mxu0 0.0
      %3510 = vmatpush1.msra.mxu0 0.0
      %3511 = vmatprep.subr.mxu0 0.0
      %3512 = vmatpush1.msra.mxu0 0.0
      %3513 = vmatprep.subr.mxu0 0.0
      %3514 = vmatpush1.msra.mxu0 0.0
      %3515 = vmatprep.subr.mxu0 0.0
      %3516 = vmatpush1.msra.mxu0 0.0
      %3517 = vmatprep.subr.mxu0 0.0
      %3518 = vmatpush1.msra.mxu0 0.0
      %3519 = vmatprep.subr.mxu0 0.0
      %3520 = vmatpush1.msra.mxu0 0.0
      %3521 = vmatprep.subr.mxu0 0.0
      %3522 = vmatpush1.msra.mxu0 0.0
      %3523 = vmatprep.subr.mxu0 %v3485
      %3524 = vmatpush1.msra.mxu0 %v3477
      %3525 = vmatprep.subr.mxu0 %v3484
      %3526 = vmatpush1.msra.mxu0 %v3476
      %3527 = vmatprep.subr.mxu0 0.0
      %3528 = vmatpush2.msra.mxu0 0.0
      %3529 = vmatprep.subr.mxu0 0.0
      %3530 = vmatpush2.msra.mxu0 0.0
      %3531 = vmatprep.subr.mxu0 0.0
      %3532 = vmatpush2.msra.mxu0 0.0
      %3533 = vmatprep.subr.mxu0 0.0
      %3534 = vmatpush2.msra.mxu0 0.0
      %3535 = vmatprep.subr.mxu0 0.0
      %3536 = vmatpush2.msra.mxu0 0.0
      %3537 = vmatprep.subr.mxu0 0.0
      %3538 = vmatpush2.msra.mxu0 0.0
      %3539 = vmatprep.subr.mxu0 0.0
      %3540 = vmatpush2.msra.mxu0 0.0
      %3541 = vmatprep.subr.mxu0 0.0
      %3542 = vmatpush2.msra.mxu0 0.0
      %3543 = vmatprep.subr.mxu0 0.0
      %3544 = vmatpush2.msra.mxu0 0.0
      %3545 = vmatprep.subr.mxu0 0.0
      %3546 = vmatpush2.msra.mxu0 0.0
      %3547 = vmatprep.subr.mxu0 0.0
      %3548 = vmatpush2.msra.mxu0 0.0
      %3549 = vmatprep.subr.mxu0 0.0
      %3550 = vmatpush2.msra.mxu0 0.0
      %3551 = vmatprep.subr.mxu0 0.0
      %3552 = vmatpush2.msra.mxu0 0.0
      %3553 = vmatprep.subr.mxu0 0.0
      %3554 = vmatpush2.msra.mxu0 0.0
      %3555 = vmatprep.subr.mxu0 0.0
      %3556 = vmatpush2.msra.mxu0 0.0
      %3557 = vmatprep.subr.mxu0 0.0
      %3558 = vmatpush2.msra.mxu0 0.0
      %3559 = vmatprep.mubr.f32.mxu0 0.0
      %3560 = vmatmul.mubr.f32.gmra.mxu0 %v3490
      %v3561 = vpop.f32.mrf.mxu0
      %v3562 = vadd.f32 0.0, %v3561
      %v3563 = vpop.f32.mrf.mxu0
      %v3564 = vadd.f32 0.0, %v3563
      %3565 = vmatprep.mubr.f32.mxu0 0.0
      %3566 = vmatmul.mubr.f32.gmra.mxu0 %v3493
      %v3567 = vpop.f32.mrf.mxu0
      %v3568 = vadd.f32 0.0, %v3567
      %v3569 = vpop.f32.mrf.mxu0
      %v3570 = vadd.f32 0.0, %v3569
      %3571 = vdwg.mxu0
      %v3572 = vmul.f32 %v3562, %v1271
      %v3573 = vmul.f32 %v3564, %v1275
      %v3574 = vmul.f32 %v3568, %v1271
      %v3575 = vmul.f32 %v3570, %v1275
      %v3576 = vadd.f32 %v3464, %v3572
      %v3577 = vadd.f32 %v3465, %v3573
      %v3578 = vadd.f32 %v3466, %v3574
      %v3579 = vadd.f32 %v3467, %v3575
      %3580 = vrot.lane.b32.xlu0 %v2608, 111
      %v3581 = vpop.permute.xlu0 %3580
      %3582 = vrot.lane.b32.xlu0 %v2609, 111
      %v3583 = vpop.permute.xlu0 %3582
      %3584 = vrot.lane.b32.xlu0 %v2610, 111
      %v3585 = vpop.permute.xlu0 %3584
      %3586 = vrot.lane.b32.xlu0 %v2611, 111
      %v3587 = vpop.permute.xlu0 %3586
      %v3588 = vsel %vm1294, %v3581, %v3583
      %v3589 = vsel %vm1294, %v3585, %v3587
      %v3596 = vsel %vm1294, %v3583, %v3581
      %v3597 = vsel %vm1294, %v3587, %v3585
      %s3598 = scalar_lea.vmem %s2, 416
      %v3599 = vld [vmem:[%s3598] sm:$0xff]
      %v3600 = vld [vmem:[%s3598 + $0x8] sm:$0xff]
      %v3602 = vsel %vm337, %v3599, 0
      %v3605 = vsel %vm337, %v3600, 0
      %3607 = vmatprep.subr.mxu0 0.0
      %3608 = vmatpush1.msra.mxu0 0.0
      %3609 = vmatprep.subr.mxu0 0.0
      %3610 = vmatpush1.msra.mxu0 0.0
      %3611 = vmatprep.subr.mxu0 0.0
      %3612 = vmatpush1.msra.mxu0 0.0
      %3613 = vmatprep.subr.mxu0 0.0
      %3614 = vmatpush1.msra.mxu0 0.0
      %3615 = vmatprep.subr.mxu0 0.0
      %3616 = vmatpush1.msra.mxu0 0.0
      %3617 = vmatprep.subr.mxu0 0.0
      %3618 = vmatpush1.msra.mxu0 0.0
      %3619 = vmatprep.subr.mxu0 0.0
      %3620 = vmatpush1.msra.mxu0 0.0
      %3621 = vmatprep.subr.mxu0 0.0
      %3622 = vmatpush1.msra.mxu0 0.0
      %3623 = vmatprep.subr.mxu0 0.0
      %3624 = vmatpush1.msra.mxu0 0.0
      %3625 = vmatprep.subr.mxu0 0.0
      %3626 = vmatpush1.msra.mxu0 0.0
      %3627 = vmatprep.subr.mxu0 0.0
      %3628 = vmatpush1.msra.mxu0 0.0
      %3629 = vmatprep.subr.mxu0 0.0
      %3630 = vmatpush1.msra.mxu0 0.0
      %3631 = vmatprep.subr.mxu0 0.0
      %3632 = vmatpush1.msra.mxu0 0.0
      %3633 = vmatprep.subr.mxu0 0.0
      %3634 = vmatpush1.msra.mxu0 0.0
      %3635 = vmatprep.subr.mxu0 %v3597
      %3636 = vmatpush1.msra.mxu0 %v3589
      %3637 = vmatprep.subr.mxu0 %v3596
      %3638 = vmatpush1.msra.mxu0 %v3588
      %3639 = vmatprep.subr.mxu0 0.0
      %3640 = vmatpush2.msra.mxu0 0.0
      %3641 = vmatprep.subr.mxu0 0.0
      %3642 = vmatpush2.msra.mxu0 0.0
      %3643 = vmatprep.subr.mxu0 0.0
      %3644 = vmatpush2.msra.mxu0 0.0
      %3645 = vmatprep.subr.mxu0 0.0
      %3646 = vmatpush2.msra.mxu0 0.0
      %3647 = vmatprep.subr.mxu0 0.0
      %3648 = vmatpush2.msra.mxu0 0.0
      %3649 = vmatprep.subr.mxu0 0.0
      %3650 = vmatpush2.msra.mxu0 0.0
      %3651 = vmatprep.subr.mxu0 0.0
      %3652 = vmatpush2.msra.mxu0 0.0
      %3653 = vmatprep.subr.mxu0 0.0
      %3654 = vmatpush2.msra.mxu0 0.0
      %3655 = vmatprep.subr.mxu0 0.0
      %3656 = vmatpush2.msra.mxu0 0.0
      %3657 = vmatprep.subr.mxu0 0.0
      %3658 = vmatpush2.msra.mxu0 0.0
      %3659 = vmatprep.subr.mxu0 0.0
      %3660 = vmatpush2.msra.mxu0 0.0
      %3661 = vmatprep.subr.mxu0 0.0
      %3662 = vmatpush2.msra.mxu0 0.0
      %3663 = vmatprep.subr.mxu0 0.0
      %3664 = vmatpush2.msra.mxu0 0.0
      %3665 = vmatprep.subr.mxu0 0.0
      %3666 = vmatpush2.msra.mxu0 0.0
      %3667 = vmatprep.subr.mxu0 0.0
      %3668 = vmatpush2.msra.mxu0 0.0
      %3669 = vmatprep.subr.mxu0 0.0
      %3670 = vmatpush2.msra.mxu0 0.0
      %3671 = vmatprep.mubr.f32.mxu0 0.0
      %3672 = vmatmul.mubr.f32.gmra.mxu0 %v3602
      %v3673 = vpop.f32.mrf.mxu0
      %v3674 = vadd.f32 0.0, %v3673
      %v3675 = vpop.f32.mrf.mxu0
      %v3676 = vadd.f32 0.0, %v3675
      %3677 = vmatprep.mubr.f32.mxu0 0.0
      %3678 = vmatmul.mubr.f32.gmra.mxu0 %v3605
      %v3679 = vpop.f32.mrf.mxu0
      %v3680 = vadd.f32 0.0, %v3679
      %v3681 = vpop.f32.mrf.mxu0
      %v3682 = vadd.f32 0.0, %v3681
      %3683 = vdwg.mxu0
      %v3684 = vmul.f32 %v3674, %v1397
      %v3685 = vmul.f32 %v3676, %v1401
      %v3686 = vmul.f32 %v3680, %v1397
      %v3687 = vmul.f32 %v3682, %v1401
      %v3688 = vadd.f32 %v3576, %v3684
      %v3689 = vadd.f32 %v3577, %v3685
      %v3690 = vadd.f32 %v3578, %v3686
      %v3691 = vadd.f32 %v3579, %v3687
      %s3692 = scalar_lea.vmem %s3, 32
      %v3693 = vld [vmem:[%s3692] sm:$0xff]
      %v3694 = vld [vmem:[%s3692 + $0x8] sm:$0xff]
      %3696 = vset.pattern.permute.xlu0 0
      %3697 = vperm.xlu0 %3696, %v3693
      %v3698 = vpop.permute.xlu0 %3697
      %3701 = vset.pattern.permute.xlu0 0
      %3702 = vperm.xlu0 %3701, %v3694
      %v3703 = vpop.permute.xlu0 %3702
      %v3705 = vadd.f32 %v3688, %v3698
      %v3706 = vadd.f32 %v3689, %v3698
      %v3707 = vadd.f32 %v3690, %v3703
      %v3708 = vadd.f32 %v3691, %v3703
      %v3709 = vmax.f32 %v3705, 0.0
      %v3710 = vmax.f32 %v3706, 0.0
      %v3711 = vmax.f32 %v3707, 0.0
      %v3712 = vmax.f32 %v3708, 0.0
      %s3713 = scalar_lea.vmem %s4, 48
      %v3714 = vld [vmem:[%s3713] sm:$0xff]
      %v3715 = vld [vmem:[%s3713 + $0x8] sm:$0xff]
      %v3717 = vsel %vm337, %v3714, 0
      %v3720 = vsel %vm337, %v3715, 0
      %3722 = vmatprep.subr.mxu0 0.0
      %3723 = vmatpush1.msra.mxu0 0.0
      %3724 = vmatprep.subr.mxu0 0.0
      %3725 = vmatpush1.msra.mxu0 0.0
      %3726 = vmatprep.subr.mxu0 0.0
      %3727 = vmatpush1.msra.mxu0 0.0
      %3728 = vmatprep.subr.mxu0 0.0
      %3729 = vmatpush1.msra.mxu0 0.0
      %3730 = vmatprep.subr.mxu0 0.0
      %3731 = vmatpush1.msra.mxu0 0.0
      %3732 = vmatprep.subr.mxu0 0.0
      %3733 = vmatpush1.msra.mxu0 0.0
      %3734 = vmatprep.subr.mxu0 0.0
      %3735 = vmatpush1.msra.mxu0 0.0
      %3736 = vmatprep.subr.mxu0 0.0
      %3737 = vmatpush1.msra.mxu0 0.0
      %3738 = vmatprep.subr.mxu0 0.0
      %3739 = vmatpush1.msra.mxu0 0.0
      %3740 = vmatprep.subr.mxu0 0.0
      %3741 = vmatpush1.msra.mxu0 0.0
      %3742 = vmatprep.subr.mxu0 0.0
      %3743 = vmatpush1.msra.mxu0 0.0
      %3744 = vmatprep.subr.mxu0 0.0
      %3745 = vmatpush1.msra.mxu0 0.0
      %3746 = vmatprep.subr.mxu0 0.0
      %3747 = vmatpush1.msra.mxu0 0.0
      %3748 = vmatprep.subr.mxu0 0.0
      %3749 = vmatpush1.msra.mxu0 0.0
      %3750 = vmatprep.subr.mxu0 %v3712
      %3751 = vmatpush1.msra.mxu0 %v3711
      %3752 = vmatprep.subr.mxu0 %v3710
      %3753 = vmatpush1.msra.mxu0 %v3709
      %3754 = vmatprep.subr.mxu0 0.0
      %3755 = vmatpush2.msra.mxu0 0.0
      %3756 = vmatprep.subr.mxu0 0.0
      %3757 = vmatpush2.msra.mxu0 0.0
      %3758 = vmatprep.subr.mxu0 0.0
      %3759 = vmatpush2.msra.mxu0 0.0
      %3760 = vmatprep.subr.mxu0 0.0
      %3761 = vmatpush2.msra.mxu0 0.0
      %3762 = vmatprep.subr.mxu0 0.0
      %3763 = vmatpush2.msra.mxu0 0.0
      %3764 = vmatprep.subr.mxu0 0.0
      %3765 = vmatpush2.msra.mxu0 0.0
      %3766 = vmatprep.subr.mxu0 0.0
      %3767 = vmatpush2.msra.mxu0 0.0
      %3768 = vmatprep.subr.mxu0 0.0
      %3769 = vmatpush2.msra.mxu0 0.0
      %3770 = vmatprep.subr.mxu0 0.0
      %3771 = vmatpush2.msra.mxu0 0.0
      %3772 = vmatprep.subr.mxu0 0.0
      %3773 = vmatpush2.msra.mxu0 0.0
      %3774 = vmatprep.subr.mxu0 0.0
      %3775 = vmatpush2.msra.mxu0 0.0
      %3776 = vmatprep.subr.mxu0 0.0
      %3777 = vmatpush2.msra.mxu0 0.0
      %3778 = vmatprep.subr.mxu0 0.0
      %3779 = vmatpush2.msra.mxu0 0.0
      %3780 = vmatprep.subr.mxu0 0.0
      %3781 = vmatpush2.msra.mxu0 0.0
      %3782 = vmatprep.subr.mxu0 0.0
      %3783 = vmatpush2.msra.mxu0 0.0
      %3784 = vmatprep.subr.mxu0 0.0
      %3785 = vmatpush2.msra.mxu0 0.0
      %3786 = vmatprep.mubr.f32.mxu0 0.0
      %3787 = vmatmul.mubr.f32.gmra.mxu0 %v3717
      %v3788 = vpop.f32.mrf.mxu0
      %v3789 = vadd.f32 0.0, %v3788
      %v3790 = vpop.f32.mrf.mxu0
      %v3791 = vadd.f32 0.0, %v3790
      %3792 = vmatprep.mubr.f32.mxu0 0.0
      %3793 = vmatmul.mubr.f32.gmra.mxu0 %v3720
      %v3794 = vpop.f32.mrf.mxu0
      %v3795 = vadd.f32 0.0, %v3794
      %v3796 = vpop.f32.mrf.mxu0
      %v3797 = vadd.f32 0.0, %v3796
      %3798 = vdwg.mxu0
      %v3799 = vadd.f32 %v2698, %v3789
      %v3800 = vadd.f32 %v2699, %v3791
      %v3801 = vadd.f32 %v2700, %v3795
      %v3802 = vadd.f32 %v2701, %v3797
      %3805 = vrot.lane.b32.xlu0 %v3710, 17
      %v3806 = vpop.permute.xlu0 %3805
      %3807 = vrot.lane.b32.xlu0 %v3712, 17
      %v3808 = vpop.permute.xlu0 %3807
      %3813 = vrot.lane.b32.xlu0 %v3709, 17
      %v3814 = vpop.permute.xlu0 %3813
      %3815 = vrot.lane.b32.xlu0 %v3711, 17
      %v3816 = vpop.permute.xlu0 %3815
      %v3817 = vsel %vm326, %v3814, %v3806
      %v3818 = vsel %vm326, %v3816, %v3808
      %v3823 = vsel %vm326, %v3806, %v3814
      %v3824 = vsel %vm326, %v3808, %v3816
      %s3825 = scalar_lea.vmem %s2, 432
      %v3826 = vld [vmem:[%s3825] sm:$0xff]
      %v3827 = vld [vmem:[%s3825 + $0x8] sm:$0xff]
      %v3829 = vsel %vm337, %v3826, 0
      %v3832 = vsel %vm337, %v3827, 0
      %3834 = vmatprep.subr.mxu0 0.0
      %3835 = vmatpush1.msra.mxu0 0.0
      %3836 = vmatprep.subr.mxu0 0.0
      %3837 = vmatpush1.msra.mxu0 0.0
      %3838 = vmatprep.subr.mxu0 0.0
      %3839 = vmatpush1.msra.mxu0 0.0
      %3840 = vmatprep.subr.mxu0 0.0
      %3841 = vmatpush1.msra.mxu0 0.0
      %3842 = vmatprep.subr.mxu0 0.0
      %3843 = vmatpush1.msra.mxu0 0.0
      %3844 = vmatprep.subr.mxu0 0.0
      %3845 = vmatpush1.msra.mxu0 0.0
      %3846 = vmatprep.subr.mxu0 0.0
      %3847 = vmatpush1.msra.mxu0 0.0
      %3848 = vmatprep.subr.mxu0 0.0
      %3849 = vmatpush1.msra.mxu0 0.0
      %3850 = vmatprep.subr.mxu0 0.0
      %3851 = vmatpush1.msra.mxu0 0.0
      %3852 = vmatprep.subr.mxu0 0.0
      %3853 = vmatpush1.msra.mxu0 0.0
      %3854 = vmatprep.subr.mxu0 0.0
      %3855 = vmatpush1.msra.mxu0 0.0
      %3856 = vmatprep.subr.mxu0 0.0
      %3857 = vmatpush1.msra.mxu0 0.0
      %3858 = vmatprep.subr.mxu0 0.0
      %3859 = vmatpush1.msra.mxu0 0.0
      %3860 = vmatprep.subr.mxu0 0.0
      %3861 = vmatpush1.msra.mxu0 0.0
      %3862 = vmatprep.subr.mxu0 %v3818
      %3863 = vmatpush1.msra.mxu0 %v3824
      %3864 = vmatprep.subr.mxu0 %v3817
      %3865 = vmatpush1.msra.mxu0 %v3823
      %3866 = vmatprep.subr.mxu0 0.0
      %3867 = vmatpush2.msra.mxu0 0.0
      %3868 = vmatprep.subr.mxu0 0.0
      %3869 = vmatpush2.msra.mxu0 0.0
      %3870 = vmatprep.subr.mxu0 0.0
      %3871 = vmatpush2.msra.mxu0 0.0
      %3872 = vmatprep.subr.mxu0 0.0
      %3873 = vmatpush2.msra.mxu0 0.0
      %3874 = vmatprep.subr.mxu0 0.0
      %3875 = vmatpush2.msra.mxu0 0.0
      %3876 = vmatprep.subr.mxu0 0.0
      %3877 = vmatpush2.msra.mxu0 0.0
      %3878 = vmatprep.subr.mxu0 0.0
      %3879 = vmatpush2.msra.mxu0 0.0
      %3880 = vmatprep.subr.mxu0 0.0
      %3881 = vmatpush2.msra.mxu0 0.0
      %3882 = vmatprep.subr.mxu0 0.0
      %3883 = vmatpush2.msra.mxu0 0.0
      %3884 = vmatprep.subr.mxu0 0.0
      %3885 = vmatpush2.msra.mxu0 0.0
      %3886 = vmatprep.subr.mxu0 0.0
      %3887 = vmatpush2.msra.mxu0 0.0
      %3888 = vmatprep.subr.mxu0 0.0
      %3889 = vmatpush2.msra.mxu0 0.0
      %3890 = vmatprep.subr.mxu0 0.0
      %3891 = vmatpush2.msra.mxu0 0.0
      %3892 = vmatprep.subr.mxu0 0.0
      %3893 = vmatpush2.msra.mxu0 0.0
      %3894 = vmatprep.subr.mxu0 0.0
      %3895 = vmatpush2.msra.mxu0 0.0
      %3896 = vmatprep.subr.mxu0 0.0
      %3897 = vmatpush2.msra.mxu0 0.0
      %3898 = vmatprep.mubr.f32.mxu0 0.0
      %3899 = vmatmul.mubr.f32.gmra.mxu0 %v3829
      %v3900 = vpop.f32.mrf.mxu0
      %v3901 = vadd.f32 0.0, %v3900
      %v3902 = vpop.f32.mrf.mxu0
      %v3903 = vadd.f32 0.0, %v3902
      %3904 = vmatprep.mubr.f32.mxu0 0.0
      %3905 = vmatmul.mubr.f32.gmra.mxu0 %v3832
      %v3906 = vpop.f32.mrf.mxu0
      %v3907 = vadd.f32 0.0, %v3906
      %v3908 = vpop.f32.mrf.mxu0
      %v3909 = vadd.f32 0.0, %v3908
      %3910 = vdwg.mxu0
      %v3911 = vmul.f32 %v3901, %v426
      %v3912 = vmul.f32 %v3903, %v430
      %v3913 = vmul.f32 %v3907, %v426
      %v3914 = vmul.f32 %v3909, %v430
      %v3915 = vadd.f32 %v3911, 0.0
      %v3916 = vadd.f32 %v3912, 0.0
      %v3917 = vadd.f32 %v3913, 0.0
      %v3918 = vadd.f32 %v3914, 0.0
      %3919 = vrot.lane.b32.xlu0 %v3710, 16
      %v3920 = vpop.permute.xlu0 %3919
      %3921 = vrot.lane.b32.xlu0 %v3712, 16
      %v3922 = vpop.permute.xlu0 %3921
      %3925 = vrot.lane.b32.xlu0 %v3709, 16
      %v3926 = vpop.permute.xlu0 %3925
      %3927 = vrot.lane.b32.xlu0 %v3711, 16
      %v3928 = vpop.permute.xlu0 %3927
      %v3929 = vsel %vm337, %v3926, %v3920
      %v3930 = vsel %vm337, %v3928, %v3922
      %v3935 = vsel %vm337, %v3920, %v3926
      %v3936 = vsel %vm337, %v3922, %v3928
      %s3937 = scalar_lea.vmem %s2, 448
      %v3938 = vld [vmem:[%s3937] sm:$0xff]
      %v3939 = vld [vmem:[%s3937 + $0x8] sm:$0xff]
      %v3941 = vsel %vm337, %v3938, 0
      %v3944 = vsel %vm337, %v3939, 0
      %3946 = vmatprep.subr.mxu0 0.0
      %3947 = vmatpush1.msra.mxu0 0.0
      %3948 = vmatprep.subr.mxu0 0.0
      %3949 = vmatpush1.msra.mxu0 0.0
      %3950 = vmatprep.subr.mxu0 0.0
      %3951 = vmatpush1.msra.mxu0 0.0
      %3952 = vmatprep.subr.mxu0 0.0
      %3953 = vmatpush1.msra.mxu0 0.0
      %3954 = vmatprep.subr.mxu0 0.0
      %3955 = vmatpush1.msra.mxu0 0.0
      %3956 = vmatprep.subr.mxu0 0.0
      %3957 = vmatpush1.msra.mxu0 0.0
      %3958 = vmatprep.subr.mxu0 0.0
      %3959 = vmatpush1.msra.mxu0 0.0
      %3960 = vmatprep.subr.mxu0 0.0
      %3961 = vmatpush1.msra.mxu0 0.0
      %3962 = vmatprep.subr.mxu0 0.0
      %3963 = vmatpush1.msra.mxu0 0.0
      %3964 = vmatprep.subr.mxu0 0.0
      %3965 = vmatpush1.msra.mxu0 0.0
      %3966 = vmatprep.subr.mxu0 0.0
      %3967 = vmatpush1.msra.mxu0 0.0
      %3968 = vmatprep.subr.mxu0 0.0
      %3969 = vmatpush1.msra.mxu0 0.0
      %3970 = vmatprep.subr.mxu0 0.0
      %3971 = vmatpush1.msra.mxu0 0.0
      %3972 = vmatprep.subr.mxu0 0.0
      %3973 = vmatpush1.msra.mxu0 0.0
      %3974 = vmatprep.subr.mxu0 %v3930
      %3975 = vmatpush1.msra.mxu0 %v3936
      %3976 = vmatprep.subr.mxu0 %v3929
      %3977 = vmatpush1.msra.mxu0 %v3935
      %3978 = vmatprep.subr.mxu0 0.0
      %3979 = vmatpush2.msra.mxu0 0.0
      %3980 = vmatprep.subr.mxu0 0.0
      %3981 = vmatpush2.msra.mxu0 0.0
      %3982 = vmatprep.subr.mxu0 0.0
      %3983 = vmatpush2.msra.mxu0 0.0
      %3984 = vmatprep.subr.mxu0 0.0
      %3985 = vmatpush2.msra.mxu0 0.0
      %3986 = vmatprep.subr.mxu0 0.0
      %3987 = vmatpush2.msra.mxu0 0.0
      %3988 = vmatprep.subr.mxu0 0.0
      %3989 = vmatpush2.msra.mxu0 0.0
      %3990 = vmatprep.subr.mxu0 0.0
      %3991 = vmatpush2.msra.mxu0 0.0
      %3992 = vmatprep.subr.mxu0 0.0
      %3993 = vmatpush2.msra.mxu0 0.0
      %3994 = vmatprep.subr.mxu0 0.0
      %3995 = vmatpush2.msra.mxu0 0.0
      %3996 = vmatprep.subr.mxu0 0.0
      %3997 = vmatpush2.msra.mxu0 0.0
      %3998 = vmatprep.subr.mxu0 0.0
      %3999 = vmatpush2.msra.mxu0 0.0
      %4000 = vmatprep.subr.mxu0 0.0
      %4001 = vmatpush2.msra.mxu0 0.0
      %4002 = vmatprep.subr.mxu0 0.0
      %4003 = vmatpush2.msra.mxu0 0.0
      %4004 = vmatprep.subr.mxu0 0.0
      %4005 = vmatpush2.msra.mxu0 0.0
      %4006 = vmatprep.subr.mxu0 0.0
      %4007 = vmatpush2.msra.mxu0 0.0
      %4008 = vmatprep.subr.mxu0 0.0
      %4009 = vmatpush2.msra.mxu0 0.0
      %4010 = vmatprep.mubr.f32.mxu0 0.0
      %4011 = vmatmul.mubr.f32.gmra.mxu0 %v3941
      %v4012 = vpop.f32.mrf.mxu0
      %v4013 = vadd.f32 0.0, %v4012
      %v4014 = vpop.f32.mrf.mxu0
      %v4015 = vadd.f32 0.0, %v4014
      %4016 = vmatprep.mubr.f32.mxu0 0.0
      %4017 = vmatmul.mubr.f32.gmra.mxu0 %v3944
      %v4018 = vpop.f32.mrf.mxu0
      %v4019 = vadd.f32 0.0, %v4018
      %v4020 = vpop.f32.mrf.mxu0
      %v4021 = vadd.f32 0.0, %v4020
      %4022 = vdwg.mxu0
      %v4023 = vmul.f32 %v4013, %v551
      %v4024 = vmul.f32 %v4015, %v555
      %v4025 = vmul.f32 %v4019, %v551
      %v4026 = vmul.f32 %v4021, %v555
      %v4027 = vadd.f32 %v3915, %v4023
      %v4028 = vadd.f32 %v3916, %v4024
      %v4029 = vadd.f32 %v3917, %v4025
      %v4030 = vadd.f32 %v3918, %v4026
      %4031 = vrot.lane.b32.xlu0 %v3710, 15
      %v4032 = vpop.permute.xlu0 %4031
      %4033 = vrot.lane.b32.xlu0 %v3712, 15
      %v4034 = vpop.permute.xlu0 %4033
      %4037 = vrot.lane.b32.xlu0 %v3709, 15
      %v4038 = vpop.permute.xlu0 %4037
      %4039 = vrot.lane.b32.xlu0 %v3711, 15
      %v4040 = vpop.permute.xlu0 %4039
      %v4041 = vsel %vm576, %v4038, %v4032
      %v4042 = vsel %vm576, %v4040, %v4034
      %v4047 = vsel %vm576, %v4032, %v4038
      %v4048 = vsel %vm576, %v4034, %v4040
      %s4049 = scalar_lea.vmem %s2, 464
      %v4050 = vld [vmem:[%s4049] sm:$0xff]
      %v4051 = vld [vmem:[%s4049 + $0x8] sm:$0xff]
      %v4053 = vsel %vm337, %v4050, 0
      %v4056 = vsel %vm337, %v4051, 0
      %4058 = vmatprep.subr.mxu0 0.0
      %4059 = vmatpush1.msra.mxu0 0.0
      %4060 = vmatprep.subr.mxu0 0.0
      %4061 = vmatpush1.msra.mxu0 0.0
      %4062 = vmatprep.subr.mxu0 0.0
      %4063 = vmatpush1.msra.mxu0 0.0
      %4064 = vmatprep.subr.mxu0 0.0
      %4065 = vmatpush1.msra.mxu0 0.0
      %4066 = vmatprep.subr.mxu0 0.0
      %4067 = vmatpush1.msra.mxu0 0.0
      %4068 = vmatprep.subr.mxu0 0.0
      %4069 = vmatpush1.msra.mxu0 0.0
      %4070 = vmatprep.subr.mxu0 0.0
      %4071 = vmatpush1.msra.mxu0 0.0
      %4072 = vmatprep.subr.mxu0 0.0
      %4073 = vmatpush1.msra.mxu0 0.0
      %4074 = vmatprep.subr.mxu0 0.0
      %4075 = vmatpush1.msra.mxu0 0.0
      %4076 = vmatprep.subr.mxu0 0.0
      %4077 = vmatpush1.msra.mxu0 0.0
      %4078 = vmatprep.subr.mxu0 0.0
      %4079 = vmatpush1.msra.mxu0 0.0
      %4080 = vmatprep.subr.mxu0 0.0
      %4081 = vmatpush1.msra.mxu0 0.0
      %4082 = vmatprep.subr.mxu0 0.0
      %4083 = vmatpush1.msra.mxu0 0.0
      %4084 = vmatprep.subr.mxu0 0.0
      %4085 = vmatpush1.msra.mxu0 0.0
      %4086 = vmatprep.subr.mxu0 %v4042
      %4087 = vmatpush1.msra.mxu0 %v4048
      %4088 = vmatprep.subr.mxu0 %v4041
      %4089 = vmatpush1.msra.mxu0 %v4047
      %4090 = vmatprep.subr.mxu0 0.0
      %4091 = vmatpush2.msra.mxu0 0.0
      %4092 = vmatprep.subr.mxu0 0.0
      %4093 = vmatpush2.msra.mxu0 0.0
      %4094 = vmatprep.subr.mxu0 0.0
      %4095 = vmatpush2.msra.mxu0 0.0
      %4096 = vmatprep.subr.mxu0 0.0
      %4097 = vmatpush2.msra.mxu0 0.0
      %4098 = vmatprep.subr.mxu0 0.0
      %4099 = vmatpush2.msra.mxu0 0.0
      %4100 = vmatprep.subr.mxu0 0.0
      %4101 = vmatpush2.msra.mxu0 0.0
      %4102 = vmatprep.subr.mxu0 0.0
      %4103 = vmatpush2.msra.mxu0 0.0
      %4104 = vmatprep.subr.mxu0 0.0
      %4105 = vmatpush2.msra.mxu0 0.0
      %4106 = vmatprep.subr.mxu0 0.0
      %4107 = vmatpush2.msra.mxu0 0.0
      %4108 = vmatprep.subr.mxu0 0.0
      %4109 = vmatpush2.msra.mxu0 0.0
      %4110 = vmatprep.subr.mxu0 0.0
      %4111 = vmatpush2.msra.mxu0 0.0
      %4112 = vmatprep.subr.mxu0 0.0
      %4113 = vmatpush2.msra.mxu0 0.0
      %4114 = vmatprep.subr.mxu0 0.0
      %4115 = vmatpush2.msra.mxu0 0.0
      %4116 = vmatprep.subr.mxu0 0.0
      %4117 = vmatpush2.msra.mxu0 0.0
      %4118 = vmatprep.subr.mxu0 0.0
      %4119 = vmatpush2.msra.mxu0 0.0
      %4120 = vmatprep.subr.mxu0 0.0
      %4121 = vmatpush2.msra.mxu0 0.0
      %4122 = vmatprep.mubr.f32.mxu0 0.0
      %4123 = vmatmul.mubr.f32.gmra.mxu0 %v4053
      %v4124 = vpop.f32.mrf.mxu0
      %v4125 = vadd.f32 0.0, %v4124
      %v4126 = vpop.f32.mrf.mxu0
      %v4127 = vadd.f32 0.0, %v4126
      %4128 = vmatprep.mubr.f32.mxu0 0.0
      %4129 = vmatmul.mubr.f32.gmra.mxu0 %v4056
      %v4130 = vpop.f32.mrf.mxu0
      %v4131 = vadd.f32 0.0, %v4130
      %v4132 = vpop.f32.mrf.mxu0
      %v4133 = vadd.f32 0.0, %v4132
      %4134 = vdwg.mxu0
      %v4135 = vmul.f32 %v4125, %v677
      %v4136 = vmul.f32 %v4127, %v681
      %v4137 = vmul.f32 %v4131, %v677
      %v4138 = vmul.f32 %v4133, %v681
      %v4139 = vadd.f32 %v4027, %v4135
      %v4140 = vadd.f32 %v4028, %v4136
      %v4141 = vadd.f32 %v4029, %v4137
      %v4142 = vadd.f32 %v4030, %v4138
      %4143 = vrot.lane.b32.xlu0 %v3710, 1
      %v4144 = vpop.permute.xlu0 %4143
      %4145 = vrot.lane.b32.xlu0 %v3712, 1
      %v4146 = vpop.permute.xlu0 %4145
      %4149 = vrot.lane.b32.xlu0 %v3709, 1
      %v4150 = vpop.permute.xlu0 %4149
      %4151 = vrot.lane.b32.xlu0 %v3711, 1
      %v4152 = vpop.permute.xlu0 %4151
      %v4153 = vsel %vm702, %v4150, %v4144
      %v4154 = vsel %vm702, %v4152, %v4146
      %v4159 = vsel %vm702, %v4144, %v4150
      %v4160 = vsel %vm702, %v4146, %v4152
      %s4161 = scalar_lea.vmem %s2, 480
      %v4162 = vld [vmem:[%s4161] sm:$0xff]
      %v4163 = vld [vmem:[%s4161 + $0x8] sm:$0xff]
      %v4165 = vsel %vm337, %v4162, 0
      %v4168 = vsel %vm337, %v4163, 0
      %4170 = vmatprep.subr.mxu0 0.0
      %4171 = vmatpush1.msra.mxu0 0.0
      %4172 = vmatprep.subr.mxu0 0.0
      %4173 = vmatpush1.msra.mxu0 0.0
      %4174 = vmatprep.subr.mxu0 0.0
      %4175 = vmatpush1.msra.mxu0 0.0
      %4176 = vmatprep.subr.mxu0 0.0
      %4177 = vmatpush1.msra.mxu0 0.0
      %4178 = vmatprep.subr.mxu0 0.0
      %4179 = vmatpush1.msra.mxu0 0.0
      %4180 = vmatprep.subr.mxu0 0.0
      %4181 = vmatpush1.msra.mxu0 0.0
      %4182 = vmatprep.subr.mxu0 0.0
      %4183 = vmatpush1.msra.mxu0 0.0
      %4184 = vmatprep.subr.mxu0 0.0
      %4185 = vmatpush1.msra.mxu0 0.0
      %4186 = vmatprep.subr.mxu0 0.0
      %4187 = vmatpush1.msra.mxu0 0.0
      %4188 = vmatprep.subr.mxu0 0.0
      %4189 = vmatpush1.msra.mxu0 0.0
      %4190 = vmatprep.subr.mxu0 0.0
      %4191 = vmatpush1.msra.mxu0 0.0
      %4192 = vmatprep.subr.mxu0 0.0
      %4193 = vmatpush1.msra.mxu0 0.0
      %4194 = vmatprep.subr.mxu0 0.0
      %4195 = vmatpush1.msra.mxu0 0.0
      %4196 = vmatprep.subr.mxu0 0.0
      %4197 = vmatpush1.msra.mxu0 0.0
      %4198 = vmatprep.subr.mxu0 %v4154
      %4199 = vmatpush1.msra.mxu0 %v4160
      %4200 = vmatprep.subr.mxu0 %v4153
      %4201 = vmatpush1.msra.mxu0 %v4159
      %4202 = vmatprep.subr.mxu0 0.0
      %4203 = vmatpush2.msra.mxu0 0.0
      %4204 = vmatprep.subr.mxu0 0.0
      %4205 = vmatpush2.msra.mxu0 0.0
      %4206 = vmatprep.subr.mxu0 0.0
      %4207 = vmatpush2.msra.mxu0 0.0
      %4208 = vmatprep.subr.mxu0 0.0
      %4209 = vmatpush2.msra.mxu0 0.0
      %4210 = vmatprep.subr.mxu0 0.0
      %4211 = vmatpush2.msra.mxu0 0.0
      %4212 = vmatprep.subr.mxu0 0.0
      %4213 = vmatpush2.msra.mxu0 0.0
      %4214 = vmatprep.subr.mxu0 0.0
      %4215 = vmatpush2.msra.mxu0 0.0
      %4216 = vmatprep.subr.mxu0 0.0
      %4217 = vmatpush2.msra.mxu0 0.0
      %4218 = vmatprep.subr.mxu0 0.0
      %4219 = vmatpush2.msra.mxu0 0.0
      %4220 = vmatprep.subr.mxu0 0.0
      %4221 = vmatpush2.msra.mxu0 0.0
      %4222 = vmatprep.subr.mxu0 0.0
      %4223 = vmatpush2.msra.mxu0 0.0
      %4224 = vmatprep.subr.mxu0 0.0
      %4225 = vmatpush2.msra.mxu0 0.0
      %4226 = vmatprep.subr.mxu0 0.0
      %4227 = vmatpush2.msra.mxu0 0.0
      %4228 = vmatprep.subr.mxu0 0.0
      %4229 = vmatpush2.msra.mxu0 0.0
      %4230 = vmatprep.subr.mxu0 0.0
      %4231 = vmatpush2.msra.mxu0 0.0
      %4232 = vmatprep.subr.mxu0 0.0
      %4233 = vmatpush2.msra.mxu0 0.0
      %4234 = vmatprep.mubr.f32.mxu0 0.0
      %4235 = vmatmul.mubr.f32.gmra.mxu0 %v4165
      %v4236 = vpop.f32.mrf.mxu0
      %v4237 = vadd.f32 0.0, %v4236
      %v4238 = vpop.f32.mrf.mxu0
      %v4239 = vadd.f32 0.0, %v4238
      %4240 = vmatprep.mubr.f32.mxu0 0.0
      %4241 = vmatmul.mubr.f32.gmra.mxu0 %v4168
      %v4242 = vpop.f32.mrf.mxu0
      %v4243 = vadd.f32 0.0, %v4242
      %v4244 = vpop.f32.mrf.mxu0
      %v4245 = vadd.f32 0.0, %v4244
      %4246 = vdwg.mxu0
      %v4247 = vmul.f32 %v4237, %v803
      %v4248 = vmul.f32 %v4239, %v807
      %v4249 = vmul.f32 %v4243, %v803
      %v4250 = vmul.f32 %v4245, %v807
      %v4251 = vadd.f32 %v4139, %v4247
      %v4252 = vadd.f32 %v4140, %v4248
      %v4253 = vadd.f32 %v4141, %v4249
      %v4254 = vadd.f32 %v4142, %v4250
      %s4255 = scalar_lea.vmem %s2, 496
      %v4256 = vld [vmem:[%s4255] sm:$0xff]
      %v4257 = vld [vmem:[%s4255 + $0x8] sm:$0xff]
      %v4259 = vsel %vm337, %v4256, 0
      %v4262 = vsel %vm337, %v4257, 0
      %4264 = vmatprep.subr.mxu0 0.0
      %4265 = vmatpush1.msra.mxu0 0.0
      %4266 = vmatprep.subr.mxu0 0.0
      %4267 = vmatpush1.msra.mxu0 0.0
      %4268 = vmatprep.subr.mxu0 0.0
      %4269 = vmatpush1.msra.mxu0 0.0
      %4270 = vmatprep.subr.mxu0 0.0
      %4271 = vmatpush1.msra.mxu0 0.0
      %4272 = vmatprep.subr.mxu0 0.0
      %4273 = vmatpush1.msra.mxu0 0.0
      %4274 = vmatprep.subr.mxu0 0.0
      %4275 = vmatpush1.msra.mxu0 0.0
      %4276 = vmatprep.subr.mxu0 0.0
      %4277 = vmatpush1.msra.mxu0 0.0
      %4278 = vmatprep.subr.mxu0 0.0
      %4279 = vmatpush1.msra.mxu0 0.0
      %4280 = vmatprep.subr.mxu0 0.0
      %4281 = vmatpush1.msra.mxu0 0.0
      %4282 = vmatprep.subr.mxu0 0.0
      %4283 = vmatpush1.msra.mxu0 0.0
      %4284 = vmatprep.subr.mxu0 0.0
      %4285 = vmatpush1.msra.mxu0 0.0
      %4286 = vmatprep.subr.mxu0 0.0
      %4287 = vmatpush1.msra.mxu0 0.0
      %4288 = vmatprep.subr.mxu0 0.0
      %4289 = vmatpush1.msra.mxu0 0.0
      %4290 = vmatprep.subr.mxu0 0.0
      %4291 = vmatpush1.msra.mxu0 0.0
      %4292 = vmatprep.subr.mxu0 %v3712
      %4293 = vmatpush1.msra.mxu0 %v3711
      %4294 = vmatprep.subr.mxu0 %v3710
      %4295 = vmatpush1.msra.mxu0 %v3709
      %4296 = vmatprep.subr.mxu0 0.0
      %4297 = vmatpush2.msra.mxu0 0.0
      %4298 = vmatprep.subr.mxu0 0.0
      %4299 = vmatpush2.msra.mxu0 0.0
      %4300 = vmatprep.subr.mxu0 0.0
      %4301 = vmatpush2.msra.mxu0 0.0
      %4302 = vmatprep.subr.mxu0 0.0
      %4303 = vmatpush2.msra.mxu0 0.0
      %4304 = vmatprep.subr.mxu0 0.0
      %4305 = vmatpush2.msra.mxu0 0.0
      %4306 = vmatprep.subr.mxu0 0.0
      %4307 = vmatpush2.msra.mxu0 0.0
      %4308 = vmatprep.subr.mxu0 0.0
      %4309 = vmatpush2.msra.mxu0 0.0
      %4310 = vmatprep.subr.mxu0 0.0
      %4311 = vmatpush2.msra.mxu0 0.0
      %4312 = vmatprep.subr.mxu0 0.0
      %4313 = vmatpush2.msra.mxu0 0.0
      %4314 = vmatprep.subr.mxu0 0.0
      %4315 = vmatpush2.msra.mxu0 0.0
      %4316 = vmatprep.subr.mxu0 0.0
      %4317 = vmatpush2.msra.mxu0 0.0
      %4318 = vmatprep.subr.mxu0 0.0
      %4319 = vmatpush2.msra.mxu0 0.0
      %4320 = vmatprep.subr.mxu0 0.0
      %4321 = vmatpush2.msra.mxu0 0.0
      %4322 = vmatprep.subr.mxu0 0.0
      %4323 = vmatpush2.msra.mxu0 0.0
      %4324 = vmatprep.subr.mxu0 0.0
      %4325 = vmatpush2.msra.mxu0 0.0
      %4326 = vmatprep.subr.mxu0 0.0
      %4327 = vmatpush2.msra.mxu0 0.0
      %4328 = vmatprep.mubr.f32.mxu0 0.0
      %4329 = vmatmul.mubr.f32.gmra.mxu0 %v4259
      %v4330 = vpop.f32.mrf.mxu0
      %v4331 = vadd.f32 0.0, %v4330
      %v4332 = vpop.f32.mrf.mxu0
      %v4333 = vadd.f32 0.0, %v4332
      %4334 = vmatprep.mubr.f32.mxu0 0.0
      %4335 = vmatmul.mubr.f32.gmra.mxu0 %v4262
      %v4336 = vpop.f32.mrf.mxu0
      %v4337 = vadd.f32 0.0, %v4336
      %v4338 = vpop.f32.mrf.mxu0
      %v4339 = vadd.f32 0.0, %v4338
      %4340 = vdwg.mxu0
      %v4341 = vadd.f32 %v4251, %v4331
      %v4342 = vadd.f32 %v4252, %v4333
      %v4343 = vadd.f32 %v4253, %v4337
      %v4344 = vadd.f32 %v4254, %v4339
      %4345 = vrot.lane.b32.xlu0 %v3709, 127
      %v4346 = vpop.permute.xlu0 %4345
      %4347 = vrot.lane.b32.xlu0 %v3710, 127
      %v4348 = vpop.permute.xlu0 %4347
      %4349 = vrot.lane.b32.xlu0 %v3711, 127
      %v4350 = vpop.permute.xlu0 %4349
      %4351 = vrot.lane.b32.xlu0 %v3712, 127
      %v4352 = vpop.permute.xlu0 %4351
      %v4353 = vsel %vm916, %v4346, %v4348
      %v4354 = vsel %vm916, %v4350, %v4352
      %v4361 = vsel %vm916, %v4348, %v4346
      %v4362 = vsel %vm916, %v4352, %v4350
      %s4363 = scalar_lea.vmem %s2, 512
      %v4364 = vld [vmem:[%s4363] sm:$0xff]
      %v4365 = vld [vmem:[%s4363 + $0x8] sm:$0xff]
      %v4367 = vsel %vm337, %v4364, 0
      %v4370 = vsel %vm337, %v4365, 0
      %4372 = vmatprep.subr.mxu0 0.0
      %4373 = vmatpush1.msra.mxu0 0.0
      %4374 = vmatprep.subr.mxu0 0.0
      %4375 = vmatpush1.msra.mxu0 0.0
      %4376 = vmatprep.subr.mxu0 0.0
      %4377 = vmatpush1.msra.mxu0 0.0
      %4378 = vmatprep.subr.mxu0 0.0
      %4379 = vmatpush1.msra.mxu0 0.0
      %4380 = vmatprep.subr.mxu0 0.0
      %4381 = vmatpush1.msra.mxu0 0.0
      %4382 = vmatprep.subr.mxu0 0.0
      %4383 = vmatpush1.msra.mxu0 0.0
      %4384 = vmatprep.subr.mxu0 0.0
      %4385 = vmatpush1.msra.mxu0 0.0
      %4386 = vmatprep.subr.mxu0 0.0
      %4387 = vmatpush1.msra.mxu0 0.0
      %4388 = vmatprep.subr.mxu0 0.0
      %4389 = vmatpush1.msra.mxu0 0.0
      %4390 = vmatprep.subr.mxu0 0.0
      %4391 = vmatpush1.msra.mxu0 0.0
      %4392 = vmatprep.subr.mxu0 0.0
      %4393 = vmatpush1.msra.mxu0 0.0
      %4394 = vmatprep.subr.mxu0 0.0
      %4395 = vmatpush1.msra.mxu0 0.0
      %4396 = vmatprep.subr.mxu0 0.0
      %4397 = vmatpush1.msra.mxu0 0.0
      %4398 = vmatprep.subr.mxu0 0.0
      %4399 = vmatpush1.msra.mxu0 0.0
      %4400 = vmatprep.subr.mxu0 %v4362
      %4401 = vmatpush1.msra.mxu0 %v4354
      %4402 = vmatprep.subr.mxu0 %v4361
      %4403 = vmatpush1.msra.mxu0 %v4353
      %4404 = vmatprep.subr.mxu0 0.0
      %4405 = vmatpush2.msra.mxu0 0.0
      %4406 = vmatprep.subr.mxu0 0.0
      %4407 = vmatpush2.msra.mxu0 0.0
      %4408 = vmatprep.subr.mxu0 0.0
      %4409 = vmatpush2.msra.mxu0 0.0
      %4410 = vmatprep.subr.mxu0 0.0
      %4411 = vmatpush2.msra.mxu0 0.0
      %4412 = vmatprep.subr.mxu0 0.0
      %4413 = vmatpush2.msra.mxu0 0.0
      %4414 = vmatprep.subr.mxu0 0.0
      %4415 = vmatpush2.msra.mxu0 0.0
      %4416 = vmatprep.subr.mxu0 0.0
      %4417 = vmatpush2.msra.mxu0 0.0
      %4418 = vmatprep.subr.mxu0 0.0
      %4419 = vmatpush2.msra.mxu0 0.0
      %4420 = vmatprep.subr.mxu0 0.0
      %4421 = vmatpush2.msra.mxu0 0.0
      %4422 = vmatprep.subr.mxu0 0.0
      %4423 = vmatpush2.msra.mxu0 0.0
      %4424 = vmatprep.subr.mxu0 0.0
      %4425 = vmatpush2.msra.mxu0 0.0
      %4426 = vmatprep.subr.mxu0 0.0
      %4427 = vmatpush2.msra.mxu0 0.0
      %4428 = vmatprep.subr.mxu0 0.0
      %4429 = vmatpush2.msra.mxu0 0.0
      %4430 = vmatprep.subr.mxu0 0.0
      %4431 = vmatpush2.msra.mxu0 0.0
      %4432 = vmatprep.subr.mxu0 0.0
      %4433 = vmatpush2.msra.mxu0 0.0
      %4434 = vmatprep.subr.mxu0 0.0
      %4435 = vmatpush2.msra.mxu0 0.0
      %4436 = vmatprep.mubr.f32.mxu0 0.0
      %4437 = vmatmul.mubr.f32.gmra.mxu0 %v4367
      %v4438 = vpop.f32.mrf.mxu0
      %v4439 = vadd.f32 0.0, %v4438
      %v4440 = vpop.f32.mrf.mxu0
      %v4441 = vadd.f32 0.0, %v4440
      %4442 = vmatprep.mubr.f32.mxu0 0.0
      %4443 = vmatmul.mubr.f32.gmra.mxu0 %v4370
      %v4444 = vpop.f32.mrf.mxu0
      %v4445 = vadd.f32 0.0, %v4444
      %v4446 = vpop.f32.mrf.mxu0
      %v4447 = vadd.f32 0.0, %v4446
      %4448 = vdwg.mxu0
      %v4449 = vmul.f32 %v4439, %v1019
      %v4450 = vmul.f32 %v4441, %v1023
      %v4451 = vmul.f32 %v4445, %v1019
      %v4452 = vmul.f32 %v4447, %v1023
      %v4453 = vadd.f32 %v4341, %v4449
      %v4454 = vadd.f32 %v4342, %v4450
      %v4455 = vadd.f32 %v4343, %v4451
      %v4456 = vadd.f32 %v4344, %v4452
      %4457 = vrot.lane.b32.xlu0 %v3709, 113
      %v4458 = vpop.permute.xlu0 %4457
      %4459 = vrot.lane.b32.xlu0 %v3710, 113
      %v4460 = vpop.permute.xlu0 %4459
      %4461 = vrot.lane.b32.xlu0 %v3711, 113
      %v4462 = vpop.permute.xlu0 %4461
      %4463 = vrot.lane.b32.xlu0 %v3712, 113
      %v4464 = vpop.permute.xlu0 %4463
      %v4465 = vsel %vm1042, %v4458, %v4460
      %v4466 = vsel %vm1042, %v4462, %v4464
      %v4473 = vsel %vm1042, %v4460, %v4458
      %v4474 = vsel %vm1042, %v4464, %v4462
      %s4475 = scalar_lea.vmem %s2, 528
      %v4476 = vld [vmem:[%s4475] sm:$0xff]
      %v4477 = vld [vmem:[%s4475 + $0x8] sm:$0xff]
      %v4479 = vsel %vm337, %v4476, 0
      %v4482 = vsel %vm337, %v4477, 0
      %4484 = vmatprep.subr.mxu0 0.0
      %4485 = vmatpush1.msra.mxu0 0.0
      %4486 = vmatprep.subr.mxu0 0.0
      %4487 = vmatpush1.msra.mxu0 0.0
      %4488 = vmatprep.subr.mxu0 0.0
      %4489 = vmatpush1.msra.mxu0 0.0
      %4490 = vmatprep.subr.mxu0 0.0
      %4491 = vmatpush1.msra.mxu0 0.0
      %4492 = vmatprep.subr.mxu0 0.0
      %4493 = vmatpush1.msra.mxu0 0.0
      %4494 = vmatprep.subr.mxu0 0.0
      %4495 = vmatpush1.msra.mxu0 0.0
      %4496 = vmatprep.subr.mxu0 0.0
      %4497 = vmatpush1.msra.mxu0 0.0
      %4498 = vmatprep.subr.mxu0 0.0
      %4499 = vmatpush1.msra.mxu0 0.0
      %4500 = vmatprep.subr.mxu0 0.0
      %4501 = vmatpush1.msra.mxu0 0.0
      %4502 = vmatprep.subr.mxu0 0.0
      %4503 = vmatpush1.msra.mxu0 0.0
      %4504 = vmatprep.subr.mxu0 0.0
      %4505 = vmatpush1.msra.mxu0 0.0
      %4506 = vmatprep.subr.mxu0 0.0
      %4507 = vmatpush1.msra.mxu0 0.0
      %4508 = vmatprep.subr.mxu0 0.0
      %4509 = vmatpush1.msra.mxu0 0.0
      %4510 = vmatprep.subr.mxu0 0.0
      %4511 = vmatpush1.msra.mxu0 0.0
      %4512 = vmatprep.subr.mxu0 %v4474
      %4513 = vmatpush1.msra.mxu0 %v4466
      %4514 = vmatprep.subr.mxu0 %v4473
      %4515 = vmatpush1.msra.mxu0 %v4465
      %4516 = vmatprep.subr.mxu0 0.0
      %4517 = vmatpush2.msra.mxu0 0.0
      %4518 = vmatprep.subr.mxu0 0.0
      %4519 = vmatpush2.msra.mxu0 0.0
      %4520 = vmatprep.subr.mxu0 0.0
      %4521 = vmatpush2.msra.mxu0 0.0
      %4522 = vmatprep.subr.mxu0 0.0
      %4523 = vmatpush2.msra.mxu0 0.0
      %4524 = vmatprep.subr.mxu0 0.0
      %4525 = vmatpush2.msra.mxu0 0.0
      %4526 = vmatprep.subr.mxu0 0.0
      %4527 = vmatpush2.msra.mxu0 0.0
      %4528 = vmatprep.subr.mxu0 0.0
      %4529 = vmatpush2.msra.mxu0 0.0
      %4530 = vmatprep.subr.mxu0 0.0
      %4531 = vmatpush2.msra.mxu0 0.0
      %4532 = vmatprep.subr.mxu0 0.0
      %4533 = vmatpush2.msra.mxu0 0.0
      %4534 = vmatprep.subr.mxu0 0.0
      %4535 = vmatpush2.msra.mxu0 0.0
      %4536 = vmatprep.subr.mxu0 0.0
      %4537 = vmatpush2.msra.mxu0 0.0
      %4538 = vmatprep.subr.mxu0 0.0
      %4539 = vmatpush2.msra.mxu0 0.0
      %4540 = vmatprep.subr.mxu0 0.0
      %4541 = vmatpush2.msra.mxu0 0.0
      %4542 = vmatprep.subr.mxu0 0.0
      %4543 = vmatpush2.msra.mxu0 0.0
      %4544 = vmatprep.subr.mxu0 0.0
      %4545 = vmatpush2.msra.mxu0 0.0
      %4546 = vmatprep.subr.mxu0 0.0
      %4547 = vmatpush2.msra.mxu0 0.0
      %4548 = vmatprep.mubr.f32.mxu0 0.0
      %4549 = vmatmul.mubr.f32.gmra.mxu0 %v4479
      %v4550 = vpop.f32.mrf.mxu0
      %v4551 = vadd.f32 0.0, %v4550
      %v4552 = vpop.f32.mrf.mxu0
      %v4553 = vadd.f32 0.0, %v4552
      %4554 = vmatprep.mubr.f32.mxu0 0.0
      %4555 = vmatmul.mubr.f32.gmra.mxu0 %v4482
      %v4556 = vpop.f32.mrf.mxu0
      %v4557 = vadd.f32 0.0, %v4556
      %v4558 = vpop.f32.mrf.mxu0
      %v4559 = vadd.f32 0.0, %v4558
      %4560 = vdwg.mxu0
      %v4561 = vmul.f32 %v4551, %v1145
      %v4562 = vmul.f32 %v4553, %v1149
      %v4563 = vmul.f32 %v4557, %v1145
      %v4564 = vmul.f32 %v4559, %v1149
      %v4565 = vadd.f32 %v4453, %v4561
      %v4566 = vadd.f32 %v4454, %v4562
      %v4567 = vadd.f32 %v4455, %v4563
      %v4568 = vadd.f32 %v4456, %v4564
      %4569 = vrot.lane.b32.xlu0 %v3709, 112
      %v4570 = vpop.permute.xlu0 %4569
      %4571 = vrot.lane.b32.xlu0 %v3710, 112
      %v4572 = vpop.permute.xlu0 %4571
      %4573 = vrot.lane.b32.xlu0 %v3711, 112
      %v4574 = vpop.permute.xlu0 %4573
      %4575 = vrot.lane.b32.xlu0 %v3712, 112
      %v4576 = vpop.permute.xlu0 %4575
      %v4577 = vsel %vm1168, %v4570, %v4572
      %v4578 = vsel %vm1168, %v4574, %v4576
      %v4585 = vsel %vm1168, %v4572, %v4570
      %v4586 = vsel %vm1168, %v4576, %v4574
      %s4587 = scalar_lea.vmem %s2, 544
      %v4588 = vld [vmem:[%s4587] sm:$0xff]
      %v4589 = vld [vmem:[%s4587 + $0x8] sm:$0xff]
      %v4591 = vsel %vm337, %v4588, 0
      %v4594 = vsel %vm337, %v4589, 0
      %4596 = vmatprep.subr.mxu0 0.0
      %4597 = vmatpush1.msra.mxu0 0.0
      %4598 = vmatprep.subr.mxu0 0.0
      %4599 = vmatpush1.msra.mxu0 0.0
      %4600 = vmatprep.subr.mxu0 0.0
      %4601 = vmatpush1.msra.mxu0 0.0
      %4602 = vmatprep.subr.mxu0 0.0
      %4603 = vmatpush1.msra.mxu0 0.0
      %4604 = vmatprep.subr.mxu0 0.0
      %4605 = vmatpush1.msra.mxu0 0.0
      %4606 = vmatprep.subr.mxu0 0.0
      %4607 = vmatpush1.msra.mxu0 0.0
      %4608 = vmatprep.subr.mxu0 0.0
      %4609 = vmatpush1.msra.mxu0 0.0
      %4610 = vmatprep.subr.mxu0 0.0
      %4611 = vmatpush1.msra.mxu0 0.0
      %4612 = vmatprep.subr.mxu0 0.0
      %4613 = vmatpush1.msra.mxu0 0.0
      %4614 = vmatprep.subr.mxu0 0.0
      %4615 = vmatpush1.msra.mxu0 0.0
      %4616 = vmatprep.subr.mxu0 0.0
      %4617 = vmatpush1.msra.mxu0 0.0
      %4618 = vmatprep.subr.mxu0 0.0
      %4619 = vmatpush1.msra.mxu0 0.0
      %4620 = vmatprep.subr.mxu0 0.0
      %4621 = vmatpush1.msra.mxu0 0.0
      %4622 = vmatprep.subr.mxu0 0.0
      %4623 = vmatpush1.msra.mxu0 0.0
      %4624 = vmatprep.subr.mxu0 %v4586
      %4625 = vmatpush1.msra.mxu0 %v4578
      %4626 = vmatprep.subr.mxu0 %v4585
      %4627 = vmatpush1.msra.mxu0 %v4577
      %4628 = vmatprep.subr.mxu0 0.0
      %4629 = vmatpush2.msra.mxu0 0.0
      %4630 = vmatprep.subr.mxu0 0.0
      %4631 = vmatpush2.msra.mxu0 0.0
      %4632 = vmatprep.subr.mxu0 0.0
      %4633 = vmatpush2.msra.mxu0 0.0
      %4634 = vmatprep.subr.mxu0 0.0
      %4635 = vmatpush2.msra.mxu0 0.0
      %4636 = vmatprep.subr.mxu0 0.0
      %4637 = vmatpush2.msra.mxu0 0.0
      %4638 = vmatprep.subr.mxu0 0.0
      %4639 = vmatpush2.msra.mxu0 0.0
      %4640 = vmatprep.subr.mxu0 0.0
      %4641 = vmatpush2.msra.mxu0 0.0
      %4642 = vmatprep.subr.mxu0 0.0
      %4643 = vmatpush2.msra.mxu0 0.0
      %4644 = vmatprep.subr.mxu0 0.0
      %4645 = vmatpush2.msra.mxu0 0.0
      %4646 = vmatprep.subr.mxu0 0.0
      %4647 = vmatpush2.msra.mxu0 0.0
      %4648 = vmatprep.subr.mxu0 0.0
      %4649 = vmatpush2.msra.mxu0 0.0
      %4650 = vmatprep.subr.mxu0 0.0
      %4651 = vmatpush2.msra.mxu0 0.0
      %4652 = vmatprep.subr.mxu0 0.0
      %4653 = vmatpush2.msra.mxu0 0.0
      %4654 = vmatprep.subr.mxu0 0.0
      %4655 = vmatpush2.msra.mxu0 0.0
      %4656 = vmatprep.subr.mxu0 0.0
      %4657 = vmatpush2.msra.mxu0 0.0
      %4658 = vmatprep.subr.mxu0 0.0
      %4659 = vmatpush2.msra.mxu0 0.0
      %4660 = vmatprep.mubr.f32.mxu0 0.0
      %4661 = vmatmul.mubr.f32.gmra.mxu0 %v4591
      %v4662 = vpop.f32.mrf.mxu0
      %v4663 = vadd.f32 0.0, %v4662
      %v4664 = vpop.f32.mrf.mxu0
      %v4665 = vadd.f32 0.0, %v4664
      %4666 = vmatprep.mubr.f32.mxu0 0.0
      %4667 = vmatmul.mubr.f32.gmra.mxu0 %v4594
      %v4668 = vpop.f32.mrf.mxu0
      %v4669 = vadd.f32 0.0, %v4668
      %v4670 = vpop.f32.mrf.mxu0
      %v4671 = vadd.f32 0.0, %v4670
      %4672 = vdwg.mxu0
      %v4673 = vmul.f32 %v4663, %v1271
      %v4674 = vmul.f32 %v4665, %v1275
      %v4675 = vmul.f32 %v4669, %v1271
      %v4676 = vmul.f32 %v4671, %v1275
      %v4677 = vadd.f32 %v4565, %v4673
      %v4678 = vadd.f32 %v4566, %v4674
      %v4679 = vadd.f32 %v4567, %v4675
      %v4680 = vadd.f32 %v4568, %v4676
      %4681 = vrot.lane.b32.xlu0 %v3709, 111
      %v4682 = vpop.permute.xlu0 %4681
      %4683 = vrot.lane.b32.xlu0 %v3710, 111
      %v4684 = vpop.permute.xlu0 %4683
      %4685 = vrot.lane.b32.xlu0 %v3711, 111
      %v4686 = vpop.permute.xlu0 %4685
      %4687 = vrot.lane.b32.xlu0 %v3712, 111
      %v4688 = vpop.permute.xlu0 %4687
      %v4689 = vsel %vm1294, %v4682, %v4684
      %v4690 = vsel %vm1294, %v4686, %v4688
      %v4697 = vsel %vm1294, %v4684, %v4682
      %v4698 = vsel %vm1294, %v4688, %v4686
      %s4699 = scalar_lea.vmem %s2, 560
      %v4700 = vld [vmem:[%s4699] sm:$0xff]
      %v4701 = vld [vmem:[%s4699 + $0x8] sm:$0xff]
      %v4703 = vsel %vm337, %v4700, 0
      %v4706 = vsel %vm337, %v4701, 0
      %4708 = vmatprep.subr.mxu0 0.0
      %4709 = vmatpush1.msra.mxu0 0.0
      %4710 = vmatprep.subr.mxu0 0.0
      %4711 = vmatpush1.msra.mxu0 0.0
      %4712 = vmatprep.subr.mxu0 0.0
      %4713 = vmatpush1.msra.mxu0 0.0
      %4714 = vmatprep.subr.mxu0 0.0
      %4715 = vmatpush1.msra.mxu0 0.0
      %4716 = vmatprep.subr.mxu0 0.0
      %4717 = vmatpush1.msra.mxu0 0.0
      %4718 = vmatprep.subr.mxu0 0.0
      %4719 = vmatpush1.msra.mxu0 0.0
      %4720 = vmatprep.subr.mxu0 0.0
      %4721 = vmatpush1.msra.mxu0 0.0
      %4722 = vmatprep.subr.mxu0 0.0
      %4723 = vmatpush1.msra.mxu0 0.0
      %4724 = vmatprep.subr.mxu0 0.0
      %4725 = vmatpush1.msra.mxu0 0.0
      %4726 = vmatprep.subr.mxu0 0.0
      %4727 = vmatpush1.msra.mxu0 0.0
      %4728 = vmatprep.subr.mxu0 0.0
      %4729 = vmatpush1.msra.mxu0 0.0
      %4730 = vmatprep.subr.mxu0 0.0
      %4731 = vmatpush1.msra.mxu0 0.0
      %4732 = vmatprep.subr.mxu0 0.0
      %4733 = vmatpush1.msra.mxu0 0.0
      %4734 = vmatprep.subr.mxu0 0.0
      %4735 = vmatpush1.msra.mxu0 0.0
      %4736 = vmatprep.subr.mxu0 %v4698
      %4737 = vmatpush1.msra.mxu0 %v4690
      %4738 = vmatprep.subr.mxu0 %v4697
      %4739 = vmatpush1.msra.mxu0 %v4689
      %4740 = vmatprep.subr.mxu0 0.0
      %4741 = vmatpush2.msra.mxu0 0.0
      %4742 = vmatprep.subr.mxu0 0.0
      %4743 = vmatpush2.msra.mxu0 0.0
      %4744 = vmatprep.subr.mxu0 0.0
      %4745 = vmatpush2.msra.mxu0 0.0
      %4746 = vmatprep.subr.mxu0 0.0
      %4747 = vmatpush2.msra.mxu0 0.0
      %4748 = vmatprep.subr.mxu0 0.0
      %4749 = vmatpush2.msra.mxu0 0.0
      %4750 = vmatprep.subr.mxu0 0.0
      %4751 = vmatpush2.msra.mxu0 0.0
      %4752 = vmatprep.subr.mxu0 0.0
      %4753 = vmatpush2.msra.mxu0 0.0
      %4754 = vmatprep.subr.mxu0 0.0
      %4755 = vmatpush2.msra.mxu0 0.0
      %4756 = vmatprep.subr.mxu0 0.0
      %4757 = vmatpush2.msra.mxu0 0.0
      %4758 = vmatprep.subr.mxu0 0.0
      %4759 = vmatpush2.msra.mxu0 0.0
      %4760 = vmatprep.subr.mxu0 0.0
      %4761 = vmatpush2.msra.mxu0 0.0
      %4762 = vmatprep.subr.mxu0 0.0
      %4763 = vmatpush2.msra.mxu0 0.0
      %4764 = vmatprep.subr.mxu0 0.0
      %4765 = vmatpush2.msra.mxu0 0.0
      %4766 = vmatprep.subr.mxu0 0.0
      %4767 = vmatpush2.msra.mxu0 0.0
      %4768 = vmatprep.subr.mxu0 0.0
      %4769 = vmatpush2.msra.mxu0 0.0
      %4770 = vmatprep.subr.mxu0 0.0
      %4771 = vmatpush2.msra.mxu0 0.0
      %4772 = vmatprep.mubr.f32.mxu0 0.0
      %4773 = vmatmul.mubr.f32.gmra.mxu0 %v4703
      %v4774 = vpop.f32.mrf.mxu0
      %v4775 = vadd.f32 0.0, %v4774
      %v4776 = vpop.f32.mrf.mxu0
      %v4777 = vadd.f32 0.0, %v4776
      %4778 = vmatprep.mubr.f32.mxu0 0.0
      %4779 = vmatmul.mubr.f32.gmra.mxu0 %v4706
      %v4780 = vpop.f32.mrf.mxu0
      %v4781 = vadd.f32 0.0, %v4780
      %v4782 = vpop.f32.mrf.mxu0
      %v4783 = vadd.f32 0.0, %v4782
      %4784 = vdwg.mxu0
      %v4785 = vmul.f32 %v4775, %v1397
      %v4786 = vmul.f32 %v4777, %v1401
      %v4787 = vmul.f32 %v4781, %v1397
      %v4788 = vmul.f32 %v4783, %v1401
      %v4789 = vadd.f32 %v4677, %v4785
      %v4790 = vadd.f32 %v4678, %v4786
      %v4791 = vadd.f32 %v4679, %v4787
      %v4792 = vadd.f32 %v4680, %v4788
      %s4793 = scalar_lea.vmem %s3, 48
      %v4794 = vld [vmem:[%s4793] sm:$0xff]
      %v4795 = vld [vmem:[%s4793 + $0x8] sm:$0xff]
      %4797 = vset.pattern.permute.xlu0 0
      %4798 = vperm.xlu0 %4797, %v4794
      %v4799 = vpop.permute.xlu0 %4798
      %4802 = vset.pattern.permute.xlu0 0
      %4803 = vperm.xlu0 %4802, %v4795
      %v4804 = vpop.permute.xlu0 %4803
      %v4806 = vadd.f32 %v4789, %v4799
      %v4807 = vadd.f32 %v4790, %v4799
      %v4808 = vadd.f32 %v4791, %v4804
      %v4809 = vadd.f32 %v4792, %v4804
      %v4810 = vmax.f32 %v4806, 0.0
      %v4811 = vmax.f32 %v4807, 0.0
      %v4812 = vmax.f32 %v4808, 0.0
      %v4813 = vmax.f32 %v4809, 0.0
      %s4814 = scalar_lea.vmem %s4, 64
      %v4815 = vld [vmem:[%s4814] sm:$0xff]
      %v4816 = vld [vmem:[%s4814 + $0x8] sm:$0xff]
      %v4818 = vsel %vm337, %v4815, 0
      %v4821 = vsel %vm337, %v4816, 0
      %4823 = vmatprep.subr.mxu0 0.0
      %4824 = vmatpush1.msra.mxu0 0.0
      %4825 = vmatprep.subr.mxu0 0.0
      %4826 = vmatpush1.msra.mxu0 0.0
      %4827 = vmatprep.subr.mxu0 0.0
      %4828 = vmatpush1.msra.mxu0 0.0
      %4829 = vmatprep.subr.mxu0 0.0
      %4830 = vmatpush1.msra.mxu0 0.0
      %4831 = vmatprep.subr.mxu0 0.0
      %4832 = vmatpush1.msra.mxu0 0.0
      %4833 = vmatprep.subr.mxu0 0.0
      %4834 = vmatpush1.msra.mxu0 0.0
      %4835 = vmatprep.subr.mxu0 0.0
      %4836 = vmatpush1.msra.mxu0 0.0
      %4837 = vmatprep.subr.mxu0 0.0
      %4838 = vmatpush1.msra.mxu0 0.0
      %4839 = vmatprep.subr.mxu0 0.0
      %4840 = vmatpush1.msra.mxu0 0.0
      %4841 = vmatprep.subr.mxu0 0.0
      %4842 = vmatpush1.msra.mxu0 0.0
      %4843 = vmatprep.subr.mxu0 0.0
      %4844 = vmatpush1.msra.mxu0 0.0
      %4845 = vmatprep.subr.mxu0 0.0
      %4846 = vmatpush1.msra.mxu0 0.0
      %4847 = vmatprep.subr.mxu0 0.0
      %4848 = vmatpush1.msra.mxu0 0.0
      %4849 = vmatprep.subr.mxu0 0.0
      %4850 = vmatpush1.msra.mxu0 0.0
      %4851 = vmatprep.subr.mxu0 %v4813
      %4852 = vmatpush1.msra.mxu0 %v4812
      %4853 = vmatprep.subr.mxu0 %v4811
      %4854 = vmatpush1.msra.mxu0 %v4810
      %4855 = vmatprep.subr.mxu0 0.0
      %4856 = vmatpush2.msra.mxu0 0.0
      %4857 = vmatprep.subr.mxu0 0.0
      %4858 = vmatpush2.msra.mxu0 0.0
      %4859 = vmatprep.subr.mxu0 0.0
      %4860 = vmatpush2.msra.mxu0 0.0
      %4861 = vmatprep.subr.mxu0 0.0
      %4862 = vmatpush2.msra.mxu0 0.0
      %4863 = vmatprep.subr.mxu0 0.0
      %4864 = vmatpush2.msra.mxu0 0.0
      %4865 = vmatprep.subr.mxu0 0.0
      %4866 = vmatpush2.msra.mxu0 0.0
      %4867 = vmatprep.subr.mxu0 0.0
      %4868 = vmatpush2.msra.mxu0 0.0
      %4869 = vmatprep.subr.mxu0 0.0
      %4870 = vmatpush2.msra.mxu0 0.0
      %4871 = vmatprep.subr.mxu0 0.0
      %4872 = vmatpush2.msra.mxu0 0.0
      %4873 = vmatprep.subr.mxu0 0.0
      %4874 = vmatpush2.msra.mxu0 0.0
      %4875 = vmatprep.subr.mxu0 0.0
      %4876 = vmatpush2.msra.mxu0 0.0
      %4877 = vmatprep.subr.mxu0 0.0
      %4878 = vmatpush2.msra.mxu0 0.0
      %4879 = vmatprep.subr.mxu0 0.0
      %4880 = vmatpush2.msra.mxu0 0.0
      %4881 = vmatprep.subr.mxu0 0.0
      %4882 = vmatpush2.msra.mxu0 0.0
      %4883 = vmatprep.subr.mxu0 0.0
      %4884 = vmatpush2.msra.mxu0 0.0
      %4885 = vmatprep.subr.mxu0 0.0
      %4886 = vmatpush2.msra.mxu0 0.0
      %4887 = vmatprep.mubr.f32.mxu0 0.0
      %4888 = vmatmul.mubr.f32.gmra.mxu0 %v4818
      %v4889 = vpop.f32.mrf.mxu0
      %v4890 = vadd.f32 0.0, %v4889
      %v4891 = vpop.f32.mrf.mxu0
      %v4892 = vadd.f32 0.0, %v4891
      %4893 = vmatprep.mubr.f32.mxu0 0.0
      %4894 = vmatmul.mubr.f32.gmra.mxu0 %v4821
      %v4895 = vpop.f32.mrf.mxu0
      %v4896 = vadd.f32 0.0, %v4895
      %v4897 = vpop.f32.mrf.mxu0
      %v4898 = vadd.f32 0.0, %v4897
      %4899 = vdwg.mxu0
      %v4900 = vadd.f32 %v3799, %v4890
      %v4901 = vadd.f32 %v3800, %v4892
      %v4902 = vadd.f32 %v3801, %v4896
      %v4903 = vadd.f32 %v3802, %v4898
      %4906 = vrot.lane.b32.xlu0 %v4811, 17
      %v4907 = vpop.permute.xlu0 %4906
      %4908 = vrot.lane.b32.xlu0 %v4813, 17
      %v4909 = vpop.permute.xlu0 %4908
      %4914 = vrot.lane.b32.xlu0 %v4810, 17
      %v4915 = vpop.permute.xlu0 %4914
      %4916 = vrot.lane.b32.xlu0 %v4812, 17
      %v4917 = vpop.permute.xlu0 %4916
      %v4918 = vsel %vm326, %v4915, %v4907
      %v4919 = vsel %vm326, %v4917, %v4909
      %v4924 = vsel %vm326, %v4907, %v4915
      %v4925 = vsel %vm326, %v4909, %v4917
      %s4926 = scalar_lea.vmem %s2, 576
      %v4927 = vld [vmem:[%s4926] sm:$0xff]
      %v4928 = vld [vmem:[%s4926 + $0x8] sm:$0xff]
      %v4930 = vsel %vm337, %v4927, 0
      %v4933 = vsel %vm337, %v4928, 0
      %4935 = vmatprep.subr.mxu0 0.0
      %4936 = vmatpush1.msra.mxu0 0.0
      %4937 = vmatprep.subr.mxu0 0.0
      %4938 = vmatpush1.msra.mxu0 0.0
      %4939 = vmatprep.subr.mxu0 0.0
      %4940 = vmatpush1.msra.mxu0 0.0
      %4941 = vmatprep.subr.mxu0 0.0
      %4942 = vmatpush1.msra.mxu0 0.0
      %4943 = vmatprep.subr.mxu0 0.0
      %4944 = vmatpush1.msra.mxu0 0.0
      %4945 = vmatprep.subr.mxu0 0.0
      %4946 = vmatpush1.msra.mxu0 0.0
      %4947 = vmatprep.subr.mxu0 0.0
      %4948 = vmatpush1.msra.mxu0 0.0
      %4949 = vmatprep.subr.mxu0 0.0
      %4950 = vmatpush1.msra.mxu0 0.0
      %4951 = vmatprep.subr.mxu0 0.0
      %4952 = vmatpush1.msra.mxu0 0.0
      %4953 = vmatprep.subr.mxu0 0.0
      %4954 = vmatpush1.msra.mxu0 0.0
      %4955 = vmatprep.subr.mxu0 0.0
      %4956 = vmatpush1.msra.mxu0 0.0
      %4957 = vmatprep.subr.mxu0 0.0
      %4958 = vmatpush1.msra.mxu0 0.0
      %4959 = vmatprep.subr.mxu0 0.0
      %4960 = vmatpush1.msra.mxu0 0.0
      %4961 = vmatprep.subr.mxu0 0.0
      %4962 = vmatpush1.msra.mxu0 0.0
      %4963 = vmatprep.subr.mxu0 %v4919
      %4964 = vmatpush1.msra.mxu0 %v4925
      %4965 = vmatprep.subr.mxu0 %v4918
      %4966 = vmatpush1.msra.mxu0 %v4924
      %4967 = vmatprep.subr.mxu0 0.0
      %4968 = vmatpush2.msra.mxu0 0.0
      %4969 = vmatprep.subr.mxu0 0.0
      %4970 = vmatpush2.msra.mxu0 0.0
      %4971 = vmatprep.subr.mxu0 0.0
      %4972 = vmatpush2.msra.mxu0 0.0
      %4973 = vmatprep.subr.mxu0 0.0
      %4974 = vmatpush2.msra.mxu0 0.0
      %4975 = vmatprep.subr.mxu0 0.0
      %4976 = vmatpush2.msra.mxu0 0.0
      %4977 = vmatprep.subr.mxu0 0.0
      %4978 = vmatpush2.msra.mxu0 0.0
      %4979 = vmatprep.subr.mxu0 0.0
      %4980 = vmatpush2.msra.mxu0 0.0
      %4981 = vmatprep.subr.mxu0 0.0
      %4982 = vmatpush2.msra.mxu0 0.0
      %4983 = vmatprep.subr.mxu0 0.0
      %4984 = vmatpush2.msra.mxu0 0.0
      %4985 = vmatprep.subr.mxu0 0.0
      %4986 = vmatpush2.msra.mxu0 0.0
      %4987 = vmatprep.subr.mxu0 0.0
      %4988 = vmatpush2.msra.mxu0 0.0
      %4989 = vmatprep.subr.mxu0 0.0
      %4990 = vmatpush2.msra.mxu0 0.0
      %4991 = vmatprep.subr.mxu0 0.0
      %4992 = vmatpush2.msra.mxu0 0.0
      %4993 = vmatprep.subr.mxu0 0.0
      %4994 = vmatpush2.msra.mxu0 0.0
      %4995 = vmatprep.subr.mxu0 0.0
      %4996 = vmatpush2.msra.mxu0 0.0
      %4997 = vmatprep.subr.mxu0 0.0
      %4998 = vmatpush2.msra.mxu0 0.0
      %4999 = vmatprep.mubr.f32.mxu0 0.0
      %5000 = vmatmul.mubr.f32.gmra.mxu0 %v4930
      %v5001 = vpop.f32.mrf.mxu0
      %v5002 = vadd.f32 0.0, %v5001
      %v5003 = vpop.f32.mrf.mxu0
      %v5004 = vadd.f32 0.0, %v5003
      %5005 = vmatprep.mubr.f32.mxu0 0.0
      %5006 = vmatmul.mubr.f32.gmra.mxu0 %v4933
      %v5007 = vpop.f32.mrf.mxu0
      %v5008 = vadd.f32 0.0, %v5007
      %v5009 = vpop.f32.mrf.mxu0
      %v5010 = vadd.f32 0.0, %v5009
      %5011 = vdwg.mxu0
      %v5012 = vmul.f32 %v5002, %v426
      %v5013 = vmul.f32 %v5004, %v430
      %v5014 = vmul.f32 %v5008, %v426
      %v5015 = vmul.f32 %v5010, %v430
      %v5016 = vadd.f32 %v5012, 0.0
      %v5017 = vadd.f32 %v5013, 0.0
      %v5018 = vadd.f32 %v5014, 0.0
      %v5019 = vadd.f32 %v5015, 0.0
      %5020 = vrot.lane.b32.xlu0 %v4811, 16
      %v5021 = vpop.permute.xlu0 %5020
      %5022 = vrot.lane.b32.xlu0 %v4813, 16
      %v5023 = vpop.permute.xlu0 %5022
      %5026 = vrot.lane.b32.xlu0 %v4810, 16
      %v5027 = vpop.permute.xlu0 %5026
      %5028 = vrot.lane.b32.xlu0 %v4812, 16
      %v5029 = vpop.permute.xlu0 %5028
      %v5030 = vsel %vm337, %v5027, %v5021
      %v5031 = vsel %vm337, %v5029, %v5023
      %v5036 = vsel %vm337, %v5021, %v5027
      %v5037 = vsel %vm337, %v5023, %v5029
      %s5038 = scalar_lea.vmem %s2, 592
      %v5039 = vld [vmem:[%s5038] sm:$0xff]
      %v5040 = vld [vmem:[%s5038 + $0x8] sm:$0xff]
      %v5042 = vsel %vm337, %v5039, 0
      %v5045 = vsel %vm337, %v5040, 0
      %5047 = vmatprep.subr.mxu0 0.0
      %5048 = vmatpush1.msra.mxu0 0.0
      %5049 = vmatprep.subr.mxu0 0.0
      %5050 = vmatpush1.msra.mxu0 0.0
      %5051 = vmatprep.subr.mxu0 0.0
      %5052 = vmatpush1.msra.mxu0 0.0
      %5053 = vmatprep.subr.mxu0 0.0
      %5054 = vmatpush1.msra.mxu0 0.0
      %5055 = vmatprep.subr.mxu0 0.0
      %5056 = vmatpush1.msra.mxu0 0.0
      %5057 = vmatprep.subr.mxu0 0.0
      %5058 = vmatpush1.msra.mxu0 0.0
      %5059 = vmatprep.subr.mxu0 0.0
      %5060 = vmatpush1.msra.mxu0 0.0
      %5061 = vmatprep.subr.mxu0 0.0
      %5062 = vmatpush1.msra.mxu0 0.0
      %5063 = vmatprep.subr.mxu0 0.0
      %5064 = vmatpush1.msra.mxu0 0.0
      %5065 = vmatprep.subr.mxu0 0.0
      %5066 = vmatpush1.msra.mxu0 0.0
      %5067 = vmatprep.subr.mxu0 0.0
      %5068 = vmatpush1.msra.mxu0 0.0
      %5069 = vmatprep.subr.mxu0 0.0
      %5070 = vmatpush1.msra.mxu0 0.0
      %5071 = vmatprep.subr.mxu0 0.0
      %5072 = vmatpush1.msra.mxu0 0.0
      %5073 = vmatprep.subr.mxu0 0.0
      %5074 = vmatpush1.msra.mxu0 0.0
      %5075 = vmatprep.subr.mxu0 %v5031
      %5076 = vmatpush1.msra.mxu0 %v5037
      %5077 = vmatprep.subr.mxu0 %v5030
      %5078 = vmatpush1.msra.mxu0 %v5036
      %5079 = vmatprep.subr.mxu0 0.0
      %5080 = vmatpush2.msra.mxu0 0.0
      %5081 = vmatprep.subr.mxu0 0.0
      %5082 = vmatpush2.msra.mxu0 0.0
      %5083 = vmatprep.subr.mxu0 0.0
      %5084 = vmatpush2.msra.mxu0 0.0
      %5085 = vmatprep.subr.mxu0 0.0
      %5086 = vmatpush2.msra.mxu0 0.0
      %5087 = vmatprep.subr.mxu0 0.0
      %5088 = vmatpush2.msra.mxu0 0.0
      %5089 = vmatprep.subr.mxu0 0.0
      %5090 = vmatpush2.msra.mxu0 0.0
      %5091 = vmatprep.subr.mxu0 0.0
      %5092 = vmatpush2.msra.mxu0 0.0
      %5093 = vmatprep.subr.mxu0 0.0
      %5094 = vmatpush2.msra.mxu0 0.0
      %5095 = vmatprep.subr.mxu0 0.0
      %5096 = vmatpush2.msra.mxu0 0.0
      %5097 = vmatprep.subr.mxu0 0.0
      %5098 = vmatpush2.msra.mxu0 0.0
      %5099 = vmatprep.subr.mxu0 0.0
      %5100 = vmatpush2.msra.mxu0 0.0
      %5101 = vmatprep.subr.mxu0 0.0
      %5102 = vmatpush2.msra.mxu0 0.0
      %5103 = vmatprep.subr.mxu0 0.0
      %5104 = vmatpush2.msra.mxu0 0.0
      %5105 = vmatprep.subr.mxu0 0.0
      %5106 = vmatpush2.msra.mxu0 0.0
      %5107 = vmatprep.subr.mxu0 0.0
      %5108 = vmatpush2.msra.mxu0 0.0
      %5109 = vmatprep.subr.mxu0 0.0
      %5110 = vmatpush2.msra.mxu0 0.0
      %5111 = vmatprep.mubr.f32.mxu0 0.0
      %5112 = vmatmul.mubr.f32.gmra.mxu0 %v5042
      %v5113 = vpop.f32.mrf.mxu0
      %v5114 = vadd.f32 0.0, %v5113
      %v5115 = vpop.f32.mrf.mxu0
      %v5116 = vadd.f32 0.0, %v5115
      %5117 = vmatprep.mubr.f32.mxu0 0.0
      %5118 = vmatmul.mubr.f32.gmra.mxu0 %v5045
      %v5119 = vpop.f32.mrf.mxu0
      %v5120 = vadd.f32 0.0, %v5119
      %v5121 = vpop.f32.mrf.mxu0
      %v5122 = vadd.f32 0.0, %v5121
      %5123 = vdwg.mxu0
      %v5124 = vmul.f32 %v5114, %v551
      %v5125 = vmul.f32 %v5116, %v555
      %v5126 = vmul.f32 %v5120, %v551
      %v5127 = vmul.f32 %v5122, %v555
      %v5128 = vadd.f32 %v5016, %v5124
      %v5129 = vadd.f32 %v5017, %v5125
      %v5130 = vadd.f32 %v5018, %v5126
      %v5131 = vadd.f32 %v5019, %v5127
      %5132 = vrot.lane.b32.xlu0 %v4811, 15
      %v5133 = vpop.permute.xlu0 %5132
      %5134 = vrot.lane.b32.xlu0 %v4813, 15
      %v5135 = vpop.permute.xlu0 %5134
      %5138 = vrot.lane.b32.xlu0 %v4810, 15
      %v5139 = vpop.permute.xlu0 %5138
      %5140 = vrot.lane.b32.xlu0 %v4812, 15
      %v5141 = vpop.permute.xlu0 %5140
      %v5142 = vsel %vm576, %v5139, %v5133
      %v5143 = vsel %vm576, %v5141, %v5135
      %v5148 = vsel %vm576, %v5133, %v5139
      %v5149 = vsel %vm576, %v5135, %v5141
      %s5150 = scalar_lea.vmem %s2, 608
      %v5151 = vld [vmem:[%s5150] sm:$0xff]
      %v5152 = vld [vmem:[%s5150 + $0x8] sm:$0xff]
      %v5154 = vsel %vm337, %v5151, 0
      %v5157 = vsel %vm337, %v5152, 0
      %5159 = vmatprep.subr.mxu0 0.0
      %5160 = vmatpush1.msra.mxu0 0.0
      %5161 = vmatprep.subr.mxu0 0.0
      %5162 = vmatpush1.msra.mxu0 0.0
      %5163 = vmatprep.subr.mxu0 0.0
      %5164 = vmatpush1.msra.mxu0 0.0
      %5165 = vmatprep.subr.mxu0 0.0
      %5166 = vmatpush1.msra.mxu0 0.0
      %5167 = vmatprep.subr.mxu0 0.0
      %5168 = vmatpush1.msra.mxu0 0.0
      %5169 = vmatprep.subr.mxu0 0.0
      %5170 = vmatpush1.msra.mxu0 0.0
      %5171 = vmatprep.subr.mxu0 0.0
      %5172 = vmatpush1.msra.mxu0 0.0
      %5173 = vmatprep.subr.mxu0 0.0
      %5174 = vmatpush1.msra.mxu0 0.0
      %5175 = vmatprep.subr.mxu0 0.0
      %5176 = vmatpush1.msra.mxu0 0.0
      %5177 = vmatprep.subr.mxu0 0.0
      %5178 = vmatpush1.msra.mxu0 0.0
      %5179 = vmatprep.subr.mxu0 0.0
      %5180 = vmatpush1.msra.mxu0 0.0
      %5181 = vmatprep.subr.mxu0 0.0
      %5182 = vmatpush1.msra.mxu0 0.0
      %5183 = vmatprep.subr.mxu0 0.0
      %5184 = vmatpush1.msra.mxu0 0.0
      %5185 = vmatprep.subr.mxu0 0.0
      %5186 = vmatpush1.msra.mxu0 0.0
      %5187 = vmatprep.subr.mxu0 %v5143
      %5188 = vmatpush1.msra.mxu0 %v5149
      %5189 = vmatprep.subr.mxu0 %v5142
      %5190 = vmatpush1.msra.mxu0 %v5148
      %5191 = vmatprep.subr.mxu0 0.0
      %5192 = vmatpush2.msra.mxu0 0.0
      %5193 = vmatprep.subr.mxu0 0.0
      %5194 = vmatpush2.msra.mxu0 0.0
      %5195 = vmatprep.subr.mxu0 0.0
      %5196 = vmatpush2.msra.mxu0 0.0
      %5197 = vmatprep.subr.mxu0 0.0
      %5198 = vmatpush2.msra.mxu0 0.0
      %5199 = vmatprep.subr.mxu0 0.0
      %5200 = vmatpush2.msra.mxu0 0.0
      %5201 = vmatprep.subr.mxu0 0.0
      %5202 = vmatpush2.msra.mxu0 0.0
      %5203 = vmatprep.subr.mxu0 0.0
      %5204 = vmatpush2.msra.mxu0 0.0
      %5205 = vmatprep.subr.mxu0 0.0
      %5206 = vmatpush2.msra.mxu0 0.0
      %5207 = vmatprep.subr.mxu0 0.0
      %5208 = vmatpush2.msra.mxu0 0.0
      %5209 = vmatprep.subr.mxu0 0.0
      %5210 = vmatpush2.msra.mxu0 0.0
      %5211 = vmatprep.subr.mxu0 0.0
      %5212 = vmatpush2.msra.mxu0 0.0
      %5213 = vmatprep.subr.mxu0 0.0
      %5214 = vmatpush2.msra.mxu0 0.0
      %5215 = vmatprep.subr.mxu0 0.0
      %5216 = vmatpush2.msra.mxu0 0.0
      %5217 = vmatprep.subr.mxu0 0.0
      %5218 = vmatpush2.msra.mxu0 0.0
      %5219 = vmatprep.subr.mxu0 0.0
      %5220 = vmatpush2.msra.mxu0 0.0
      %5221 = vmatprep.subr.mxu0 0.0
      %5222 = vmatpush2.msra.mxu0 0.0
      %5223 = vmatprep.mubr.f32.mxu0 0.0
      %5224 = vmatmul.mubr.f32.gmra.mxu0 %v5154
      %v5225 = vpop.f32.mrf.mxu0
      %v5226 = vadd.f32 0.0, %v5225
      %v5227 = vpop.f32.mrf.mxu0
      %v5228 = vadd.f32 0.0, %v5227
      %5229 = vmatprep.mubr.f32.mxu0 0.0
      %5230 = vmatmul.mubr.f32.gmra.mxu0 %v5157
      %v5231 = vpop.f32.mrf.mxu0
      %v5232 = vadd.f32 0.0, %v5231
      %v5233 = vpop.f32.mrf.mxu0
      %v5234 = vadd.f32 0.0, %v5233
      %5235 = vdwg.mxu0
      %v5236 = vmul.f32 %v5226, %v677
      %v5237 = vmul.f32 %v5228, %v681
      %v5238 = vmul.f32 %v5232, %v677
      %v5239 = vmul.f32 %v5234, %v681
      %v5240 = vadd.f32 %v5128, %v5236
      %v5241 = vadd.f32 %v5129, %v5237
      %v5242 = vadd.f32 %v5130, %v5238
      %v5243 = vadd.f32 %v5131, %v5239
      %5244 = vrot.lane.b32.xlu0 %v4811, 1
      %v5245 = vpop.permute.xlu0 %5244
      %5246 = vrot.lane.b32.xlu0 %v4813, 1
      %v5247 = vpop.permute.xlu0 %5246
      %5250 = vrot.lane.b32.xlu0 %v4810, 1
      %v5251 = vpop.permute.xlu0 %5250
      %5252 = vrot.lane.b32.xlu0 %v4812, 1
      %v5253 = vpop.permute.xlu0 %5252
      %v5254 = vsel %vm702, %v5251, %v5245
      %v5255 = vsel %vm702, %v5253, %v5247
      %v5260 = vsel %vm702, %v5245, %v5251
      %v5261 = vsel %vm702, %v5247, %v5253
      %s5262 = scalar_lea.vmem %s2, 624
      %v5263 = vld [vmem:[%s5262] sm:$0xff]
      %v5264 = vld [vmem:[%s5262 + $0x8] sm:$0xff]
      %v5266 = vsel %vm337, %v5263, 0
      %v5269 = vsel %vm337, %v5264, 0
      %5271 = vmatprep.subr.mxu0 0.0
      %5272 = vmatpush1.msra.mxu0 0.0
      %5273 = vmatprep.subr.mxu0 0.0
      %5274 = vmatpush1.msra.mxu0 0.0
      %5275 = vmatprep.subr.mxu0 0.0
      %5276 = vmatpush1.msra.mxu0 0.0
      %5277 = vmatprep.subr.mxu0 0.0
      %5278 = vmatpush1.msra.mxu0 0.0
      %5279 = vmatprep.subr.mxu0 0.0
      %5280 = vmatpush1.msra.mxu0 0.0
      %5281 = vmatprep.subr.mxu0 0.0
      %5282 = vmatpush1.msra.mxu0 0.0
      %5283 = vmatprep.subr.mxu0 0.0
      %5284 = vmatpush1.msra.mxu0 0.0
      %5285 = vmatprep.subr.mxu0 0.0
      %5286 = vmatpush1.msra.mxu0 0.0
      %5287 = vmatprep.subr.mxu0 0.0
      %5288 = vmatpush1.msra.mxu0 0.0
      %5289 = vmatprep.subr.mxu0 0.0
      %5290 = vmatpush1.msra.mxu0 0.0
      %5291 = vmatprep.subr.mxu0 0.0
      %5292 = vmatpush1.msra.mxu0 0.0
      %5293 = vmatprep.subr.mxu0 0.0
      %5294 = vmatpush1.msra.mxu0 0.0
      %5295 = vmatprep.subr.mxu0 0.0
      %5296 = vmatpush1.msra.mxu0 0.0
      %5297 = vmatprep.subr.mxu0 0.0
      %5298 = vmatpush1.msra.mxu0 0.0
      %5299 = vmatprep.subr.mxu0 %v5255
      %5300 = vmatpush1.msra.mxu0 %v5261
      %5301 = vmatprep.subr.mxu0 %v5254
      %5302 = vmatpush1.msra.mxu0 %v5260
      %5303 = vmatprep.subr.mxu0 0.0
      %5304 = vmatpush2.msra.mxu0 0.0
      %5305 = vmatprep.subr.mxu0 0.0
      %5306 = vmatpush2.msra.mxu0 0.0
      %5307 = vmatprep.subr.mxu0 0.0
      %5308 = vmatpush2.msra.mxu0 0.0
      %5309 = vmatprep.subr.mxu0 0.0
      %5310 = vmatpush2.msra.mxu0 0.0
      %5311 = vmatprep.subr.mxu0 0.0
      %5312 = vmatpush2.msra.mxu0 0.0
      %5313 = vmatprep.subr.mxu0 0.0
      %5314 = vmatpush2.msra.mxu0 0.0
      %5315 = vmatprep.subr.mxu0 0.0
      %5316 = vmatpush2.msra.mxu0 0.0
      %5317 = vmatprep.subr.mxu0 0.0
      %5318 = vmatpush2.msra.mxu0 0.0
      %5319 = vmatprep.subr.mxu0 0.0
      %5320 = vmatpush2.msra.mxu0 0.0
      %5321 = vmatprep.subr.mxu0 0.0
      %5322 = vmatpush2.msra.mxu0 0.0
      %5323 = vmatprep.subr.mxu0 0.0
      %5324 = vmatpush2.msra.mxu0 0.0
      %5325 = vmatprep.subr.mxu0 0.0
      %5326 = vmatpush2.msra.mxu0 0.0
      %5327 = vmatprep.subr.mxu0 0.0
      %5328 = vmatpush2.msra.mxu0 0.0
      %5329 = vmatprep.subr.mxu0 0.0
      %5330 = vmatpush2.msra.mxu0 0.0
      %5331 = vmatprep.subr.mxu0 0.0
      %5332 = vmatpush2.msra.mxu0 0.0
      %5333 = vmatprep.subr.mxu0 0.0
      %5334 = vmatpush2.msra.mxu0 0.0
      %5335 = vmatprep.mubr.f32.mxu0 0.0
      %5336 = vmatmul.mubr.f32.gmra.mxu0 %v5266
      %v5337 = vpop.f32.mrf.mxu0
      %v5338 = vadd.f32 0.0, %v5337
      %v5339 = vpop.f32.mrf.mxu0
      %v5340 = vadd.f32 0.0, %v5339
      %5341 = vmatprep.mubr.f32.mxu0 0.0
      %5342 = vmatmul.mubr.f32.gmra.mxu0 %v5269
      %v5343 = vpop.f32.mrf.mxu0
      %v5344 = vadd.f32 0.0, %v5343
      %v5345 = vpop.f32.mrf.mxu0
      %v5346 = vadd.f32 0.0, %v5345
      %5347 = vdwg.mxu0
      %v5348 = vmul.f32 %v5338, %v803
      %v5349 = vmul.f32 %v5340, %v807
      %v5350 = vmul.f32 %v5344, %v803
      %v5351 = vmul.f32 %v5346, %v807
      %v5352 = vadd.f32 %v5240, %v5348
      %v5353 = vadd.f32 %v5241, %v5349
      %v5354 = vadd.f32 %v5242, %v5350
      %v5355 = vadd.f32 %v5243, %v5351
      %s5356 = scalar_lea.vmem %s2, 640
      %v5357 = vld [vmem:[%s5356] sm:$0xff]
      %v5358 = vld [vmem:[%s5356 + $0x8] sm:$0xff]
      %v5360 = vsel %vm337, %v5357, 0
      %v5363 = vsel %vm337, %v5358, 0
      %5365 = vmatprep.subr.mxu0 0.0
      %5366 = vmatpush1.msra.mxu0 0.0
      %5367 = vmatprep.subr.mxu0 0.0
      %5368 = vmatpush1.msra.mxu0 0.0
      %5369 = vmatprep.subr.mxu0 0.0
      %5370 = vmatpush1.msra.mxu0 0.0
      %5371 = vmatprep.subr.mxu0 0.0
      %5372 = vmatpush1.msra.mxu0 0.0
      %5373 = vmatprep.subr.mxu0 0.0
      %5374 = vmatpush1.msra.mxu0 0.0
      %5375 = vmatprep.subr.mxu0 0.0
      %5376 = vmatpush1.msra.mxu0 0.0
      %5377 = vmatprep.subr.mxu0 0.0
      %5378 = vmatpush1.msra.mxu0 0.0
      %5379 = vmatprep.subr.mxu0 0.0
      %5380 = vmatpush1.msra.mxu0 0.0
      %5381 = vmatprep.subr.mxu0 0.0
      %5382 = vmatpush1.msra.mxu0 0.0
      %5383 = vmatprep.subr.mxu0 0.0
      %5384 = vmatpush1.msra.mxu0 0.0
      %5385 = vmatprep.subr.mxu0 0.0
      %5386 = vmatpush1.msra.mxu0 0.0
      %5387 = vmatprep.subr.mxu0 0.0
      %5388 = vmatpush1.msra.mxu0 0.0
      %5389 = vmatprep.subr.mxu0 0.0
      %5390 = vmatpush1.msra.mxu0 0.0
      %5391 = vmatprep.subr.mxu0 0.0
      %5392 = vmatpush1.msra.mxu0 0.0
      %5393 = vmatprep.subr.mxu0 %v4813
      %5394 = vmatpush1.msra.mxu0 %v4812
      %5395 = vmatprep.subr.mxu0 %v4811
      %5396 = vmatpush1.msra.mxu0 %v4810
      %5397 = vmatprep.subr.mxu0 0.0
      %5398 = vmatpush2.msra.mxu0 0.0
      %5399 = vmatprep.subr.mxu0 0.0
      %5400 = vmatpush2.msra.mxu0 0.0
      %5401 = vmatprep.subr.mxu0 0.0
      %5402 = vmatpush2.msra.mxu0 0.0
      %5403 = vmatprep.subr.mxu0 0.0
      %5404 = vmatpush2.msra.mxu0 0.0
      %5405 = vmatprep.subr.mxu0 0.0
      %5406 = vmatpush2.msra.mxu0 0.0
      %5407 = vmatprep.subr.mxu0 0.0
      %5408 = vmatpush2.msra.mxu0 0.0
      %5409 = vmatprep.subr.mxu0 0.0
      %5410 = vmatpush2.msra.mxu0 0.0
      %5411 = vmatprep.subr.mxu0 0.0
      %5412 = vmatpush2.msra.mxu0 0.0
      %5413 = vmatprep.subr.mxu0 0.0
      %5414 = vmatpush2.msra.mxu0 0.0
      %5415 = vmatprep.subr.mxu0 0.0
      %5416 = vmatpush2.msra.mxu0 0.0
      %5417 = vmatprep.subr.mxu0 0.0
      %5418 = vmatpush2.msra.mxu0 0.0
      %5419 = vmatprep.subr.mxu0 0.0
      %5420 = vmatpush2.msra.mxu0 0.0
      %5421 = vmatprep.subr.mxu0 0.0
      %5422 = vmatpush2.msra.mxu0 0.0
      %5423 = vmatprep.subr.mxu0 0.0
      %5424 = vmatpush2.msra.mxu0 0.0
      %5425 = vmatprep.subr.mxu0 0.0
      %5426 = vmatpush2.msra.mxu0 0.0
      %5427 = vmatprep.subr.mxu0 0.0
      %5428 = vmatpush2.msra.mxu0 0.0
      %5429 = vmatprep.mubr.f32.mxu0 0.0
      %5430 = vmatmul.mubr.f32.gmra.mxu0 %v5360
      %v5431 = vpop.f32.mrf.mxu0
      %v5432 = vadd.f32 0.0, %v5431
      %v5433 = vpop.f32.mrf.mxu0
      %v5434 = vadd.f32 0.0, %v5433
      %5435 = vmatprep.mubr.f32.mxu0 0.0
      %5436 = vmatmul.mubr.f32.gmra.mxu0 %v5363
      %v5437 = vpop.f32.mrf.mxu0
      %v5438 = vadd.f32 0.0, %v5437
      %v5439 = vpop.f32.mrf.mxu0
      %v5440 = vadd.f32 0.0, %v5439
      %5441 = vdwg.mxu0
      %v5442 = vadd.f32 %v5352, %v5432
      %v5443 = vadd.f32 %v5353, %v5434
      %v5444 = vadd.f32 %v5354, %v5438
      %v5445 = vadd.f32 %v5355, %v5440
      %5446 = vrot.lane.b32.xlu0 %v4810, 127
      %v5447 = vpop.permute.xlu0 %5446
      %5448 = vrot.lane.b32.xlu0 %v4811, 127
      %v5449 = vpop.permute.xlu0 %5448
      %5450 = vrot.lane.b32.xlu0 %v4812, 127
      %v5451 = vpop.permute.xlu0 %5450
      %5452 = vrot.lane.b32.xlu0 %v4813, 127
      %v5453 = vpop.permute.xlu0 %5452
      %v5454 = vsel %vm916, %v5447, %v5449
      %v5455 = vsel %vm916, %v5451, %v5453
      %v5462 = vsel %vm916, %v5449, %v5447
      %v5463 = vsel %vm916, %v5453, %v5451
      %s5464 = scalar_lea.vmem %s2, 656
      %v5465 = vld [vmem:[%s5464] sm:$0xff]
      %v5466 = vld [vmem:[%s5464 + $0x8] sm:$0xff]
      %v5468 = vsel %vm337, %v5465, 0
      %v5471 = vsel %vm337, %v5466, 0
      %5473 = vmatprep.subr.mxu0 0.0
      %5474 = vmatpush1.msra.mxu0 0.0
      %5475 = vmatprep.subr.mxu0 0.0
      %5476 = vmatpush1.msra.mxu0 0.0
      %5477 = vmatprep.subr.mxu0 0.0
      %5478 = vmatpush1.msra.mxu0 0.0
      %5479 = vmatprep.subr.mxu0 0.0
      %5480 = vmatpush1.msra.mxu0 0.0
      %5481 = vmatprep.subr.mxu0 0.0
      %5482 = vmatpush1.msra.mxu0 0.0
      %5483 = vmatprep.subr.mxu0 0.0
      %5484 = vmatpush1.msra.mxu0 0.0
      %5485 = vmatprep.subr.mxu0 0.0
      %5486 = vmatpush1.msra.mxu0 0.0
      %5487 = vmatprep.subr.mxu0 0.0
      %5488 = vmatpush1.msra.mxu0 0.0
      %5489 = vmatprep.subr.mxu0 0.0
      %5490 = vmatpush1.msra.mxu0 0.0
      %5491 = vmatprep.subr.mxu0 0.0
      %5492 = vmatpush1.msra.mxu0 0.0
      %5493 = vmatprep.subr.mxu0 0.0
      %5494 = vmatpush1.msra.mxu0 0.0
      %5495 = vmatprep.subr.mxu0 0.0
      %5496 = vmatpush1.msra.mxu0 0.0
      %5497 = vmatprep.subr.mxu0 0.0
      %5498 = vmatpush1.msra.mxu0 0.0
      %5499 = vmatprep.subr.mxu0 0.0
      %5500 = vmatpush1.msra.mxu0 0.0
      %5501 = vmatprep.subr.mxu0 %v5463
      %5502 = vmatpush1.msra.mxu0 %v5455
      %5503 = vmatprep.subr.mxu0 %v5462
      %5504 = vmatpush1.msra.mxu0 %v5454
      %5505 = vmatprep.subr.mxu0 0.0
      %5506 = vmatpush2.msra.mxu0 0.0
      %5507 = vmatprep.subr.mxu0 0.0
      %5508 = vmatpush2.msra.mxu0 0.0
      %5509 = vmatprep.subr.mxu0 0.0
      %5510 = vmatpush2.msra.mxu0 0.0
      %5511 = vmatprep.subr.mxu0 0.0
      %5512 = vmatpush2.msra.mxu0 0.0
      %5513 = vmatprep.subr.mxu0 0.0
      %5514 = vmatpush2.msra.mxu0 0.0
      %5515 = vmatprep.subr.mxu0 0.0
      %5516 = vmatpush2.msra.mxu0 0.0
      %5517 = vmatprep.subr.mxu0 0.0
      %5518 = vmatpush2.msra.mxu0 0.0
      %5519 = vmatprep.subr.mxu0 0.0
      %5520 = vmatpush2.msra.mxu0 0.0
      %5521 = vmatprep.subr.mxu0 0.0
      %5522 = vmatpush2.msra.mxu0 0.0
      %5523 = vmatprep.subr.mxu0 0.0
      %5524 = vmatpush2.msra.mxu0 0.0
      %5525 = vmatprep.subr.mxu0 0.0
      %5526 = vmatpush2.msra.mxu0 0.0
      %5527 = vmatprep.subr.mxu0 0.0
      %5528 = vmatpush2.msra.mxu0 0.0
      %5529 = vmatprep.subr.mxu0 0.0
      %5530 = vmatpush2.msra.mxu0 0.0
      %5531 = vmatprep.subr.mxu0 0.0
      %5532 = vmatpush2.msra.mxu0 0.0
      %5533 = vmatprep.subr.mxu0 0.0
      %5534 = vmatpush2.msra.mxu0 0.0
      %5535 = vmatprep.subr.mxu0 0.0
      %5536 = vmatpush2.msra.mxu0 0.0
      %5537 = vmatprep.mubr.f32.mxu0 0.0
      %5538 = vmatmul.mubr.f32.gmra.mxu0 %v5468
      %v5539 = vpop.f32.mrf.mxu0
      %v5540 = vadd.f32 0.0, %v5539
      %v5541 = vpop.f32.mrf.mxu0
      %v5542 = vadd.f32 0.0, %v5541
      %5543 = vmatprep.mubr.f32.mxu0 0.0
      %5544 = vmatmul.mubr.f32.gmra.mxu0 %v5471
      %v5545 = vpop.f32.mrf.mxu0
      %v5546 = vadd.f32 0.0, %v5545
      %v5547 = vpop.f32.mrf.mxu0
      %v5548 = vadd.f32 0.0, %v5547
      %5549 = vdwg.mxu0
      %v5550 = vmul.f32 %v5540, %v1019
      %v5551 = vmul.f32 %v5542, %v1023
      %v5552 = vmul.f32 %v5546, %v1019
      %v5553 = vmul.f32 %v5548, %v1023
      %v5554 = vadd.f32 %v5442, %v5550
      %v5555 = vadd.f32 %v5443, %v5551
      %v5556 = vadd.f32 %v5444, %v5552
      %v5557 = vadd.f32 %v5445, %v5553
      %5558 = vrot.lane.b32.xlu0 %v4810, 113
      %v5559 = vpop.permute.xlu0 %5558
      %5560 = vrot.lane.b32.xlu0 %v4811, 113
      %v5561 = vpop.permute.xlu0 %5560
      %5562 = vrot.lane.b32.xlu0 %v4812, 113
      %v5563 = vpop.permute.xlu0 %5562
      %5564 = vrot.lane.b32.xlu0 %v4813, 113
      %v5565 = vpop.permute.xlu0 %5564
      %v5566 = vsel %vm1042, %v5559, %v5561
      %v5567 = vsel %vm1042, %v5563, %v5565
      %v5574 = vsel %vm1042, %v5561, %v5559
      %v5575 = vsel %vm1042, %v5565, %v5563
      %s5576 = scalar_lea.vmem %s2, 672
      %v5577 = vld [vmem:[%s5576] sm:$0xff]
      %v5578 = vld [vmem:[%s5576 + $0x8] sm:$0xff]
      %v5580 = vsel %vm337, %v5577, 0
      %v5583 = vsel %vm337, %v5578, 0
      %5585 = vmatprep.subr.mxu0 0.0
      %5586 = vmatpush1.msra.mxu0 0.0
      %5587 = vmatprep.subr.mxu0 0.0
      %5588 = vmatpush1.msra.mxu0 0.0
      %5589 = vmatprep.subr.mxu0 0.0
      %5590 = vmatpush1.msra.mxu0 0.0
      %5591 = vmatprep.subr.mxu0 0.0
      %5592 = vmatpush1.msra.mxu0 0.0
      %5593 = vmatprep.subr.mxu0 0.0
      %5594 = vmatpush1.msra.mxu0 0.0
      %5595 = vmatprep.subr.mxu0 0.0
      %5596 = vmatpush1.msra.mxu0 0.0
      %5597 = vmatprep.subr.mxu0 0.0
      %5598 = vmatpush1.msra.mxu0 0.0
      %5599 = vmatprep.subr.mxu0 0.0
      %5600 = vmatpush1.msra.mxu0 0.0
      %5601 = vmatprep.subr.mxu0 0.0
      %5602 = vmatpush1.msra.mxu0 0.0
      %5603 = vmatprep.subr.mxu0 0.0
      %5604 = vmatpush1.msra.mxu0 0.0
      %5605 = vmatprep.subr.mxu0 0.0
      %5606 = vmatpush1.msra.mxu0 0.0
      %5607 = vmatprep.subr.mxu0 0.0
      %5608 = vmatpush1.msra.mxu0 0.0
      %5609 = vmatprep.subr.mxu0 0.0
      %5610 = vmatpush1.msra.mxu0 0.0
      %5611 = vmatprep.subr.mxu0 0.0
      %5612 = vmatpush1.msra.mxu0 0.0
      %5613 = vmatprep.subr.mxu0 %v5575
      %5614 = vmatpush1.msra.mxu0 %v5567
      %5615 = vmatprep.subr.mxu0 %v5574
      %5616 = vmatpush1.msra.mxu0 %v5566
      %5617 = vmatprep.subr.mxu0 0.0
      %5618 = vmatpush2.msra.mxu0 0.0
      %5619 = vmatprep.subr.mxu0 0.0
      %5620 = vmatpush2.msra.mxu0 0.0
      %5621 = vmatprep.subr.mxu0 0.0
      %5622 = vmatpush2.msra.mxu0 0.0
      %5623 = vmatprep.subr.mxu0 0.0
      %5624 = vmatpush2.msra.mxu0 0.0
      %5625 = vmatprep.subr.mxu0 0.0
      %5626 = vmatpush2.msra.mxu0 0.0
      %5627 = vmatprep.subr.mxu0 0.0
      %5628 = vmatpush2.msra.mxu0 0.0
      %5629 = vmatprep.subr.mxu0 0.0
      %5630 = vmatpush2.msra.mxu0 0.0
      %5631 = vmatprep.subr.mxu0 0.0
      %5632 = vmatpush2.msra.mxu0 0.0
      %5633 = vmatprep.subr.mxu0 0.0
      %5634 = vmatpush2.msra.mxu0 0.0
      %5635 = vmatprep.subr.mxu0 0.0
      %5636 = vmatpush2.msra.mxu0 0.0
      %5637 = vmatprep.subr.mxu0 0.0
      %5638 = vmatpush2.msra.mxu0 0.0
      %5639 = vmatprep.subr.mxu0 0.0
      %5640 = vmatpush2.msra.mxu0 0.0
      %5641 = vmatprep.subr.mxu0 0.0
      %5642 = vmatpush2.msra.mxu0 0.0
      %5643 = vmatprep.subr.mxu0 0.0
      %5644 = vmatpush2.msra.mxu0 0.0
      %5645 = vmatprep.subr.mxu0 0.0
      %5646 = vmatpush2.msra.mxu0 0.0
      %5647 = vmatprep.subr.mxu0 0.0
      %5648 = vmatpush2.msra.mxu0 0.0
      %5649 = vmatprep.mubr.f32.mxu0 0.0
      %5650 = vmatmul.mubr.f32.gmra.mxu0 %v5580
      %v5651 = vpop.f32.mrf.mxu0
      %v5652 = vadd.f32 0.0, %v5651
      %v5653 = vpop.f32.mrf.mxu0
      %v5654 = vadd.f32 0.0, %v5653
      %5655 = vmatprep.mubr.f32.mxu0 0.0
      %5656 = vmatmul.mubr.f32.gmra.mxu0 %v5583
      %v5657 = vpop.f32.mrf.mxu0
      %v5658 = vadd.f32 0.0, %v5657
      %v5659 = vpop.f32.mrf.mxu0
      %v5660 = vadd.f32 0.0, %v5659
      %5661 = vdwg.mxu0
      %v5662 = vmul.f32 %v5652, %v1145
      %v5663 = vmul.f32 %v5654, %v1149
      %v5664 = vmul.f32 %v5658, %v1145
      %v5665 = vmul.f32 %v5660, %v1149
      %v5666 = vadd.f32 %v5554, %v5662
      %v5667 = vadd.f32 %v5555, %v5663
      %v5668 = vadd.f32 %v5556, %v5664
      %v5669 = vadd.f32 %v5557, %v5665
      %5670 = vrot.lane.b32.xlu0 %v4810, 112
      %v5671 = vpop.permute.xlu0 %5670
      %5672 = vrot.lane.b32.xlu0 %v4811, 112
      %v5673 = vpop.permute.xlu0 %5672
      %5674 = vrot.lane.b32.xlu0 %v4812, 112
      %v5675 = vpop.permute.xlu0 %5674
      %5676 = vrot.lane.b32.xlu0 %v4813, 112
      %v5677 = vpop.permute.xlu0 %5676
      %v5678 = vsel %vm1168, %v5671, %v5673
      %v5679 = vsel %vm1168, %v5675, %v5677
      %v5686 = vsel %vm1168, %v5673, %v5671
      %v5687 = vsel %vm1168, %v5677, %v5675
      %s5688 = scalar_lea.vmem %s2, 688
      %v5689 = vld [vmem:[%s5688] sm:$0xff]
      %v5690 = vld [vmem:[%s5688 + $0x8] sm:$0xff]
      %v5692 = vsel %vm337, %v5689, 0
      %v5695 = vsel %vm337, %v5690, 0
      %5697 = vmatprep.subr.mxu0 0.0
      %5698 = vmatpush1.msra.mxu0 0.0
      %5699 = vmatprep.subr.mxu0 0.0
      %5700 = vmatpush1.msra.mxu0 0.0
      %5701 = vmatprep.subr.mxu0 0.0
      %5702 = vmatpush1.msra.mxu0 0.0
      %5703 = vmatprep.subr.mxu0 0.0
      %5704 = vmatpush1.msra.mxu0 0.0
      %5705 = vmatprep.subr.mxu0 0.0
      %5706 = vmatpush1.msra.mxu0 0.0
      %5707 = vmatprep.subr.mxu0 0.0
      %5708 = vmatpush1.msra.mxu0 0.0
      %5709 = vmatprep.subr.mxu0 0.0
      %5710 = vmatpush1.msra.mxu0 0.0
      %5711 = vmatprep.subr.mxu0 0.0
      %5712 = vmatpush1.msra.mxu0 0.0
      %5713 = vmatprep.subr.mxu0 0.0
      %5714 = vmatpush1.msra.mxu0 0.0
      %5715 = vmatprep.subr.mxu0 0.0
      %5716 = vmatpush1.msra.mxu0 0.0
      %5717 = vmatprep.subr.mxu0 0.0
      %5718 = vmatpush1.msra.mxu0 0.0
      %5719 = vmatprep.subr.mxu0 0.0
      %5720 = vmatpush1.msra.mxu0 0.0
      %5721 = vmatprep.subr.mxu0 0.0
      %5722 = vmatpush1.msra.mxu0 0.0
      %5723 = vmatprep.subr.mxu0 0.0
      %5724 = vmatpush1.msra.mxu0 0.0
      %5725 = vmatprep.subr.mxu0 %v5687
      %5726 = vmatpush1.msra.mxu0 %v5679
      %5727 = vmatprep.subr.mxu0 %v5686
      %5728 = vmatpush1.msra.mxu0 %v5678
      %5729 = vmatprep.subr.mxu0 0.0
      %5730 = vmatpush2.msra.mxu0 0.0
      %5731 = vmatprep.subr.mxu0 0.0
      %5732 = vmatpush2.msra.mxu0 0.0
      %5733 = vmatprep.subr.mxu0 0.0
      %5734 = vmatpush2.msra.mxu0 0.0
      %5735 = vmatprep.subr.mxu0 0.0
      %5736 = vmatpush2.msra.mxu0 0.0
      %5737 = vmatprep.subr.mxu0 0.0
      %5738 = vmatpush2.msra.mxu0 0.0
      %5739 = vmatprep.subr.mxu0 0.0
      %5740 = vmatpush2.msra.mxu0 0.0
      %5741 = vmatprep.subr.mxu0 0.0
      %5742 = vmatpush2.msra.mxu0 0.0
      %5743 = vmatprep.subr.mxu0 0.0
      %5744 = vmatpush2.msra.mxu0 0.0
      %5745 = vmatprep.subr.mxu0 0.0
      %5746 = vmatpush2.msra.mxu0 0.0
      %5747 = vmatprep.subr.mxu0 0.0
      %5748 = vmatpush2.msra.mxu0 0.0
      %5749 = vmatprep.subr.mxu0 0.0
      %5750 = vmatpush2.msra.mxu0 0.0
      %5751 = vmatprep.subr.mxu0 0.0
      %5752 = vmatpush2.msra.mxu0 0.0
      %5753 = vmatprep.subr.mxu0 0.0
      %5754 = vmatpush2.msra.mxu0 0.0
      %5755 = vmatprep.subr.mxu0 0.0
      %5756 = vmatpush2.msra.mxu0 0.0
      %5757 = vmatprep.subr.mxu0 0.0
      %5758 = vmatpush2.msra.mxu0 0.0
      %5759 = vmatprep.subr.mxu0 0.0
      %5760 = vmatpush2.msra.mxu0 0.0
      %5761 = vmatprep.mubr.f32.mxu0 0.0
      %5762 = vmatmul.mubr.f32.gmra.mxu0 %v5692
      %v5763 = vpop.f32.mrf.mxu0
      %v5764 = vadd.f32 0.0, %v5763
      %v5765 = vpop.f32.mrf.mxu0
      %v5766 = vadd.f32 0.0, %v5765
      %5767 = vmatprep.mubr.f32.mxu0 0.0
      %5768 = vmatmul.mubr.f32.gmra.mxu0 %v5695
      %v5769 = vpop.f32.mrf.mxu0
      %v5770 = vadd.f32 0.0, %v5769
      %v5771 = vpop.f32.mrf.mxu0
      %v5772 = vadd.f32 0.0, %v5771
      %5773 = vdwg.mxu0
      %v5774 = vmul.f32 %v5764, %v1271
      %v5775 = vmul.f32 %v5766, %v1275
      %v5776 = vmul.f32 %v5770, %v1271
      %v5777 = vmul.f32 %v5772, %v1275
      %v5778 = vadd.f32 %v5666, %v5774
      %v5779 = vadd.f32 %v5667, %v5775
      %v5780 = vadd.f32 %v5668, %v5776
      %v5781 = vadd.f32 %v5669, %v5777
      %5782 = vrot.lane.b32.xlu0 %v4810, 111
      %v5783 = vpop.permute.xlu0 %5782
      %5784 = vrot.lane.b32.xlu0 %v4811, 111
      %v5785 = vpop.permute.xlu0 %5784
      %5786 = vrot.lane.b32.xlu0 %v4812, 111
      %v5787 = vpop.permute.xlu0 %5786
      %5788 = vrot.lane.b32.xlu0 %v4813, 111
      %v5789 = vpop.permute.xlu0 %5788
      %v5790 = vsel %vm1294, %v5783, %v5785
      %v5791 = vsel %vm1294, %v5787, %v5789
      %v5798 = vsel %vm1294, %v5785, %v5783
      %v5799 = vsel %vm1294, %v5789, %v5787
      %s5800 = scalar_lea.vmem %s2, 704
      %v5801 = vld [vmem:[%s5800] sm:$0xff]
      %v5802 = vld [vmem:[%s5800 + $0x8] sm:$0xff]
      %v5804 = vsel %vm337, %v5801, 0
      %v5807 = vsel %vm337, %v5802, 0
      %5809 = vmatprep.subr.mxu0 0.0
      %5810 = vmatpush1.msra.mxu0 0.0
      %5811 = vmatprep.subr.mxu0 0.0
      %5812 = vmatpush1.msra.mxu0 0.0
      %5813 = vmatprep.subr.mxu0 0.0
      %5814 = vmatpush1.msra.mxu0 0.0
      %5815 = vmatprep.subr.mxu0 0.0
      %5816 = vmatpush1.msra.mxu0 0.0
      %5817 = vmatprep.subr.mxu0 0.0
      %5818 = vmatpush1.msra.mxu0 0.0
      %5819 = vmatprep.subr.mxu0 0.0
      %5820 = vmatpush1.msra.mxu0 0.0
      %5821 = vmatprep.subr.mxu0 0.0
      %5822 = vmatpush1.msra.mxu0 0.0
      %5823 = vmatprep.subr.mxu0 0.0
      %5824 = vmatpush1.msra.mxu0 0.0
      %5825 = vmatprep.subr.mxu0 0.0
      %5826 = vmatpush1.msra.mxu0 0.0
      %5827 = vmatprep.subr.mxu0 0.0
      %5828 = vmatpush1.msra.mxu0 0.0
      %5829 = vmatprep.subr.mxu0 0.0
      %5830 = vmatpush1.msra.mxu0 0.0
      %5831 = vmatprep.subr.mxu0 0.0
      %5832 = vmatpush1.msra.mxu0 0.0
      %5833 = vmatprep.subr.mxu0 0.0
      %5834 = vmatpush1.msra.mxu0 0.0
      %5835 = vmatprep.subr.mxu0 0.0
      %5836 = vmatpush1.msra.mxu0 0.0
      %5837 = vmatprep.subr.mxu0 %v5799
      %5838 = vmatpush1.msra.mxu0 %v5791
      %5839 = vmatprep.subr.mxu0 %v5798
      %5840 = vmatpush1.msra.mxu0 %v5790
      %5841 = vmatprep.subr.mxu0 0.0
      %5842 = vmatpush2.msra.mxu0 0.0
      %5843 = vmatprep.subr.mxu0 0.0
      %5844 = vmatpush2.msra.mxu0 0.0
      %5845 = vmatprep.subr.mxu0 0.0
      %5846 = vmatpush2.msra.mxu0 0.0
      %5847 = vmatprep.subr.mxu0 0.0
      %5848 = vmatpush2.msra.mxu0 0.0
      %5849 = vmatprep.subr.mxu0 0.0
      %5850 = vmatpush2.msra.mxu0 0.0
      %5851 = vmatprep.subr.mxu0 0.0
      %5852 = vmatpush2.msra.mxu0 0.0
      %5853 = vmatprep.subr.mxu0 0.0
      %5854 = vmatpush2.msra.mxu0 0.0
      %5855 = vmatprep.subr.mxu0 0.0
      %5856 = vmatpush2.msra.mxu0 0.0
      %5857 = vmatprep.subr.mxu0 0.0
      %5858 = vmatpush2.msra.mxu0 0.0
      %5859 = vmatprep.subr.mxu0 0.0
      %5860 = vmatpush2.msra.mxu0 0.0
      %5861 = vmatprep.subr.mxu0 0.0
      %5862 = vmatpush2.msra.mxu0 0.0
      %5863 = vmatprep.subr.mxu0 0.0
      %5864 = vmatpush2.msra.mxu0 0.0
      %5865 = vmatprep.subr.mxu0 0.0
      %5866 = vmatpush2.msra.mxu0 0.0
      %5867 = vmatprep.subr.mxu0 0.0
      %5868 = vmatpush2.msra.mxu0 0.0
      %5869 = vmatprep.subr.mxu0 0.0
      %5870 = vmatpush2.msra.mxu0 0.0
      %5871 = vmatprep.subr.mxu0 0.0
      %5872 = vmatpush2.msra.mxu0 0.0
      %5873 = vmatprep.mubr.f32.mxu0 0.0
      %5874 = vmatmul.mubr.f32.gmra.mxu0 %v5804
      %v5875 = vpop.f32.mrf.mxu0
      %v5876 = vadd.f32 0.0, %v5875
      %v5877 = vpop.f32.mrf.mxu0
      %v5878 = vadd.f32 0.0, %v5877
      %5879 = vmatprep.mubr.f32.mxu0 0.0
      %5880 = vmatmul.mubr.f32.gmra.mxu0 %v5807
      %v5881 = vpop.f32.mrf.mxu0
      %v5882 = vadd.f32 0.0, %v5881
      %v5883 = vpop.f32.mrf.mxu0
      %v5884 = vadd.f32 0.0, %v5883
      %5885 = vdwg.mxu0
      %v5886 = vmul.f32 %v5876, %v1397
      %v5887 = vmul.f32 %v5878, %v1401
      %v5888 = vmul.f32 %v5882, %v1397
      %v5889 = vmul.f32 %v5884, %v1401
      %v5890 = vadd.f32 %v5778, %v5886
      %v5891 = vadd.f32 %v5779, %v5887
      %v5892 = vadd.f32 %v5780, %v5888
      %v5893 = vadd.f32 %v5781, %v5889
      %s5894 = scalar_lea.vmem %s3, 64
      %v5895 = vld [vmem:[%s5894] sm:$0xff]
      %v5896 = vld [vmem:[%s5894 + $0x8] sm:$0xff]
      %5898 = vset.pattern.permute.xlu0 0
      %5899 = vperm.xlu0 %5898, %v5895
      %v5900 = vpop.permute.xlu0 %5899
      %5903 = vset.pattern.permute.xlu0 0
      %5904 = vperm.xlu0 %5903, %v5896
      %v5905 = vpop.permute.xlu0 %5904
      %v5907 = vadd.f32 %v5890, %v5900
      %v5908 = vadd.f32 %v5891, %v5900
      %v5909 = vadd.f32 %v5892, %v5905
      %v5910 = vadd.f32 %v5893, %v5905
      %v5911 = vmax.f32 %v5907, 0.0
      %v5912 = vmax.f32 %v5908, 0.0
      %v5913 = vmax.f32 %v5909, 0.0
      %v5914 = vmax.f32 %v5910, 0.0
      %s5915 = scalar_lea.vmem %s4, 80
      %v5916 = vld [vmem:[%s5915] sm:$0xff]
      %v5917 = vld [vmem:[%s5915 + $0x8] sm:$0xff]
      %v5919 = vsel %vm337, %v5916, 0
      %v5922 = vsel %vm337, %v5917, 0
      %5924 = vmatprep.subr.mxu0 0.0
      %5925 = vmatpush1.msra.mxu0 0.0
      %5926 = vmatprep.subr.mxu0 0.0
      %5927 = vmatpush1.msra.mxu0 0.0
      %5928 = vmatprep.subr.mxu0 0.0
      %5929 = vmatpush1.msra.mxu0 0.0
      %5930 = vmatprep.subr.mxu0 0.0
      %5931 = vmatpush1.msra.mxu0 0.0
      %5932 = vmatprep.subr.mxu0 0.0
      %5933 = vmatpush1.msra.mxu0 0.0
      %5934 = vmatprep.subr.mxu0 0.0
      %5935 = vmatpush1.msra.mxu0 0.0
      %5936 = vmatprep.subr.mxu0 0.0
      %5937 = vmatpush1.msra.mxu0 0.0
      %5938 = vmatprep.subr.mxu0 0.0
      %5939 = vmatpush1.msra.mxu0 0.0
      %5940 = vmatprep.subr.mxu0 0.0
      %5941 = vmatpush1.msra.mxu0 0.0
      %5942 = vmatprep.subr.mxu0 0.0
      %5943 = vmatpush1.msra.mxu0 0.0
      %5944 = vmatprep.subr.mxu0 0.0
      %5945 = vmatpush1.msra.mxu0 0.0
      %5946 = vmatprep.subr.mxu0 0.0
      %5947 = vmatpush1.msra.mxu0 0.0
      %5948 = vmatprep.subr.mxu0 0.0
      %5949 = vmatpush1.msra.mxu0 0.0
      %5950 = vmatprep.subr.mxu0 0.0
      %5951 = vmatpush1.msra.mxu0 0.0
      %5952 = vmatprep.subr.mxu0 %v5914
      %5953 = vmatpush1.msra.mxu0 %v5913
      %5954 = vmatprep.subr.mxu0 %v5912
      %5955 = vmatpush1.msra.mxu0 %v5911
      %5956 = vmatprep.subr.mxu0 0.0
      %5957 = vmatpush2.msra.mxu0 0.0
      %5958 = vmatprep.subr.mxu0 0.0
      %5959 = vmatpush2.msra.mxu0 0.0
      %5960 = vmatprep.subr.mxu0 0.0
      %5961 = vmatpush2.msra.mxu0 0.0
      %5962 = vmatprep.subr.mxu0 0.0
      %5963 = vmatpush2.msra.mxu0 0.0
      %5964 = vmatprep.subr.mxu0 0.0
      %5965 = vmatpush2.msra.mxu0 0.0
      %5966 = vmatprep.subr.mxu0 0.0
      %5967 = vmatpush2.msra.mxu0 0.0
      %5968 = vmatprep.subr.mxu0 0.0
      %5969 = vmatpush2.msra.mxu0 0.0
      %5970 = vmatprep.subr.mxu0 0.0
      %5971 = vmatpush2.msra.mxu0 0.0
      %5972 = vmatprep.subr.mxu0 0.0
      %5973 = vmatpush2.msra.mxu0 0.0
      %5974 = vmatprep.subr.mxu0 0.0
      %5975 = vmatpush2.msra.mxu0 0.0
      %5976 = vmatprep.subr.mxu0 0.0
      %5977 = vmatpush2.msra.mxu0 0.0
      %5978 = vmatprep.subr.mxu0 0.0
      %5979 = vmatpush2.msra.mxu0 0.0
      %5980 = vmatprep.subr.mxu0 0.0
      %5981 = vmatpush2.msra.mxu0 0.0
      %5982 = vmatprep.subr.mxu0 0.0
      %5983 = vmatpush2.msra.mxu0 0.0
      %5984 = vmatprep.subr.mxu0 0.0
      %5985 = vmatpush2.msra.mxu0 0.0
      %5986 = vmatprep.subr.mxu0 0.0
      %5987 = vmatpush2.msra.mxu0 0.0
      %5988 = vmatprep.mubr.f32.mxu0 0.0
      %5989 = vmatmul.mubr.f32.gmra.mxu0 %v5919
      %v5990 = vpop.f32.mrf.mxu0
      %v5991 = vadd.f32 0.0, %v5990
      %v5992 = vpop.f32.mrf.mxu0
      %v5993 = vadd.f32 0.0, %v5992
      %5994 = vmatprep.mubr.f32.mxu0 0.0
      %5995 = vmatmul.mubr.f32.gmra.mxu0 %v5922
      %v5996 = vpop.f32.mrf.mxu0
      %v5997 = vadd.f32 0.0, %v5996
      %v5998 = vpop.f32.mrf.mxu0
      %v5999 = vadd.f32 0.0, %v5998
      %6000 = vdwg.mxu0
      %v6001 = vadd.f32 %v4900, %v5991
      %v6002 = vadd.f32 %v4901, %v5993
      %v6003 = vadd.f32 %v4902, %v5997
      %v6004 = vadd.f32 %v4903, %v5999
      %6007 = vrot.lane.b32.xlu0 %v5912, 17
      %v6008 = vpop.permute.xlu0 %6007
      %6009 = vrot.lane.b32.xlu0 %v5914, 17
      %v6010 = vpop.permute.xlu0 %6009
      %6015 = vrot.lane.b32.xlu0 %v5911, 17
      %v6016 = vpop.permute.xlu0 %6015
      %6017 = vrot.lane.b32.xlu0 %v5913, 17
      %v6018 = vpop.permute.xlu0 %6017
      %v6019 = vsel %vm326, %v6016, %v6008
      %v6020 = vsel %vm326, %v6018, %v6010
      %v6025 = vsel %vm326, %v6008, %v6016
      %v6026 = vsel %vm326, %v6010, %v6018
      %s6027 = scalar_lea.vmem %s2, 720
      %v6028 = vld [vmem:[%s6027] sm:$0xff]
      %v6029 = vld [vmem:[%s6027 + $0x8] sm:$0xff]
      %v6031 = vsel %vm337, %v6028, 0
      %v6034 = vsel %vm337, %v6029, 0
      %6036 = vmatprep.subr.mxu0 0.0
      %6037 = vmatpush1.msra.mxu0 0.0
      %6038 = vmatprep.subr.mxu0 0.0
      %6039 = vmatpush1.msra.mxu0 0.0
      %6040 = vmatprep.subr.mxu0 0.0
      %6041 = vmatpush1.msra.mxu0 0.0
      %6042 = vmatprep.subr.mxu0 0.0
      %6043 = vmatpush1.msra.mxu0 0.0
      %6044 = vmatprep.subr.mxu0 0.0
      %6045 = vmatpush1.msra.mxu0 0.0
      %6046 = vmatprep.subr.mxu0 0.0
      %6047 = vmatpush1.msra.mxu0 0.0
      %6048 = vmatprep.subr.mxu0 0.0
      %6049 = vmatpush1.msra.mxu0 0.0
      %6050 = vmatprep.subr.mxu0 0.0
      %6051 = vmatpush1.msra.mxu0 0.0
      %6052 = vmatprep.subr.mxu0 0.0
      %6053 = vmatpush1.msra.mxu0 0.0
      %6054 = vmatprep.subr.mxu0 0.0
      %6055 = vmatpush1.msra.mxu0 0.0
      %6056 = vmatprep.subr.mxu0 0.0
      %6057 = vmatpush1.msra.mxu0 0.0
      %6058 = vmatprep.subr.mxu0 0.0
      %6059 = vmatpush1.msra.mxu0 0.0
      %6060 = vmatprep.subr.mxu0 0.0
      %6061 = vmatpush1.msra.mxu0 0.0
      %6062 = vmatprep.subr.mxu0 0.0
      %6063 = vmatpush1.msra.mxu0 0.0
      %6064 = vmatprep.subr.mxu0 %v6020
      %6065 = vmatpush1.msra.mxu0 %v6026
      %6066 = vmatprep.subr.mxu0 %v6019
      %6067 = vmatpush1.msra.mxu0 %v6025
      %6068 = vmatprep.subr.mxu0 0.0
      %6069 = vmatpush2.msra.mxu0 0.0
      %6070 = vmatprep.subr.mxu0 0.0
      %6071 = vmatpush2.msra.mxu0 0.0
      %6072 = vmatprep.subr.mxu0 0.0
      %6073 = vmatpush2.msra.mxu0 0.0
      %6074 = vmatprep.subr.mxu0 0.0
      %6075 = vmatpush2.msra.mxu0 0.0
      %6076 = vmatprep.subr.mxu0 0.0
      %6077 = vmatpush2.msra.mxu0 0.0
      %6078 = vmatprep.subr.mxu0 0.0
      %6079 = vmatpush2.msra.mxu0 0.0
      %6080 = vmatprep.subr.mxu0 0.0
      %6081 = vmatpush2.msra.mxu0 0.0
      %6082 = vmatprep.subr.mxu0 0.0
      %6083 = vmatpush2.msra.mxu0 0.0
      %6084 = vmatprep.subr.mxu0 0.0
      %6085 = vmatpush2.msra.mxu0 0.0
      %6086 = vmatprep.subr.mxu0 0.0
      %6087 = vmatpush2.msra.mxu0 0.0
      %6088 = vmatprep.subr.mxu0 0.0
      %6089 = vmatpush2.msra.mxu0 0.0
      %6090 = vmatprep.subr.mxu0 0.0
      %6091 = vmatpush2.msra.mxu0 0.0
      %6092 = vmatprep.subr.mxu0 0.0
      %6093 = vmatpush2.msra.mxu0 0.0
      %6094 = vmatprep.subr.mxu0 0.0
      %6095 = vmatpush2.msra.mxu0 0.0
      %6096 = vmatprep.subr.mxu0 0.0
      %6097 = vmatpush2.msra.mxu0 0.0
      %6098 = vmatprep.subr.mxu0 0.0
      %6099 = vmatpush2.msra.mxu0 0.0
      %6100 = vmatprep.mubr.f32.mxu0 0.0
      %6101 = vmatmul.mubr.f32.gmra.mxu0 %v6031
      %v6102 = vpop.f32.mrf.mxu0
      %v6103 = vadd.f32 0.0, %v6102
      %v6104 = vpop.f32.mrf.mxu0
      %v6105 = vadd.f32 0.0, %v6104
      %6106 = vmatprep.mubr.f32.mxu0 0.0
      %6107 = vmatmul.mubr.f32.gmra.mxu0 %v6034
      %v6108 = vpop.f32.mrf.mxu0
      %v6109 = vadd.f32 0.0, %v6108
      %v6110 = vpop.f32.mrf.mxu0
      %v6111 = vadd.f32 0.0, %v6110
      %6112 = vdwg.mxu0
      %v6113 = vmul.f32 %v6103, %v426
      %v6114 = vmul.f32 %v6105, %v430
      %v6115 = vmul.f32 %v6109, %v426
      %v6116 = vmul.f32 %v6111, %v430
      %v6117 = vadd.f32 %v6113, 0.0
      %v6118 = vadd.f32 %v6114, 0.0
      %v6119 = vadd.f32 %v6115, 0.0
      %v6120 = vadd.f32 %v6116, 0.0
      %6121 = vrot.lane.b32.xlu0 %v5912, 16
      %v6122 = vpop.permute.xlu0 %6121
      %6123 = vrot.lane.b32.xlu0 %v5914, 16
      %v6124 = vpop.permute.xlu0 %6123
      %6127 = vrot.lane.b32.xlu0 %v5911, 16
      %v6128 = vpop.permute.xlu0 %6127
      %6129 = vrot.lane.b32.xlu0 %v5913, 16
      %v6130 = vpop.permute.xlu0 %6129
      %v6131 = vsel %vm337, %v6128, %v6122
      %v6132 = vsel %vm337, %v6130, %v6124
      %v6137 = vsel %vm337, %v6122, %v6128
      %v6138 = vsel %vm337, %v6124, %v6130
      %s6139 = scalar_lea.vmem %s2, 736
      %v6140 = vld [vmem:[%s6139] sm:$0xff]
      %v6141 = vld [vmem:[%s6139 + $0x8] sm:$0xff]
      %v6143 = vsel %vm337, %v6140, 0
      %v6146 = vsel %vm337, %v6141, 0
      %6148 = vmatprep.subr.mxu0 0.0
      %6149 = vmatpush1.msra.mxu0 0.0
      %6150 = vmatprep.subr.mxu0 0.0
      %6151 = vmatpush1.msra.mxu0 0.0
      %6152 = vmatprep.subr.mxu0 0.0
      %6153 = vmatpush1.msra.mxu0 0.0
      %6154 = vmatprep.subr.mxu0 0.0
      %6155 = vmatpush1.msra.mxu0 0.0
      %6156 = vmatprep.subr.mxu0 0.0
      %6157 = vmatpush1.msra.mxu0 0.0
      %6158 = vmatprep.subr.mxu0 0.0
      %6159 = vmatpush1.msra.mxu0 0.0
      %6160 = vmatprep.subr.mxu0 0.0
      %6161 = vmatpush1.msra.mxu0 0.0
      %6162 = vmatprep.subr.mxu0 0.0
      %6163 = vmatpush1.msra.mxu0 0.0
      %6164 = vmatprep.subr.mxu0 0.0
      %6165 = vmatpush1.msra.mxu0 0.0
      %6166 = vmatprep.subr.mxu0 0.0
      %6167 = vmatpush1.msra.mxu0 0.0
      %6168 = vmatprep.subr.mxu0 0.0
      %6169 = vmatpush1.msra.mxu0 0.0
      %6170 = vmatprep.subr.mxu0 0.0
      %6171 = vmatpush1.msra.mxu0 0.0
      %6172 = vmatprep.subr.mxu0 0.0
      %6173 = vmatpush1.msra.mxu0 0.0
      %6174 = vmatprep.subr.mxu0 0.0
      %6175 = vmatpush1.msra.mxu0 0.0
      %6176 = vmatprep.subr.mxu0 %v6132
      %6177 = vmatpush1.msra.mxu0 %v6138
      %6178 = vmatprep.subr.mxu0 %v6131
      %6179 = vmatpush1.msra.mxu0 %v6137
      %6180 = vmatprep.subr.mxu0 0.0
      %6181 = vmatpush2.msra.mxu0 0.0
      %6182 = vmatprep.subr.mxu0 0.0
      %6183 = vmatpush2.msra.mxu0 0.0
      %6184 = vmatprep.subr.mxu0 0.0
      %6185 = vmatpush2.msra.mxu0 0.0
      %6186 = vmatprep.subr.mxu0 0.0
      %6187 = vmatpush2.msra.mxu0 0.0
      %6188 = vmatprep.subr.mxu0 0.0
      %6189 = vmatpush2.msra.mxu0 0.0
      %6190 = vmatprep.subr.mxu0 0.0
      %6191 = vmatpush2.msra.mxu0 0.0
      %6192 = vmatprep.subr.mxu0 0.0
      %6193 = vmatpush2.msra.mxu0 0.0
      %6194 = vmatprep.subr.mxu0 0.0
      %6195 = vmatpush2.msra.mxu0 0.0
      %6196 = vmatprep.subr.mxu0 0.0
      %6197 = vmatpush2.msra.mxu0 0.0
      %6198 = vmatprep.subr.mxu0 0.0
      %6199 = vmatpush2.msra.mxu0 0.0
      %6200 = vmatprep.subr.mxu0 0.0
      %6201 = vmatpush2.msra.mxu0 0.0
      %6202 = vmatprep.subr.mxu0 0.0
      %6203 = vmatpush2.msra.mxu0 0.0
      %6204 = vmatprep.subr.mxu0 0.0
      %6205 = vmatpush2.msra.mxu0 0.0
      %6206 = vmatprep.subr.mxu0 0.0
      %6207 = vmatpush2.msra.mxu0 0.0
      %6208 = vmatprep.subr.mxu0 0.0
      %6209 = vmatpush2.msra.mxu0 0.0
      %6210 = vmatprep.subr.mxu0 0.0
      %6211 = vmatpush2.msra.mxu0 0.0
      %6212 = vmatprep.mubr.f32.mxu0 0.0
      %6213 = vmatmul.mubr.f32.gmra.mxu0 %v6143
      %v6214 = vpop.f32.mrf.mxu0
      %v6215 = vadd.f32 0.0, %v6214
      %v6216 = vpop.f32.mrf.mxu0
      %v6217 = vadd.f32 0.0, %v6216
      %6218 = vmatprep.mubr.f32.mxu0 0.0
      %6219 = vmatmul.mubr.f32.gmra.mxu0 %v6146
      %v6220 = vpop.f32.mrf.mxu0
      %v6221 = vadd.f32 0.0, %v6220
      %v6222 = vpop.f32.mrf.mxu0
      %v6223 = vadd.f32 0.0, %v6222
      %6224 = vdwg.mxu0
      %v6225 = vmul.f32 %v6215, %v551
      %v6226 = vmul.f32 %v6217, %v555
      %v6227 = vmul.f32 %v6221, %v551
      %v6228 = vmul.f32 %v6223, %v555
      %v6229 = vadd.f32 %v6117, %v6225
      %v6230 = vadd.f32 %v6118, %v6226
      %v6231 = vadd.f32 %v6119, %v6227
      %v6232 = vadd.f32 %v6120, %v6228
      %6233 = vrot.lane.b32.xlu0 %v5912, 15
      %v6234 = vpop.permute.xlu0 %6233
      %6235 = vrot.lane.b32.xlu0 %v5914, 15
      %v6236 = vpop.permute.xlu0 %6235
      %6239 = vrot.lane.b32.xlu0 %v5911, 15
      %v6240 = vpop.permute.xlu0 %6239
      %6241 = vrot.lane.b32.xlu0 %v5913, 15
      %v6242 = vpop.permute.xlu0 %6241
      %v6243 = vsel %vm576, %v6240, %v6234
      %v6244 = vsel %vm576, %v6242, %v6236
      %v6249 = vsel %vm576, %v6234, %v6240
      %v6250 = vsel %vm576, %v6236, %v6242
      %s6251 = scalar_lea.vmem %s2, 752
      %v6252 = vld [vmem:[%s6251] sm:$0xff]
      %v6253 = vld [vmem:[%s6251 + $0x8] sm:$0xff]
      %v6255 = vsel %vm337, %v6252, 0
      %v6258 = vsel %vm337, %v6253, 0
      %6260 = vmatprep.subr.mxu0 0.0
      %6261 = vmatpush1.msra.mxu0 0.0
      %6262 = vmatprep.subr.mxu0 0.0
      %6263 = vmatpush1.msra.mxu0 0.0
      %6264 = vmatprep.subr.mxu0 0.0
      %6265 = vmatpush1.msra.mxu0 0.0
      %6266 = vmatprep.subr.mxu0 0.0
      %6267 = vmatpush1.msra.mxu0 0.0
      %6268 = vmatprep.subr.mxu0 0.0
      %6269 = vmatpush1.msra.mxu0 0.0
      %6270 = vmatprep.subr.mxu0 0.0
      %6271 = vmatpush1.msra.mxu0 0.0
      %6272 = vmatprep.subr.mxu0 0.0
      %6273 = vmatpush1.msra.mxu0 0.0
      %6274 = vmatprep.subr.mxu0 0.0
      %6275 = vmatpush1.msra.mxu0 0.0
      %6276 = vmatprep.subr.mxu0 0.0
      %6277 = vmatpush1.msra.mxu0 0.0
      %6278 = vmatprep.subr.mxu0 0.0
      %6279 = vmatpush1.msra.mxu0 0.0
      %6280 = vmatprep.subr.mxu0 0.0
      %6281 = vmatpush1.msra.mxu0 0.0
      %6282 = vmatprep.subr.mxu0 0.0
      %6283 = vmatpush1.msra.mxu0 0.0
      %6284 = vmatprep.subr.mxu0 0.0
      %6285 = vmatpush1.msra.mxu0 0.0
      %6286 = vmatprep.subr.mxu0 0.0
      %6287 = vmatpush1.msra.mxu0 0.0
      %6288 = vmatprep.subr.mxu0 %v6244
      %6289 = vmatpush1.msra.mxu0 %v6250
      %6290 = vmatprep.subr.mxu0 %v6243
      %6291 = vmatpush1.msra.mxu0 %v6249
      %6292 = vmatprep.subr.mxu0 0.0
      %6293 = vmatpush2.msra.mxu0 0.0
      %6294 = vmatprep.subr.mxu0 0.0
      %6295 = vmatpush2.msra.mxu0 0.0
      %6296 = vmatprep.subr.mxu0 0.0
      %6297 = vmatpush2.msra.mxu0 0.0
      %6298 = vmatprep.subr.mxu0 0.0
      %6299 = vmatpush2.msra.mxu0 0.0
      %6300 = vmatprep.subr.mxu0 0.0
      %6301 = vmatpush2.msra.mxu0 0.0
      %6302 = vmatprep.subr.mxu0 0.0
      %6303 = vmatpush2.msra.mxu0 0.0
      %6304 = vmatprep.subr.mxu0 0.0
      %6305 = vmatpush2.msra.mxu0 0.0
      %6306 = vmatprep.subr.mxu0 0.0
      %6307 = vmatpush2.msra.mxu0 0.0
      %6308 = vmatprep.subr.mxu0 0.0
      %6309 = vmatpush2.msra.mxu0 0.0
      %6310 = vmatprep.subr.mxu0 0.0
      %6311 = vmatpush2.msra.mxu0 0.0
      %6312 = vmatprep.subr.mxu0 0.0
      %6313 = vmatpush2.msra.mxu0 0.0
      %6314 = vmatprep.subr.mxu0 0.0
      %6315 = vmatpush2.msra.mxu0 0.0
      %6316 = vmatprep.subr.mxu0 0.0
      %6317 = vmatpush2.msra.mxu0 0.0
      %6318 = vmatprep.subr.mxu0 0.0
      %6319 = vmatpush2.msra.mxu0 0.0
      %6320 = vmatprep.subr.mxu0 0.0
      %6321 = vmatpush2.msra.mxu0 0.0
      %6322 = vmatprep.subr.mxu0 0.0
      %6323 = vmatpush2.msra.mxu0 0.0
      %6324 = vmatprep.mubr.f32.mxu0 0.0
      %6325 = vmatmul.mubr.f32.gmra.mxu0 %v6255
      %v6326 = vpop.f32.mrf.mxu0
      %v6327 = vadd.f32 0.0, %v6326
      %v6328 = vpop.f32.mrf.mxu0
      %v6329 = vadd.f32 0.0, %v6328
      %6330 = vmatprep.mubr.f32.mxu0 0.0
      %6331 = vmatmul.mubr.f32.gmra.mxu0 %v6258
      %v6332 = vpop.f32.mrf.mxu0
      %v6333 = vadd.f32 0.0, %v6332
      %v6334 = vpop.f32.mrf.mxu0
      %v6335 = vadd.f32 0.0, %v6334
      %6336 = vdwg.mxu0
      %v6337 = vmul.f32 %v6327, %v677
      %v6338 = vmul.f32 %v6329, %v681
      %v6339 = vmul.f32 %v6333, %v677
      %v6340 = vmul.f32 %v6335, %v681
      %v6341 = vadd.f32 %v6229, %v6337
      %v6342 = vadd.f32 %v6230, %v6338
      %v6343 = vadd.f32 %v6231, %v6339
      %v6344 = vadd.f32 %v6232, %v6340
      %6345 = vrot.lane.b32.xlu0 %v5912, 1
      %v6346 = vpop.permute.xlu0 %6345
      %6347 = vrot.lane.b32.xlu0 %v5914, 1
      %v6348 = vpop.permute.xlu0 %6347
      %6351 = vrot.lane.b32.xlu0 %v5911, 1
      %v6352 = vpop.permute.xlu0 %6351
      %6353 = vrot.lane.b32.xlu0 %v5913, 1
      %v6354 = vpop.permute.xlu0 %6353
      %v6355 = vsel %vm702, %v6352, %v6346
      %v6356 = vsel %vm702, %v6354, %v6348
      %v6361 = vsel %vm702, %v6346, %v6352
      %v6362 = vsel %vm702, %v6348, %v6354
      %s6363 = scalar_lea.vmem %s2, 768
      %v6364 = vld [vmem:[%s6363] sm:$0xff]
      %v6365 = vld [vmem:[%s6363 + $0x8] sm:$0xff]
      %v6367 = vsel %vm337, %v6364, 0
      %v6370 = vsel %vm337, %v6365, 0
      %6372 = vmatprep.subr.mxu0 0.0
      %6373 = vmatpush1.msra.mxu0 0.0
      %6374 = vmatprep.subr.mxu0 0.0
      %6375 = vmatpush1.msra.mxu0 0.0
      %6376 = vmatprep.subr.mxu0 0.0
      %6377 = vmatpush1.msra.mxu0 0.0
      %6378 = vmatprep.subr.mxu0 0.0
      %6379 = vmatpush1.msra.mxu0 0.0
      %6380 = vmatprep.subr.mxu0 0.0
      %6381 = vmatpush1.msra.mxu0 0.0
      %6382 = vmatprep.subr.mxu0 0.0
      %6383 = vmatpush1.msra.mxu0 0.0
      %6384 = vmatprep.subr.mxu0 0.0
      %6385 = vmatpush1.msra.mxu0 0.0
      %6386 = vmatprep.subr.mxu0 0.0
      %6387 = vmatpush1.msra.mxu0 0.0
      %6388 = vmatprep.subr.mxu0 0.0
      %6389 = vmatpush1.msra.mxu0 0.0
      %6390 = vmatprep.subr.mxu0 0.0
      %6391 = vmatpush1.msra.mxu0 0.0
      %6392 = vmatprep.subr.mxu0 0.0
      %6393 = vmatpush1.msra.mxu0 0.0
      %6394 = vmatprep.subr.mxu0 0.0
      %6395 = vmatpush1.msra.mxu0 0.0
      %6396 = vmatprep.subr.mxu0 0.0
      %6397 = vmatpush1.msra.mxu0 0.0
      %6398 = vmatprep.subr.mxu0 0.0
      %6399 = vmatpush1.msra.mxu0 0.0
      %6400 = vmatprep.subr.mxu0 %v6356
      %6401 = vmatpush1.msra.mxu0 %v6362
      %6402 = vmatprep.subr.mxu0 %v6355
      %6403 = vmatpush1.msra.mxu0 %v6361
      %6404 = vmatprep.subr.mxu0 0.0
      %6405 = vmatpush2.msra.mxu0 0.0
      %6406 = vmatprep.subr.mxu0 0.0
      %6407 = vmatpush2.msra.mxu0 0.0
      %6408 = vmatprep.subr.mxu0 0.0
      %6409 = vmatpush2.msra.mxu0 0.0
      %6410 = vmatprep.subr.mxu0 0.0
      %6411 = vmatpush2.msra.mxu0 0.0
      %6412 = vmatprep.subr.mxu0 0.0
      %6413 = vmatpush2.msra.mxu0 0.0
      %6414 = vmatprep.subr.mxu0 0.0
      %6415 = vmatpush2.msra.mxu0 0.0
      %6416 = vmatprep.subr.mxu0 0.0
      %6417 = vmatpush2.msra.mxu0 0.0
      %6418 = vmatprep.subr.mxu0 0.0
      %6419 = vmatpush2.msra.mxu0 0.0
      %6420 = vmatprep.subr.mxu0 0.0
      %6421 = vmatpush2.msra.mxu0 0.0
      %6422 = vmatprep.subr.mxu0 0.0
      %6423 = vmatpush2.msra.mxu0 0.0
      %6424 = vmatprep.subr.mxu0 0.0
      %6425 = vmatpush2.msra.mxu0 0.0
      %6426 = vmatprep.subr.mxu0 0.0
      %6427 = vmatpush2.msra.mxu0 0.0
      %6428 = vmatprep.subr.mxu0 0.0
      %6429 = vmatpush2.msra.mxu0 0.0
      %6430 = vmatprep.subr.mxu0 0.0
      %6431 = vmatpush2.msra.mxu0 0.0
      %6432 = vmatprep.subr.mxu0 0.0
      %6433 = vmatpush2.msra.mxu0 0.0
      %6434 = vmatprep.subr.mxu0 0.0
      %6435 = vmatpush2.msra.mxu0 0.0
      %6436 = vmatprep.mubr.f32.mxu0 0.0
      %6437 = vmatmul.mubr.f32.gmra.mxu0 %v6367
      %v6438 = vpop.f32.mrf.mxu0
      %v6439 = vadd.f32 0.0, %v6438
      %v6440 = vpop.f32.mrf.mxu0
      %v6441 = vadd.f32 0.0, %v6440
      %6442 = vmatprep.mubr.f32.mxu0 0.0
      %6443 = vmatmul.mubr.f32.gmra.mxu0 %v6370
      %v6444 = vpop.f32.mrf.mxu0
      %v6445 = vadd.f32 0.0, %v6444
      %v6446 = vpop.f32.mrf.mxu0
      %v6447 = vadd.f32 0.0, %v6446
      %6448 = vdwg.mxu0
      %v6449 = vmul.f32 %v6439, %v803
      %v6450 = vmul.f32 %v6441, %v807
      %v6451 = vmul.f32 %v6445, %v803
      %v6452 = vmul.f32 %v6447, %v807
      %v6453 = vadd.f32 %v6341, %v6449
      %v6454 = vadd.f32 %v6342, %v6450
      %v6455 = vadd.f32 %v6343, %v6451
      %v6456 = vadd.f32 %v6344, %v6452
      %s6457 = scalar_lea.vmem %s2, 784
      %v6458 = vld [vmem:[%s6457] sm:$0xff]
      %v6459 = vld [vmem:[%s6457 + $0x8] sm:$0xff]
      %v6461 = vsel %vm337, %v6458, 0
      %v6464 = vsel %vm337, %v6459, 0
      %6466 = vmatprep.subr.mxu0 0.0
      %6467 = vmatpush1.msra.mxu0 0.0
      %6468 = vmatprep.subr.mxu0 0.0
      %6469 = vmatpush1.msra.mxu0 0.0
      %6470 = vmatprep.subr.mxu0 0.0
      %6471 = vmatpush1.msra.mxu0 0.0
      %6472 = vmatprep.subr.mxu0 0.0
      %6473 = vmatpush1.msra.mxu0 0.0
      %6474 = vmatprep.subr.mxu0 0.0
      %6475 = vmatpush1.msra.mxu0 0.0
      %6476 = vmatprep.subr.mxu0 0.0
      %6477 = vmatpush1.msra.mxu0 0.0
      %6478 = vmatprep.subr.mxu0 0.0
      %6479 = vmatpush1.msra.mxu0 0.0
      %6480 = vmatprep.subr.mxu0 0.0
      %6481 = vmatpush1.msra.mxu0 0.0
      %6482 = vmatprep.subr.mxu0 0.0
      %6483 = vmatpush1.msra.mxu0 0.0
      %6484 = vmatprep.subr.mxu0 0.0
      %6485 = vmatpush1.msra.mxu0 0.0
      %6486 = vmatprep.subr.mxu0 0.0
      %6487 = vmatpush1.msra.mxu0 0.0
      %6488 = vmatprep.subr.mxu0 0.0
      %6489 = vmatpush1.msra.mxu0 0.0
      %6490 = vmatprep.subr.mxu0 0.0
      %6491 = vmatpush1.msra.mxu0 0.0
      %6492 = vmatprep.subr.mxu0 0.0
      %6493 = vmatpush1.msra.mxu0 0.0
      %6494 = vmatprep.subr.mxu0 %v5914
      %6495 = vmatpush1.msra.mxu0 %v5913
      %6496 = vmatprep.subr.mxu0 %v5912
      %6497 = vmatpush1.msra.mxu0 %v5911
      %6498 = vmatprep.subr.mxu0 0.0
      %6499 = vmatpush2.msra.mxu0 0.0
      %6500 = vmatprep.subr.mxu0 0.0
      %6501 = vmatpush2.msra.mxu0 0.0
      %6502 = vmatprep.subr.mxu0 0.0
      %6503 = vmatpush2.msra.mxu0 0.0
      %6504 = vmatprep.subr.mxu0 0.0
      %6505 = vmatpush2.msra.mxu0 0.0
      %6506 = vmatprep.subr.mxu0 0.0
      %6507 = vmatpush2.msra.mxu0 0.0
      %6508 = vmatprep.subr.mxu0 0.0
      %6509 = vmatpush2.msra.mxu0 0.0
      %6510 = vmatprep.subr.mxu0 0.0
      %6511 = vmatpush2.msra.mxu0 0.0
      %6512 = vmatprep.subr.mxu0 0.0
      %6513 = vmatpush2.msra.mxu0 0.0
      %6514 = vmatprep.subr.mxu0 0.0
      %6515 = vmatpush2.msra.mxu0 0.0
      %6516 = vmatprep.subr.mxu0 0.0
      %6517 = vmatpush2.msra.mxu0 0.0
      %6518 = vmatprep.subr.mxu0 0.0
      %6519 = vmatpush2.msra.mxu0 0.0
      %6520 = vmatprep.subr.mxu0 0.0
      %6521 = vmatpush2.msra.mxu0 0.0
      %6522 = vmatprep.subr.mxu0 0.0
      %6523 = vmatpush2.msra.mxu0 0.0
      %6524 = vmatprep.subr.mxu0 0.0
      %6525 = vmatpush2.msra.mxu0 0.0
      %6526 = vmatprep.subr.mxu0 0.0
      %6527 = vmatpush2.msra.mxu0 0.0
      %6528 = vmatprep.subr.mxu0 0.0
      %6529 = vmatpush2.msra.mxu0 0.0
      %6530 = vmatprep.mubr.f32.mxu0 0.0
      %6531 = vmatmul.mubr.f32.gmra.mxu0 %v6461
      %v6532 = vpop.f32.mrf.mxu0
      %v6533 = vadd.f32 0.0, %v6532
      %v6534 = vpop.f32.mrf.mxu0
      %v6535 = vadd.f32 0.0, %v6534
      %6536 = vmatprep.mubr.f32.mxu0 0.0
      %6537 = vmatmul.mubr.f32.gmra.mxu0 %v6464
      %v6538 = vpop.f32.mrf.mxu0
      %v6539 = vadd.f32 0.0, %v6538
      %v6540 = vpop.f32.mrf.mxu0
      %v6541 = vadd.f32 0.0, %v6540
      %6542 = vdwg.mxu0
      %v6543 = vadd.f32 %v6453, %v6533
      %v6544 = vadd.f32 %v6454, %v6535
      %v6545 = vadd.f32 %v6455, %v6539
      %v6546 = vadd.f32 %v6456, %v6541
      %6547 = vrot.lane.b32.xlu0 %v5911, 127
      %v6548 = vpop.permute.xlu0 %6547
      %6549 = vrot.lane.b32.xlu0 %v5912, 127
      %v6550 = vpop.permute.xlu0 %6549
      %6551 = vrot.lane.b32.xlu0 %v5913, 127
      %v6552 = vpop.permute.xlu0 %6551
      %6553 = vrot.lane.b32.xlu0 %v5914, 127
      %v6554 = vpop.permute.xlu0 %6553
      %v6555 = vsel %vm916, %v6548, %v6550
      %v6556 = vsel %vm916, %v6552, %v6554
      %v6563 = vsel %vm916, %v6550, %v6548
      %v6564 = vsel %vm916, %v6554, %v6552
      %s6565 = scalar_lea.vmem %s2, 800
      %v6566 = vld [vmem:[%s6565] sm:$0xff]
      %v6567 = vld [vmem:[%s6565 + $0x8] sm:$0xff]
      %v6569 = vsel %vm337, %v6566, 0
      %v6572 = vsel %vm337, %v6567, 0
      %6574 = vmatprep.subr.mxu0 0.0
      %6575 = vmatpush1.msra.mxu0 0.0
      %6576 = vmatprep.subr.mxu0 0.0
      %6577 = vmatpush1.msra.mxu0 0.0
      %6578 = vmatprep.subr.mxu0 0.0
      %6579 = vmatpush1.msra.mxu0 0.0
      %6580 = vmatprep.subr.mxu0 0.0
      %6581 = vmatpush1.msra.mxu0 0.0
      %6582 = vmatprep.subr.mxu0 0.0
      %6583 = vmatpush1.msra.mxu0 0.0
      %6584 = vmatprep.subr.mxu0 0.0
      %6585 = vmatpush1.msra.mxu0 0.0
      %6586 = vmatprep.subr.mxu0 0.0
      %6587 = vmatpush1.msra.mxu0 0.0
      %6588 = vmatprep.subr.mxu0 0.0
      %6589 = vmatpush1.msra.mxu0 0.0
      %6590 = vmatprep.subr.mxu0 0.0
      %6591 = vmatpush1.msra.mxu0 0.0
      %6592 = vmatprep.subr.mxu0 0.0
      %6593 = vmatpush1.msra.mxu0 0.0
      %6594 = vmatprep.subr.mxu0 0.0
      %6595 = vmatpush1.msra.mxu0 0.0
      %6596 = vmatprep.subr.mxu0 0.0
      %6597 = vmatpush1.msra.mxu0 0.0
      %6598 = vmatprep.subr.mxu0 0.0
      %6599 = vmatpush1.msra.mxu0 0.0
      %6600 = vmatprep.subr.mxu0 0.0
      %6601 = vmatpush1.msra.mxu0 0.0
      %6602 = vmatprep.subr.mxu0 %v6564
      %6603 = vmatpush1.msra.mxu0 %v6556
      %6604 = vmatprep.subr.mxu0 %v6563
      %6605 = vmatpush1.msra.mxu0 %v6555
      %6606 = vmatprep.subr.mxu0 0.0
      %6607 = vmatpush2.msra.mxu0 0.0
      %6608 = vmatprep.subr.mxu0 0.0
      %6609 = vmatpush2.msra.mxu0 0.0
      %6610 = vmatprep.subr.mxu0 0.0
      %6611 = vmatpush2.msra.mxu0 0.0
      %6612 = vmatprep.subr.mxu0 0.0
      %6613 = vmatpush2.msra.mxu0 0.0
      %6614 = vmatprep.subr.mxu0 0.0
      %6615 = vmatpush2.msra.mxu0 0.0
      %6616 = vmatprep.subr.mxu0 0.0
      %6617 = vmatpush2.msra.mxu0 0.0
      %6618 = vmatprep.subr.mxu0 0.0
      %6619 = vmatpush2.msra.mxu0 0.0
      %6620 = vmatprep.subr.mxu0 0.0
      %6621 = vmatpush2.msra.mxu0 0.0
      %6622 = vmatprep.subr.mxu0 0.0
      %6623 = vmatpush2.msra.mxu0 0.0
      %6624 = vmatprep.subr.mxu0 0.0
      %6625 = vmatpush2.msra.mxu0 0.0
      %6626 = vmatprep.subr.mxu0 0.0
      %6627 = vmatpush2.msra.mxu0 0.0
      %6628 = vmatprep.subr.mxu0 0.0
      %6629 = vmatpush2.msra.mxu0 0.0
      %6630 = vmatprep.subr.mxu0 0.0
      %6631 = vmatpush2.msra.mxu0 0.0
      %6632 = vmatprep.subr.mxu0 0.0
      %6633 = vmatpush2.msra.mxu0 0.0
      %6634 = vmatprep.subr.mxu0 0.0
      %6635 = vmatpush2.msra.mxu0 0.0
      %6636 = vmatprep.subr.mxu0 0.0
      %6637 = vmatpush2.msra.mxu0 0.0
      %6638 = vmatprep.mubr.f32.mxu0 0.0
      %6639 = vmatmul.mubr.f32.gmra.mxu0 %v6569
      %v6640 = vpop.f32.mrf.mxu0
      %v6641 = vadd.f32 0.0, %v6640
      %v6642 = vpop.f32.mrf.mxu0
      %v6643 = vadd.f32 0.0, %v6642
      %6644 = vmatprep.mubr.f32.mxu0 0.0
      %6645 = vmatmul.mubr.f32.gmra.mxu0 %v6572
      %v6646 = vpop.f32.mrf.mxu0
      %v6647 = vadd.f32 0.0, %v6646
      %v6648 = vpop.f32.mrf.mxu0
      %v6649 = vadd.f32 0.0, %v6648
      %6650 = vdwg.mxu0
      %v6651 = vmul.f32 %v6641, %v1019
      %v6652 = vmul.f32 %v6643, %v1023
      %v6653 = vmul.f32 %v6647, %v1019
      %v6654 = vmul.f32 %v6649, %v1023
      %v6655 = vadd.f32 %v6543, %v6651
      %v6656 = vadd.f32 %v6544, %v6652
      %v6657 = vadd.f32 %v6545, %v6653
      %v6658 = vadd.f32 %v6546, %v6654
      %6659 = vrot.lane.b32.xlu0 %v5911, 113
      %v6660 = vpop.permute.xlu0 %6659
      %6661 = vrot.lane.b32.xlu0 %v5912, 113
      %v6662 = vpop.permute.xlu0 %6661
      %6663 = vrot.lane.b32.xlu0 %v5913, 113
      %v6664 = vpop.permute.xlu0 %6663
      %6665 = vrot.lane.b32.xlu0 %v5914, 113
      %v6666 = vpop.permute.xlu0 %6665
      %v6667 = vsel %vm1042, %v6660, %v6662
      %v6668 = vsel %vm1042, %v6664, %v6666
      %v6675 = vsel %vm1042, %v6662, %v6660
      %v6676 = vsel %vm1042, %v6666, %v6664
      %s6677 = scalar_lea.vmem %s2, 816
      %v6678 = vld [vmem:[%s6677] sm:$0xff]
      %v6679 = vld [vmem:[%s6677 + $0x8] sm:$0xff]
      %v6681 = vsel %vm337, %v6678, 0
      %v6684 = vsel %vm337, %v6679, 0
      %6686 = vmatprep.subr.mxu0 0.0
      %6687 = vmatpush1.msra.mxu0 0.0
      %6688 = vmatprep.subr.mxu0 0.0
      %6689 = vmatpush1.msra.mxu0 0.0
      %6690 = vmatprep.subr.mxu0 0.0
      %6691 = vmatpush1.msra.mxu0 0.0
      %6692 = vmatprep.subr.mxu0 0.0
      %6693 = vmatpush1.msra.mxu0 0.0
      %6694 = vmatprep.subr.mxu0 0.0
      %6695 = vmatpush1.msra.mxu0 0.0
      %6696 = vmatprep.subr.mxu0 0.0
      %6697 = vmatpush1.msra.mxu0 0.0
      %6698 = vmatprep.subr.mxu0 0.0
      %6699 = vmatpush1.msra.mxu0 0.0
      %6700 = vmatprep.subr.mxu0 0.0
      %6701 = vmatpush1.msra.mxu0 0.0
      %6702 = vmatprep.subr.mxu0 0.0
      %6703 = vmatpush1.msra.mxu0 0.0
      %6704 = vmatprep.subr.mxu0 0.0
      %6705 = vmatpush1.msra.mxu0 0.0
      %6706 = vmatprep.subr.mxu0 0.0
      %6707 = vmatpush1.msra.mxu0 0.0
      %6708 = vmatprep.subr.mxu0 0.0
      %6709 = vmatpush1.msra.mxu0 0.0
      %6710 = vmatprep.subr.mxu0 0.0
      %6711 = vmatpush1.msra.mxu0 0.0
      %6712 = vmatprep.subr.mxu0 0.0
      %6713 = vmatpush1.msra.mxu0 0.0
      %6714 = vmatprep.subr.mxu0 %v6676
      %6715 = vmatpush1.msra.mxu0 %v6668
      %6716 = vmatprep.subr.mxu0 %v6675
      %6717 = vmatpush1.msra.mxu0 %v6667
      %6718 = vmatprep.subr.mxu0 0.0
      %6719 = vmatpush2.msra.mxu0 0.0
      %6720 = vmatprep.subr.mxu0 0.0
      %6721 = vmatpush2.msra.mxu0 0.0
      %6722 = vmatprep.subr.mxu0 0.0
      %6723 = vmatpush2.msra.mxu0 0.0
      %6724 = vmatprep.subr.mxu0 0.0
      %6725 = vmatpush2.msra.mxu0 0.0
      %6726 = vmatprep.subr.mxu0 0.0
      %6727 = vmatpush2.msra.mxu0 0.0
      %6728 = vmatprep.subr.mxu0 0.0
      %6729 = vmatpush2.msra.mxu0 0.0
      %6730 = vmatprep.subr.mxu0 0.0
      %6731 = vmatpush2.msra.mxu0 0.0
      %6732 = vmatprep.subr.mxu0 0.0
      %6733 = vmatpush2.msra.mxu0 0.0
      %6734 = vmatprep.subr.mxu0 0.0
      %6735 = vmatpush2.msra.mxu0 0.0
      %6736 = vmatprep.subr.mxu0 0.0
      %6737 = vmatpush2.msra.mxu0 0.0
      %6738 = vmatprep.subr.mxu0 0.0
      %6739 = vmatpush2.msra.mxu0 0.0
      %6740 = vmatprep.subr.mxu0 0.0
      %6741 = vmatpush2.msra.mxu0 0.0
      %6742 = vmatprep.subr.mxu0 0.0
      %6743 = vmatpush2.msra.mxu0 0.0
      %6744 = vmatprep.subr.mxu0 0.0
      %6745 = vmatpush2.msra.mxu0 0.0
      %6746 = vmatprep.subr.mxu0 0.0
      %6747 = vmatpush2.msra.mxu0 0.0
      %6748 = vmatprep.subr.mxu0 0.0
      %6749 = vmatpush2.msra.mxu0 0.0
      %6750 = vmatprep.mubr.f32.mxu0 0.0
      %6751 = vmatmul.mubr.f32.gmra.mxu0 %v6681
      %v6752 = vpop.f32.mrf.mxu0
      %v6753 = vadd.f32 0.0, %v6752
      %v6754 = vpop.f32.mrf.mxu0
      %v6755 = vadd.f32 0.0, %v6754
      %6756 = vmatprep.mubr.f32.mxu0 0.0
      %6757 = vmatmul.mubr.f32.gmra.mxu0 %v6684
      %v6758 = vpop.f32.mrf.mxu0
      %v6759 = vadd.f32 0.0, %v6758
      %v6760 = vpop.f32.mrf.mxu0
      %v6761 = vadd.f32 0.0, %v6760
      %6762 = vdwg.mxu0
      %v6763 = vmul.f32 %v6753, %v1145
      %v6764 = vmul.f32 %v6755, %v1149
      %v6765 = vmul.f32 %v6759, %v1145
      %v6766 = vmul.f32 %v6761, %v1149
      %v6767 = vadd.f32 %v6655, %v6763
      %v6768 = vadd.f32 %v6656, %v6764
      %v6769 = vadd.f32 %v6657, %v6765
      %v6770 = vadd.f32 %v6658, %v6766
      %6771 = vrot.lane.b32.xlu0 %v5911, 112
      %v6772 = vpop.permute.xlu0 %6771
      %6773 = vrot.lane.b32.xlu0 %v5912, 112
      %v6774 = vpop.permute.xlu0 %6773
      %6775 = vrot.lane.b32.xlu0 %v5913, 112
      %v6776 = vpop.permute.xlu0 %6775
      %6777 = vrot.lane.b32.xlu0 %v5914, 112
      %v6778 = vpop.permute.xlu0 %6777
      %v6779 = vsel %vm1168, %v6772, %v6774
      %v6780 = vsel %vm1168, %v6776, %v6778
      %v6787 = vsel %vm1168, %v6774, %v6772
      %v6788 = vsel %vm1168, %v6778, %v6776
      %s6789 = scalar_lea.vmem %s2, 832
      %v6790 = vld [vmem:[%s6789] sm:$0xff]
      %v6791 = vld [vmem:[%s6789 + $0x8] sm:$0xff]
      %v6793 = vsel %vm337, %v6790, 0
      %v6796 = vsel %vm337, %v6791, 0
      %6798 = vmatprep.subr.mxu0 0.0
      %6799 = vmatpush1.msra.mxu0 0.0
      %6800 = vmatprep.subr.mxu0 0.0
      %6801 = vmatpush1.msra.mxu0 0.0
      %6802 = vmatprep.subr.mxu0 0.0
      %6803 = vmatpush1.msra.mxu0 0.0
      %6804 = vmatprep.subr.mxu0 0.0
      %6805 = vmatpush1.msra.mxu0 0.0
      %6806 = vmatprep.subr.mxu0 0.0
      %6807 = vmatpush1.msra.mxu0 0.0
      %6808 = vmatprep.subr.mxu0 0.0
      %6809 = vmatpush1.msra.mxu0 0.0
      %6810 = vmatprep.subr.mxu0 0.0
      %6811 = vmatpush1.msra.mxu0 0.0
      %6812 = vmatprep.subr.mxu0 0.0
      %6813 = vmatpush1.msra.mxu0 0.0
      %6814 = vmatprep.subr.mxu0 0.0
      %6815 = vmatpush1.msra.mxu0 0.0
      %6816 = vmatprep.subr.mxu0 0.0
      %6817 = vmatpush1.msra.mxu0 0.0
      %6818 = vmatprep.subr.mxu0 0.0
      %6819 = vmatpush1.msra.mxu0 0.0
      %6820 = vmatprep.subr.mxu0 0.0
      %6821 = vmatpush1.msra.mxu0 0.0
      %6822 = vmatprep.subr.mxu0 0.0
      %6823 = vmatpush1.msra.mxu0 0.0
      %6824 = vmatprep.subr.mxu0 0.0
      %6825 = vmatpush1.msra.mxu0 0.0
      %6826 = vmatprep.subr.mxu0 %v6788
      %6827 = vmatpush1.msra.mxu0 %v6780
      %6828 = vmatprep.subr.mxu0 %v6787
      %6829 = vmatpush1.msra.mxu0 %v6779
      %6830 = vmatprep.subr.mxu0 0.0
      %6831 = vmatpush2.msra.mxu0 0.0
      %6832 = vmatprep.subr.mxu0 0.0
      %6833 = vmatpush2.msra.mxu0 0.0
      %6834 = vmatprep.subr.mxu0 0.0
      %6835 = vmatpush2.msra.mxu0 0.0
      %6836 = vmatprep.subr.mxu0 0.0
      %6837 = vmatpush2.msra.mxu0 0.0
      %6838 = vmatprep.subr.mxu0 0.0
      %6839 = vmatpush2.msra.mxu0 0.0
      %6840 = vmatprep.subr.mxu0 0.0
      %6841 = vmatpush2.msra.mxu0 0.0
      %6842 = vmatprep.subr.mxu0 0.0
      %6843 = vmatpush2.msra.mxu0 0.0
      %6844 = vmatprep.subr.mxu0 0.0
      %6845 = vmatpush2.msra.mxu0 0.0
      %6846 = vmatprep.subr.mxu0 0.0
      %6847 = vmatpush2.msra.mxu0 0.0
      %6848 = vmatprep.subr.mxu0 0.0
      %6849 = vmatpush2.msra.mxu0 0.0
      %6850 = vmatprep.subr.mxu0 0.0
      %6851 = vmatpush2.msra.mxu0 0.0
      %6852 = vmatprep.subr.mxu0 0.0
      %6853 = vmatpush2.msra.mxu0 0.0
      %6854 = vmatprep.subr.mxu0 0.0
      %6855 = vmatpush2.msra.mxu0 0.0
      %6856 = vmatprep.subr.mxu0 0.0
      %6857 = vmatpush2.msra.mxu0 0.0
      %6858 = vmatprep.subr.mxu0 0.0
      %6859 = vmatpush2.msra.mxu0 0.0
      %6860 = vmatprep.subr.mxu0 0.0
      %6861 = vmatpush2.msra.mxu0 0.0
      %6862 = vmatprep.mubr.f32.mxu0 0.0
      %6863 = vmatmul.mubr.f32.gmra.mxu0 %v6793
      %v6864 = vpop.f32.mrf.mxu0
      %v6865 = vadd.f32 0.0, %v6864
      %v6866 = vpop.f32.mrf.mxu0
      %v6867 = vadd.f32 0.0, %v6866
      %6868 = vmatprep.mubr.f32.mxu0 0.0
      %6869 = vmatmul.mubr.f32.gmra.mxu0 %v6796
      %v6870 = vpop.f32.mrf.mxu0
      %v6871 = vadd.f32 0.0, %v6870
      %v6872 = vpop.f32.mrf.mxu0
      %v6873 = vadd.f32 0.0, %v6872
      %6874 = vdwg.mxu0
      %v6875 = vmul.f32 %v6865, %v1271
      %v6876 = vmul.f32 %v6867, %v1275
      %v6877 = vmul.f32 %v6871, %v1271
      %v6878 = vmul.f32 %v6873, %v1275
      %v6879 = vadd.f32 %v6767, %v6875
      %v6880 = vadd.f32 %v6768, %v6876
      %v6881 = vadd.f32 %v6769, %v6877
      %v6882 = vadd.f32 %v6770, %v6878
      %6883 = vrot.lane.b32.xlu0 %v5911, 111
      %v6884 = vpop.permute.xlu0 %6883
      %6885 = vrot.lane.b32.xlu0 %v5912, 111
      %v6886 = vpop.permute.xlu0 %6885
      %6887 = vrot.lane.b32.xlu0 %v5913, 111
      %v6888 = vpop.permute.xlu0 %6887
      %6889 = vrot.lane.b32.xlu0 %v5914, 111
      %v6890 = vpop.permute.xlu0 %6889
      %v6891 = vsel %vm1294, %v6884, %v6886
      %v6892 = vsel %vm1294, %v6888, %v6890
      %v6899 = vsel %vm1294, %v6886, %v6884
      %v6900 = vsel %vm1294, %v6890, %v6888
      %s6901 = scalar_lea.vmem %s2, 848
      %v6902 = vld [vmem:[%s6901] sm:$0xff]
      %v6903 = vld [vmem:[%s6901 + $0x8] sm:$0xff]
      %v6905 = vsel %vm337, %v6902, 0
      %v6908 = vsel %vm337, %v6903, 0
      %6910 = vmatprep.subr.mxu0 0.0
      %6911 = vmatpush1.msra.mxu0 0.0
      %6912 = vmatprep.subr.mxu0 0.0
      %6913 = vmatpush1.msra.mxu0 0.0
      %6914 = vmatprep.subr.mxu0 0.0
      %6915 = vmatpush1.msra.mxu0 0.0
      %6916 = vmatprep.subr.mxu0 0.0
      %6917 = vmatpush1.msra.mxu0 0.0
      %6918 = vmatprep.subr.mxu0 0.0
      %6919 = vmatpush1.msra.mxu0 0.0
      %6920 = vmatprep.subr.mxu0 0.0
      %6921 = vmatpush1.msra.mxu0 0.0
      %6922 = vmatprep.subr.mxu0 0.0
      %6923 = vmatpush1.msra.mxu0 0.0
      %6924 = vmatprep.subr.mxu0 0.0
      %6925 = vmatpush1.msra.mxu0 0.0
      %6926 = vmatprep.subr.mxu0 0.0
      %6927 = vmatpush1.msra.mxu0 0.0
      %6928 = vmatprep.subr.mxu0 0.0
      %6929 = vmatpush1.msra.mxu0 0.0
      %6930 = vmatprep.subr.mxu0 0.0
      %6931 = vmatpush1.msra.mxu0 0.0
      %6932 = vmatprep.subr.mxu0 0.0
      %6933 = vmatpush1.msra.mxu0 0.0
      %6934 = vmatprep.subr.mxu0 0.0
      %6935 = vmatpush1.msra.mxu0 0.0
      %6936 = vmatprep.subr.mxu0 0.0
      %6937 = vmatpush1.msra.mxu0 0.0
      %6938 = vmatprep.subr.mxu0 %v6900
      %6939 = vmatpush1.msra.mxu0 %v6892
      %6940 = vmatprep.subr.mxu0 %v6899
      %6941 = vmatpush1.msra.mxu0 %v6891
      %6942 = vmatprep.subr.mxu0 0.0
      %6943 = vmatpush2.msra.mxu0 0.0
      %6944 = vmatprep.subr.mxu0 0.0
      %6945 = vmatpush2.msra.mxu0 0.0
      %6946 = vmatprep.subr.mxu0 0.0
      %6947 = vmatpush2.msra.mxu0 0.0
      %6948 = vmatprep.subr.mxu0 0.0
      %6949 = vmatpush2.msra.mxu0 0.0
      %6950 = vmatprep.subr.mxu0 0.0
      %6951 = vmatpush2.msra.mxu0 0.0
      %6952 = vmatprep.subr.mxu0 0.0
      %6953 = vmatpush2.msra.mxu0 0.0
      %6954 = vmatprep.subr.mxu0 0.0
      %6955 = vmatpush2.msra.mxu0 0.0
      %6956 = vmatprep.subr.mxu0 0.0
      %6957 = vmatpush2.msra.mxu0 0.0
      %6958 = vmatprep.subr.mxu0 0.0
      %6959 = vmatpush2.msra.mxu0 0.0
      %6960 = vmatprep.subr.mxu0 0.0
      %6961 = vmatpush2.msra.mxu0 0.0
      %6962 = vmatprep.subr.mxu0 0.0
      %6963 = vmatpush2.msra.mxu0 0.0
      %6964 = vmatprep.subr.mxu0 0.0
      %6965 = vmatpush2.msra.mxu0 0.0
      %6966 = vmatprep.subr.mxu0 0.0
      %6967 = vmatpush2.msra.mxu0 0.0
      %6968 = vmatprep.subr.mxu0 0.0
      %6969 = vmatpush2.msra.mxu0 0.0
      %6970 = vmatprep.subr.mxu0 0.0
      %6971 = vmatpush2.msra.mxu0 0.0
      %6972 = vmatprep.subr.mxu0 0.0
      %6973 = vmatpush2.msra.mxu0 0.0
      %6974 = vmatprep.mubr.f32.mxu0 0.0
      %6975 = vmatmul.mubr.f32.gmra.mxu0 %v6905
      %v6976 = vpop.f32.mrf.mxu0
      %v6977 = vadd.f32 0.0, %v6976
      %v6978 = vpop.f32.mrf.mxu0
      %v6979 = vadd.f32 0.0, %v6978
      %6980 = vmatprep.mubr.f32.mxu0 0.0
      %6981 = vmatmul.mubr.f32.gmra.mxu0 %v6908
      %v6982 = vpop.f32.mrf.mxu0
      %v6983 = vadd.f32 0.0, %v6982
      %v6984 = vpop.f32.mrf.mxu0
      %v6985 = vadd.f32 0.0, %v6984
      %6986 = vdwg.mxu0
      %v6987 = vmul.f32 %v6977, %v1397
      %v6988 = vmul.f32 %v6979, %v1401
      %v6989 = vmul.f32 %v6983, %v1397
      %v6990 = vmul.f32 %v6985, %v1401
      %v6991 = vadd.f32 %v6879, %v6987
      %v6992 = vadd.f32 %v6880, %v6988
      %v6993 = vadd.f32 %v6881, %v6989
      %v6994 = vadd.f32 %v6882, %v6990
      %s6995 = scalar_lea.vmem %s3, 80
      %v6996 = vld [vmem:[%s6995] sm:$0xff]
      %v6997 = vld [vmem:[%s6995 + $0x8] sm:$0xff]
      %6999 = vset.pattern.permute.xlu0 0
      %7000 = vperm.xlu0 %6999, %v6996
      %v7001 = vpop.permute.xlu0 %7000
      %7004 = vset.pattern.permute.xlu0 0
      %7005 = vperm.xlu0 %7004, %v6997
      %v7006 = vpop.permute.xlu0 %7005
      %v7008 = vadd.f32 %v6991, %v7001
      %v7009 = vadd.f32 %v6992, %v7001
      %v7010 = vadd.f32 %v6993, %v7006
      %v7011 = vadd.f32 %v6994, %v7006
      %v7012 = vmax.f32 %v7008, 0.0
      %v7013 = vmax.f32 %v7009, 0.0
      %v7014 = vmax.f32 %v7010, 0.0
      %v7015 = vmax.f32 %v7011, 0.0
      %s7016 = scalar_lea.vmem %s4, 96
      %v7017 = vld [vmem:[%s7016] sm:$0xff]
      %v7018 = vld [vmem:[%s7016 + $0x8] sm:$0xff]
      %v7020 = vsel %vm337, %v7017, 0
      %v7023 = vsel %vm337, %v7018, 0
      %7025 = vmatprep.subr.mxu0 0.0
      %7026 = vmatpush1.msra.mxu0 0.0
      %7027 = vmatprep.subr.mxu0 0.0
      %7028 = vmatpush1.msra.mxu0 0.0
      %7029 = vmatprep.subr.mxu0 0.0
      %7030 = vmatpush1.msra.mxu0 0.0
      %7031 = vmatprep.subr.mxu0 0.0
      %7032 = vmatpush1.msra.mxu0 0.0
      %7033 = vmatprep.subr.mxu0 0.0
      %7034 = vmatpush1.msra.mxu0 0.0
      %7035 = vmatprep.subr.mxu0 0.0
      %7036 = vmatpush1.msra.mxu0 0.0
      %7037 = vmatprep.subr.mxu0 0.0
      %7038 = vmatpush1.msra.mxu0 0.0
      %7039 = vmatprep.subr.mxu0 0.0
      %7040 = vmatpush1.msra.mxu0 0.0
      %7041 = vmatprep.subr.mxu0 0.0
      %7042 = vmatpush1.msra.mxu0 0.0
      %7043 = vmatprep.subr.mxu0 0.0
      %7044 = vmatpush1.msra.mxu0 0.0
      %7045 = vmatprep.subr.mxu0 0.0
      %7046 = vmatpush1.msra.mxu0 0.0
      %7047 = vmatprep.subr.mxu0 0.0
      %7048 = vmatpush1.msra.mxu0 0.0
      %7049 = vmatprep.subr.mxu0 0.0
      %7050 = vmatpush1.msra.mxu0 0.0
      %7051 = vmatprep.subr.mxu0 0.0
      %7052 = vmatpush1.msra.mxu0 0.0
      %7053 = vmatprep.subr.mxu0 %v7015
      %7054 = vmatpush1.msra.mxu0 %v7014
      %7055 = vmatprep.subr.mxu0 %v7013
      %7056 = vmatpush1.msra.mxu0 %v7012
      %7057 = vmatprep.subr.mxu0 0.0
      %7058 = vmatpush2.msra.mxu0 0.0
      %7059 = vmatprep.subr.mxu0 0.0
      %7060 = vmatpush2.msra.mxu0 0.0
      %7061 = vmatprep.subr.mxu0 0.0
      %7062 = vmatpush2.msra.mxu0 0.0
      %7063 = vmatprep.subr.mxu0 0.0
      %7064 = vmatpush2.msra.mxu0 0.0
      %7065 = vmatprep.subr.mxu0 0.0
      %7066 = vmatpush2.msra.mxu0 0.0
      %7067 = vmatprep.subr.mxu0 0.0
      %7068 = vmatpush2.msra.mxu0 0.0
      %7069 = vmatprep.subr.mxu0 0.0
      %7070 = vmatpush2.msra.mxu0 0.0
      %7071 = vmatprep.subr.mxu0 0.0
      %7072 = vmatpush2.msra.mxu0 0.0
      %7073 = vmatprep.subr.mxu0 0.0
      %7074 = vmatpush2.msra.mxu0 0.0
      %7075 = vmatprep.subr.mxu0 0.0
      %7076 = vmatpush2.msra.mxu0 0.0
      %7077 = vmatprep.subr.mxu0 0.0
      %7078 = vmatpush2.msra.mxu0 0.0
      %7079 = vmatprep.subr.mxu0 0.0
      %7080 = vmatpush2.msra.mxu0 0.0
      %7081 = vmatprep.subr.mxu0 0.0
      %7082 = vmatpush2.msra.mxu0 0.0
      %7083 = vmatprep.subr.mxu0 0.0
      %7084 = vmatpush2.msra.mxu0 0.0
      %7085 = vmatprep.subr.mxu0 0.0
      %7086 = vmatpush2.msra.mxu0 0.0
      %7087 = vmatprep.subr.mxu0 0.0
      %7088 = vmatpush2.msra.mxu0 0.0
      %7089 = vmatprep.mubr.f32.mxu0 0.0
      %7090 = vmatmul.mubr.f32.gmra.mxu0 %v7020
      %v7091 = vpop.f32.mrf.mxu0
      %v7092 = vadd.f32 0.0, %v7091
      %v7093 = vpop.f32.mrf.mxu0
      %v7094 = vadd.f32 0.0, %v7093
      %7095 = vmatprep.mubr.f32.mxu0 0.0
      %7096 = vmatmul.mubr.f32.gmra.mxu0 %v7023
      %v7097 = vpop.f32.mrf.mxu0
      %v7098 = vadd.f32 0.0, %v7097
      %v7099 = vpop.f32.mrf.mxu0
      %v7100 = vadd.f32 0.0, %v7099
      %7101 = vdwg.mxu0
      %v7102 = vadd.f32 %v6001, %v7092
      %v7103 = vadd.f32 %v6002, %v7094
      %v7104 = vadd.f32 %v6003, %v7098
      %v7105 = vadd.f32 %v6004, %v7100
      %v7106 = vld [vmem:[%s5] sm:$0xff]
      %v7107 = vld [vmem:[%s5 + $0x8] sm:$0xff]
      %7109 = vset.pattern.permute.xlu0 0
      %7110 = vperm.xlu0 %7109, %v7106
      %v7111 = vpop.permute.xlu0 %7110
      %7114 = vset.pattern.permute.xlu0 0
      %7115 = vperm.xlu0 %7114, %v7107
      %v7116 = vpop.permute.xlu0 %7115
      %v7118 = vadd.f32 %v7102, %v7111
      %v7119 = vadd.f32 %v7103, %v7111
      %v7120 = vadd.f32 %v7104, %v7116
      %v7121 = vadd.f32 %v7105, %v7116
      %v7122 = vmax.f32 %v7118, 0.0
      %v7123 = vmax.f32 %v7119, 0.0
      %v7124 = vmax.f32 %v7120, 0.0
      %v7125 = vmax.f32 %v7121, 0.0
      %v7126 = vld [vmem:[%s6] sm:$0xff]
      %v7127 = vld [vmem:[%s6 + $0x8] sm:$0xff]
      %v7128 = vld [vmem:[%s6 + $0x10] sm:$0xff]
      %v7129 = vld [vmem:[%s6 + $0x18] sm:$0xff]
      %v7130 = vld [vmem:[%s7] sm:$0xff]
      %v7131 = vld [vmem:[%s7 + $0x8] sm:$0xff]
      %v7132 = vld [vmem:[%s7 + $0x10] sm:$0xff]
      %v7133 = vld [vmem:[%s7 + $0x18] sm:$0xff]
      %7135 = vset.pattern.permute.xlu0 0
      %7136 = vperm.xlu0 %7135, %v7130
      %v7137 = vpop.permute.xlu0 %7136
      %7140 = vset.pattern.permute.xlu0 0
      %7141 = vperm.xlu0 %7140, %v7131
      %v7142 = vpop.permute.xlu0 %7141
      %7145 = vset.pattern.permute.xlu0 0
      %7146 = vperm.xlu0 %7145, %v7132
      %v7147 = vpop.permute.xlu0 %7146
      %7150 = vset.pattern.permute.xlu0 0
      %7151 = vperm.xlu0 %7150, %v7133
      %v7152 = vpop.permute.xlu0 %7151
      %v7155 = vsel %vm337, %v7126, 0
      %v7158 = vsel %vm337, %v7127, 0
      %v7161 = vsel %vm337, %v7128, 0
      %v7164 = vsel %vm337, %v7129, 0
      %7166 = vmatprep.subr.mxu0 0.0
      %7167 = vmatpush1.msra.mxu0 0.0
      %7168 = vmatprep.subr.mxu0 0.0
      %7169 = vmatpush1.msra.mxu0 0.0
      %7170 = vmatprep.subr.mxu0 0.0
      %7171 = vmatpush1.msra.mxu0 0.0
      %7172 = vmatprep.subr.mxu0 0.0
      %7173 = vmatpush1.msra.mxu0 0.0
      %7174 = vmatprep.subr.mxu0 0.0
      %7175 = vmatpush1.msra.mxu0 0.0
      %7176 = vmatprep.subr.mxu0 0.0
      %7177 = vmatpush1.msra.mxu0 0.0
      %7178 = vmatprep.subr.mxu0 0.0
      %7179 = vmatpush1.msra.mxu0 0.0
      %7180 = vmatprep.subr.mxu0 0.0
      %7181 = vmatpush1.msra.mxu0 0.0
      %7182 = vmatprep.subr.mxu0 0.0
      %7183 = vmatpush1.msra.mxu0 0.0
      %7184 = vmatprep.subr.mxu0 0.0
      %7185 = vmatpush1.msra.mxu0 0.0
      %7186 = vmatprep.subr.mxu0 0.0
      %7187 = vmatpush1.msra.mxu0 0.0
      %7188 = vmatprep.subr.mxu0 0.0
      %7189 = vmatpush1.msra.mxu0 0.0
      %7190 = vmatprep.subr.mxu0 0.0
      %7191 = vmatpush1.msra.mxu0 0.0
      %7192 = vmatprep.subr.mxu0 0.0
      %7193 = vmatpush1.msra.mxu0 0.0
      %7194 = vmatprep.subr.mxu0 %v7125
      %7195 = vmatpush1.msra.mxu0 %v7124
      %7196 = vmatprep.subr.mxu0 %v7123
      %7197 = vmatpush1.msra.mxu0 %v7122
      %7198 = vmatprep.subr.mxu0 0.0
      %7199 = vmatpush2.msra.mxu0 0.0
      %7200 = vmatprep.subr.mxu0 0.0
      %7201 = vmatpush2.msra.mxu0 0.0
      %7202 = vmatprep.subr.mxu0 0.0
      %7203 = vmatpush2.msra.mxu0 0.0
      %7204 = vmatprep.subr.mxu0 0.0
      %7205 = vmatpush2.msra.mxu0 0.0
      %7206 = vmatprep.subr.mxu0 0.0
      %7207 = vmatpush2.msra.mxu0 0.0
      %7208 = vmatprep.subr.mxu0 0.0
      %7209 = vmatpush2.msra.mxu0 0.0
      %7210 = vmatprep.subr.mxu0 0.0
      %7211 = vmatpush2.msra.mxu0 0.0
      %7212 = vmatprep.subr.mxu0 0.0
      %7213 = vmatpush2.msra.mxu0 0.0
      %7214 = vmatprep.subr.mxu0 0.0
      %7215 = vmatpush2.msra.mxu0 0.0
      %7216 = vmatprep.subr.mxu0 0.0
      %7217 = vmatpush2.msra.mxu0 0.0
      %7218 = vmatprep.subr.mxu0 0.0
      %7219 = vmatpush2.msra.mxu0 0.0
      %7220 = vmatprep.subr.mxu0 0.0
      %7221 = vmatpush2.msra.mxu0 0.0
      %7222 = vmatprep.subr.mxu0 0.0
      %7223 = vmatpush2.msra.mxu0 0.0
      %7224 = vmatprep.subr.mxu0 0.0
      %7225 = vmatpush2.msra.mxu0 0.0
      %7226 = vmatprep.subr.mxu0 0.0
      %7227 = vmatpush2.msra.mxu0 0.0
      %7228 = vmatprep.subr.mxu0 0.0
      %7229 = vmatpush2.msra.mxu0 0.0
      %7230 = vmatprep.mubr.f32.mxu0 0.0
      %7231 = vmatmul.mubr.f32.gmra.mxu0 %v7155
      %v7232 = vpop.f32.mrf.mxu0
      %v7233 = vadd.f32 %v7137, %v7232
      %v7234 = vpop.f32.mrf.mxu0
      %v7235 = vadd.f32 %v7137, %v7234
      %7236 = vmatprep.mubr.f32.mxu0 0.0
      %7237 = vmatmul.mubr.f32.gmra.mxu0 %v7158
      %v7238 = vpop.f32.mrf.mxu0
      %v7239 = vadd.f32 %v7142, %v7238
      %v7240 = vpop.f32.mrf.mxu0
      %v7241 = vadd.f32 %v7142, %v7240
      %7242 = vmatprep.mubr.f32.mxu0 0.0
      %7243 = vmatmul.mubr.f32.gmra.mxu0 %v7161
      %v7244 = vpop.f32.mrf.mxu0
      %v7245 = vadd.f32 %v7147, %v7244
      %v7246 = vpop.f32.mrf.mxu0
      %v7247 = vadd.f32 %v7147, %v7246
      %7248 = vmatprep.mubr.f32.mxu0 0.0
      %7249 = vmatmul.mubr.f32.gmra.mxu0 %v7164
      %v7250 = vpop.f32.mrf.mxu0
      %v7251 = vadd.f32 %v7152, %v7250
      %v7252 = vpop.f32.mrf.mxu0
      %v7253 = vadd.f32 %v7152, %v7252
      %7254 = vdwg.mxu0
      %v7255 = vmax.f32 %v7233, 0.0
      %v7256 = vmax.f32 %v7235, 0.0
      %v7257 = vmax.f32 %v7239, 0.0
      %v7258 = vmax.f32 %v7241, 0.0
      %v7259 = vmax.f32 %v7245, 0.0
      %v7260 = vmax.f32 %v7247, 0.0
      %v7261 = vmax.f32 %v7251, 0.0
      %v7262 = vmax.f32 %v7253, 0.0
      %7263 = vst [vmem:[%s305] sm:$0xff] %v7255
      %7264 = vst [vmem:[%s305 + $0x8] sm:$0xff] %v7256
      %7265 = vst [vmem:[%s305 + $0x10] sm:$0xff] %v7257
      %7266 = vst [vmem:[%s305 + $0x18] sm:$0xff] %v7258
      %7267 = vst [vmem:[%s305 + $0x20] sm:$0xff] %v7259
      %7268 = vst [vmem:[%s305 + $0x28] sm:$0xff] %v7260
      %7269 = vst [vmem:[%s305 + $0x30] sm:$0xff] %v7261
      %7270 = vst [vmem:[%s305 + $0x38] sm:$0xff] %v7262
      %p7271 = scmp.lt.s32.totalorder %s19, 1
      %s7272 = scalar_select %p7271, %s19, 1
      %s7273 = smul.addr %s7272, 8
      %s7274 = smul.addr %s7273, 8
      %s7275 = scalar_lea.vmem %s8, %s7274
      // Predicated region
      $region53: #{hgblock_forward.1} parent=51 // pred_check
        %p7276 = pneg %p210
      $region54: #{hgblock_forward.1} parent=51 // pred_check_branch
        %7278 = sbr.rel (%p7276) target = $region56
      $region55: #{hgblock_forward.1} parent=51 // pred_region
        _
      $region56: #{hgblock_forward.1} parent=51 // pred_fallthru
        _
    $region52: #{hgblock_forward.1} parent=5 // pred_fallthru
      _
    %p7279 = scmp.le.s32.totalorder 2, %s14
    // Predicated region
    $region57: #{hgblock_forward.1} parent=5 // pred_check
      %p7280 = pneg %p7279
    $region58: #{hgblock_forward.1} parent=5 // pred_check_branch
      %7282 = sbr.rel (%p7280) target = $region60
    $region59: #{hgblock_forward.1} parent=5 // pred_region
      %s7283 = ssub.s32 %s14, 2
      // Predicated region
      $region61: #{hgblock_forward.1} parent=59 // pred_check
        %p7284 = pneg %p216
      $region62: #{hgblock_forward.1} parent=59 // pred_check_branch
        %7286 = sbr.rel (%p7284) target = $region64
      $region63: #{hgblock_forward.1} parent=59 // pred_region
        %p7287 = scmp.lt.s32.totalorder %s20, 1
        %s7288 = scalar_select %p7287, %s20, 1
        %s7289 = smul.addr %s7288, 8
        %s7290 = smul.addr %s7289, 8
        %s7291 = scalar_lea.vmem %s8, %s7290
      $region64: #{hgblock_forward.1} parent=59 // pred_fallthru
        _
    $region60: #{hgblock_forward.1} parent=5 // pred_fallthru
      _
  $region6: #{hgblock_forward.1} parent=0 // loop_footer
    %s18 = sadd.s32 1, %s14
  $region7: #{hgblock_forward.1} parent=0 // loop_footer_branch
    %13 = sbr.rel target = $region3
  $region8: #{hgblock_forward.1} parent=0 // loop_exit
    _

</llo_original>
